<compile_context>
chip_gen: v6e
topology: v6e:2x2x1
jax: 0.10.0
libtpu: 0.0.40
codegen_flags: <defaults>
</compile_context>

<pallas_src>
import math
import functools

import jax
import jax.numpy as jnp
from jax import lax
from jax.experimental import pallas as pl
from jax.experimental.pallas import tpu as pltpu


# ----------------------------------------------------------------------------
# In-kernel helpers (operate on loaded jnp arrays, not Refs)
# ----------------------------------------------------------------------------
def _layernorm(x, gamma, beta, eps=1e-5):
    # PyTorch nn.LayerNorm: biased variance, eps inside sqrt, affine.
    mean = jnp.mean(x, axis=-1, keepdims=True)
    var = jnp.mean((x - mean) ** 2, axis=-1, keepdims=True)
    return (x - mean) * lax.rsqrt(var + eps) * gamma + beta


def _softmax_rows(s):
    s = s - jnp.max(s, axis=-1, keepdims=True)
    e = jnp.exp(s)
    # Divide -> EUP reciprocal (otherwise-idle slot after exp), not a VALU div.
    return e * pl.reciprocal(jnp.sum(e, axis=-1, keepdims=True), approx=True)


def _mha(qh, kh, vh, wo, *, num_heads, key_dim, val_dim, causal):
    """Multi-head attention on pre-folded, full-width projections.

    qh : (Sq, H*key_dim)  -- the 1/sqrt(key_dim) scale is already folded into
                             the Q weights at fold time.
    kh : (Sk, H*key_dim)
    vh : (Sk, H*val_dim)
    wo : (H*val_dim, D)
    """
    Sq, Sk = qh.shape[0], kh.shape[0]
    if causal:
        # Built ONCE (hoisted out of the per-head loop; JAX does not CSE
        # broadcast_in_dim inside kernels).
        row = lax.broadcasted_iota(jnp.int32, (Sq, Sk), 0)
        col = lax.broadcasted_iota(jnp.int32, (Sq, Sk), 1)
        causal_mask = col > row
    heads = []
    for h in range(num_heads):
        q_h = qh[:, h * key_dim:(h + 1) * key_dim]
        k_h = kh[:, h * key_dim:(h + 1) * key_dim]
        v_h = vh[:, h * val_dim:(h + 1) * val_dim]
        # Contract on the last dim of BOTH operands: no explicit k_h.T (no
        # per-head XLU transpose) — Mosaic consumes the transposed contraction.
        s = lax.dot_general(q_h, k_h, (((1,), (1,)), ((), ())),
                            preferred_element_type=jnp.float32)
        if causal:
            # TODO(synk): reference builds the mask via triu_indices(S, model_dim)
            # (out-of-bounds when S != model_dim); implemented as the intended
            # causal mask over the (S, S) score matrix.  Large finite negative
            # instead of -inf avoids inf-inf -> NaN on masked rows.
            s = jnp.where(causal_mask, -1e30, s)
        p = _softmax_rows(s)
        heads.append(jnp.dot(p, v_h, preferred_element_type=jnp.float32))
    concat = jnp.concatenate(heads, axis=-1)                 # (Sq, H*val_dim)
    return jnp.dot(concat, wo, preferred_element_type=jnp.float32)


# ----------------------------------------------------------------------------
# Single fused encoder+decoder STACK kernel.  grid = (2 * num_layers,)
#   layers [0, L)    : encoder layer `l`       (activation in enc_ref scratch)
#   layers [L, 2L)   : decoder layer `l - L`   (activation carried in out_ref)
# ----------------------------------------------------------------------------
def transformer_stack_kernel(
        src_ref, tgt_ref,
        e_wq, e_wk, e_wv, e_wo, e_wfc1, e_bfc1, e_wfc2, e_vec,
        d_wq1, d_wk1, d_wv1, d_wo1, d_wq2, d_wek, d_wev, d_wo2,
        d_wfc1, d_bfc1, d_wfc2, d_vec,
        out_ref, enc_ref,
        *, num_layers, num_heads, key_dim, val_dim):
    layer = pl.program_id(0)

    # -------------------------- encoder phase --------------------------
    @pl.when(layer < num_layers)
    def _enc_phase():
        @pl.when(layer == 0)
        def _():
            enc_ref[...] = src_ref[...]

        x = enc_ref[...]
        vec = e_vec[...]                       # (8, D): g1,b1,g2,b2,bfc2,pad
        g1, b1 = vec[0:1, :], vec[1:2, :]
        g2, b2 = vec[2:3, :], vec[3:4, :]
        bfc2 = vec[4:5, :]
        bfc1 = e_bfc1[...][0:1, :]             # (8, HID) padded tile -> row 0

        # Folded projections: one full-width matmul per Q/K/V.
        # (Reference bug reproduced: encoder K's input projection uses linear_q;
        #  the duplicate x @ wq_in matmul is eliminated by the fold.)
        qh = jnp.dot(x, e_wq[...], preferred_element_type=jnp.float32)
        kh = jnp.dot(x, e_wk[...], preferred_element_type=jnp.float32)
        vh = jnp.dot(x, e_wv[...], preferred_element_type=jnp.float32)
        att = _mha(qh, kh, vh, e_wo[...], num_heads=num_heads,
                   key_dim=key_dim, val_dim=val_dim, causal=False)
        out = _layernorm(att + x, g1, b1)
        shortcut = out

        h = jnp.dot(out, e_wfc1[...], preferred_element_type=jnp.float32) + bfc1
        h = jnp.maximum(h, 0.0)
        out = jnp.dot(h, e_wfc2[...], preferred_element_type=jnp.float32) + bfc2
        out = _layernorm(out + shortcut, g2, b2)
        enc_ref[...] = out

    # -------------------------- decoder phase --------------------------
    @pl.when(layer >= num_layers)
    def _dec_phase():
        @pl.when(layer == num_layers)
        def _():
            out_ref[...] = tgt_ref[...]

        x = out_ref[...]                        # carried decoder activation
        enc = enc_ref[...]                      # encoder output, VMEM-resident
        vec = d_vec[...]                        # (8,D): g1,b1,g2,b2,g3,b3,bfc2,pad
        g1, b1 = vec[0:1, :], vec[1:2, :]
        g2, b2 = vec[2:3, :], vec[3:4, :]
        g3, b3 = vec[4:5, :], vec[5:6, :]
        bfc2 = vec[6:7, :]
        bfc1 = d_bfc1[...][0:1, :]

        # masked (causal) self-attention block
        qh = jnp.dot(x, d_wq1[...], preferred_element_type=jnp.float32)
        kh = jnp.dot(x, d_wk1[...], preferred_element_type=jnp.float32)
        vh = jnp.dot(x, d_wv1[...], preferred_element_type=jnp.float32)
        att = _mha(qh, kh, vh, d_wo1[...], num_heads=num_heads,
                   key_dim=key_dim, val_dim=val_dim, causal=True)
        out = _layernorm(att + x, g1, b1)
        shortcut = out

        # cross-attention block
        # TODO(synk): reference calls multi_head_att2(Q, K, V) with the `mask`
        # argument missing (TypeError in PyTorch); treated here as mask=None.
        qh2 = jnp.dot(out, d_wq2[...], preferred_element_type=jnp.float32)
        kh2 = jnp.dot(enc, d_wek[...], preferred_element_type=jnp.float32)
        vh2 = jnp.dot(enc, d_wev[...], preferred_element_type=jnp.float32)
        att2 = _mha(qh2, kh2, vh2, d_wo2[...], num_heads=num_heads,
                    key_dim=key_dim, val_dim=val_dim, causal=False)
        out = _layernorm(att2 + shortcut, g2, b2)
        shortcut = out

        # feed-forward block
        h = jnp.dot(out, d_wfc1[...], preferred_element_type=jnp.float32) + bfc1
        h = jnp.maximum(h, 0.0)
        out = jnp.dot(h, d_wfc2[...], preferred_element_type=jnp.float32) + bfc2
        out = _layernorm(out + shortcut, g3, b3)
        out_ref[...] = out


# ----------------------------------------------------------------------------
# pallas_call wrapper (single launch for the whole encoder+decoder stack)
# ----------------------------------------------------------------------------
_ENC_NAMES = ["wq", "wk", "wv", "wo", "wfc1", "bfc1", "wfc2", "vec"]
_DEC_NAMES = ["wq1", "wk1", "wv1", "wo1", "wq2", "wek", "wev", "wo2",
              "wfc1", "bfc1", "wfc2", "vec"]


def _phase_spec(arr, num_layers, phase):
    """BlockSpec for a (L, ...) weight stack in the fused (2L,) grid.

    phase=0 (encoder): layer index = min(l, L-1)  — clamped so the block index
    is constant through the decoder phase (no redundant re-fetch).
    phase=1 (decoder): layer index = max(l - L, 0).
    """
    tail = tuple(arr.shape[1:])
    zeros = (0,) * len(tail)
    if phase == 0:
        def idx(l):
            return (jnp.minimum(l, num_layers - 1),) + zeros
    else:
        def idx(l):
            return (jnp.maximum(l - num_layers, 0),) + zeros
    return pl.BlockSpec((pl.Squeezed(),) + tail, idx)


def run_transformer_stack(src_emb, tgt_emb, enc_w, dec_w, *,
                          num_layers, num_heads, key_dim, val_dim):
    Ss, D = src_emb.shape
    St, _ = tgt_emb.shape
    kern = functools.partial(transformer_stack_kernel, num_layers=num_layers,
                             num_heads=num_heads, key_dim=key_dim,
                             val_dim=val_dim)
    in_specs = ([pl.BlockSpec((Ss, D), lambda l: (0, 0)),
                 pl.BlockSpec((St, D), lambda l: (0, 0))]
                + [_phase_spec(enc_w[n], num_layers, 0) for n in _ENC_NAMES]
                + [_phase_spec(dec_w[n], num_layers, 1) for n in _DEC_NAMES])
    grid_spec = pltpu.PrefetchScalarGridSpec(
        num_scalar_prefetch=0,
        grid=(2 * num_layers,),
        in_specs=in_specs,
        out_specs=pl.BlockSpec((St, D), lambda l: (0, 0)),
        scratch_shapes=[pltpu.VMEM((Ss, D), jnp.float32)],
    )
    # TODO(synk): for large S on v7x, add a leading "parallel" grid axis over
    # Q/sublane tiles to use both TensorCores; pointless at S=16.
    return pl.pallas_call(
        kern,
        out_shape=jax.ShapeDtypeStruct((St, D), jnp.float32),
        grid_spec=grid_spec,
        compiler_params=pltpu.CompilerParams(
            dimension_semantics=("arbitrary",),       # carried layer loop
            vmem_limit_bytes=32 * 1024 * 1024,
        ),
    )(src_emb, tgt_emb,
      *[enc_w[n] for n in _ENC_NAMES],
      *[dec_w[n] for n in _DEC_NAMES])


# ----------------------------------------------------------------------------
# Host-side weight folding / stacking (runs ONCE at init, outside the forward)
# ----------------------------------------------------------------------------
def _concat_heads(w_heads):
    # (H, D, d) -> (D, H*d); head h occupies columns [h*d, (h+1)*d)
    H, D, d = w_heads.shape
    return jnp.swapaxes(w_heads, 0, 1).reshape(D, H * d)


def _pad_rows(x, rows=8):
    # Pad a (r, C) row-pack to exactly `rows` rows so the block is a full tile.
    return jnp.concatenate(
        [x, jnp.zeros((rows - x.shape[0], x.shape[1]), x.dtype)], axis=0)


def fold_encoder_stack(layers, *, key_dim):
    scale = 1.0 / math.sqrt(float(key_dim))
    # 1/sqrt(key_dim) folded into the Q weights (done once, not per kernel step).
    wq = jnp.stack([(l["wq_in"] @ _concat_heads(l["wqh"])) * scale for l in layers])
    # Reference bug: encoder K's input projection uses linear_q (wq_in).
    wk = jnp.stack([l["wq_in"] @ _concat_heads(l["wkh"]) for l in layers])
    wv = jnp.stack([l["wv_in"] @ _concat_heads(l["wvh"]) for l in layers])
    wo = jnp.stack([l["wo"] for l in layers])
    wfc1 = jnp.stack([l["wfc1"] for l in layers])
    bfc1 = jnp.stack([_pad_rows(l["bfc1"]) for l in layers])          # (L,8,HID)
    wfc2 = jnp.stack([l["wfc2"] for l in layers])
    vec = jnp.stack([_pad_rows(jnp.concatenate(
        [l["g1"], l["b1"], l["g2"], l["b2"], l["bfc2"]], axis=0))
        for l in layers])                                             # (L,8,D)
    return dict(wq=wq, wk=wk, wv=wv, wo=wo,
                wfc1=wfc1, bfc1=bfc1, wfc2=wfc2, vec=vec)


def fold_decoder_stack(layers, *, key_dim):
    scale = 1.0 / math.sqrt(float(key_dim))
    wq1 = jnp.stack([(l["wq1"] @ _concat_heads(l["wqh1"])) * scale for l in layers])
    wk1 = jnp.stack([l["wk"] @ _concat_heads(l["wkh1"]) for l in layers])
    wv1 = jnp.stack([l["wv"] @ _concat_heads(l["wvh1"]) for l in layers])
    wo1 = jnp.stack([l["wo1"] for l in layers])
    wq2 = jnp.stack([(l["wq2"] @ _concat_heads(l["wqh2"])) * scale for l in layers])
    wek = jnp.stack([l["wek"] @ _concat_heads(l["wkh2"]) for l in layers])
    wev = jnp.stack([l["wev"] @ _concat_heads(l["wvh2"]) for l in layers])
    wo2 = jnp.stack([l["wo2"] for l in layers])
    wfc1 = jnp.stack([l["wfc1"] for l in layers])
    bfc1 = jnp.stack([_pad_rows(l["bfc1"]) for l in layers])
    wfc2 = jnp.stack([l["wfc2"] for l in layers])
    vec = jnp.stack([_pad_rows(jnp.concatenate(
        [l["g1"], l["b1"], l["g2"], l["b2"], l["g3"], l["b3"], l["bfc2"]],
        axis=0)) for l in layers])
    return dict(wq1=wq1, wk1=wk1, wv1=wv1, wo1=wo1,
                wq2=wq2, wek=wek, wev=wev, wo2=wo2,
                wfc1=wfc1, bfc1=bfc1, wfc2=wfc2, vec=vec)


# ----------------------------------------------------------------------------
# Glue: positional encoding, params, full forward
# ----------------------------------------------------------------------------
def positional_encoding(num_tokens, model_dim):
    position = jnp.arange(num_tokens, dtype=jnp.float32)[:, None]
    div_term = jnp.exp(jnp.arange(0, model_dim, 2, dtype=jnp.float32)
                       * (-math.log(10000.0) / model_dim))
    pe = jnp.zeros((num_tokens, model_dim), jnp.float32)
    pe = pe.at[:, 0::2].set(jnp.sin(position * div_term))
    pe = pe.at[:, 1::2].set(jnp.cos(position * div_term))
    return pe


def _mha_params(key, model_dim, num_heads, key_dim, val_dim):
    ks = jax.random.split(key, 4)
    sc = 0.05
    return {
        "wqh": sc * jax.random.normal(ks[0], (num_heads, model_dim, key_dim), jnp.float32),
        "wkh": sc * jax.random.normal(ks[1], (num_heads, model_dim, key_dim), jnp.float32),
        "wvh": sc * jax.random.normal(ks[2], (num_heads, model_dim, val_dim), jnp.float32),
        "wo": sc * jax.random.normal(ks[3], (num_heads * val_dim, model_dim), jnp.float32),
    }


def init_params(key, *, num_heads, model_dim, key_dim, val_dim,
                hidden_dim, num_layers, vocab_size):
    sc = 0.05
    params = {"encoder": [], "decoder": []}
    key, ek = jax.random.split(key)
    params["embedding"] = sc * jax.random.normal(ek, (vocab_size, model_dim), jnp.float32)

    for _ in range(num_layers):
        key, k0, k1, k2, k3, k4, k5, k6 = jax.random.split(key, 8)
        mha = _mha_params(k2, model_dim, num_heads, key_dim, val_dim)
        layer = {
            "wq_in": sc * jax.random.normal(k0, (model_dim, model_dim), jnp.float32),
            "wv_in": sc * jax.random.normal(k1, (model_dim, model_dim), jnp.float32),
            "wqh": mha["wqh"], "wkh": mha["wkh"], "wvh": mha["wvh"], "wo": mha["wo"],
            "g1": jnp.ones((1, model_dim), jnp.float32),
            "b1": jnp.zeros((1, model_dim), jnp.float32),
            "wfc1": sc * jax.random.normal(k3, (model_dim, hidden_dim), jnp.float32),
            "bfc1": sc * jax.random.normal(k5, (1, hidden_dim), jnp.float32),
            "wfc2": sc * jax.random.normal(k4, (hidden_dim, model_dim), jnp.float32),
            "bfc2": sc * jax.random.normal(k6, (1, model_dim), jnp.float32),
            "g2": jnp.ones((1, model_dim), jnp.float32),
            "b2": jnp.zeros((1, model_dim), jnp.float32),
        }
        params["encoder"].append(layer)

    for _ in range(num_layers):
        key, *ks = jax.random.split(key, 13)
        mha1 = _mha_params(ks[6], model_dim, num_heads, key_dim, val_dim)
        mha2 = _mha_params(ks[7], model_dim, num_heads, key_dim, val_dim)
        layer = {
            "wq1": sc * jax.random.normal(ks[0], (model_dim, model_dim), jnp.float32),
            "wk": sc * jax.random.normal(ks[1], (model_dim, model_dim), jnp.float32),
            "wv": sc * jax.random.normal(ks[2], (model_dim, model_dim), jnp.float32),
            "wq2": sc * jax.random.normal(ks[3], (model_dim, model_dim), jnp.float32),
            "wek": sc * jax.random.normal(ks[4], (model_dim, model_dim), jnp.float32),
            "wev": sc * jax.random.normal(ks[5], (model_dim, model_dim), jnp.float32),
            "wqh1": mha1["wqh"], "wkh1": mha1["wkh"], "wvh1": mha1["wvh"], "wo1": mha1["wo"],
            "g1": jnp.ones((1, model_dim), jnp.float32),
            "b1": jnp.zeros((1, model_dim), jnp.float32),
            "wqh2": mha2["wqh"], "wkh2": mha2["wkh"], "wvh2": mha2["wvh"], "wo2": mha2["wo"],
            "g2": jnp.ones((1, model_dim), jnp.float32),
            "b2": jnp.zeros((1, model_dim), jnp.float32),
            "wfc1": sc * jax.random.normal(ks[8], (model_dim, hidden_dim), jnp.float32),
            "bfc1": sc * jax.random.normal(ks[10], (1, hidden_dim), jnp.float32),
            "wfc2": sc * jax.random.normal(ks[9], (hidden_dim, model_dim), jnp.float32),
            "bfc2": sc * jax.random.normal(ks[11], (1, model_dim), jnp.float32),
            "g3": jnp.ones((1, model_dim), jnp.float32),
            "b3": jnp.zeros((1, model_dim), jnp.float32),
        }
        params["decoder"].append(layer)
    return params


def transformer_forward(src, target, embedding, enc_w, dec_w, *,
                        num_heads, model_dim, key_dim, val_dim, num_layers):
    # TODO(synk): reference indexes src.size(1) for positional encoding, but its
    # attention math only supports un-batched (S, D) activations; using seq len.
    src_emb = jnp.take(embedding, src, axis=0) \
        + positional_encoding(src.shape[0], model_dim)
    tgt_emb = jnp.take(embedding, target, axis=0) \
        + positional_encoding(target.shape[0], model_dim)

    dec = run_transformer_stack(src_emb, tgt_emb, enc_w, dec_w,
                                num_layers=num_layers, num_heads=num_heads,
                                key_dim=key_dim, val_dim=val_dim)
    # TODO(synk): reference ends with breakpoint() and calls self.linear which
    # is never defined in __init__; returning the decoder stack output instead.
    return dec


# ----------------------------------------------------------------------------
if __name__ == "__main__":
    NUM_HEADS = 4
    MODEL_DIM = 128                      # lane-dense (multiple of 128)
    KEY_DIM = MODEL_DIM // NUM_HEADS     # 32  -> H*KEY_DIM = 128 (lane-dense)
    VAL_DIM = KEY_DIM                    # 32
    HIDDEN_DIM = 256                     # lane-dense
    NUM_LAYERS = 2
    VOCAB = 64
    SEQ_SRC = 16                         # sublane-friendly
    SEQ_TGT = 16

    root = jax.random.PRNGKey(0)
    k_params, k_src, k_tgt = jax.random.split(root, 3)

    params = init_params(k_params, num_heads=NUM_HEADS, model_dim=MODEL_DIM,
                         key_dim=KEY_DIM, val_dim=VAL_DIM,
                         hidden_dim=HIDDEN_DIM, num_layers=NUM_LAYERS,
                         vocab_size=VOCAB)

    # Fold + stack weights ONCE (outside the jitted per-call forward).
    enc_w = fold_encoder_stack(params["encoder"], key_dim=KEY_DIM)
    dec_w = fold_decoder_stack(params["decoder"], key_dim=KEY_DIM)
    enc_w = jax.block_until_ready(enc_w)
    dec_w = jax.block_until_ready(dec_w)

    src = jax.random.randint(k_src, (SEQ_SRC,), 0, VOCAB, dtype=jnp.int32)
    target = jax.random.randint(k_tgt, (SEQ_TGT,), 0, VOCAB, dtype=jnp.int32)

    fwd = jax.jit(functools.partial(transformer_forward,
                                    num_heads=NUM_HEADS, model_dim=MODEL_DIM,
                                    key_dim=KEY_DIM, val_dim=VAL_DIM,
                                    num_layers=NUM_LAYERS))
    out = fwd(src, target, params["embedding"], enc_w, dec_w)
    out = jax.block_until_ready(out)
    assert out.shape == (SEQ_TGT, MODEL_DIM)
    assert bool(jnp.all(jnp.isfinite(out)))
    print("KERNEL_OK")
</pallas_src>

<mosaic_0001>
module attributes {stable_mosaic.version = 11 : i64} {
  func.func @transformer_stack_kernel(%arg0: i32, %arg1: memref<16x128xf32, #tpu.memory_space<vmem>>, %arg2: memref<16x128xf32, #tpu.memory_space<vmem>>, %arg3: memref<1x128x128xf32, #tpu.memory_space<vmem>>, %arg4: memref<1x128x128xf32, #tpu.memory_space<vmem>>, %arg5: memref<1x128x128xf32, #tpu.memory_space<vmem>>, %arg6: memref<1x128x128xf32, #tpu.memory_space<vmem>>, %arg7: memref<1x128x256xf32, #tpu.memory_space<vmem>>, %arg8: memref<1x8x256xf32, #tpu.memory_space<vmem>>, %arg9: memref<1x256x128xf32, #tpu.memory_space<vmem>>, %arg10: memref<1x8x128xf32, #tpu.memory_space<vmem>>, %arg11: memref<1x128x128xf32, #tpu.memory_space<vmem>>, %arg12: memref<1x128x128xf32, #tpu.memory_space<vmem>>, %arg13: memref<1x128x128xf32, #tpu.memory_space<vmem>>, %arg14: memref<1x128x128xf32, #tpu.memory_space<vmem>>, %arg15: memref<1x128x128xf32, #tpu.memory_space<vmem>>, %arg16: memref<1x128x128xf32, #tpu.memory_space<vmem>>, %arg17: memref<1x128x128xf32, #tpu.memory_space<vmem>>, %arg18: memref<1x128x128xf32, #tpu.memory_space<vmem>>, %arg19: memref<1x128x256xf32, #tpu.memory_space<vmem>>, %arg20: memref<1x8x256xf32, #tpu.memory_space<vmem>>, %arg21: memref<1x256x128xf32, #tpu.memory_space<vmem>>, %arg22: memref<1x8x128xf32, #tpu.memory_space<vmem>>, %arg23: memref<16x128xf32, #tpu.memory_space<vmem>>, %arg24: memref<16x128xf32, #tpu.memory_space<vmem>>) attributes {dimension_semantics = [#tpu.dimension_semantics<arbitrary>], iteration_bounds = array<i64: 4>, scalar_prefetch = 0 : i64, scratch_operands = 1 : i64, tpu.core_type = #tpu.core_type<tc>, window_params = [{pipeline_mode = #tpu.pipeline_mode<synchronous>, transform_indices = @transform_0, window_bounds = array<i64: 16, 128>}, {pipeline_mode = #tpu.pipeline_mode<synchronous>, transform_indices = @transform_1, window_bounds = array<i64: 16, 128>}, {transform_indices = @transform_2, window_bounds = array<i64: 1, 128, 128>}, {transform_indices = @transform_3, window_bounds = array<i64: 1, 128, 128>}, {transform_indices = @transform_4, window_bounds = array<i64: 1, 128, 128>}, {transform_indices = @transform_5, window_bounds = array<i64: 1, 128, 128>}, {transform_indices = @transform_6, window_bounds = array<i64: 1, 128, 256>}, {transform_indices = @transform_7, window_bounds = array<i64: 1, 8, 256>}, {transform_indices = @transform_8, window_bounds = array<i64: 1, 256, 128>}, {transform_indices = @transform_9, window_bounds = array<i64: 1, 8, 128>}, {transform_indices = @transform_10, window_bounds = array<i64: 1, 128, 128>}, {transform_indices = @transform_11, window_bounds = array<i64: 1, 128, 128>}, {transform_indices = @transform_12, window_bounds = array<i64: 1, 128, 128>}, {transform_indices = @transform_13, window_bounds = array<i64: 1, 128, 128>}, {transform_indices = @transform_14, window_bounds = array<i64: 1, 128, 128>}, {transform_indices = @transform_15, window_bounds = array<i64: 1, 128, 128>}, {transform_indices = @transform_16, window_bounds = array<i64: 1, 128, 128>}, {transform_indices = @transform_17, window_bounds = array<i64: 1, 128, 128>}, {transform_indices = @transform_18, window_bounds = array<i64: 1, 128, 256>}, {transform_indices = @transform_19, window_bounds = array<i64: 1, 8, 256>}, {transform_indices = @transform_20, window_bounds = array<i64: 1, 256, 128>}, {transform_indices = @transform_21, window_bounds = array<i64: 1, 8, 128>}, {pipeline_mode = #tpu.pipeline_mode<synchronous>, transform_indices = @transform_22, window_bounds = array<i64: 16, 128>}]} {
    %c2_i32 = arith.constant 2 : i32
    %0 = arith.cmpi slt, %arg0, %c2_i32 : i32
    %1 = arith.extui %0 : i1 to i32
    %c0_i32 = arith.constant 0 : i32
    %2 = arith.cmpi ne, %1, %c0_i32 : i32
    scf.if %2 {
      %c0_i32_2 = arith.constant 0 : i32
      %6 = arith.cmpi eq, %arg0, %c0_i32_2 : i32
      %7 = arith.extui %6 : i1 to i32
      %c0_i32_3 = arith.constant 0 : i32
      %8 = arith.cmpi ne, %7, %c0_i32_3 : i32
      scf.if %8 {
        %c0_63 = arith.constant 0 : index
        %c0_64 = arith.constant 0 : index
        %152 = vector.load %arg1[%c0_63, %c0_64] : memref<16x128xf32, #tpu.memory_space<vmem>>, vector<16x128xf32>
        %c0_65 = arith.constant 0 : index
        %c0_66 = arith.constant 0 : index
        %153 = vector.load %arg24[%c0_65, %c0_66] : memref<16x128xf32, #tpu.memory_space<vmem>>, vector<16x128xf32>
        tpu.vector_store %arg24[%c0_65, %c0_66], %152 {strides = array<i32>} : memref<16x128xf32, #tpu.memory_space<vmem>>, vector<16x128xf32>,
      } else {
      }
      %c0 = arith.constant 0 : index
      %c0_4 = arith.constant 0 : index
      %9 = vector.load %arg24[%c0, %c0_4] : memref<16x128xf32, #tpu.memory_space<vmem>>, vector<16x128xf32>
      %c0_5 = arith.constant 0 : index
      %c0_6 = arith.constant 0 : index
      %c0_7 = arith.constant 0 : index
      %10 = vector.load %arg10[%c0_5, %c0_6, %c0_7] : memref<1x8x128xf32, #tpu.memory_space<vmem>>, vector<1x8x128xf32>
      %11 = vector.shape_cast %10 : vector<1x8x128xf32> to vector<8x128xf32>
      %12 = vector.extract_strided_slice %11 {offsets = [0, 0], sizes = [1, 128], strides = [1, 1]} : vector<8x128xf32> to vector<1x128xf32>
      %13 = vector.extract_strided_slice %11 {offsets = [1, 0], sizes = [1, 128], strides = [1, 1]} : vector<8x128xf32> to vector<1x128xf32>
      %14 = vector.extract_strided_slice %11 {offsets = [2, 0], sizes = [1, 128], strides = [1, 1]} : vector<8x128xf32> to vector<1x128xf32>
      %15 = vector.extract_strided_slice %11 {offsets = [3, 0], sizes = [1, 128], strides = [1, 1]} : vector<8x128xf32> to vector<1x128xf32>
      %16 = vector.extract_strided_slice %11 {offsets = [4, 0], sizes = [1, 128], strides = [1, 1]} : vector<8x128xf32> to vector<1x128xf32>
      %c0_8 = arith.constant 0 : index
      %c0_9 = arith.constant 0 : index
      %c0_10 = arith.constant 0 : index
      %17 = vector.load %arg8[%c0_8, %c0_9, %c0_10] : memref<1x8x256xf32, #tpu.memory_space<vmem>>, vector<1x8x256xf32>
      %18 = vector.shape_cast %17 : vector<1x8x256xf32> to vector<8x256xf32>
      %19 = vector.extract_strided_slice %18 {offsets = [0, 0], sizes = [1, 256], strides = [1, 1]} : vector<8x256xf32> to vector<1x256xf32>
      %c0_11 = arith.constant 0 : index
      %c0_12 = arith.constant 0 : index
      %c0_13 = arith.constant 0 : index
      %20 = vector.load %arg3[%c0_11, %c0_12, %c0_13] : memref<1x128x128xf32, #tpu.memory_space<vmem>>, vector<1x128x128xf32>
      %21 = vector.shape_cast %20 : vector<1x128x128xf32> to vector<128x128xf32>
      %cst = arith.constant dense<0.000000e+00> : vector<16x128xf32>
      %22 = tpu.matmul %9, %21, %cst {dimension_numbers = #tpu.dot_dimension_numbers<[1], [0], [0], [1], [0, 0, 1, 1], [], []>} : vector<16x128xf32>, vector<128x128xf32>, vector<16x128xf32> -> vector<16x128xf32>
      %c0_14 = arith.constant 0 : index
      %c0_15 = arith.constant 0 : index
      %c0_16 = arith.constant 0 : index
      %23 = vector.load %arg4[%c0_14, %c0_15, %c0_16] : memref<1x128x128xf32, #tpu.memory_space<vmem>>, vector<1x128x128xf32>
      %24 = vector.shape_cast %23 : vector<1x128x128xf32> to vector<128x128xf32>
      %cst_17 = arith.constant dense<0.000000e+00> : vector<16x128xf32>
      %25 = tpu.matmul %9, %24, %cst_17 {dimension_numbers = #tpu.dot_dimension_numbers<[1], [0], [0], [1], [0, 0, 1, 1], [], []>} : vector<16x128xf32>, vector<128x128xf32>, vector<16x128xf32> -> vector<16x128xf32>
      %c0_18 = arith.constant 0 : index
      %c0_19 = arith.constant 0 : index
      %c0_20 = arith.constant 0 : index
      %26 = vector.load %arg5[%c0_18, %c0_19, %c0_20] : memref<1x128x128xf32, #tpu.memory_space<vmem>>, vector<1x128x128xf32>
      %27 = vector.shape_cast %26 : vector<1x128x128xf32> to vector<128x128xf32>
      %cst_21 = arith.constant dense<0.000000e+00> : vector<16x128xf32>
      %28 = tpu.matmul %9, %27, %cst_21 {dimension_numbers = #tpu.dot_dimension_numbers<[1], [0], [0], [1], [0, 0, 1, 1], [], []>} : vector<16x128xf32>, vector<128x128xf32>, vector<16x128xf32> -> vector<16x128xf32>
      %c0_22 = arith.constant 0 : index
      %c0_23 = arith.constant 0 : index
      %c0_24 = arith.constant 0 : index
      %29 = vector.load %arg6[%c0_22, %c0_23, %c0_24] : memref<1x128x128xf32, #tpu.memory_space<vmem>>, vector<1x128x128xf32>
      %30 = vector.shape_cast %29 : vector<1x128x128xf32> to vector<128x128xf32>
      %31 = vector.extract_strided_slice %22 {offsets = [0, 0], sizes = [16, 32], strides = [1, 1]} : vector<16x128xf32> to vector<16x32xf32>
      %32 = vector.extract_strided_slice %25 {offsets = [0, 0], sizes = [16, 32], strides = [1, 1]} : vector<16x128xf32> to vector<16x32xf32>
      %33 = vector.extract_strided_slice %28 {offsets = [0, 0], sizes = [16, 32], strides = [1, 1]} : vector<16x128xf32> to vector<16x32xf32>
      %cst_25 = arith.constant dense<0.000000e+00> : vector<16x16xf32>
      %34 = tpu.matmul %31, %32, %cst_25 {dimension_numbers = #tpu.dot_dimension_numbers<[1], [1], [0], [0], [0, 0, 1, 0], [], []>} : vector<16x32xf32>, vector<16x32xf32>, vector<16x16xf32> -> vector<16x16xf32>
      %cst_26 = arith.constant dense<0xFF800000> : vector<16xf32>
      %35 = vector.multi_reduction <maximumf>, %34, %cst_26 [1] : vector<16x16xf32> to vector<16xf32>
      %36 = vector.shape_cast %35 : vector<16xf32> to vector<16x1xf32>
      %37 = vector.broadcast %36 : vector<16x1xf32> to vector<16x16xf32>
      %38 = arith.subf %34, %37 : vector<16x16xf32>
      %39 = math.exp %38 : vector<16x16xf32>
      %cst_27 = arith.constant dense<0.000000e+00> : vector<16xf32>
      %40 = vector.multi_reduction <add>, %39, %cst_27 [1] : vector<16x16xf32> to vector<16xf32>
      %41 = vector.shape_cast %40 : vector<16xf32> to vector<16x1xf32>
      %42 = tpu.reciprocal %41 {approx = true} : vector<16x1xf32> -> vector<16x1xf32>
      %43 = vector.broadcast %42 : vector<16x1xf32> to vector<16x16xf32>
      %44 = arith.mulf %39, %43 : vector<16x16xf32>
      %cst_28 = arith.constant dense<0.000000e+00> : vector<16x32xf32>
      %45 = tpu.matmul %44, %33, %cst_28 {dimension_numbers = #tpu.dot_dimension_numbers<[1], [0], [0], [1], [0, 0, 1, 1], [], []>} : vector<16x16xf32>, vector<16x32xf32>, vector<16x32xf32> -> vector<16x32xf32>
      %46 = vector.extract_strided_slice %22 {offsets = [0, 32], sizes = [16, 32], strides = [1, 1]} : vector<16x128xf32> to vector<16x32xf32>
      %47 = vector.extract_strided_slice %25 {offsets = [0, 32], sizes = [16, 32], strides = [1, 1]} : vector<16x128xf32> to vector<16x32xf32>
      %48 = vector.extract_strided_slice %28 {offsets = [0, 32], sizes = [16, 32], strides = [1, 1]} : vector<16x128xf32> to vector<16x32xf32>
      %cst_29 = arith.constant dense<0.000000e+00> : vector<16x16xf32>
      %49 = tpu.matmul %46, %47, %cst_29 {dimension_numbers = #tpu.dot_dimension_numbers<[1], [1], [0], [0], [0, 0, 1, 0], [], []>} : vector<16x32xf32>, vector<16x32xf32>, vector<16x16xf32> -> vector<16x16xf32>
      %cst_30 = arith.constant dense<0xFF800000> : vector<16xf32>
      %50 = vector.multi_reduction <maximumf>, %49, %cst_30 [1] : vector<16x16xf32> to vector<16xf32>
      %51 = vector.shape_cast %50 : vector<16xf32> to vector<16x1xf32>
      %52 = vector.broadcast %51 : vector<16x1xf32> to vector<16x16xf32>
      %53 = arith.subf %49, %52 : vector<16x16xf32>
      %54 = math.exp %53 : vector<16x16xf32>
      %cst_31 = arith.constant dense<0.000000e+00> : vector<16xf32>
      %55 = vector.multi_reduction <add>, %54, %cst_31 [1] : vector<16x16xf32> to vector<16xf32>
      %56 = vector.shape_cast %55 : vector<16xf32> to vector<16x1xf32>
      %57 = tpu.reciprocal %56 {approx = true} : vector<16x1xf32> -> vector<16x1xf32>
      %58 = vector.broadcast %57 : vector<16x1xf32> to vector<16x16xf32>
      %59 = arith.mulf %54, %58 : vector<16x16xf32>
      %cst_32 = arith.constant dense<0.000000e+00> : vector<16x32xf32>
      %60 = tpu.matmul %59, %48, %cst_32 {dimension_numbers = #tpu.dot_dimension_numbers<[1], [0], [0], [1], [0, 0, 1, 1], [], []>} : vector<16x16xf32>, vector<16x32xf32>, vector<16x32xf32> -> vector<16x32xf32>
      %61 = vector.extract_strided_slice %22 {offsets = [0, 64], sizes = [16, 32], strides = [1, 1]} : vector<16x128xf32> to vector<16x32xf32>
      %62 = vector.extract_strided_slice %25 {offsets = [0, 64], sizes = [16, 32], strides = [1, 1]} : vector<16x128xf32> to vector<16x32xf32>
      %63 = vector.extract_strided_slice %28 {offsets = [0, 64], sizes = [16, 32], strides = [1, 1]} : vector<16x128xf32> to vector<16x32xf32>
      %cst_33 = arith.constant dense<0.000000e+00> : vector<16x16xf32>
      %64 = tpu.matmul %61, %62, %cst_33 {dimension_numbers = #tpu.dot_dimension_numbers<[1], [1], [0], [0], [0, 0, 1, 0], [], []>} : vector<16x32xf32>, vector<16x32xf32>, vector<16x16xf32> -> vector<16x16xf32>
      %cst_34 = arith.constant dense<0xFF800000> : vector<16xf32>
      %65 = vector.multi_reduction <maximumf>, %64, %cst_34 [1] : vector<16x16xf32> to vector<16xf32>
      %66 = vector.shape_cast %65 : vector<16xf32> to vector<16x1xf32>
      %67 = vector.broadcast %66 : vector<16x1xf32> to vector<16x16xf32>
      %68 = arith.subf %64, %67 : vector<16x16xf32>
      %69 = math.exp %68 : vector<16x16xf32>
      %cst_35 = arith.constant dense<0.000000e+00> : vector<16xf32>
      %70 = vector.multi_reduction <add>, %69, %cst_35 [1] : vector<16x16xf32> to vector<16xf32>
      %71 = vector.shape_cast %70 : vector<16xf32> to vector<16x1xf32>
      %72 = tpu.reciprocal %71 {approx = true} : vector<16x1xf32> -> vector<16x1xf32>
      %73 = vector.broadcast %72 : vector<16x1xf32> to vector<16x16xf32>
      %74 = arith.mulf %69, %73 : vector<16x16xf32>
      %cst_36 = arith.constant dense<0.000000e+00> : vector<16x32xf32>
      %75 = tpu.matmul %74, %63, %cst_36 {dimension_numbers = #tpu.dot_dimension_numbers<[1], [0], [0], [1], [0, 0, 1, 1], [], []>} : vector<16x16xf32>, vector<16x32xf32>, vector<16x32xf32> -> vector<16x32xf32>
      %76 = vector.extract_strided_slice %22 {offsets = [0, 96], sizes = [16, 32], strides = [1, 1]} : vector<16x128xf32> to vector<16x32xf32>
      %77 = vector.extract_strided_slice %25 {offsets = [0, 96], sizes = [16, 32], strides = [1, 1]} : vector<16x128xf32> to vector<16x32xf32>
      %78 = vector.extract_strided_slice %28 {offsets = [0, 96], sizes = [16, 32], strides = [1, 1]} : vector<16x128xf32> to vector<16x32xf32>
      %cst_37 = arith.constant dense<0.000000e+00> : vector<16x16xf32>
      %79 = tpu.matmul %76, %77, %cst_37 {dimension_numbers = #tpu.dot_dimension_numbers<[1], [1], [0], [0], [0, 0, 1, 0], [], []>} : vector<16x32xf32>, vector<16x32xf32>, vector<16x16xf32> -> vector<16x16xf32>
      %cst_38 = arith.constant dense<0xFF800000> : vector<16xf32>
      %80 = vector.multi_reduction <maximumf>, %79, %cst_38 [1] : vector<16x16xf32> to vector<16xf32>
      %81 = vector.shape_cast %80 : vector<16xf32> to vector<16x1xf32>
      %82 = vector.broadcast %81 : vector<16x1xf32> to vector<16x16xf32>
      %83 = arith.subf %79, %82 : vector<16x16xf32>
      %84 = math.exp %83 : vector<16x16xf32>
      %cst_39 = arith.constant dense<0.000000e+00> : vector<16xf32>
      %85 = vector.multi_reduction <add>, %84, %cst_39 [1] : vector<16x16xf32> to vector<16xf32>
      %86 = vector.shape_cast %85 : vector<16xf32> to vector<16x1xf32>
      %87 = tpu.reciprocal %86 {approx = true} : vector<16x1xf32> -> vector<16x1xf32>
      %88 = vector.broadcast %87 : vector<16x1xf32> to vector<16x16xf32>
      %89 = arith.mulf %84, %88 : vector<16x16xf32>
      %cst_40 = arith.constant dense<0.000000e+00> : vector<16x32xf32>
      %90 = tpu.matmul %89, %78, %cst_40 {dimension_numbers = #tpu.dot_dimension_numbers<[1], [0], [0], [1], [0, 0, 1, 1], [], []>} : vector<16x16xf32>, vector<16x32xf32>, vector<16x32xf32> -> vector<16x32xf32>
      %91 = tpu.concatenate %45, %60, %75, %90 in 1 : vector<16x32xf32>, vector<16x32xf32>, vector<16x32xf32>, vector<16x32xf32> -> vector<16x128xf32>
      %cst_41 = arith.constant dense<0.000000e+00> : vector<16x128xf32>
      %92 = tpu.matmul %91, %30, %cst_41 {dimension_numbers = #tpu.dot_dimension_numbers<[1], [0], [0], [1], [0, 0, 1, 1], [], []>} : vector<16x128xf32>, vector<128x128xf32>, vector<16x128xf32> -> vector<16x128xf32>
      %93 = arith.addf %92, %9 : vector<16x128xf32>
      %cst_42 = arith.constant dense<0.000000e+00> : vector<16xf32>
      %94 = vector.multi_reduction <add>, %93, %cst_42 [1] : vector<16x128xf32> to vector<16xf32>
      %95 = vector.shape_cast %94 : vector<16xf32> to vector<16x1xf32>
      %cst_43 = arith.constant 1.280000e+02 : f32
      %96 = vector.broadcast %cst_43 : f32 to vector<16x1xf32>
      %97 = arith.divf %95, %96 : vector<16x1xf32>
      %98 = vector.broadcast %97 : vector<16x1xf32> to vector<16x128xf32>
      %99 = arith.subf %93, %98 : vector<16x128xf32>
      %100 = arith.mulf %99, %99 : vector<16x128xf32>
      %cst_44 = arith.constant dense<0.000000e+00> : vector<16xf32>
      %101 = vector.multi_reduction <add>, %100, %cst_44 [1] : vector<16x128xf32> to vector<16xf32>
      %102 = vector.shape_cast %101 : vector<16xf32> to vector<16x1xf32>
      %cst_45 = arith.constant 1.280000e+02 : f32
      %103 = vector.broadcast %cst_45 : f32 to vector<16x1xf32>
      %104 = arith.divf %102, %103 : vector<16x1xf32>
      %105 = vector.broadcast %97 : vector<16x1xf32> to vector<16x128xf32>
      %106 = arith.subf %93, %105 : vector<16x128xf32>
      %cst_46 = arith.constant 9.99999974E-6 : f32
      %107 = vector.broadcast %cst_46 : f32 to vector<16x1xf32>
      %108 = arith.addf %104, %107 : vector<16x1xf32>
      %109 = math.rsqrt %108 : vector<16x1xf32>
      %110 = vector.broadcast %109 : vector<16x1xf32> to vector<16x128xf32>
      %111 = arith.mulf %106, %110 : vector<16x128xf32>
      %112 = vector.broadcast %12 : vector<1x128xf32> to vector<16x128xf32>
      %113 = arith.mulf %111, %112 : vector<16x128xf32>
      %114 = vector.broadcast %13 : vector<1x128xf32> to vector<16x128xf32>
      %115 = arith.addf %113, %114 : vector<16x128xf32>
      %c0_47 = arith.constant 0 : index
      %c0_48 = arith.constant 0 : index
      %c0_49 = arith.constant 0 : index
      %116 = vector.load %arg7[%c0_47, %c0_48, %c0_49] : memref<1x128x256xf32, #tpu.memory_space<vmem>>, vector<1x128x256xf32>
      %117 = vector.shape_cast %116 : vector<1x128x256xf32> to vector<128x256xf32>
      %cst_50 = arith.constant dense<0.000000e+00> : vector<16x256xf32>
      %118 = tpu.matmul %115, %117, %cst_50 {dimension_numbers = #tpu.dot_dimension_numbers<[1], [0], [0], [1], [0, 0, 1, 1], [], []>} : vector<16x128xf32>, vector<128x256xf32>, vector<16x256xf32> -> vector<16x256xf32>
      %119 = vector.broadcast %19 : vector<1x256xf32> to vector<16x256xf32>
      %120 = arith.addf %118, %119 : vector<16x256xf32>
      %cst_51 = arith.constant 0.000000e+00 : f32
      %121 = vector.broadcast %cst_51 : f32 to vector<16x256xf32>
      %122 = arith.maximumf %120, %121 : vector<16x256xf32>
      %c0_52 = arith.constant 0 : index
      %c0_53 = arith.constant 0 : index
      %c0_54 = arith.constant 0 : index
      %123 = vector.load %arg9[%c0_52, %c0_53, %c0_54] : memref<1x256x128xf32, #tpu.memory_space<vmem>>, vector<1x256x128xf32>
      %124 = vector.shape_cast %123 : vector<1x256x128xf32> to vector<256x128xf32>
      %cst_55 = arith.constant dense<0.000000e+00> : vector<16x128xf32>
      %125 = tpu.matmul %122, %124, %cst_55 {dimension_numbers = #tpu.dot_dimension_numbers<[1], [0], [0], [1], [0, 0, 1, 1], [], []>} : vector<16x256xf32>, vector<256x128xf32>, vector<16x128xf32> -> vector<16x128xf32>
      %126 = vector.broadcast %16 : vector<1x128xf32> to vector<16x128xf32>
      %127 = arith.addf %125, %126 : vector<16x128xf32>
      %128 = arith.addf %127, %115 : vector<16x128xf32>
      %cst_56 = arith.constant dense<0.000000e+00> : vector<16xf32>
      %129 = vector.multi_reduction <add>, %128, %cst_56 [1] : vector<16x128xf32> to vector<16xf32>
      %130 = vector.shape_cast %129 : vector<16xf32> to vector<16x1xf32>
      %cst_57 = arith.constant 1.280000e+02 : f32
      %131 = vector.broadcast %cst_57 : f32 to vector<16x1xf32>
      %132 = arith.divf %130, %131 : vector<16x1xf32>
      %133 = vector.broadcast %132 : vector<16x1xf32> to vector<16x128xf32>
      %134 = arith.subf %128, %133 : vector<16x128xf32>
      %135 = arith.mulf %134, %134 : vector<16x128xf32>
      %cst_58 = arith.constant dense<0.000000e+00> : vector<16xf32>
      %136 = vector.multi_reduction <add>, %135, %cst_58 [1] : vector<16x128xf32> to vector<16xf32>
      %137 = vector.shape_cast %136 : vector<16xf32> to vector<16x1xf32>
      %cst_59 = arith.constant 1.280000e+02 : f32
      %138 = vector.broadcast %cst_59 : f32 to vector<16x1xf32>
      %139 = arith.divf %137, %138 : vector<16x1xf32>
      %140 = vector.broadcast %132 : vector<16x1xf32> to vector<16x128xf32>
      %141 = arith.subf %128, %140 : vector<16x128xf32>
      %cst_60 = arith.constant 9.99999974E-6 : f32
      %142 = vector.broadcast %cst_60 : f32 to vector<16x1xf32>
      %143 = arith.addf %139, %142 : vector<16x1xf32>
      %144 = math.rsqrt %143 : vector<16x1xf32>
      %145 = vector.broadcast %144 : vector<16x1xf32> to vector<16x128xf32>
      %146 = arith.mulf %141, %145 : vector<16x128xf32>
      %147 = vector.broadcast %14 : vector<1x128xf32> to vector<16x128xf32>
      %148 = arith.mulf %146, %147 : vector<16x128xf32>
      %149 = vector.broadcast %15 : vector<1x128xf32> to vector<16x128xf32>
      %150 = arith.addf %148, %149 : vector<16x128xf32>
      %c0_61 = arith.constant 0 : index
      %c0_62 = arith.constant 0 : index
      %151 = vector.load %arg24[%c0_61, %c0_62] : memref<16x128xf32, #tpu.memory_space<vmem>>, vector<16x128xf32>
      tpu.vector_store %arg24[%c0_61, %c0_62], %150 {strides = array<i32>} : memref<16x128xf32, #tpu.memory_space<vmem>>, vector<16x128xf32>,
    } else {
    }
    %c2_i32_0 = arith.constant 2 : i32
    %3 = arith.cmpi sge, %arg0, %c2_i32_0 : i32
    %4 = arith.extui %3 : i1 to i32
    %c0_i32_1 = arith.constant 0 : i32
    %5 = arith.cmpi ne, %4, %c0_i32_1 : i32
    scf.if %5 {
      %c2_i32_2 = arith.constant 2 : i32
      %6 = arith.cmpi eq, %arg0, %c2_i32_2 : i32
      %7 = arith.extui %6 : i1 to i32
      %c0_i32_3 = arith.constant 0 : i32
      %8 = arith.cmpi ne, %7, %c0_i32_3 : i32
      scf.if %8 {
        %c0_106 = arith.constant 0 : index
        %c0_107 = arith.constant 0 : index
        %262 = vector.load %arg2[%c0_106, %c0_107] : memref<16x128xf32, #tpu.memory_space<vmem>>, vector<16x128xf32>
        %c0_108 = arith.constant 0 : index
        %c0_109 = arith.constant 0 : index
        %263 = vector.load %arg23[%c0_108, %c0_109] : memref<16x128xf32, #tpu.memory_space<vmem>>, vector<16x128xf32>
        tpu.vector_store %arg23[%c0_108, %c0_109], %262 {strides = array<i32>} : memref<16x128xf32, #tpu.memory_space<vmem>>, vector<16x128xf32>,
      } else {
      }
      %c0 = arith.constant 0 : index
      %c0_4 = arith.constant 0 : index
      %9 = vector.load %arg23[%c0, %c0_4] : memref<16x128xf32, #tpu.memory_space<vmem>>, vector<16x128xf32>
      %c0_5 = arith.constant 0 : index
      %c0_6 = arith.constant 0 : index
      %10 = vector.load %arg24[%c0_5, %c0_6] : memref<16x128xf32, #tpu.memory_space<vmem>>, vector<16x128xf32>
      %c0_7 = arith.constant 0 : index
      %c0_8 = arith.constant 0 : index
      %c0_9 = arith.constant 0 : index
      %11 = vector.load %arg22[%c0_7, %c0_8, %c0_9] : memref<1x8x128xf32, #tpu.memory_space<vmem>>, vector<1x8x128xf32>
      %12 = vector.shape_cast %11 : vector<1x8x128xf32> to vector<8x128xf32>
      %13 = vector.extract_strided_slice %12 {offsets = [0, 0], sizes = [1, 128], strides = [1, 1]} : vector<8x128xf32> to vector<1x128xf32>
      %14 = vector.extract_strided_slice %12 {offsets = [1, 0], sizes = [1, 128], strides = [1, 1]} : vector<8x128xf32> to vector<1x128xf32>
      %15 = vector.extract_strided_slice %12 {offsets = [2, 0], sizes = [1, 128], strides = [1, 1]} : vector<8x128xf32> to vector<1x128xf32>
      %16 = vector.extract_strided_slice %12 {offsets = [3, 0], sizes = [1, 128], strides = [1, 1]} : vector<8x128xf32> to vector<1x128xf32>
      %17 = vector.extract_strided_slice %12 {offsets = [4, 0], sizes = [1, 128], strides = [1, 1]} : vector<8x128xf32> to vector<1x128xf32>
      %18 = vector.extract_strided_slice %12 {offsets = [5, 0], sizes = [1, 128], strides = [1, 1]} : vector<8x128xf32> to vector<1x128xf32>
      %19 = vector.extract_strided_slice %12 {offsets = [6, 0], sizes = [1, 128], strides = [1, 1]} : vector<8x128xf32> to vector<1x128xf32>
      %c0_10 = arith.constant 0 : index
      %c0_11 = arith.constant 0 : index
      %c0_12 = arith.constant 0 : index
      %20 = vector.load %arg20[%c0_10, %c0_11, %c0_12] : memref<1x8x256xf32, #tpu.memory_space<vmem>>, vector<1x8x256xf32>
      %21 = vector.shape_cast %20 : vector<1x8x256xf32> to vector<8x256xf32>
      %22 = vector.extract_strided_slice %21 {offsets = [0, 0], sizes = [1, 256], strides = [1, 1]} : vector<8x256xf32> to vector<1x256xf32>
      %c0_13 = arith.constant 0 : index
      %c0_14 = arith.constant 0 : index
      %c0_15 = arith.constant 0 : index
      %23 = vector.load %arg11[%c0_13, %c0_14, %c0_15] : memref<1x128x128xf32, #tpu.memory_space<vmem>>, vector<1x128x128xf32>
      %24 = vector.shape_cast %23 : vector<1x128x128xf32> to vector<128x128xf32>
      %cst = arith.constant dense<0.000000e+00> : vector<16x128xf32>
      %25 = tpu.matmul %9, %24, %cst {dimension_numbers = #tpu.dot_dimension_numbers<[1], [0], [0], [1], [0, 0, 1, 1], [], []>} : vector<16x128xf32>, vector<128x128xf32>, vector<16x128xf32> -> vector<16x128xf32>
      %c0_16 = arith.constant 0 : index
      %c0_17 = arith.constant 0 : index
      %c0_18 = arith.constant 0 : index
      %26 = vector.load %arg12[%c0_16, %c0_17, %c0_18] : memref<1x128x128xf32, #tpu.memory_space<vmem>>, vector<1x128x128xf32>
      %27 = vector.shape_cast %26 : vector<1x128x128xf32> to vector<128x128xf32>
      %cst_19 = arith.constant dense<0.000000e+00> : vector<16x128xf32>
      %28 = tpu.matmul %9, %27, %cst_19 {dimension_numbers = #tpu.dot_dimension_numbers<[1], [0], [0], [1], [0, 0, 1, 1], [], []>} : vector<16x128xf32>, vector<128x128xf32>, vector<16x128xf32> -> vector<16x128xf32>
      %c0_20 = arith.constant 0 : index
      %c0_21 = arith.constant 0 : index
      %c0_22 = arith.constant 0 : index
      %29 = vector.load %arg13[%c0_20, %c0_21, %c0_22] : memref<1x128x128xf32, #tpu.memory_space<vmem>>, vector<1x128x128xf32>
      %30 = vector.shape_cast %29 : vector<1x128x128xf32> to vector<128x128xf32>
      %cst_23 = arith.constant dense<0.000000e+00> : vector<16x128xf32>
      %31 = tpu.matmul %9, %30, %cst_23 {dimension_numbers = #tpu.dot_dimension_numbers<[1], [0], [0], [1], [0, 0, 1, 1], [], []>} : vector<16x128xf32>, vector<128x128xf32>, vector<16x128xf32> -> vector<16x128xf32>
      %c0_24 = arith.constant 0 : index
      %c0_25 = arith.constant 0 : index
      %c0_26 = arith.constant 0 : index
      %32 = vector.load %arg14[%c0_24, %c0_25, %c0_26] : memref<1x128x128xf32, #tpu.memory_space<vmem>>, vector<1x128x128xf32>
      %33 = vector.shape_cast %32 : vector<1x128x128xf32> to vector<128x128xf32>
      %34 = tpu.iota {dimensions = array<i32: 0>} : vector<16x16xi32>
      %35 = tpu.iota {dimensions = array<i32: 1>} : vector<16x16xi32>
      %36 = arith.cmpi sgt, %35, %34 : vector<16x16xi32>
      %37 = vector.extract_strided_slice %25 {offsets = [0, 0], sizes = [16, 32], strides = [1, 1]} : vector<16x128xf32> to vector<16x32xf32>
      %38 = vector.extract_strided_slice %28 {offsets = [0, 0], sizes = [16, 32], strides = [1, 1]} : vector<16x128xf32> to vector<16x32xf32>
      %39 = vector.extract_strided_slice %31 {offsets = [0, 0], sizes = [16, 32], strides = [1, 1]} : vector<16x128xf32> to vector<16x32xf32>
      %cst_27 = arith.constant dense<0.000000e+00> : vector<16x16xf32>
      %40 = tpu.matmul %37, %38, %cst_27 {dimension_numbers = #tpu.dot_dimension_numbers<[1], [1], [0], [0], [0, 0, 1, 0], [], []>} : vector<16x32xf32>, vector<16x32xf32>, vector<16x16xf32> -> vector<16x16xf32>
      %cst_28 = arith.constant -1.000000e+30 : f32
      %41 = vector.broadcast %cst_28 : f32 to vector<16x16xf32>
      %42 = arith.select %36, %41, %40 : vector<16x16xi1>, vector<16x16xf32>
      %cst_29 = arith.constant dense<0xFF800000> : vector<16xf32>
      %43 = vector.multi_reduction <maximumf>, %42, %cst_29 [1] : vector<16x16xf32> to vector<16xf32>
      %44 = vector.shape_cast %43 : vector<16xf32> to vector<16x1xf32>
      %45 = vector.broadcast %44 : vector<16x1xf32> to vector<16x16xf32>
      %46 = arith.subf %42, %45 : vector<16x16xf32>
      %47 = math.exp %46 : vector<16x16xf32>
      %cst_30 = arith.constant dense<0.000000e+00> : vector<16xf32>
      %48 = vector.multi_reduction <add>, %47, %cst_30 [1] : vector<16x16xf32> to vector<16xf32>
      %49 = vector.shape_cast %48 : vector<16xf32> to vector<16x1xf32>
      %50 = tpu.reciprocal %49 {approx = true} : vector<16x1xf32> -> vector<16x1xf32>
      %51 = vector.broadcast %50 : vector<16x1xf32> to vector<16x16xf32>
      %52 = arith.mulf %47, %51 : vector<16x16xf32>
      %cst_31 = arith.constant dense<0.000000e+00> : vector<16x32xf32>
      %53 = tpu.matmul %52, %39, %cst_31 {dimension_numbers = #tpu.dot_dimension_numbers<[1], [0], [0], [1], [0, 0, 1, 1], [], []>} : vector<16x16xf32>, vector<16x32xf32>, vector<16x32xf32> -> vector<16x32xf32>
      %54 = vector.extract_strided_slice %25 {offsets = [0, 32], sizes = [16, 32], strides = [1, 1]} : vector<16x128xf32> to vector<16x32xf32>
      %55 = vector.extract_strided_slice %28 {offsets = [0, 32], sizes = [16, 32], strides = [1, 1]} : vector<16x128xf32> to vector<16x32xf32>
      %56 = vector.extract_strided_slice %31 {offsets = [0, 32], sizes = [16, 32], strides = [1, 1]} : vector<16x128xf32> to vector<16x32xf32>
      %cst_32 = arith.constant dense<0.000000e+00> : vector<16x16xf32>
      %57 = tpu.matmul %54, %55, %cst_32 {dimension_numbers = #tpu.dot_dimension_numbers<[1], [1], [0], [0], [0, 0, 1, 0], [], []>} : vector<16x32xf32>, vector<16x32xf32>, vector<16x16xf32> -> vector<16x16xf32>
      %cst_33 = arith.constant -1.000000e+30 : f32
      %58 = vector.broadcast %cst_33 : f32 to vector<16x16xf32>
      %59 = arith.select %36, %58, %57 : vector<16x16xi1>, vector<16x16xf32>
      %cst_34 = arith.constant dense<0xFF800000> : vector<16xf32>
      %60 = vector.multi_reduction <maximumf>, %59, %cst_34 [1] : vector<16x16xf32> to vector<16xf32>
      %61 = vector.shape_cast %60 : vector<16xf32> to vector<16x1xf32>
      %62 = vector.broadcast %61 : vector<16x1xf32> to vector<16x16xf32>
      %63 = arith.subf %59, %62 : vector<16x16xf32>
      %64 = math.exp %63 : vector<16x16xf32>
      %cst_35 = arith.constant dense<0.000000e+00> : vector<16xf32>
      %65 = vector.multi_reduction <add>, %64, %cst_35 [1] : vector<16x16xf32> to vector<16xf32>
      %66 = vector.shape_cast %65 : vector<16xf32> to vector<16x1xf32>
      %67 = tpu.reciprocal %66 {approx = true} : vector<16x1xf32> -> vector<16x1xf32>
      %68 = vector.broadcast %67 : vector<16x1xf32> to vector<16x16xf32>
      %69 = arith.mulf %64, %68 : vector<16x16xf32>
      %cst_36 = arith.constant dense<0.000000e+00> : vector<16x32xf32>
      %70 = tpu.matmul %69, %56, %cst_36 {dimension_numbers = #tpu.dot_dimension_numbers<[1], [0], [0], [1], [0, 0, 1, 1], [], []>} : vector<16x16xf32>, vector<16x32xf32>, vector<16x32xf32> -> vector<16x32xf32>
      %71 = vector.extract_strided_slice %25 {offsets = [0, 64], sizes = [16, 32], strides = [1, 1]} : vector<16x128xf32> to vector<16x32xf32>
      %72 = vector.extract_strided_slice %28 {offsets = [0, 64], sizes = [16, 32], strides = [1, 1]} : vector<16x128xf32> to vector<16x32xf32>
      %73 = vector.extract_strided_slice %31 {offsets = [0, 64], sizes = [16, 32], strides = [1, 1]} : vector<16x128xf32> to vector<16x32xf32>
      %cst_37 = arith.constant dense<0.000000e+00> : vector<16x16xf32>
      %74 = tpu.matmul %71, %72, %cst_37 {dimension_numbers = #tpu.dot_dimension_numbers<[1], [1], [0], [0], [0, 0, 1, 0], [], []>} : vector<16x32xf32>, vector<16x32xf32>, vector<16x16xf32> -> vector<16x16xf32>
      %cst_38 = arith.constant -1.000000e+30 : f32
      %75 = vector.broadcast %cst_38 : f32 to vector<16x16xf32>
      %76 = arith.select %36, %75, %74 : vector<16x16xi1>, vector<16x16xf32>
      %cst_39 = arith.constant dense<0xFF800000> : vector<16xf32>
      %77 = vector.multi_reduction <maximumf>, %76, %cst_39 [1] : vector<16x16xf32> to vector<16xf32>
      %78 = vector.shape_cast %77 : vector<16xf32> to vector<16x1xf32>
      %79 = vector.broadcast %78 : vector<16x1xf32> to vector<16x16xf32>
      %80 = arith.subf %76, %79 : vector<16x16xf32>
      %81 = math.exp %80 : vector<16x16xf32>
      %cst_40 = arith.constant dense<0.000000e+00> : vector<16xf32>
      %82 = vector.multi_reduction <add>, %81, %cst_40 [1] : vector<16x16xf32> to vector<16xf32>
      %83 = vector.shape_cast %82 : vector<16xf32> to vector<16x1xf32>
      %84 = tpu.reciprocal %83 {approx = true} : vector<16x1xf32> -> vector<16x1xf32>
      %85 = vector.broadcast %84 : vector<16x1xf32> to vector<16x16xf32>
      %86 = arith.mulf %81, %85 : vector<16x16xf32>
      %cst_41 = arith.constant dense<0.000000e+00> : vector<16x32xf32>
      %87 = tpu.matmul %86, %73, %cst_41 {dimension_numbers = #tpu.dot_dimension_numbers<[1], [0], [0], [1], [0, 0, 1, 1], [], []>} : vector<16x16xf32>, vector<16x32xf32>, vector<16x32xf32> -> vector<16x32xf32>
      %88 = vector.extract_strided_slice %25 {offsets = [0, 96], sizes = [16, 32], strides = [1, 1]} : vector<16x128xf32> to vector<16x32xf32>
      %89 = vector.extract_strided_slice %28 {offsets = [0, 96], sizes = [16, 32], strides = [1, 1]} : vector<16x128xf32> to vector<16x32xf32>
      %90 = vector.extract_strided_slice %31 {offsets = [0, 96], sizes = [16, 32], strides = [1, 1]} : vector<16x128xf32> to vector<16x32xf32>
      %cst_42 = arith.constant dense<0.000000e+00> : vector<16x16xf32>
      %91 = tpu.matmul %88, %89, %cst_42 {dimension_numbers = #tpu.dot_dimension_numbers<[1], [1], [0], [0], [0, 0, 1, 0], [], []>} : vector<16x32xf32>, vector<16x32xf32>, vector<16x16xf32> -> vector<16x16xf32>
      %cst_43 = arith.constant -1.000000e+30 : f32
      %92 = vector.broadcast %cst_43 : f32 to vector<16x16xf32>
      %93 = arith.select %36, %92, %91 : vector<16x16xi1>, vector<16x16xf32>
      %cst_44 = arith.constant dense<0xFF800000> : vector<16xf32>
      %94 = vector.multi_reduction <maximumf>, %93, %cst_44 [1] : vector<16x16xf32> to vector<16xf32>
      %95 = vector.shape_cast %94 : vector<16xf32> to vector<16x1xf32>
      %96 = vector.broadcast %95 : vector<16x1xf32> to vector<16x16xf32>
      %97 = arith.subf %93, %96 : vector<16x16xf32>
      %98 = math.exp %97 : vector<16x16xf32>
      %cst_45 = arith.constant dense<0.000000e+00> : vector<16xf32>
      %99 = vector.multi_reduction <add>, %98, %cst_45 [1] : vector<16x16xf32> to vector<16xf32>
      %100 = vector.shape_cast %99 : vector<16xf32> to vector<16x1xf32>
      %101 = tpu.reciprocal %100 {approx = true} : vector<16x1xf32> -> vector<16x1xf32>
      %102 = vector.broadcast %101 : vector<16x1xf32> to vector<16x16xf32>
      %103 = arith.mulf %98, %102 : vector<16x16xf32>
      %cst_46 = arith.constant dense<0.000000e+00> : vector<16x32xf32>
      %104 = tpu.matmul %103, %90, %cst_46 {dimension_numbers = #tpu.dot_dimension_numbers<[1], [0], [0], [1], [0, 0, 1, 1], [], []>} : vector<16x16xf32>, vector<16x32xf32>, vector<16x32xf32> -> vector<16x32xf32>
      %105 = tpu.concatenate %53, %70, %87, %104 in 1 : vector<16x32xf32>, vector<16x32xf32>, vector<16x32xf32>, vector<16x32xf32> -> vector<16x128xf32>
      %cst_47 = arith.constant dense<0.000000e+00> : vector<16x128xf32>
      %106 = tpu.matmul %105, %33, %cst_47 {dimension_numbers = #tpu.dot_dimension_numbers<[1], [0], [0], [1], [0, 0, 1, 1], [], []>} : vector<16x128xf32>, vector<128x128xf32>, vector<16x128xf32> -> vector<16x128xf32>
      %107 = arith.addf %106, %9 : vector<16x128xf32>
      %cst_48 = arith.constant dense<0.000000e+00> : vector<16xf32>
      %108 = vector.multi_reduction <add>, %107, %cst_48 [1] : vector<16x128xf32> to vector<16xf32>
      %109 = vector.shape_cast %108 : vector<16xf32> to vector<16x1xf32>
      %cst_49 = arith.constant 1.280000e+02 : f32
      %110 = vector.broadcast %cst_49 : f32 to vector<16x1xf32>
      %111 = arith.divf %109, %110 : vector<16x1xf32>
      %112 = vector.broadcast %111 : vector<16x1xf32> to vector<16x128xf32>
      %113 = arith.subf %107, %112 : vector<16x128xf32>
      %114 = arith.mulf %113, %113 : vector<16x128xf32>
      %cst_50 = arith.constant dense<0.000000e+00> : vector<16xf32>
      %115 = vector.multi_reduction <add>, %114, %cst_50 [1] : vector<16x128xf32> to vector<16xf32>
      %116 = vector.shape_cast %115 : vector<16xf32> to vector<16x1xf32>
      %cst_51 = arith.constant 1.280000e+02 : f32
      %117 = vector.broadcast %cst_51 : f32 to vector<16x1xf32>
      %118 = arith.divf %116, %117 : vector<16x1xf32>
      %119 = vector.broadcast %111 : vector<16x1xf32> to vector<16x128xf32>
      %120 = arith.subf %107, %119 : vector<16x128xf32>
      %cst_52 = arith.constant 9.99999974E-6 : f32
      %121 = vector.broadcast %cst_52 : f32 to vector<16x1xf32>
      %122 = arith.addf %118, %121 : vector<16x1xf32>
      %123 = math.rsqrt %122 : vector<16x1xf32>
      %124 = vector.broadcast %123 : vector<16x1xf32> to vector<16x128xf32>
      %125 = arith.mulf %120, %124 : vector<16x128xf32>
      %126 = vector.broadcast %13 : vector<1x128xf32> to vector<16x128xf32>
      %127 = arith.mulf %125, %126 : vector<16x128xf32>
      %128 = vector.broadcast %14 : vector<1x128xf32> to vector<16x128xf32>
      %129 = arith.addf %127, %128 : vector<16x128xf32>
      %c0_53 = arith.constant 0 : index
      %c0_54 = arith.constant 0 : index
      %c0_55 = arith.constant 0 : index
      %130 = vector.load %arg15[%c0_53, %c0_54, %c0_55] : memref<1x128x128xf32, #tpu.memory_space<vmem>>, vector<1x128x128xf32>
      %131 = vector.shape_cast %130 : vector<1x128x128xf32> to vector<128x128xf32>
      %cst_56 = arith.constant dense<0.000000e+00> : vector<16x128xf32>
      %132 = tpu.matmul %129, %131, %cst_56 {dimension_numbers = #tpu.dot_dimension_numbers<[1], [0], [0], [1], [0, 0, 1, 1], [], []>} : vector<16x128xf32>, vector<128x128xf32>, vector<16x128xf32> -> vector<16x128xf32>
      %c0_57 = arith.constant 0 : index
      %c0_58 = arith.constant 0 : index
      %c0_59 = arith.constant 0 : index
      %133 = vector.load %arg16[%c0_57, %c0_58, %c0_59] : memref<1x128x128xf32, #tpu.memory_space<vmem>>, vector<1x128x128xf32>
      %134 = vector.shape_cast %133 : vector<1x128x128xf32> to vector<128x128xf32>
      %cst_60 = arith.constant dense<0.000000e+00> : vector<16x128xf32>
      %135 = tpu.matmul %10, %134, %cst_60 {dimension_numbers = #tpu.dot_dimension_numbers<[1], [0], [0], [1], [0, 0, 1, 1], [], []>} : vector<16x128xf32>, vector<128x128xf32>, vector<16x128xf32> -> vector<16x128xf32>
      %c0_61 = arith.constant 0 : index
      %c0_62 = arith.constant 0 : index
      %c0_63 = arith.constant 0 : index
      %136 = vector.load %arg17[%c0_61, %c0_62, %c0_63] : memref<1x128x128xf32, #tpu.memory_space<vmem>>, vector<1x128x128xf32>
      %137 = vector.shape_cast %136 : vector<1x128x128xf32> to vector<128x128xf32>
      %cst_64 = arith.constant dense<0.000000e+00> : vector<16x128xf32>
      %138 = tpu.matmul %10, %137, %cst_64 {dimension_numbers = #tpu.dot_dimension_numbers<[1], [0], [0], [1], [0, 0, 1, 1], [], []>} : vector<16x128xf32>, vector<128x128xf32>, vector<16x128xf32> -> vector<16x128xf32>
      %c0_65 = arith.constant 0 : index
      %c0_66 = arith.constant 0 : index
      %c0_67 = arith.constant 0 : index
      %139 = vector.load %arg18[%c0_65, %c0_66, %c0_67] : memref<1x128x128xf32, #tpu.memory_space<vmem>>, vector<1x128x128xf32>
      %140 = vector.shape_cast %139 : vector<1x128x128xf32> to vector<128x128xf32>
      %141 = vector.extract_strided_slice %132 {offsets = [0, 0], sizes = [16, 32], strides = [1, 1]} : vector<16x128xf32> to vector<16x32xf32>
      %142 = vector.extract_strided_slice %135 {offsets = [0, 0], sizes = [16, 32], strides = [1, 1]} : vector<16x128xf32> to vector<16x32xf32>
      %143 = vector.extract_strided_slice %138 {offsets = [0, 0], sizes = [16, 32], strides = [1, 1]} : vector<16x128xf32> to vector<16x32xf32>
      %cst_68 = arith.constant dense<0.000000e+00> : vector<16x16xf32>
      %144 = tpu.matmul %141, %142, %cst_68 {dimension_numbers = #tpu.dot_dimension_numbers<[1], [1], [0], [0], [0, 0, 1, 0], [], []>} : vector<16x32xf32>, vector<16x32xf32>, vector<16x16xf32> -> vector<16x16xf32>
      %cst_69 = arith.constant dense<0xFF800000> : vector<16xf32>
      %145 = vector.multi_reduction <maximumf>, %144, %cst_69 [1] : vector<16x16xf32> to vector<16xf32>
      %146 = vector.shape_cast %145 : vector<16xf32> to vector<16x1xf32>
      %147 = vector.broadcast %146 : vector<16x1xf32> to vector<16x16xf32>
      %148 = arith.subf %144, %147 : vector<16x16xf32>
      %149 = math.exp %148 : vector<16x16xf32>
      %cst_70 = arith.constant dense<0.000000e+00> : vector<16xf32>
      %150 = vector.multi_reduction <add>, %149, %cst_70 [1] : vector<16x16xf32> to vector<16xf32>
      %151 = vector.shape_cast %150 : vector<16xf32> to vector<16x1xf32>
      %152 = tpu.reciprocal %151 {approx = true} : vector<16x1xf32> -> vector<16x1xf32>
      %153 = vector.broadcast %152 : vector<16x1xf32> to vector<16x16xf32>
      %154 = arith.mulf %149, %153 : vector<16x16xf32>
      %cst_71 = arith.constant dense<0.000000e+00> : vector<16x32xf32>
      %155 = tpu.matmul %154, %143, %cst_71 {dimension_numbers = #tpu.dot_dimension_numbers<[1], [0], [0], [1], [0, 0, 1, 1], [], []>} : vector<16x16xf32>, vector<16x32xf32>, vector<16x32xf32> -> vector<16x32xf32>
      %156 = vector.extract_strided_slice %132 {offsets = [0, 32], sizes = [16, 32], strides = [1, 1]} : vector<16x128xf32> to vector<16x32xf32>
      %157 = vector.extract_strided_slice %135 {offsets = [0, 32], sizes = [16, 32], strides = [1, 1]} : vector<16x128xf32> to vector<16x32xf32>
      %158 = vector.extract_strided_slice %138 {offsets = [0, 32], sizes = [16, 32], strides = [1, 1]} : vector<16x128xf32> to vector<16x32xf32>
      %cst_72 = arith.constant dense<0.000000e+00> : vector<16x16xf32>
      %159 = tpu.matmul %156, %157, %cst_72 {dimension_numbers = #tpu.dot_dimension_numbers<[1], [1], [0], [0], [0, 0, 1, 0], [], []>} : vector<16x32xf32>, vector<16x32xf32>, vector<16x16xf32> -> vector<16x16xf32>
      %cst_73 = arith.constant dense<0xFF800000> : vector<16xf32>
      %160 = vector.multi_reduction <maximumf>, %159, %cst_73 [1] : vector<16x16xf32> to vector<16xf32>
      %161 = vector.shape_cast %160 : vector<16xf32> to vector<16x1xf32>
      %162 = vector.broadcast %161 : vector<16x1xf32> to vector<16x16xf32>
      %163 = arith.subf %159, %162 : vector<16x16xf32>
      %164 = math.exp %163 : vector<16x16xf32>
      %cst_74 = arith.constant dense<0.000000e+00> : vector<16xf32>
      %165 = vector.multi_reduction <add>, %164, %cst_74 [1] : vector<16x16xf32> to vector<16xf32>
      %166 = vector.shape_cast %165 : vector<16xf32> to vector<16x1xf32>
      %167 = tpu.reciprocal %166 {approx = true} : vector<16x1xf32> -> vector<16x1xf32>
      %168 = vector.broadcast %167 : vector<16x1xf32> to vector<16x16xf32>
      %169 = arith.mulf %164, %168 : vector<16x16xf32>
      %cst_75 = arith.constant dense<0.000000e+00> : vector<16x32xf32>
      %170 = tpu.matmul %169, %158, %cst_75 {dimension_numbers = #tpu.dot_dimension_numbers<[1], [0], [0], [1], [0, 0, 1, 1], [], []>} : vector<16x16xf32>, vector<16x32xf32>, vector<16x32xf32> -> vector<16x32xf32>
      %171 = vector.extract_strided_slice %132 {offsets = [0, 64], sizes = [16, 32], strides = [1, 1]} : vector<16x128xf32> to vector<16x32xf32>
      %172 = vector.extract_strided_slice %135 {offsets = [0, 64], sizes = [16, 32], strides = [1, 1]} : vector<16x128xf32> to vector<16x32xf32>
      %173 = vector.extract_strided_slice %138 {offsets = [0, 64], sizes = [16, 32], strides = [1, 1]} : vector<16x128xf32> to vector<16x32xf32>
      %cst_76 = arith.constant dense<0.000000e+00> : vector<16x16xf32>
      %174 = tpu.matmul %171, %172, %cst_76 {dimension_numbers = #tpu.dot_dimension_numbers<[1], [1], [0], [0], [0, 0, 1, 0], [], []>} : vector<16x32xf32>, vector<16x32xf32>, vector<16x16xf32> -> vector<16x16xf32>
      %cst_77 = arith.constant dense<0xFF800000> : vector<16xf32>
      %175 = vector.multi_reduction <maximumf>, %174, %cst_77 [1] : vector<16x16xf32> to vector<16xf32>
      %176 = vector.shape_cast %175 : vector<16xf32> to vector<16x1xf32>
      %177 = vector.broadcast %176 : vector<16x1xf32> to vector<16x16xf32>
      %178 = arith.subf %174, %177 : vector<16x16xf32>
      %179 = math.exp %178 : vector<16x16xf32>
      %cst_78 = arith.constant dense<0.000000e+00> : vector<16xf32>
      %180 = vector.multi_reduction <add>, %179, %cst_78 [1] : vector<16x16xf32> to vector<16xf32>
      %181 = vector.shape_cast %180 : vector<16xf32> to vector<16x1xf32>
      %182 = tpu.reciprocal %181 {approx = true} : vector<16x1xf32> -> vector<16x1xf32>
      %183 = vector.broadcast %182 : vector<16x1xf32> to vector<16x16xf32>
      %184 = arith.mulf %179, %183 : vector<16x16xf32>
      %cst_79 = arith.constant dense<0.000000e+00> : vector<16x32xf32>
      %185 = tpu.matmul %184, %173, %cst_79 {dimension_numbers = #tpu.dot_dimension_numbers<[1], [0], [0], [1], [0, 0, 1, 1], [], []>} : vector<16x16xf32>, vector<16x32xf32>, vector<16x32xf32> -> vector<16x32xf32>
      %186 = vector.extract_strided_slice %132 {offsets = [0, 96], sizes = [16, 32], strides = [1, 1]} : vector<16x128xf32> to vector<16x32xf32>
      %187 = vector.extract_strided_slice %135 {offsets = [0, 96], sizes = [16, 32], strides = [1, 1]} : vector<16x128xf32> to vector<16x32xf32>
      %188 = vector.extract_strided_slice %138 {offsets = [0, 96], sizes = [16, 32], strides = [1, 1]} : vector<16x128xf32> to vector<16x32xf32>
      %cst_80 = arith.constant dense<0.000000e+00> : vector<16x16xf32>
      %189 = tpu.matmul %186, %187, %cst_80 {dimension_numbers = #tpu.dot_dimension_numbers<[1], [1], [0], [0], [0, 0, 1, 0], [], []>} : vector<16x32xf32>, vector<16x32xf32>, vector<16x16xf32> -> vector<16x16xf32>
      %cst_81 = arith.constant dense<0xFF800000> : vector<16xf32>
      %190 = vector.multi_reduction <maximumf>, %189, %cst_81 [1] : vector<16x16xf32> to vector<16xf32>
      %191 = vector.shape_cast %190 : vector<16xf32> to vector<16x1xf32>
      %192 = vector.broadcast %191 : vector<16x1xf32> to vector<16x16xf32>
      %193 = arith.subf %189, %192 : vector<16x16xf32>
      %194 = math.exp %193 : vector<16x16xf32>
      %cst_82 = arith.constant dense<0.000000e+00> : vector<16xf32>
      %195 = vector.multi_reduction <add>, %194, %cst_82 [1] : vector<16x16xf32> to vector<16xf32>
      %196 = vector.shape_cast %195 : vector<16xf32> to vector<16x1xf32>
      %197 = tpu.reciprocal %196 {approx = true} : vector<16x1xf32> -> vector<16x1xf32>
      %198 = vector.broadcast %197 : vector<16x1xf32> to vector<16x16xf32>
      %199 = arith.mulf %194, %198 : vector<16x16xf32>
      %cst_83 = arith.constant dense<0.000000e+00> : vector<16x32xf32>
      %200 = tpu.matmul %199, %188, %cst_83 {dimension_numbers = #tpu.dot_dimension_numbers<[1], [0], [0], [1], [0, 0, 1, 1], [], []>} : vector<16x16xf32>, vector<16x32xf32>, vector<16x32xf32> -> vector<16x32xf32>
      %201 = tpu.concatenate %155, %170, %185, %200 in 1 : vector<16x32xf32>, vector<16x32xf32>, vector<16x32xf32>, vector<16x32xf32> -> vector<16x128xf32>
      %cst_84 = arith.constant dense<0.000000e+00> : vector<16x128xf32>
      %202 = tpu.matmul %201, %140, %cst_84 {dimension_numbers = #tpu.dot_dimension_numbers<[1], [0], [0], [1], [0, 0, 1, 1], [], []>} : vector<16x128xf32>, vector<128x128xf32>, vector<16x128xf32> -> vector<16x128xf32>
      %203 = arith.addf %202, %129 : vector<16x128xf32>
      %cst_85 = arith.constant dense<0.000000e+00> : vector<16xf32>
      %204 = vector.multi_reduction <add>, %203, %cst_85 [1] : vector<16x128xf32> to vector<16xf32>
      %205 = vector.shape_cast %204 : vector<16xf32> to vector<16x1xf32>
      %cst_86 = arith.constant 1.280000e+02 : f32
      %206 = vector.broadcast %cst_86 : f32 to vector<16x1xf32>
      %207 = arith.divf %205, %206 : vector<16x1xf32>
      %208 = vector.broadcast %207 : vector<16x1xf32> to vector<16x128xf32>
      %209 = arith.subf %203, %208 : vector<16x128xf32>
      %210 = arith.mulf %209, %209 : vector<16x128xf32>
      %cst_87 = arith.constant dense<0.000000e+00> : vector<16xf32>
      %211 = vector.multi_reduction <add>, %210, %cst_87 [1] : vector<16x128xf32> to vector<16xf32>
      %212 = vector.shape_cast %211 : vector<16xf32> to vector<16x1xf32>
      %cst_88 = arith.constant 1.280000e+02 : f32
      %213 = vector.broadcast %cst_88 : f32 to vector<16x1xf32>
      %214 = arith.divf %212, %213 : vector<16x1xf32>
      %215 = vector.broadcast %207 : vector<16x1xf32> to vector<16x128xf32>
      %216 = arith.subf %203, %215 : vector<16x128xf32>
      %cst_89 = arith.constant 9.99999974E-6 : f32
      %217 = vector.broadcast %cst_89 : f32 to vector<16x1xf32>
      %218 = arith.addf %214, %217 : vector<16x1xf32>
      %219 = math.rsqrt %218 : vector<16x1xf32>
      %220 = vector.broadcast %219 : vector<16x1xf32> to vector<16x128xf32>
      %221 = arith.mulf %216, %220 : vector<16x128xf32>
      %222 = vector.broadcast %15 : vector<1x128xf32> to vector<16x128xf32>
      %223 = arith.mulf %221, %222 : vector<16x128xf32>
      %224 = vector.broadcast %16 : vector<1x128xf32> to vector<16x128xf32>
      %225 = arith.addf %223, %224 : vector<16x128xf32>
      %c0_90 = arith.constant 0 : index
      %c0_91 = arith.constant 0 : index
      %c0_92 = arith.constant 0 : index
      %226 = vector.load %arg19[%c0_90, %c0_91, %c0_92] : memref<1x128x256xf32, #tpu.memory_space<vmem>>, vector<1x128x256xf32>
      %227 = vector.shape_cast %226 : vector<1x128x256xf32> to vector<128x256xf32>
      %cst_93 = arith.constant dense<0.000000e+00> : vector<16x256xf32>
      %228 = tpu.matmul %225, %227, %cst_93 {dimension_numbers = #tpu.dot_dimension_numbers<[1], [0], [0], [1], [0, 0, 1, 1], [], []>} : vector<16x128xf32>, vector<128x256xf32>, vector<16x256xf32> -> vector<16x256xf32>
      %229 = vector.broadcast %22 : vector<1x256xf32> to vector<16x256xf32>
      %230 = arith.addf %228, %229 : vector<16x256xf32>
      %cst_94 = arith.constant 0.000000e+00 : f32
      %231 = vector.broadcast %cst_94 : f32 to vector<16x256xf32>
      %232 = arith.maximumf %230, %231 : vector<16x256xf32>
      %c0_95 = arith.constant 0 : index
      %c0_96 = arith.constant 0 : index
      %c0_97 = arith.constant 0 : index
      %233 = vector.load %arg21[%c0_95, %c0_96, %c0_97] : memref<1x256x128xf32, #tpu.memory_space<vmem>>, vector<1x256x128xf32>
      %234 = vector.shape_cast %233 : vector<1x256x128xf32> to vector<256x128xf32>
      %cst_98 = arith.constant dense<0.000000e+00> : vector<16x128xf32>
      %235 = tpu.matmul %232, %234, %cst_98 {dimension_numbers = #tpu.dot_dimension_numbers<[1], [0], [0], [1], [0, 0, 1, 1], [], []>} : vector<16x256xf32>, vector<256x128xf32>, vector<16x128xf32> -> vector<16x128xf32>
      %236 = vector.broadcast %19 : vector<1x128xf32> to vector<16x128xf32>
      %237 = arith.addf %235, %236 : vector<16x128xf32>
      %238 = arith.addf %237, %225 : vector<16x128xf32>
      %cst_99 = arith.constant dense<0.000000e+00> : vector<16xf32>
      %239 = vector.multi_reduction <add>, %238, %cst_99 [1] : vector<16x128xf32> to vector<16xf32>
      %240 = vector.shape_cast %239 : vector<16xf32> to vector<16x1xf32>
      %cst_100 = arith.constant 1.280000e+02 : f32
      %241 = vector.broadcast %cst_100 : f32 to vector<16x1xf32>
      %242 = arith.divf %240, %241 : vector<16x1xf32>
      %243 = vector.broadcast %242 : vector<16x1xf32> to vector<16x128xf32>
      %244 = arith.subf %238, %243 : vector<16x128xf32>
      %245 = arith.mulf %244, %244 : vector<16x128xf32>
      %cst_101 = arith.constant dense<0.000000e+00> : vector<16xf32>
      %246 = vector.multi_reduction <add>, %245, %cst_101 [1] : vector<16x128xf32> to vector<16xf32>
      %247 = vector.shape_cast %246 : vector<16xf32> to vector<16x1xf32>
      %cst_102 = arith.constant 1.280000e+02 : f32
      %248 = vector.broadcast %cst_102 : f32 to vector<16x1xf32>
      %249 = arith.divf %247, %248 : vector<16x1xf32>
      %250 = vector.broadcast %242 : vector<16x1xf32> to vector<16x128xf32>
      %251 = arith.subf %238, %250 : vector<16x128xf32>
      %cst_103 = arith.constant 9.99999974E-6 : f32
      %252 = vector.broadcast %cst_103 : f32 to vector<16x1xf32>
      %253 = arith.addf %249, %252 : vector<16x1xf32>
      %254 = math.rsqrt %253 : vector<16x1xf32>
      %255 = vector.broadcast %254 : vector<16x1xf32> to vector<16x128xf32>
      %256 = arith.mulf %251, %255 : vector<16x128xf32>
      %257 = vector.broadcast %17 : vector<1x128xf32> to vector<16x128xf32>
      %258 = arith.mulf %256, %257 : vector<16x128xf32>
      %259 = vector.broadcast %18 : vector<1x128xf32> to vector<16x128xf32>
      %260 = arith.addf %258, %259 : vector<16x128xf32>
      %c0_104 = arith.constant 0 : index
      %c0_105 = arith.constant 0 : index
      %261 = vector.load %arg23[%c0_104, %c0_105] : memref<16x128xf32, #tpu.memory_space<vmem>>, vector<16x128xf32>
      tpu.vector_store %arg23[%c0_104, %c0_105], %260 {strides = array<i32>} : memref<16x128xf32, #tpu.memory_space<vmem>>, vector<16x128xf32>,
    } else {
    }
    return
  }
  func.func @transform_0(%arg0: i32) -> (i32, i32) {
    %c0_i32 = arith.constant 0 : i32
    %c0_i32_0 = arith.constant 0 : i32
    %c0_i32_1 = arith.constant 0 : i32
    return %c0_i32, %c0_i32_0 : i32, i32
  }
  func.func @transform_1(%arg0: i32) -> (i32, i32) {
    %c0_i32 = arith.constant 0 : i32
    %c0_i32_0 = arith.constant 0 : i32
    %c0_i32_1 = arith.constant 0 : i32
    return %c0_i32, %c0_i32_0 : i32, i32
  }
  func.func @transform_2(%arg0: i32) -> (i32, i32, i32) {
    %c1_i32 = arith.constant 1 : i32
    %0 = arith.minsi %arg0, %c1_i32 : i32
    %c0_i32 = arith.constant 0 : i32
    %c0_i32_0 = arith.constant 0 : i32
    %c0_i32_1 = arith.constant 0 : i32
    return %0, %c0_i32, %c0_i32_0 : i32, i32, i32
  }
  func.func @transform_3(%arg0: i32) -> (i32, i32, i32) {
    %c1_i32 = arith.constant 1 : i32
    %0 = arith.minsi %arg0, %c1_i32 : i32
    %c0_i32 = arith.constant 0 : i32
    %c0_i32_0 = arith.constant 0 : i32
    %c0_i32_1 = arith.constant 0 : i32
    return %0, %c0_i32, %c0_i32_0 : i32, i32, i32
  }
  func.func @transform_4(%arg0: i32) -> (i32, i32, i32) {
    %c1_i32 = arith.constant 1 : i32
    %0 = arith.minsi %arg0, %c1_i32 : i32
    %c0_i32 = arith.constant 0 : i32
    %c0_i32_0 = arith.constant 0 : i32
    %c0_i32_1 = arith.constant 0 : i32
    return %0, %c0_i32, %c0_i32_0 : i32, i32, i32
  }
  func.func @transform_5(%arg0: i32) -> (i32, i32, i32) {
    %c1_i32 = arith.constant 1 : i32
    %0 = arith.minsi %arg0, %c1_i32 : i32
    %c0_i32 = arith.constant 0 : i32
    %c0_i32_0 = arith.constant 0 : i32
    %c0_i32_1 = arith.constant 0 : i32
    return %0, %c0_i32, %c0_i32_0 : i32, i32, i32
  }
  func.func @transform_6(%arg0: i32) -> (i32, i32, i32) {
    %c1_i32 = arith.constant 1 : i32
    %0 = arith.minsi %arg0, %c1_i32 : i32
    %c0_i32 = arith.constant 0 : i32
    %c0_i32_0 = arith.constant 0 : i32
    %c0_i32_1 = arith.constant 0 : i32
    return %0, %c0_i32, %c0_i32_0 : i32, i32, i32
  }
  func.func @transform_7(%arg0: i32) -> (i32, i32, i32) {
    %c1_i32 = arith.constant 1 : i32
    %0 = arith.minsi %arg0, %c1_i32 : i32
    %c0_i32 = arith.constant 0 : i32
    %c0_i32_0 = arith.constant 0 : i32
    %c0_i32_1 = arith.constant 0 : i32
    return %0, %c0_i32, %c0_i32_0 : i32, i32, i32
  }
  func.func @transform_8(%arg0: i32) -> (i32, i32, i32) {
    %c1_i32 = arith.constant 1 : i32
    %0 = arith.minsi %arg0, %c1_i32 : i32
    %c0_i32 = arith.constant 0 : i32
    %c0_i32_0 = arith.constant 0 : i32
    %c0_i32_1 = arith.constant 0 : i32
    return %0, %c0_i32, %c0_i32_0 : i32, i32, i32
  }
  func.func @transform_9(%arg0: i32) -> (i32, i32, i32) {
    %c1_i32 = arith.constant 1 : i32
    %0 = arith.minsi %arg0, %c1_i32 : i32
    %c0_i32 = arith.constant 0 : i32
    %c0_i32_0 = arith.constant 0 : i32
    %c0_i32_1 = arith.constant 0 : i32
    return %0, %c0_i32, %c0_i32_0 : i32, i32, i32
  }
  func.func @transform_10(%arg0: i32) -> (i32, i32, i32) {
    %c2_i32 = arith.constant 2 : i32
    %0 = arith.subi %arg0, %c2_i32 : i32
    %c0_i32 = arith.constant 0 : i32
    %1 = arith.maxsi %0, %c0_i32 : i32
    %c0_i32_0 = arith.constant 0 : i32
    %c0_i32_1 = arith.constant 0 : i32
    %c0_i32_2 = arith.constant 0 : i32
    return %1, %c0_i32_0, %c0_i32_1 : i32, i32, i32
  }
  func.func @transform_11(%arg0: i32) -> (i32, i32, i32) {
    %c2_i32 = arith.constant 2 : i32
    %0 = arith.subi %arg0, %c2_i32 : i32
    %c0_i32 = arith.constant 0 : i32
    %1 = arith.maxsi %0, %c0_i32 : i32
    %c0_i32_0 = arith.constant 0 : i32
    %c0_i32_1 = arith.constant 0 : i32
    %c0_i32_2 = arith.constant 0 : i32
    return %1, %c0_i32_0, %c0_i32_1 : i32, i32, i32
  }
  func.func @transform_12(%arg0: i32) -> (i32, i32, i32) {
    %c2_i32 = arith.constant 2 : i32
    %0 = arith.subi %arg0, %c2_i32 : i32
    %c0_i32 = arith.constant 0 : i32
    %1 = arith.maxsi %0, %c0_i32 : i32
    %c0_i32_0 = arith.constant 0 : i32
    %c0_i32_1 = arith.constant 0 : i32
    %c0_i32_2 = arith.constant 0 : i32
    return %1, %c0_i32_0, %c0_i32_1 : i32, i32, i32
  }
  func.func @transform_13(%arg0: i32) -> (i32, i32, i32) {
    %c2_i32 = arith.constant 2 : i32
    %0 = arith.subi %arg0, %c2_i32 : i32
    %c0_i32 = arith.constant 0 : i32
    %1 = arith.maxsi %0, %c0_i32 : i32
    %c0_i32_0 = arith.constant 0 : i32
    %c0_i32_1 = arith.constant 0 : i32
    %c0_i32_2 = arith.constant 0 : i32
    return %1, %c0_i32_0, %c0_i32_1 : i32, i32, i32
  }
  func.func @transform_14(%arg0: i32) -> (i32, i32, i32) {
    %c2_i32 = arith.constant 2 : i32
    %0 = arith.subi %arg0, %c2_i32 : i32
    %c0_i32 = arith.constant 0 : i32
    %1 = arith.maxsi %0, %c0_i32 : i32
    %c0_i32_0 = arith.constant 0 : i32
    %c0_i32_1 = arith.constant 0 : i32
    %c0_i32_2 = arith.constant 0 : i32
    return %1, %c0_i32_0, %c0_i32_1 : i32, i32, i32
  }
  func.func @transform_15(%arg0: i32) -> (i32, i32, i32) {
    %c2_i32 = arith.constant 2 : i32
    %0 = arith.subi %arg0, %c2_i32 : i32
    %c0_i32 = arith.constant 0 : i32
    %1 = arith.maxsi %0, %c0_i32 : i32
    %c0_i32_0 = arith.constant 0 : i32
    %c0_i32_1 = arith.constant 0 : i32
    %c0_i32_2 = arith.constant 0 : i32
    return %1, %c0_i32_0, %c0_i32_1 : i32, i32, i32
  }
  func.func @transform_16(%arg0: i32) -> (i32, i32, i32) {
    %c2_i32 = arith.constant 2 : i32
    %0 = arith.subi %arg0, %c2_i32 : i32
    %c0_i32 = arith.constant 0 : i32
    %1 = arith.maxsi %0, %c0_i32 : i32
    %c0_i32_0 = arith.constant 0 : i32
    %c0_i32_1 = arith.constant 0 : i32
    %c0_i32_2 = arith.constant 0 : i32
    return %1, %c0_i32_0, %c0_i32_1 : i32, i32, i32
  }
  func.func @transform_17(%arg0: i32) -> (i32, i32, i32) {
    %c2_i32 = arith.constant 2 : i32
    %0 = arith.subi %arg0, %c2_i32 : i32
    %c0_i32 = arith.constant 0 : i32
    %1 = arith.maxsi %0, %c0_i32 : i32
    %c0_i32_0 = arith.constant 0 : i32
    %c0_i32_1 = arith.constant 0 : i32
    %c0_i32_2 = arith.constant 0 : i32
    return %1, %c0_i32_0, %c0_i32_1 : i32, i32, i32
  }
  func.func @transform_18(%arg0: i32) -> (i32, i32, i32) {
    %c2_i32 = arith.constant 2 : i32
    %0 = arith.subi %arg0, %c2_i32 : i32
    %c0_i32 = arith.constant 0 : i32
    %1 = arith.maxsi %0, %c0_i32 : i32
    %c0_i32_0 = arith.constant 0 : i32
    %c0_i32_1 = arith.constant 0 : i32
    %c0_i32_2 = arith.constant 0 : i32
    return %1, %c0_i32_0, %c0_i32_1 : i32, i32, i32
  }
  func.func @transform_19(%arg0: i32) -> (i32, i32, i32) {
    %c2_i32 = arith.constant 2 : i32
    %0 = arith.subi %arg0, %c2_i32 : i32
    %c0_i32 = arith.constant 0 : i32
    %1 = arith.maxsi %0, %c0_i32 : i32
    %c0_i32_0 = arith.constant 0 : i32
    %c0_i32_1 = arith.constant 0 : i32
    %c0_i32_2 = arith.constant 0 : i32
    return %1, %c0_i32_0, %c0_i32_1 : i32, i32, i32
  }
  func.func @transform_20(%arg0: i32) -> (i32, i32, i32) {
    %c2_i32 = arith.constant 2 : i32
    %0 = arith.subi %arg0, %c2_i32 : i32
    %c0_i32 = arith.constant 0 : i32
    %1 = arith.maxsi %0, %c0_i32 : i32
    %c0_i32_0 = arith.constant 0 : i32
    %c0_i32_1 = arith.constant 0 : i32
    %c0_i32_2 = arith.constant 0 : i32
    return %1, %c0_i32_0, %c0_i32_1 : i32, i32, i32
  }
  func.func @transform_21(%arg0: i32) -> (i32, i32, i32) {
    %c2_i32 = arith.constant 2 : i32
    %0 = arith.subi %arg0, %c2_i32 : i32
    %c0_i32 = arith.constant 0 : i32
    %1 = arith.maxsi %0, %c0_i32 : i32
    %c0_i32_0 = arith.constant 0 : i32
    %c0_i32_1 = arith.constant 0 : i32
    %c0_i32_2 = arith.constant 0 : i32
    return %1, %c0_i32_0, %c0_i32_1 : i32, i32, i32
  }
  func.func @transform_22(%arg0: i32) -> (i32, i32) {
    %c0_i32 = arith.constant 0 : i32
    %c0_i32_0 = arith.constant 0 : i32
    %c0_i32_1 = arith.constant 0 : i32
    return %c0_i32, %c0_i32_0 : i32, i32
  }
}

</mosaic_0001>

<llo_original>
// kernel: transformer_forward.1
$region0: #{transformer_forward.1}
  #allocation0 [shape = 'u32[]', space=smem, size = 0x4, offset = 0x4, fixed_abs, tag = 'smem constant byte address 0x4 - core index']
  #allocation1 [shape = 'u32[144,128]{1,0:T(1,128)}', space=vmem, size = 0x12000, scoped, tag = 'internal scratch']
  #allocation2 [shape = 'f32[16,128]{1,0:T(8,128)}', space=vmem, size = 0x2000, scoped, tag = 'scratch operand']
  %s0 = inlined_call_operand.vmem [shape: f32[16,128], index: 0, kind: input, shape index: {}]
  %s1 = inlined_call_operand.vmem [shape: f32[16,128], index: 1, kind: input, shape index: {}]
  %s2 = inlined_call_operand.vmem [shape: f32[2,128,128], index: 2, kind: input, shape index: {}]
  %s3 = inlined_call_operand.hbm [shape: f32[2,128,128], index: 3, kind: input, shape index: {}]
  %s4 = inlined_call_operand.hbm [shape: f32[2,128,128], index: 4, kind: input, shape index: {}]
  %s5 = inlined_call_operand.hbm [shape: f32[2,128,128], index: 5, kind: input, shape index: {}]
  %s6 = inlined_call_operand.vmem [shape: f32[2,128,256], index: 6, kind: input, shape index: {}]
  %s7 = inlined_call_operand.vmem [shape: f32[2,8,256], index: 7, kind: input, shape index: {}]
  %s8 = inlined_call_operand.hbm [shape: f32[2,256,128], index: 8, kind: input, shape index: {}]
  %s9 = inlined_call_operand.hbm [shape: f32[2,8,128], index: 9, kind: input, shape index: {}]
  %s10 = inlined_call_operand.hbm [shape: f32[2,128,128], index: 10, kind: input, shape index: {}]
  %s11 = inlined_call_operand.hbm [shape: f32[2,128,128], index: 11, kind: input, shape index: {}]
  %s12 = inlined_call_operand.hbm [shape: f32[2,128,128], index: 12, kind: input, shape index: {}]
  %s13 = inlined_call_operand.hbm [shape: f32[2,128,128], index: 13, kind: input, shape index: {}]
  %s14 = inlined_call_operand.hbm [shape: f32[2,128,128], index: 14, kind: input, shape index: {}]
  %s15 = inlined_call_operand.hbm [shape: f32[2,128,128], index: 15, kind: input, shape index: {}]
  %s16 = inlined_call_operand.hbm [shape: f32[2,128,128], index: 16, kind: input, shape index: {}]
  %s17 = inlined_call_operand.hbm [shape: f32[2,128,128], index: 17, kind: input, shape index: {}]
  %s18 = inlined_call_operand.hbm [shape: f32[2,128,256], index: 18, kind: input, shape index: {}]
  %s19 = inlined_call_operand.vmem [shape: f32[2,8,256], index: 19, kind: input, shape index: {}]
  %s20 = inlined_call_operand.hbm [shape: f32[2,256,128], index: 20, kind: input, shape index: {}]
  %s21 = inlined_call_operand.hbm [shape: f32[2,8,128], index: 21, kind: input, shape index: {}]
  %s22 = inlined_call_operand.hbm [shape: f32[16,128], index: 22, kind: output, shape index: {}]
  %s23 = sld [smem:[#allocation0]]
  $region201: #{transformer_forward.1} parent=0
    _
  %s25 = ssub.s32 1, %s23
  %s26 = scalar_select 0, %s25, %s23
  $region1: #{transformer_forward.1} parent=0
    #allocation3 [shape = 'u8[131072]{0}', space=vmem, size = 0x20000, scoped, tag = 'input window, operand 3']
    #allocation4 [shape = 's32[2]{0}', space=sflag, size = 0x8, scoped, tag = 'scoped memory for transformer_forward.1']
    #allocation5 [shape = 's32[2]{0}', space=sflag, size = 0x8, scoped, tag = 'scoped memory for transformer_forward.1']
    #allocation6 [shape = 'u8[131072]{0}', space=vmem, size = 0x20000, scoped, tag = 'input window, operand 4']
    #allocation7 [shape = 's32[2]{0}', space=sflag, size = 0x8, scoped, tag = 'scoped memory for transformer_forward.1']
    #allocation8 [shape = 'u8[131072]{0}', space=vmem, size = 0x20000, scoped, tag = 'input window, operand 5']
    #allocation9 [shape = 'u8[262144]{0}', space=vmem, size = 0x40000, scoped, tag = 'input window, operand 8']
    #allocation10 [shape = 's32[2]{0}', space=sflag, size = 0x8, scoped, tag = 'scoped memory for transformer_forward.1']
    #allocation11 [shape = 'u8[8192]{0}', space=vmem, size = 0x2000, scoped, tag = 'input window, operand 9']
    #allocation12 [shape = 'u8[131072]{0}', space=vmem, size = 0x20000, scoped, tag = 'input window, operand 10']
    #allocation13 [shape = 's32[2]{0}', space=sflag, size = 0x8, scoped, tag = 'scoped memory for transformer_forward.1']
    #allocation14 [shape = 'u8[131072]{0}', space=vmem, size = 0x20000, scoped, tag = 'input window, operand 11']
    #allocation15 [shape = 'u8[131072]{0}', space=vmem, size = 0x20000, scoped, tag = 'input window, operand 12']
    #allocation16 [shape = 's32[2]{0}', space=sflag, size = 0x8, scoped, tag = 'scoped memory for transformer_forward.1']
    #allocation17 [shape = 'u8[131072]{0}', space=vmem, size = 0x20000, scoped, tag = 'input window, operand 13']
    #allocation18 [shape = 'u8[131072]{0}', space=vmem, size = 0x20000, scoped, tag = 'input window, operand 14']
    #allocation19 [shape = 's32[2]{0}', space=sflag, size = 0x8, scoped, tag = 'scoped memory for transformer_forward.1']
    #allocation20 [shape = 'u8[131072]{0}', space=vmem, size = 0x20000, scoped, tag = 'input window, operand 15']
    #allocation21 [shape = 'u8[131072]{0}', space=vmem, size = 0x20000, scoped, tag = 'input window, operand 16']
    #allocation22 [shape = 's32[2]{0}', space=sflag, size = 0x8, scoped, tag = 'scoped memory for transformer_forward.1']
    #allocation23 [shape = 'u8[131072]{0}', space=vmem, size = 0x20000, scoped, tag = 'input window, operand 17']
    #allocation24 [shape = 'u8[262144]{0}', space=vmem, size = 0x40000, scoped, tag = 'input window, operand 18']
    #allocation25 [shape = 's32[2]{0}', space=sflag, size = 0x8, scoped, tag = 'scoped memory for transformer_forward.1']
    #allocation26 [shape = 'u8[262144]{0}', space=vmem, size = 0x40000, scoped, tag = 'input window, operand 20']
    #allocation27 [shape = 'u8[8192]{0}', space=vmem, size = 0x2000, scoped, tag = 'input window, operand 21']
    #allocation28 [shape = 's32[2]{0}', space=sflag, size = 0x8, scoped, tag = 'scoped memory for transformer_forward.1']
    #allocation29 [shape = 'u8[8192]{0}', space=vmem, size = 0x2000, scoped, tag = 'output window, operand 0, single buffered']
    %27 = vsyncpa [#allocation4], 0
    %s28 = scalar_lea.sflag [#allocation4], 1
    %29 = vsyncpa %s28, 0
    %30 = vsyncpa [#allocation7], 0
    %s31 = scalar_lea.sflag [#allocation7], 1
    %32 = vsyncpa %s31, 0
    %33 = vsyncpa [#allocation10], 0
    %s34 = scalar_lea.sflag [#allocation10], 1
    %35 = vsyncpa %s34, 0
    %36 = vsyncpa [#allocation13], 0
    %s37 = scalar_lea.sflag [#allocation13], 1
    %38 = vsyncpa %s37, 0
    %39 = vsyncpa [#allocation16], 0
    %s40 = scalar_lea.sflag [#allocation16], 1
    %41 = vsyncpa %s40, 0
    %42 = vsyncpa [#allocation19], 0
    %s43 = scalar_lea.sflag [#allocation19], 1
    %44 = vsyncpa %s43, 0
    %45 = vsyncpa [#allocation22], 0
    %s46 = scalar_lea.sflag [#allocation22], 1
    %47 = vsyncpa %s46, 0
    %48 = vsyncpa [#allocation25], 0
    %s49 = scalar_lea.sflag [#allocation25], 1
    %50 = vsyncpa %s49, 0
    %51 = vsyncpa [#allocation28], 0
    %s52 = scalar_lea.sflag [#allocation28], 1
    %53 = vsyncpa %s52, 0
    %54 = vsyncpa [#allocation5], 0
    loop: start=0, step=1, limit=6
    $region2: #{transformer_forward.1} parent=1 // loop_pre_header
      _
    $region3: #{transformer_forward.1} parent=1 // loop_header
      %s56 = sphi 0, %s60
      %p57 = scmp.ge.s32.totalorder %s56, 6
      %s64 = sphi 0, %s64
      %s66 = sphi 0, %s64
      %s67 = sphi 0, %s66
      %s81 = sphi 0, %s67
      %s85 = sphi 0, %s85
      %s87 = sphi 0, %s85
      %s88 = sphi 0, %s87
      %s102 = sphi 0, %s88
      %s112 = sphi 0, %s114
      %s115 = sphi 0, %s112
      %s116 = sphi 0, %s115
      %s132 = sphi 0, %s116
      %s142 = sphi 0, %s144
      %s145 = sphi 0, %s142
      %s146 = sphi 0, %s145
      %s162 = sphi 0, %s146
      %s172 = sphi 0, %s174
      %s175 = sphi 0, %s172
      %s176 = sphi 0, %s175
      %s192 = sphi 0, %s176
      %s202 = sphi 0, %s204
      %s205 = sphi 0, %s202
      %s206 = sphi 0, %s205
      %s222 = sphi 0, %s206
      %s232 = sphi 0, %s234
      %s235 = sphi 0, %s232
      %s236 = sphi 0, %s235
      %s252 = sphi 0, %s236
      %s262 = sphi 0, %s264
      %s265 = sphi 0, %s262
      %s266 = sphi 0, %s265
      %s282 = sphi 0, %s266
      %s292 = sphi 0, %s294
      %s295 = sphi 0, %s292
      %s296 = sphi 0, %s295
      %s312 = sphi 0, %s296
      %s322 = sphi 0, %s324
      %s325 = sphi 0, %s322
      %s326 = sphi 0, %s325
      %s342 = sphi 0, %s326
      %s354 = sphi 0, %s356
      %s357 = sphi 0, %s354
      %s358 = sphi 0, %s357
      %s374 = sphi 0, %s358
      %s386 = sphi 0, %s388
      %s389 = sphi 0, %s386
      %s390 = sphi 0, %s389
      %s406 = sphi 0, %s390
      %s418 = sphi 0, %s420
      %s421 = sphi 0, %s418
      %s422 = sphi 0, %s421
      %s438 = sphi 0, %s422
      %s450 = sphi 0, %s452
      %s453 = sphi 0, %s450
      %s454 = sphi 0, %s453
      %s470 = sphi 0, %s454
      %s482 = sphi 0, %s484
      %s485 = sphi 0, %s482
      %s486 = sphi 0, %s485
      %s502 = sphi 0, %s486
      %s514 = sphi 0, %s516
      %s517 = sphi 0, %s514
      %s518 = sphi 0, %s517
      %s534 = sphi 0, %s518
      %s546 = sphi 0, %s548
      %s549 = sphi 0, %s546
      %s550 = sphi 0, %s549
      %s566 = sphi 0, %s550
      %s578 = sphi 0, %s580
      %s581 = sphi 0, %s578
      %s582 = sphi 0, %s581
      %s598 = sphi 0, %s582
      %s610 = sphi 0, %s612
      %s613 = sphi 0, %s610
      %s614 = sphi 0, %s613
      %s630 = sphi 0, %s614
      %s642 = sphi 0, %s644
      %s645 = sphi 0, %s642
      %s646 = sphi 0, %s645
      %s662 = sphi 0, %s646
      %s674 = sphi 0, %s676
      %s677 = sphi 0, %s674
      %s678 = sphi 0, %s677
      %s694 = sphi 0, %s678
      %s706 = sphi 0, %s708
      %s709 = sphi 0, %s706
      %s710 = sphi 0, %s709
      %s726 = sphi 0, %s710
      %s730 = sphi 0, %s730
      %s732 = sphi 0, %s730
      %s733 = sphi 0, %s732
      %s747 = sphi 0, %s733
    $region4: #{transformer_forward.1} parent=1 // loop_header_branch
      %59 = sbr.rel (%p57) target = $region8
    $region5: #{transformer_forward.1} parent=1 // loop_body
      %s61 = ssub.s32 %s56, 1
      %s62 = ssub.s32 %s56, 2
      %s63 = sadd.s32 %s56, 1
      %s65 = sadd.s32 %s64, 1
      %p68 = scmp.eq.s32.totalorder %s56, 3
      %p69 = scmp.ne.s32.totalorder %s64, %s66
      %p70 = scmp.eq.s32.totalorder %s56, 0
      %p71 = por %p69, %p70
      %p72 = scmp.ne.s32.totalorder %s64, %s66
      %p73 = scmp.eq.s32.totalorder %s61, 3
      %p74 = por %p72, %p73
      %p75 = scmp.ne.s32.totalorder %s66, %s67
      %p76 = scmp.eq.s32.totalorder %s61, 0
      %p77 = por %p75, %p76
      %p78 = scmp.ne.s32.totalorder %s66, %s67
      %p79 = scmp.eq.s32.totalorder %s62, 3
      %p80 = por %p78, %p79
      %p82 = scmp.ne.s32.totalorder %s67, %s81
      %p83 = scmp.eq.s32.totalorder %s62, 0
      %p84 = por %p82, %p83
      %s86 = sadd.s32 %s85, 1
      %p89 = scmp.eq.s32.totalorder %s56, 3
      %p90 = scmp.ne.s32.totalorder %s85, %s87
      %p91 = scmp.eq.s32.totalorder %s56, 0
      %p92 = por %p90, %p91
      %p93 = scmp.ne.s32.totalorder %s85, %s87
      %p94 = scmp.eq.s32.totalorder %s61, 3
      %p95 = por %p93, %p94
      %p96 = scmp.ne.s32.totalorder %s87, %s88
      %p97 = scmp.eq.s32.totalorder %s61, 0
      %p98 = por %p96, %p97
      %p99 = scmp.ne.s32.totalorder %s87, %s88
      %p100 = scmp.eq.s32.totalorder %s62, 3
      %p101 = por %p99, %p100
      %p103 = scmp.ne.s32.totalorder %s88, %s102
      %p104 = scmp.eq.s32.totalorder %s62, 0
      %p105 = por %p103, %p104
      %p106 = scmp.lt.s32.totalorder %s56, 1
      %s107 = scalar_select %p106, %s56, 1
      %p108 = scmp.lt.s32.totalorder %s63, 1
      %s109 = scalar_select %p108, %s63, 1
      %s110 = ssub.s32 %s107, %s109
      %p111 = scmp.eq.s32.totalorder %s110, 0
      %s113 = sadd.s32 %s112, 1
      %s114 = scalar_select %p111, %s112, %s113
      %p117 = pneg %p111
      %p118 = scmp.eq.s32.totalorder %s56, 3
      %p119 = por %p117, %p118
      %p120 = scmp.ne.s32.totalorder %s112, %s115
      %p121 = scmp.eq.s32.totalorder %s56, 0
      %p122 = por %p120, %p121
      %p123 = scmp.ne.s32.totalorder %s112, %s115
      %p124 = scmp.eq.s32.totalorder %s61, 3
      %p125 = por %p123, %p124
      %p126 = scmp.ne.s32.totalorder %s115, %s116
      %p127 = scmp.eq.s32.totalorder %s61, 0
      %p128 = por %p126, %p127
      %p129 = scmp.ne.s32.totalorder %s115, %s116
      %p130 = scmp.eq.s32.totalorder %s62, 3
      %p131 = por %p129, %p130
      %p133 = scmp.ne.s32.totalorder %s116, %s132
      %p134 = scmp.eq.s32.totalorder %s62, 0
      %p135 = por %p133, %p134
      %p136 = scmp.lt.s32.totalorder %s56, 1
      %s137 = scalar_select %p136, %s56, 1
      %p138 = scmp.lt.s32.totalorder %s63, 1
      %s139 = scalar_select %p138, %s63, 1
      %s140 = ssub.s32 %s137, %s139
      %p141 = scmp.eq.s32.totalorder %s140, 0
      %s143 = sadd.s32 %s142, 1
      %s144 = scalar_select %p141, %s142, %s143
      %p147 = pneg %p141
      %p148 = scmp.eq.s32.totalorder %s56, 3
      %p149 = por %p147, %p148
      %p150 = scmp.ne.s32.totalorder %s142, %s145
      %p151 = scmp.eq.s32.totalorder %s56, 0
      %p152 = por %p150, %p151
      %p153 = scmp.ne.s32.totalorder %s142, %s145
      %p154 = scmp.eq.s32.totalorder %s61, 3
      %p155 = por %p153, %p154
      %p156 = scmp.ne.s32.totalorder %s145, %s146
      %p157 = scmp.eq.s32.totalorder %s61, 0
      %p158 = por %p156, %p157
      %p159 = scmp.ne.s32.totalorder %s145, %s146
      %p160 = scmp.eq.s32.totalorder %s62, 3
      %p161 = por %p159, %p160
      %p163 = scmp.ne.s32.totalorder %s146, %s162
      %p164 = scmp.eq.s32.totalorder %s62, 0
      %p165 = por %p163, %p164
      %p166 = scmp.lt.s32.totalorder %s56, 1
      %s167 = scalar_select %p166, %s56, 1
      %p168 = scmp.lt.s32.totalorder %s63, 1
      %s169 = scalar_select %p168, %s63, 1
      %s170 = ssub.s32 %s167, %s169
      %p171 = scmp.eq.s32.totalorder %s170, 0
      %s173 = sadd.s32 %s172, 1
      %s174 = scalar_select %p171, %s172, %s173
      %p177 = pneg %p171
      %p178 = scmp.eq.s32.totalorder %s56, 3
      %p179 = por %p177, %p178
      %p180 = scmp.ne.s32.totalorder %s172, %s175
      %p181 = scmp.eq.s32.totalorder %s56, 0
      %p182 = por %p180, %p181
      %p183 = scmp.ne.s32.totalorder %s172, %s175
      %p184 = scmp.eq.s32.totalorder %s61, 3
      %p185 = por %p183, %p184
      %p186 = scmp.ne.s32.totalorder %s175, %s176
      %p187 = scmp.eq.s32.totalorder %s61, 0
      %p188 = por %p186, %p187
      %p189 = scmp.ne.s32.totalorder %s175, %s176
      %p190 = scmp.eq.s32.totalorder %s62, 3
      %p191 = por %p189, %p190
      %p193 = scmp.ne.s32.totalorder %s176, %s192
      %p194 = scmp.eq.s32.totalorder %s62, 0
      %p195 = por %p193, %p194
      %p196 = scmp.lt.s32.totalorder %s56, 1
      %s197 = scalar_select %p196, %s56, 1
      %p198 = scmp.lt.s32.totalorder %s63, 1
      %s199 = scalar_select %p198, %s63, 1
      %s200 = ssub.s32 %s197, %s199
      %p201 = scmp.eq.s32.totalorder %s200, 0
      %s203 = sadd.s32 %s202, 1
      %s204 = scalar_select %p201, %s202, %s203
      %p207 = pneg %p201
      %p208 = scmp.eq.s32.totalorder %s56, 3
      %p209 = por %p207, %p208
      %p210 = scmp.ne.s32.totalorder %s202, %s205
      %p211 = scmp.eq.s32.totalorder %s56, 0
      %p212 = por %p210, %p211
      %p213 = scmp.ne.s32.totalorder %s202, %s205
      %p214 = scmp.eq.s32.totalorder %s61, 3
      %p215 = por %p213, %p214
      %p216 = scmp.ne.s32.totalorder %s205, %s206
      %p217 = scmp.eq.s32.totalorder %s61, 0
      %p218 = por %p216, %p217
      %p219 = scmp.ne.s32.totalorder %s205, %s206
      %p220 = scmp.eq.s32.totalorder %s62, 3
      %p221 = por %p219, %p220
      %p223 = scmp.ne.s32.totalorder %s206, %s222
      %p224 = scmp.eq.s32.totalorder %s62, 0
      %p225 = por %p223, %p224
      %p226 = scmp.lt.s32.totalorder %s56, 1
      %s227 = scalar_select %p226, %s56, 1
      %p228 = scmp.lt.s32.totalorder %s63, 1
      %s229 = scalar_select %p228, %s63, 1
      %s230 = ssub.s32 %s227, %s229
      %p231 = scmp.eq.s32.totalorder %s230, 0
      %s233 = sadd.s32 %s232, 1
      %s234 = scalar_select %p231, %s232, %s233
      %p237 = pneg %p231
      %p238 = scmp.eq.s32.totalorder %s56, 3
      %p239 = por %p237, %p238
      %p240 = scmp.ne.s32.totalorder %s232, %s235
      %p241 = scmp.eq.s32.totalorder %s56, 0
      %p242 = por %p240, %p241
      %p243 = scmp.ne.s32.totalorder %s232, %s235
      %p244 = scmp.eq.s32.totalorder %s61, 3
      %p245 = por %p243, %p244
      %p246 = scmp.ne.s32.totalorder %s235, %s236
      %p247 = scmp.eq.s32.totalorder %s61, 0
      %p248 = por %p246, %p247
      %p249 = scmp.ne.s32.totalorder %s235, %s236
      %p250 = scmp.eq.s32.totalorder %s62, 3
      %p251 = por %p249, %p250
      %p253 = scmp.ne.s32.totalorder %s236, %s252
      %p254 = scmp.eq.s32.totalorder %s62, 0
      %p255 = por %p253, %p254
      %p256 = scmp.lt.s32.totalorder %s56, 1
      %s257 = scalar_select %p256, %s56, 1
      %p258 = scmp.lt.s32.totalorder %s63, 1
      %s259 = scalar_select %p258, %s63, 1
      %s260 = ssub.s32 %s257, %s259
      %p261 = scmp.eq.s32.totalorder %s260, 0
      %s263 = sadd.s32 %s262, 1
      %s264 = scalar_select %p261, %s262, %s263
      %p267 = pneg %p261
      %p268 = scmp.eq.s32.totalorder %s56, 3
      %p269 = por %p267, %p268
      %p270 = scmp.ne.s32.totalorder %s262, %s265
      %p271 = scmp.eq.s32.totalorder %s56, 0
      %p272 = por %p270, %p271
      %p273 = scmp.ne.s32.totalorder %s262, %s265
      %p274 = scmp.eq.s32.totalorder %s61, 3
      %p275 = por %p273, %p274
      %p276 = scmp.ne.s32.totalorder %s265, %s266
      %p277 = scmp.eq.s32.totalorder %s61, 0
      %p278 = por %p276, %p277
      %p279 = scmp.ne.s32.totalorder %s265, %s266
      %p280 = scmp.eq.s32.totalorder %s62, 3
      %p281 = por %p279, %p280
      %p283 = scmp.ne.s32.totalorder %s266, %s282
      %p284 = scmp.eq.s32.totalorder %s62, 0
      %p285 = por %p283, %p284
      %p286 = scmp.lt.s32.totalorder %s56, 1
      %s287 = scalar_select %p286, %s56, 1
      %p288 = scmp.lt.s32.totalorder %s63, 1
      %s289 = scalar_select %p288, %s63, 1
      %s290 = ssub.s32 %s287, %s289
      %p291 = scmp.eq.s32.totalorder %s290, 0
      %s293 = sadd.s32 %s292, 1
      %s294 = scalar_select %p291, %s292, %s293
      %p297 = pneg %p291
      %p298 = scmp.eq.s32.totalorder %s56, 3
      %p299 = por %p297, %p298
      %p300 = scmp.ne.s32.totalorder %s292, %s295
      %p301 = scmp.eq.s32.totalorder %s56, 0
      %p302 = por %p300, %p301
      %p303 = scmp.ne.s32.totalorder %s292, %s295
      %p304 = scmp.eq.s32.totalorder %s61, 3
      %p305 = por %p303, %p304
      %p306 = scmp.ne.s32.totalorder %s295, %s296
      %p307 = scmp.eq.s32.totalorder %s61, 0
      %p308 = por %p306, %p307
      %p309 = scmp.ne.s32.totalorder %s295, %s296
      %p310 = scmp.eq.s32.totalorder %s62, 3
      %p311 = por %p309, %p310
      %p313 = scmp.ne.s32.totalorder %s296, %s312
      %p314 = scmp.eq.s32.totalorder %s62, 0
      %p315 = por %p313, %p314
      %p316 = scmp.lt.s32.totalorder %s56, 1
      %s317 = scalar_select %p316, %s56, 1
      %p318 = scmp.lt.s32.totalorder %s63, 1
      %s319 = scalar_select %p318, %s63, 1
      %s320 = ssub.s32 %s317, %s319
      %p321 = scmp.eq.s32.totalorder %s320, 0
      %s323 = sadd.s32 %s322, 1
      %s324 = scalar_select %p321, %s322, %s323
      %p327 = pneg %p321
      %p328 = scmp.eq.s32.totalorder %s56, 3
      %p329 = por %p327, %p328
      %p330 = scmp.ne.s32.totalorder %s322, %s325
      %p331 = scmp.eq.s32.totalorder %s56, 0
      %p332 = por %p330, %p331
      %p333 = scmp.ne.s32.totalorder %s322, %s325
      %p334 = scmp.eq.s32.totalorder %s61, 3
      %p335 = por %p333, %p334
      %p336 = scmp.ne.s32.totalorder %s325, %s326
      %p337 = scmp.eq.s32.totalorder %s61, 0
      %p338 = por %p336, %p337
      %p339 = scmp.ne.s32.totalorder %s325, %s326
      %p340 = scmp.eq.s32.totalorder %s62, 3
      %p341 = por %p339, %p340
      %p343 = scmp.ne.s32.totalorder %s326, %s342
      %p344 = scmp.eq.s32.totalorder %s62, 0
      %p345 = por %p343, %p344
      %s346 = ssub.s32 %s56, 2
      %p347 = scmp.gt.s32.totalorder %s346, 0
      %s348 = scalar_select %p347, %s346, 0
      %s349 = ssub.s32 %s63, 2
      %p350 = scmp.gt.s32.totalorder %s349, 0
      %s351 = scalar_select %p350, %s349, 0
      %s352 = ssub.s32 %s348, %s351
      %p353 = scmp.eq.s32.totalorder %s352, 0
      %s355 = sadd.s32 %s354, 1
      %s356 = scalar_select %p353, %s354, %s355
      %p359 = pneg %p353
      %p360 = scmp.eq.s32.totalorder %s56, 3
      %p361 = por %p359, %p360
      %p362 = scmp.ne.s32.totalorder %s354, %s357
      %p363 = scmp.eq.s32.totalorder %s56, 0
      %p364 = por %p362, %p363
      %p365 = scmp.ne.s32.totalorder %s354, %s357
      %p366 = scmp.eq.s32.totalorder %s61, 3
      %p367 = por %p365, %p366
      %p368 = scmp.ne.s32.totalorder %s357, %s358
      %p369 = scmp.eq.s32.totalorder %s61, 0
      %p370 = por %p368, %p369
      %p371 = scmp.ne.s32.totalorder %s357, %s358
      %p372 = scmp.eq.s32.totalorder %s62, 3
      %p373 = por %p371, %p372
      %p375 = scmp.ne.s32.totalorder %s358, %s374
      %p376 = scmp.eq.s32.totalorder %s62, 0
      %p377 = por %p375, %p376
      %s378 = ssub.s32 %s56, 2
      %p379 = scmp.gt.s32.totalorder %s378, 0
      %s380 = scalar_select %p379, %s378, 0
      %s381 = ssub.s32 %s63, 2
      %p382 = scmp.gt.s32.totalorder %s381, 0
      %s383 = scalar_select %p382, %s381, 0
      %s384 = ssub.s32 %s380, %s383
      %p385 = scmp.eq.s32.totalorder %s384, 0
      %s387 = sadd.s32 %s386, 1
      %s388 = scalar_select %p385, %s386, %s387
      %p391 = pneg %p385
      %p392 = scmp.eq.s32.totalorder %s56, 3
      %p393 = por %p391, %p392
      %p394 = scmp.ne.s32.totalorder %s386, %s389
      %p395 = scmp.eq.s32.totalorder %s56, 0
      %p396 = por %p394, %p395
      %p397 = scmp.ne.s32.totalorder %s386, %s389
      %p398 = scmp.eq.s32.totalorder %s61, 3
      %p399 = por %p397, %p398
      %p400 = scmp.ne.s32.totalorder %s389, %s390
      %p401 = scmp.eq.s32.totalorder %s61, 0
      %p402 = por %p400, %p401
      %p403 = scmp.ne.s32.totalorder %s389, %s390
      %p404 = scmp.eq.s32.totalorder %s62, 3
      %p405 = por %p403, %p404
      %p407 = scmp.ne.s32.totalorder %s390, %s406
      %p408 = scmp.eq.s32.totalorder %s62, 0
      %p409 = por %p407, %p408
      %s410 = ssub.s32 %s56, 2
      %p411 = scmp.gt.s32.totalorder %s410, 0
      %s412 = scalar_select %p411, %s410, 0
      %s413 = ssub.s32 %s63, 2
      %p414 = scmp.gt.s32.totalorder %s413, 0
      %s415 = scalar_select %p414, %s413, 0
      %s416 = ssub.s32 %s412, %s415
      %p417 = scmp.eq.s32.totalorder %s416, 0
      %s419 = sadd.s32 %s418, 1
      %s420 = scalar_select %p417, %s418, %s419
      %p423 = pneg %p417
      %p424 = scmp.eq.s32.totalorder %s56, 3
      %p425 = por %p423, %p424
      %p426 = scmp.ne.s32.totalorder %s418, %s421
      %p427 = scmp.eq.s32.totalorder %s56, 0
      %p428 = por %p426, %p427
      %p429 = scmp.ne.s32.totalorder %s418, %s421
      %p430 = scmp.eq.s32.totalorder %s61, 3
      %p431 = por %p429, %p430
      %p432 = scmp.ne.s32.totalorder %s421, %s422
      %p433 = scmp.eq.s32.totalorder %s61, 0
      %p434 = por %p432, %p433
      %p435 = scmp.ne.s32.totalorder %s421, %s422
      %p436 = scmp.eq.s32.totalorder %s62, 3
      %p437 = por %p435, %p436
      %p439 = scmp.ne.s32.totalorder %s422, %s438
      %p440 = scmp.eq.s32.totalorder %s62, 0
      %p441 = por %p439, %p440
      %s442 = ssub.s32 %s56, 2
      %p443 = scmp.gt.s32.totalorder %s442, 0
      %s444 = scalar_select %p443, %s442, 0
      %s445 = ssub.s32 %s63, 2
      %p446 = scmp.gt.s32.totalorder %s445, 0
      %s447 = scalar_select %p446, %s445, 0
      %s448 = ssub.s32 %s444, %s447
      %p449 = scmp.eq.s32.totalorder %s448, 0
      %s451 = sadd.s32 %s450, 1
      %s452 = scalar_select %p449, %s450, %s451
      %p455 = pneg %p449
      %p456 = scmp.eq.s32.totalorder %s56, 3
      %p457 = por %p455, %p456
      %p458 = scmp.ne.s32.totalorder %s450, %s453
      %p459 = scmp.eq.s32.totalorder %s56, 0
      %p460 = por %p458, %p459
      %p461 = scmp.ne.s32.totalorder %s450, %s453
      %p462 = scmp.eq.s32.totalorder %s61, 3
      %p463 = por %p461, %p462
      %p464 = scmp.ne.s32.totalorder %s453, %s454
      %p465 = scmp.eq.s32.totalorder %s61, 0
      %p466 = por %p464, %p465
      %p467 = scmp.ne.s32.totalorder %s453, %s454
      %p468 = scmp.eq.s32.totalorder %s62, 3
      %p469 = por %p467, %p468
      %p471 = scmp.ne.s32.totalorder %s454, %s470
      %p472 = scmp.eq.s32.totalorder %s62, 0
      %p473 = por %p471, %p472
      %s474 = ssub.s32 %s56, 2
      %p475 = scmp.gt.s32.totalorder %s474, 0
      %s476 = scalar_select %p475, %s474, 0
      %s477 = ssub.s32 %s63, 2
      %p478 = scmp.gt.s32.totalorder %s477, 0
      %s479 = scalar_select %p478, %s477, 0
      %s480 = ssub.s32 %s476, %s479
      %p481 = scmp.eq.s32.totalorder %s480, 0
      %s483 = sadd.s32 %s482, 1
      %s484 = scalar_select %p481, %s482, %s483
      %p487 = pneg %p481
      %p488 = scmp.eq.s32.totalorder %s56, 3
      %p489 = por %p487, %p488
      %p490 = scmp.ne.s32.totalorder %s482, %s485
      %p491 = scmp.eq.s32.totalorder %s56, 0
      %p492 = por %p490, %p491
      %p493 = scmp.ne.s32.totalorder %s482, %s485
      %p494 = scmp.eq.s32.totalorder %s61, 3
      %p495 = por %p493, %p494
      %p496 = scmp.ne.s32.totalorder %s485, %s486
      %p497 = scmp.eq.s32.totalorder %s61, 0
      %p498 = por %p496, %p497
      %p499 = scmp.ne.s32.totalorder %s485, %s486
      %p500 = scmp.eq.s32.totalorder %s62, 3
      %p501 = por %p499, %p500
      %p503 = scmp.ne.s32.totalorder %s486, %s502
      %p504 = scmp.eq.s32.totalorder %s62, 0
      %p505 = por %p503, %p504
      %s506 = ssub.s32 %s56, 2
      %p507 = scmp.gt.s32.totalorder %s506, 0
      %s508 = scalar_select %p507, %s506, 0
      %s509 = ssub.s32 %s63, 2
      %p510 = scmp.gt.s32.totalorder %s509, 0
      %s511 = scalar_select %p510, %s509, 0
      %s512 = ssub.s32 %s508, %s511
      %p513 = scmp.eq.s32.totalorder %s512, 0
      %s515 = sadd.s32 %s514, 1
      %s516 = scalar_select %p513, %s514, %s515
      %p519 = pneg %p513
      %p520 = scmp.eq.s32.totalorder %s56, 3
      %p521 = por %p519, %p520
      %p522 = scmp.ne.s32.totalorder %s514, %s517
      %p523 = scmp.eq.s32.totalorder %s56, 0
      %p524 = por %p522, %p523
      %p525 = scmp.ne.s32.totalorder %s514, %s517
      %p526 = scmp.eq.s32.totalorder %s61, 3
      %p527 = por %p525, %p526
      %p528 = scmp.ne.s32.totalorder %s517, %s518
      %p529 = scmp.eq.s32.totalorder %s61, 0
      %p530 = por %p528, %p529
      %p531 = scmp.ne.s32.totalorder %s517, %s518
      %p532 = scmp.eq.s32.totalorder %s62, 3
      %p533 = por %p531, %p532
      %p535 = scmp.ne.s32.totalorder %s518, %s534
      %p536 = scmp.eq.s32.totalorder %s62, 0
      %p537 = por %p535, %p536
      %s538 = ssub.s32 %s56, 2
      %p539 = scmp.gt.s32.totalorder %s538, 0
      %s540 = scalar_select %p539, %s538, 0
      %s541 = ssub.s32 %s63, 2
      %p542 = scmp.gt.s32.totalorder %s541, 0
      %s543 = scalar_select %p542, %s541, 0
      %s544 = ssub.s32 %s540, %s543
      %p545 = scmp.eq.s32.totalorder %s544, 0
      %s547 = sadd.s32 %s546, 1
      %s548 = scalar_select %p545, %s546, %s547
      %p551 = pneg %p545
      %p552 = scmp.eq.s32.totalorder %s56, 3
      %p553 = por %p551, %p552
      %p554 = scmp.ne.s32.totalorder %s546, %s549
      %p555 = scmp.eq.s32.totalorder %s56, 0
      %p556 = por %p554, %p555
      %p557 = scmp.ne.s32.totalorder %s546, %s549
      %p558 = scmp.eq.s32.totalorder %s61, 3
      %p559 = por %p557, %p558
      %p560 = scmp.ne.s32.totalorder %s549, %s550
      %p561 = scmp.eq.s32.totalorder %s61, 0
      %p562 = por %p560, %p561
      %p563 = scmp.ne.s32.totalorder %s549, %s550
      %p564 = scmp.eq.s32.totalorder %s62, 3
      %p565 = por %p563, %p564
      %p567 = scmp.ne.s32.totalorder %s550, %s566
      %p568 = scmp.eq.s32.totalorder %s62, 0
      %p569 = por %p567, %p568
      %s570 = ssub.s32 %s56, 2
      %p571 = scmp.gt.s32.totalorder %s570, 0
      %s572 = scalar_select %p571, %s570, 0
      %s573 = ssub.s32 %s63, 2
      %p574 = scmp.gt.s32.totalorder %s573, 0
      %s575 = scalar_select %p574, %s573, 0
      %s576 = ssub.s32 %s572, %s575
      %p577 = scmp.eq.s32.totalorder %s576, 0
      %s579 = sadd.s32 %s578, 1
      %s580 = scalar_select %p577, %s578, %s579
      %p583 = pneg %p577
      %p584 = scmp.eq.s32.totalorder %s56, 3
      %p585 = por %p583, %p584
      %p586 = scmp.ne.s32.totalorder %s578, %s581
      %p587 = scmp.eq.s32.totalorder %s56, 0
      %p588 = por %p586, %p587
      %p589 = scmp.ne.s32.totalorder %s578, %s581
      %p590 = scmp.eq.s32.totalorder %s61, 3
      %p591 = por %p589, %p590
      %p592 = scmp.ne.s32.totalorder %s581, %s582
      %p593 = scmp.eq.s32.totalorder %s61, 0
      %p594 = por %p592, %p593
      %p595 = scmp.ne.s32.totalorder %s581, %s582
      %p596 = scmp.eq.s32.totalorder %s62, 3
      %p597 = por %p595, %p596
      %p599 = scmp.ne.s32.totalorder %s582, %s598
      %p600 = scmp.eq.s32.totalorder %s62, 0
      %p601 = por %p599, %p600
      %s602 = ssub.s32 %s56, 2
      %p603 = scmp.gt.s32.totalorder %s602, 0
      %s604 = scalar_select %p603, %s602, 0
      %s605 = ssub.s32 %s63, 2
      %p606 = scmp.gt.s32.totalorder %s605, 0
      %s607 = scalar_select %p606, %s605, 0
      %s608 = ssub.s32 %s604, %s607
      %p609 = scmp.eq.s32.totalorder %s608, 0
      %s611 = sadd.s32 %s610, 1
      %s612 = scalar_select %p609, %s610, %s611
      %p615 = pneg %p609
      %p616 = scmp.eq.s32.totalorder %s56, 3
      %p617 = por %p615, %p616
      %p618 = scmp.ne.s32.totalorder %s610, %s613
      %p619 = scmp.eq.s32.totalorder %s56, 0
      %p620 = por %p618, %p619
      %p621 = scmp.ne.s32.totalorder %s610, %s613
      %p622 = scmp.eq.s32.totalorder %s61, 3
      %p623 = por %p621, %p622
      %p624 = scmp.ne.s32.totalorder %s613, %s614
      %p625 = scmp.eq.s32.totalorder %s61, 0
      %p626 = por %p624, %p625
      %p627 = scmp.ne.s32.totalorder %s613, %s614
      %p628 = scmp.eq.s32.totalorder %s62, 3
      %p629 = por %p627, %p628
      %p631 = scmp.ne.s32.totalorder %s614, %s630
      %p632 = scmp.eq.s32.totalorder %s62, 0
      %p633 = por %p631, %p632
      %s634 = ssub.s32 %s56, 2
      %p635 = scmp.gt.s32.totalorder %s634, 0
      %s636 = scalar_select %p635, %s634, 0
      %s637 = ssub.s32 %s63, 2
      %p638 = scmp.gt.s32.totalorder %s637, 0
      %s639 = scalar_select %p638, %s637, 0
      %s640 = ssub.s32 %s636, %s639
      %p641 = scmp.eq.s32.totalorder %s640, 0
      %s643 = sadd.s32 %s642, 1
      %s644 = scalar_select %p641, %s642, %s643
      %p647 = pneg %p641
      %p648 = scmp.eq.s32.totalorder %s56, 3
      %p649 = por %p647, %p648
      %p650 = scmp.ne.s32.totalorder %s642, %s645
      %p651 = scmp.eq.s32.totalorder %s56, 0
      %p652 = por %p650, %p651
      %p653 = scmp.ne.s32.totalorder %s642, %s645
      %p654 = scmp.eq.s32.totalorder %s61, 3
      %p655 = por %p653, %p654
      %p656 = scmp.ne.s32.totalorder %s645, %s646
      %p657 = scmp.eq.s32.totalorder %s61, 0
      %p658 = por %p656, %p657
      %p659 = scmp.ne.s32.totalorder %s645, %s646
      %p660 = scmp.eq.s32.totalorder %s62, 3
      %p661 = por %p659, %p660
      %p663 = scmp.ne.s32.totalorder %s646, %s662
      %p664 = scmp.eq.s32.totalorder %s62, 0
      %p665 = por %p663, %p664
      %s666 = ssub.s32 %s56, 2
      %p667 = scmp.gt.s32.totalorder %s666, 0
      %s668 = scalar_select %p667, %s666, 0
      %s669 = ssub.s32 %s63, 2
      %p670 = scmp.gt.s32.totalorder %s669, 0
      %s671 = scalar_select %p670, %s669, 0
      %s672 = ssub.s32 %s668, %s671
      %p673 = scmp.eq.s32.totalorder %s672, 0
      %s675 = sadd.s32 %s674, 1
      %s676 = scalar_select %p673, %s674, %s675
      %p679 = pneg %p673
      %p680 = scmp.eq.s32.totalorder %s56, 3
      %p681 = por %p679, %p680
      %p682 = scmp.ne.s32.totalorder %s674, %s677
      %p683 = scmp.eq.s32.totalorder %s56, 0
      %p684 = por %p682, %p683
      %p685 = scmp.ne.s32.totalorder %s674, %s677
      %p686 = scmp.eq.s32.totalorder %s61, 3
      %p687 = por %p685, %p686
      %p688 = scmp.ne.s32.totalorder %s677, %s678
      %p689 = scmp.eq.s32.totalorder %s61, 0
      %p690 = por %p688, %p689
      %p691 = scmp.ne.s32.totalorder %s677, %s678
      %p692 = scmp.eq.s32.totalorder %s62, 3
      %p693 = por %p691, %p692
      %p695 = scmp.ne.s32.totalorder %s678, %s694
      %p696 = scmp.eq.s32.totalorder %s62, 0
      %p697 = por %p695, %p696
      %s698 = ssub.s32 %s56, 2
      %p699 = scmp.gt.s32.totalorder %s698, 0
      %s700 = scalar_select %p699, %s698, 0
      %s701 = ssub.s32 %s63, 2
      %p702 = scmp.gt.s32.totalorder %s701, 0
      %s703 = scalar_select %p702, %s701, 0
      %s704 = ssub.s32 %s700, %s703
      %p705 = scmp.eq.s32.totalorder %s704, 0
      %s707 = sadd.s32 %s706, 1
      %s708 = scalar_select %p705, %s706, %s707
      %p711 = pneg %p705
      %p712 = scmp.eq.s32.totalorder %s56, 3
      %p713 = por %p711, %p712
      %p714 = scmp.ne.s32.totalorder %s706, %s709
      %p715 = scmp.eq.s32.totalorder %s56, 0
      %p716 = por %p714, %p715
      %p717 = scmp.ne.s32.totalorder %s706, %s709
      %p718 = scmp.eq.s32.totalorder %s61, 3
      %p719 = por %p717, %p718
      %p720 = scmp.ne.s32.totalorder %s709, %s710
      %p721 = scmp.eq.s32.totalorder %s61, 0
      %p722 = por %p720, %p721
      %p723 = scmp.ne.s32.totalorder %s709, %s710
      %p724 = scmp.eq.s32.totalorder %s62, 3
      %p725 = por %p723, %p724
      %p727 = scmp.ne.s32.totalorder %s710, %s726
      %p728 = scmp.eq.s32.totalorder %s62, 0
      %p729 = por %p727, %p728
      %s731 = sadd.s32 %s730, 1
      %p734 = scmp.eq.s32.totalorder %s56, 3
      %p735 = scmp.ne.s32.totalorder %s730, %s732
      %p736 = scmp.eq.s32.totalorder %s56, 0
      %p737 = por %p735, %p736
      %p738 = scmp.ne.s32.totalorder %s730, %s732
      %p739 = scmp.eq.s32.totalorder %s61, 3
      %p740 = por %p738, %p739
      %p741 = scmp.ne.s32.totalorder %s732, %s733
      %p742 = scmp.eq.s32.totalorder %s61, 0
      %p743 = por %p741, %p742
      %p744 = scmp.ne.s32.totalorder %s732, %s733
      %p745 = scmp.eq.s32.totalorder %s62, 3
      %p746 = por %p744, %p745
      %p748 = scmp.ne.s32.totalorder %s733, %s747
      %p749 = scmp.eq.s32.totalorder %s62, 0
      %p750 = por %p748, %p749
      %p751 = scmp.le.s32.totalorder 1, %s56
      %p752 = scmp.lt.s32.totalorder %s56, 5
      %p753 = pnand %p751, %p752
      %p754 = pneg %p753
      // Predicated region
      $region9: #{transformer_forward.1} parent=5 // pred_check
        _
      $region10: #{transformer_forward.1} parent=5 // pred_check_branch
        %756 = sbr.rel (%p753) target = $region12
      $region11: #{transformer_forward.1} parent=5 // pred_region
        %s757 = ssub.s32 %s56, 1
        // Predicated region
        $region13: #{transformer_forward.1} parent=11 // pred_check
          %p758 = pneg %p77
        $region14: #{transformer_forward.1} parent=11 // pred_check_branch
          %760 = sbr.rel (%p758) target = $region16
        $region15: #{transformer_forward.1} parent=11 // pred_region
          _
        $region16: #{transformer_forward.1} parent=11 // pred_fallthru
          _
        // Predicated region
        $region17: #{transformer_forward.1} parent=11 // pred_check
          %p761 = pneg %p98
        $region18: #{transformer_forward.1} parent=11 // pred_check_branch
          %763 = sbr.rel (%p761) target = $region20
        $region19: #{transformer_forward.1} parent=11 // pred_region
          _
        $region20: #{transformer_forward.1} parent=11 // pred_fallthru
          _
      $region12: #{transformer_forward.1} parent=5 // pred_fallthru
        _
      %p764 = scmp.lt.s32.totalorder %s56, 4
      // Predicated region
      $region21: #{transformer_forward.1} parent=5 // pred_check
        %p765 = pneg %p764
      $region22: #{transformer_forward.1} parent=5 // pred_check_branch
        %767 = sbr.rel (%p765) target = $region24
      $region23: #{transformer_forward.1} parent=5 // pred_region
        // Predicated region
        $region25: #{transformer_forward.1} parent=23 // pred_check
          %p768 = pneg %p122
        $region26: #{transformer_forward.1} parent=23 // pred_check_branch
          %770 = sbr.rel (%p768) target = $region28
        $region27: #{transformer_forward.1} parent=23 // pred_region
          %p771 = scmp.lt.s32.totalorder %s56, 1
          %s772 = scalar_select %p771, %s56, 1
          %p773 = scmp.lt.s32.totalorder %s772, 1
          %s774 = scalar_select %p773, %s772, 1
          %s775 = smul.addr %s774, 16
          %s776 = smul.addr %s775, 8
          %s777 = scalar_lea.vmem %s2, %s776
          %p778 = scmp.lt.s32.totalorder %s56, 1
          %s779 = scalar_select %p778, %s56, 1
        $region28: #{transformer_forward.1} parent=23 // pred_fallthru
          _
        // Predicated region
        $region29: #{transformer_forward.1} parent=23 // pred_check
          %p780 = pneg %p152
        $region30: #{transformer_forward.1} parent=23 // pred_check_branch
          %782 = sbr.rel (%p780) target = $region32
        $region31: #{transformer_forward.1} parent=23 // pred_region
          %s783 = sand.u32 %s142, 1
          %s784 = scalar_lea.sflag [#allocation4], %s783
          %s785 = sand.u32 %s142, 1
          %s786 = smul.addr %s785, 128
          %s787 = scalar_lea.vmem [#allocation3], %s786
          %p788 = scmp.lt.s32.totalorder %s56, 1
          %s789 = scalar_select %p788, %s56, 1
          %s791 = ssub.s32 2048, 2048
          %792 = vsyncadd %s784, %s791
          %s793 = smul.addr %s789, 16
          %s794 = smul.addr %s793, 128
          %s795 = scalar_lea.hbm %s3, %s794
          %s796 = sshll.u32 %s787, 4
          %s797 = int_to_ptr.vmem [resolvable:$true] %s796
          %802 = dma.hbm_to_vmem [thread:$0]  %s795, 2048, %s797, %s784, 128, 128, 8
        $region32: #{transformer_forward.1} parent=23 // pred_fallthru
          _
        // Predicated region
        $region33: #{transformer_forward.1} parent=23 // pred_check
          %p803 = pneg %p182
        $region34: #{transformer_forward.1} parent=23 // pred_check_branch
          %805 = sbr.rel (%p803) target = $region36
        $region35: #{transformer_forward.1} parent=23 // pred_region
          %s806 = sand.u32 %s56, 1
          %s807 = scalar_lea.sflag [#allocation7], %s806
          %s808 = sand.u32 %s172, 1
          %s809 = smul.addr %s808, 128
          %s810 = scalar_lea.vmem [#allocation6], %s809
          %p811 = scmp.lt.s32.totalorder %s56, 1
          %s812 = scalar_select %p811, %s56, 1
          %s814 = ssub.s32 2048, 2048
          %815 = vsyncadd %s807, %s814
          %s816 = smul.addr %s812, 16
          %s817 = smul.addr %s816, 128
          %s818 = scalar_lea.hbm %s4, %s817
          %s819 = sshll.u32 %s810, 4
          %s820 = int_to_ptr.vmem [resolvable:$true] %s819
          %825 = dma.hbm_to_vmem [thread:$0]  %s818, 2048, %s820, %s807, 128, 128, 8
        $region36: #{transformer_forward.1} parent=23 // pred_fallthru
          _
        // Predicated region
        $region37: #{transformer_forward.1} parent=23 // pred_check
          %p826 = pneg %p212
        $region38: #{transformer_forward.1} parent=23 // pred_check_branch
          %828 = sbr.rel (%p826) target = $region40
        $region39: #{transformer_forward.1} parent=23 // pred_region
          %s829 = sand.u32 %s56, 1
          %s830 = scalar_lea.sflag [#allocation7], %s829
          %s831 = sand.u32 %s202, 1
          %s832 = smul.addr %s831, 128
          %s833 = scalar_lea.vmem [#allocation8], %s832
          %p834 = scmp.lt.s32.totalorder %s56, 1
          %s835 = scalar_select %p834, %s56, 1
          %s837 = ssub.s32 2048, 2048
          %838 = vsyncadd %s830, %s837
          %s839 = smul.addr %s835, 16
          %s840 = smul.addr %s839, 128
          %s841 = scalar_lea.hbm %s5, %s840
          %s842 = sshll.u32 %s833, 4
          %s843 = int_to_ptr.vmem [resolvable:$true] %s842
          %848 = dma.hbm_to_vmem [thread:$0]  %s841, 2048, %s843, %s830, 128, 128, 8
        $region40: #{transformer_forward.1} parent=23 // pred_fallthru
          _
        // Predicated region
        $region41: #{transformer_forward.1} parent=23 // pred_check
          %p849 = pneg %p242
        $region42: #{transformer_forward.1} parent=23 // pred_check_branch
          %851 = sbr.rel (%p849) target = $region44
        $region43: #{transformer_forward.1} parent=23 // pred_region
          %p852 = scmp.lt.s32.totalorder %s56, 1
          %s853 = scalar_select %p852, %s56, 1
          %p854 = scmp.lt.s32.totalorder %s853, 1
          %s855 = scalar_select %p854, %s853, 1
          %s856 = smul.addr %s855, 32
          %s857 = smul.addr %s856, 8
          %s858 = scalar_lea.vmem %s6, %s857
          %p859 = scmp.lt.s32.totalorder %s56, 1
          %s860 = scalar_select %p859, %s56, 1
        $region44: #{transformer_forward.1} parent=23 // pred_fallthru
          _
        // Predicated region
        $region45: #{transformer_forward.1} parent=23 // pred_check
          %p861 = pneg %p272
        $region46: #{transformer_forward.1} parent=23 // pred_check_branch
          %863 = sbr.rel (%p861) target = $region48
        $region47: #{transformer_forward.1} parent=23 // pred_region
          %p864 = scmp.lt.s32.totalorder %s56, 1
          %s865 = scalar_select %p864, %s56, 1
          %p866 = scmp.lt.s32.totalorder %s865, 1
          %s867 = scalar_select %p866, %s865, 1
          %s868 = smul.addr %s867, 2
          %s869 = smul.addr %s868, 8
          %s870 = scalar_lea.vmem %s7, %s869
          %p871 = scmp.lt.s32.totalorder %s56, 1
          %s872 = scalar_select %p871, %s56, 1
        $region48: #{transformer_forward.1} parent=23 // pred_fallthru
          _
        // Predicated region
        $region49: #{transformer_forward.1} parent=23 // pred_check
          %p873 = pneg %p302
        $region50: #{transformer_forward.1} parent=23 // pred_check_branch
          %875 = sbr.rel (%p873) target = $region52
        $region51: #{transformer_forward.1} parent=23 // pred_region
          %s876 = sand.u32 %s56, 1
          %s877 = scalar_lea.sflag [#allocation10], %s876
          %s878 = sand.u32 %s292, 1
          %s879 = smul.addr %s878, 256
          %s880 = scalar_lea.vmem [#allocation9], %s879
          %p881 = scmp.lt.s32.totalorder %s56, 1
          %s882 = scalar_select %p881, %s56, 1
          %s884 = ssub.s32 4096, 4096
          %885 = vsyncadd %s877, %s884
          %s886 = smul.addr %s882, 32
          %s887 = smul.addr %s886, 128
          %s888 = scalar_lea.hbm %s8, %s887
          %s889 = sshll.u32 %s880, 4
          %s890 = int_to_ptr.vmem [resolvable:$true] %s889
          %895 = dma.hbm_to_vmem [thread:$0]  %s888, 4096, %s890, %s877, 128, 128, 8
        $region52: #{transformer_forward.1} parent=23 // pred_fallthru
          _
        // Predicated region
        $region53: #{transformer_forward.1} parent=23 // pred_check
          %p896 = pneg %p332
        $region54: #{transformer_forward.1} parent=23 // pred_check_branch
          %898 = sbr.rel (%p896) target = $region56
        $region55: #{transformer_forward.1} parent=23 // pred_region
          %s899 = sand.u32 %s56, 1
          %s900 = scalar_lea.sflag [#allocation10], %s899
          %s901 = sand.u32 %s322, 1
          %s902 = smul.addr %s901, 8
          %s903 = scalar_lea.vmem [#allocation11], %s902
          %p904 = scmp.lt.s32.totalorder %s56, 1
          %s905 = scalar_select %p904, %s56, 1
          %s907 = ssub.s32 128, 128
          %908 = vsyncadd %s900, %s907
          %s909 = smul.addr %s905, 128
          %s910 = scalar_lea.hbm %s9, %s909
          %s912 = sshll.u32 %s903, 4
          %s913 = int_to_ptr.vmem [resolvable:$true] %s912
          %915 = dma.hbm_to_vmem [thread:$0]  %s910, 128, %s913, %s900
        $region56: #{transformer_forward.1} parent=23 // pred_fallthru
          _
        // Predicated region
        $region57: #{transformer_forward.1} parent=23 // pred_check
          %p916 = pneg %p364
        $region58: #{transformer_forward.1} parent=23 // pred_check_branch
          %918 = sbr.rel (%p916) target = $region60
        $region59: #{transformer_forward.1} parent=23 // pred_region
          %s919 = sand.u32 %s56, 1
          %s920 = scalar_lea.sflag [#allocation13], %s919
          %s921 = sand.u32 %s354, 1
          %s922 = smul.addr %s921, 128
          %s923 = scalar_lea.vmem [#allocation12], %s922
          %s924 = ssub.s32 %s56, 2
          %p925 = scmp.gt.s32.totalorder %s924, 0
          %s926 = scalar_select %p925, %s924, 0
          %s928 = ssub.s32 2048, 2048
          %929 = vsyncadd %s920, %s928
          %s930 = smul.addr %s926, 16
          %s931 = smul.addr %s930, 128
          %s932 = scalar_lea.hbm %s10, %s931
          %s933 = sshll.u32 %s923, 4
          %s934 = int_to_ptr.vmem [resolvable:$true] %s933
          %939 = dma.hbm_to_vmem [thread:$0]  %s932, 2048, %s934, %s920, 128, 128, 8
        $region60: #{transformer_forward.1} parent=23 // pred_fallthru
          _
        // Predicated region
        $region61: #{transformer_forward.1} parent=23 // pred_check
          %p940 = pneg %p396
        $region62: #{transformer_forward.1} parent=23 // pred_check_branch
          %942 = sbr.rel (%p940) target = $region64
        $region63: #{transformer_forward.1} parent=23 // pred_region
          %s943 = sand.u32 %s56, 1
          %s944 = scalar_lea.sflag [#allocation13], %s943
          %s945 = sand.u32 %s386, 1
          %s946 = smul.addr %s945, 128
          %s947 = scalar_lea.vmem [#allocation14], %s946
          %s948 = ssub.s32 %s56, 2
          %p949 = scmp.gt.s32.totalorder %s948, 0
          %s950 = scalar_select %p949, %s948, 0
          %s952 = ssub.s32 2048, 2048
          %953 = vsyncadd %s944, %s952
          %s954 = smul.addr %s950, 16
          %s955 = smul.addr %s954, 128
          %s956 = scalar_lea.hbm %s11, %s955
          %s957 = sshll.u32 %s947, 4
          %s958 = int_to_ptr.vmem [resolvable:$true] %s957
          %963 = dma.hbm_to_vmem [thread:$0]  %s956, 2048, %s958, %s944, 128, 128, 8
        $region64: #{transformer_forward.1} parent=23 // pred_fallthru
          _
        // Predicated region
        $region65: #{transformer_forward.1} parent=23 // pred_check
          %p964 = pneg %p428
        $region66: #{transformer_forward.1} parent=23 // pred_check_branch
          %966 = sbr.rel (%p964) target = $region68
        $region67: #{transformer_forward.1} parent=23 // pred_region
          %s967 = sand.u32 %s56, 1
          %s968 = scalar_lea.sflag [#allocation16], %s967
          %s969 = sand.u32 %s418, 1
          %s970 = smul.addr %s969, 128
          %s971 = scalar_lea.vmem [#allocation15], %s970
          %s972 = ssub.s32 %s56, 2
          %p973 = scmp.gt.s32.totalorder %s972, 0
          %s974 = scalar_select %p973, %s972, 0
          %s976 = ssub.s32 2048, 2048
          %977 = vsyncadd %s968, %s976
          %s978 = smul.addr %s974, 16
          %s979 = smul.addr %s978, 128
          %s980 = scalar_lea.hbm %s12, %s979
          %s981 = sshll.u32 %s971, 4
          %s982 = int_to_ptr.vmem [resolvable:$true] %s981
          %987 = dma.hbm_to_vmem [thread:$0]  %s980, 2048, %s982, %s968, 128, 128, 8
        $region68: #{transformer_forward.1} parent=23 // pred_fallthru
          _
        // Predicated region
        $region69: #{transformer_forward.1} parent=23 // pred_check
          %p988 = pneg %p460
        $region70: #{transformer_forward.1} parent=23 // pred_check_branch
          %990 = sbr.rel (%p988) target = $region72
        $region71: #{transformer_forward.1} parent=23 // pred_region
          %s991 = sand.u32 %s56, 1
          %s992 = scalar_lea.sflag [#allocation16], %s991
          %s993 = sand.u32 %s450, 1
          %s994 = smul.addr %s993, 128
          %s995 = scalar_lea.vmem [#allocation17], %s994
          %s996 = ssub.s32 %s56, 2
          %p997 = scmp.gt.s32.totalorder %s996, 0
          %s998 = scalar_select %p997, %s996, 0
          %s1000 = ssub.s32 2048, 2048
          %1001 = vsyncadd %s992, %s1000
          %s1002 = smul.addr %s998, 16
          %s1003 = smul.addr %s1002, 128
          %s1004 = scalar_lea.hbm %s13, %s1003
          %s1005 = sshll.u32 %s995, 4
          %s1006 = int_to_ptr.vmem [resolvable:$true] %s1005
          %1011 = dma.hbm_to_vmem [thread:$0]  %s1004, 2048, %s1006, %s992, 128, 128, 8
        $region72: #{transformer_forward.1} parent=23 // pred_fallthru
          _
        // Predicated region
        $region73: #{transformer_forward.1} parent=23 // pred_check
          %p1012 = pneg %p492
        $region74: #{transformer_forward.1} parent=23 // pred_check_branch
          %1014 = sbr.rel (%p1012) target = $region76
        $region75: #{transformer_forward.1} parent=23 // pred_region
          %s1015 = sand.u32 %s56, 1
          %s1016 = scalar_lea.sflag [#allocation19], %s1015
          %s1017 = sand.u32 %s482, 1
          %s1018 = smul.addr %s1017, 128
          %s1019 = scalar_lea.vmem [#allocation18], %s1018
          %s1020 = ssub.s32 %s56, 2
          %p1021 = scmp.gt.s32.totalorder %s1020, 0
          %s1022 = scalar_select %p1021, %s1020, 0
          %s1024 = ssub.s32 2048, 2048
          %1025 = vsyncadd %s1016, %s1024
          %s1026 = smul.addr %s1022, 16
          %s1027 = smul.addr %s1026, 128
          %s1028 = scalar_lea.hbm %s14, %s1027
          %s1029 = sshll.u32 %s1019, 4
          %s1030 = int_to_ptr.vmem [resolvable:$true] %s1029
          %1035 = dma.hbm_to_vmem [thread:$0]  %s1028, 2048, %s1030, %s1016, 128, 128, 8
        $region76: #{transformer_forward.1} parent=23 // pred_fallthru
          _
        // Predicated region
        $region77: #{transformer_forward.1} parent=23 // pred_check
          %p1036 = pneg %p524
        $region78: #{transformer_forward.1} parent=23 // pred_check_branch
          %1038 = sbr.rel (%p1036) target = $region80
        $region79: #{transformer_forward.1} parent=23 // pred_region
          %s1039 = sand.u32 %s56, 1
          %s1040 = scalar_lea.sflag [#allocation19], %s1039
          %s1041 = sand.u32 %s514, 1
          %s1042 = smul.addr %s1041, 128
          %s1043 = scalar_lea.vmem [#allocation20], %s1042
          %s1044 = ssub.s32 %s56, 2
          %p1045 = scmp.gt.s32.totalorder %s1044, 0
          %s1046 = scalar_select %p1045, %s1044, 0
          %s1048 = ssub.s32 2048, 2048
          %1049 = vsyncadd %s1040, %s1048
          %s1050 = smul.addr %s1046, 16
          %s1051 = smul.addr %s1050, 128
          %s1052 = scalar_lea.hbm %s15, %s1051
          %s1053 = sshll.u32 %s1043, 4
          %s1054 = int_to_ptr.vmem [resolvable:$true] %s1053
          %1059 = dma.hbm_to_vmem [thread:$0]  %s1052, 2048, %s1054, %s1040, 128, 128, 8
        $region80: #{transformer_forward.1} parent=23 // pred_fallthru
          _
        // Predicated region
        $region81: #{transformer_forward.1} parent=23 // pred_check
          %p1060 = pneg %p556
        $region82: #{transformer_forward.1} parent=23 // pred_check_branch
          %1062 = sbr.rel (%p1060) target = $region84
        $region83: #{transformer_forward.1} parent=23 // pred_region
          %s1063 = sand.u32 %s56, 1
          %s1064 = scalar_lea.sflag [#allocation22], %s1063
          %s1065 = sand.u32 %s546, 1
          %s1066 = smul.addr %s1065, 128
          %s1067 = scalar_lea.vmem [#allocation21], %s1066
          %s1068 = ssub.s32 %s56, 2
          %p1069 = scmp.gt.s32.totalorder %s1068, 0
          %s1070 = scalar_select %p1069, %s1068, 0
          %s1072 = ssub.s32 2048, 2048
          %1073 = vsyncadd %s1064, %s1072
          %s1074 = smul.addr %s1070, 16
          %s1075 = smul.addr %s1074, 128
          %s1076 = scalar_lea.hbm %s16, %s1075
          %s1077 = sshll.u32 %s1067, 4
          %s1078 = int_to_ptr.vmem [resolvable:$true] %s1077
          %1083 = dma.hbm_to_vmem [thread:$0]  %s1076, 2048, %s1078, %s1064, 128, 128, 8
        $region84: #{transformer_forward.1} parent=23 // pred_fallthru
          _
        // Predicated region
        $region85: #{transformer_forward.1} parent=23 // pred_check
          %p1084 = pneg %p588
        $region86: #{transformer_forward.1} parent=23 // pred_check_branch
          %1086 = sbr.rel (%p1084) target = $region88
        $region87: #{transformer_forward.1} parent=23 // pred_region
          %s1087 = sand.u32 %s56, 1
          %s1088 = scalar_lea.sflag [#allocation22], %s1087
          %s1089 = sand.u32 %s578, 1
          %s1090 = smul.addr %s1089, 128
          %s1091 = scalar_lea.vmem [#allocation23], %s1090
          %s1092 = ssub.s32 %s56, 2
          %p1093 = scmp.gt.s32.totalorder %s1092, 0
          %s1094 = scalar_select %p1093, %s1092, 0
          %s1096 = ssub.s32 2048, 2048
          %1097 = vsyncadd %s1088, %s1096
          %s1098 = smul.addr %s1094, 16
          %s1099 = smul.addr %s1098, 128
          %s1100 = scalar_lea.hbm %s17, %s1099
          %s1101 = sshll.u32 %s1091, 4
          %s1102 = int_to_ptr.vmem [resolvable:$true] %s1101
          %1107 = dma.hbm_to_vmem [thread:$0]  %s1100, 2048, %s1102, %s1088, 128, 128, 8
        $region88: #{transformer_forward.1} parent=23 // pred_fallthru
          _
        // Predicated region
        $region89: #{transformer_forward.1} parent=23 // pred_check
          %p1108 = pneg %p620
        $region90: #{transformer_forward.1} parent=23 // pred_check_branch
          %1110 = sbr.rel (%p1108) target = $region92
        $region91: #{transformer_forward.1} parent=23 // pred_region
          %s1111 = sand.u32 %s56, 1
          %s1112 = scalar_lea.sflag [#allocation25], %s1111
          %s1113 = sand.u32 %s610, 1
          %s1114 = smul.addr %s1113, 256
          %s1115 = scalar_lea.vmem [#allocation24], %s1114
          %s1116 = ssub.s32 %s56, 2
          %p1117 = scmp.gt.s32.totalorder %s1116, 0
          %s1118 = scalar_select %p1117, %s1116, 0
          %s1120 = ssub.s32 4096, 4096
          %1121 = vsyncadd %s1112, %s1120
          %s1122 = smul.addr %s1118, 32
          %s1123 = smul.addr %s1122, 128
          %s1124 = scalar_lea.hbm %s18, %s1123
          %s1125 = sshll.u32 %s1115, 4
          %s1126 = int_to_ptr.vmem [resolvable:$true] %s1125
          %1131 = dma.hbm_to_vmem [thread:$0]  %s1124, 4096, %s1126, %s1112, 256, 256, 16
        $region92: #{transformer_forward.1} parent=23 // pred_fallthru
          _
        // Predicated region
        $region93: #{transformer_forward.1} parent=23 // pred_check
          %p1132 = pneg %p652
        $region94: #{transformer_forward.1} parent=23 // pred_check_branch
          %1134 = sbr.rel (%p1132) target = $region96
        $region95: #{transformer_forward.1} parent=23 // pred_region
          %s1135 = ssub.s32 %s56, 2
          %p1136 = scmp.gt.s32.totalorder %s1135, 0
          %s1137 = scalar_select %p1136, %s1135, 0
          %p1138 = scmp.lt.s32.totalorder %s1137, 1
          %s1139 = scalar_select %p1138, %s1137, 1
          %s1140 = smul.addr %s1139, 2
          %s1141 = smul.addr %s1140, 8
          %s1142 = scalar_lea.vmem %s19, %s1141
          %s1143 = ssub.s32 %s56, 2
          %p1144 = scmp.gt.s32.totalorder %s1143, 0
          %s1145 = scalar_select %p1144, %s1143, 0
        $region96: #{transformer_forward.1} parent=23 // pred_fallthru
          _
        // Predicated region
        $region97: #{transformer_forward.1} parent=23 // pred_check
          %p1146 = pneg %p684
        $region98: #{transformer_forward.1} parent=23 // pred_check_branch
          %1148 = sbr.rel (%p1146) target = $region100
        $region99: #{transformer_forward.1} parent=23 // pred_region
          %s1149 = sand.u32 %s56, 1
          %s1150 = scalar_lea.sflag [#allocation25], %s1149
          %s1151 = sand.u32 %s674, 1
          %s1152 = smul.addr %s1151, 256
          %s1153 = scalar_lea.vmem [#allocation26], %s1152
          %s1154 = ssub.s32 %s56, 2
          %p1155 = scmp.gt.s32.totalorder %s1154, 0
          %s1156 = scalar_select %p1155, %s1154, 0
          %s1158 = ssub.s32 4096, 4096
          %1159 = vsyncadd %s1150, %s1158
          %s1160 = smul.addr %s1156, 32
          %s1161 = smul.addr %s1160, 128
          %s1162 = scalar_lea.hbm %s20, %s1161
          %s1163 = sshll.u32 %s1153, 4
          %s1164 = int_to_ptr.vmem [resolvable:$true] %s1163
          %1169 = dma.hbm_to_vmem [thread:$0]  %s1162, 4096, %s1164, %s1150, 128, 128, 8
        $region100: #{transformer_forward.1} parent=23 // pred_fallthru
          _
        // Predicated region
        $region101: #{transformer_forward.1} parent=23 // pred_check
          %p1170 = pneg %p716
        $region102: #{transformer_forward.1} parent=23 // pred_check_branch
          %1172 = sbr.rel (%p1170) target = $region104
        $region103: #{transformer_forward.1} parent=23 // pred_region
          %s1173 = sand.u32 %s706, 1
          %s1174 = scalar_lea.sflag [#allocation28], %s1173
          %s1175 = sand.u32 %s706, 1
          %s1176 = smul.addr %s1175, 8
          %s1177 = scalar_lea.vmem [#allocation27], %s1176
          %s1178 = ssub.s32 %s56, 2
          %p1179 = scmp.gt.s32.totalorder %s1178, 0
          %s1180 = scalar_select %p1179, %s1178, 0
          %s1182 = ssub.s32 128, 128
          %1183 = vsyncadd %s1174, %s1182
          %s1184 = smul.addr %s1180, 128
          %s1185 = scalar_lea.hbm %s21, %s1184
          %s1187 = sshll.u32 %s1177, 4
          %s1188 = int_to_ptr.vmem [resolvable:$true] %s1187
          %1190 = dma.hbm_to_vmem [thread:$0]  %s1185, 128, %s1188, %s1174
        $region104: #{transformer_forward.1} parent=23 // pred_fallthru
          _
      $region24: #{transformer_forward.1} parent=5 // pred_fallthru
        _
      %p1191 = scmp.le.s32.totalorder 1, %s56
      %p1192 = scmp.lt.s32.totalorder %s56, 5
      %p1193 = pnand %p1191, %p1192
      %p1194 = pneg %p1193
      // Predicated region
      $region105: #{transformer_forward.1} parent=5 // pred_check
        _
      $region106: #{transformer_forward.1} parent=5 // pred_check_branch
        %1196 = sbr.rel (%p1193) target = $region108
      $region107: #{transformer_forward.1} parent=5 // pred_region
        %s1197 = ssub.s32 %s56, 1
        %s1198 = sand.u32 %s145, 1
        %s1199 = scalar_lea.sflag [#allocation4], %s1198
        %s1200 = sand.u32 %s145, 1
        %s1201 = smul.addr %s1200, 128
        %s1202 = scalar_lea.vmem [#allocation3], %s1201
        // Predicated region
        $region109: #{transformer_forward.1} parent=107 // pred_check
          %p1203 = pneg %p158
        $region110: #{transformer_forward.1} parent=107 // pred_check_branch
          %1205 = sbr.rel (%p1203) target = $region112
        $region111: #{transformer_forward.1} parent=107 // pred_region
          %1206 = dma.done %s1199, 2048
        $region112: #{transformer_forward.1} parent=107 // pred_fallthru
          _
        %s1207 = sand.u32 %s61, 1
        %s1208 = scalar_lea.sflag [#allocation7], %s1207
        %s1209 = sand.u32 %s175, 1
        %s1210 = smul.addr %s1209, 128
        %s1211 = scalar_lea.vmem [#allocation6], %s1210
        // Predicated region
        $region113: #{transformer_forward.1} parent=107 // pred_check
          %p1212 = pneg %p188
        $region114: #{transformer_forward.1} parent=107 // pred_check_branch
          %1214 = sbr.rel (%p1212) target = $region116
        $region115: #{transformer_forward.1} parent=107 // pred_region
          %1215 = dma.done %s1208, 2048
        $region116: #{transformer_forward.1} parent=107 // pred_fallthru
          _
        %s1216 = sand.u32 %s61, 1
        %s1217 = scalar_lea.sflag [#allocation7], %s1216
        %s1218 = sand.u32 %s205, 1
        %s1219 = smul.addr %s1218, 128
        %s1220 = scalar_lea.vmem [#allocation8], %s1219
        // Predicated region
        $region117: #{transformer_forward.1} parent=107 // pred_check
          %p1221 = pneg %p218
        $region118: #{transformer_forward.1} parent=107 // pred_check_branch
          %1223 = sbr.rel (%p1221) target = $region120
        $region119: #{transformer_forward.1} parent=107 // pred_region
          %1224 = dma.done %s1217, 2048
        $region120: #{transformer_forward.1} parent=107 // pred_fallthru
          _
        %s1225 = sand.u32 %s61, 1
        %s1226 = scalar_lea.sflag [#allocation10], %s1225
        %s1227 = sand.u32 %s295, 1
        %s1228 = smul.addr %s1227, 256
        %s1229 = scalar_lea.vmem [#allocation9], %s1228
        // Predicated region
        $region121: #{transformer_forward.1} parent=107 // pred_check
          %p1230 = pneg %p308
        $region122: #{transformer_forward.1} parent=107 // pred_check_branch
          %1232 = sbr.rel (%p1230) target = $region124
        $region123: #{transformer_forward.1} parent=107 // pred_region
          %1233 = dma.done %s1226, 4096
        $region124: #{transformer_forward.1} parent=107 // pred_fallthru
          _
        %s1234 = sand.u32 %s61, 1
        %s1235 = scalar_lea.sflag [#allocation10], %s1234
        %s1236 = sand.u32 %s325, 1
        %s1237 = smul.addr %s1236, 8
        %s1238 = scalar_lea.vmem [#allocation11], %s1237
        // Predicated region
        $region125: #{transformer_forward.1} parent=107 // pred_check
          %p1239 = pneg %p338
        $region126: #{transformer_forward.1} parent=107 // pred_check_branch
          %1241 = sbr.rel (%p1239) target = $region128
        $region127: #{transformer_forward.1} parent=107 // pred_region
          %1242 = dma.done %s1235, 128
        $region128: #{transformer_forward.1} parent=107 // pred_fallthru
          _
        %s1243 = sand.u32 %s61, 1
        %s1244 = scalar_lea.sflag [#allocation13], %s1243
        %s1245 = sand.u32 %s357, 1
        %s1246 = smul.addr %s1245, 128
        %s1247 = scalar_lea.vmem [#allocation12], %s1246
        // Predicated region
        $region129: #{transformer_forward.1} parent=107 // pred_check
          %p1248 = pneg %p370
        $region130: #{transformer_forward.1} parent=107 // pred_check_branch
          %1250 = sbr.rel (%p1248) target = $region132
        $region131: #{transformer_forward.1} parent=107 // pred_region
          %1251 = dma.done %s1244, 2048
        $region132: #{transformer_forward.1} parent=107 // pred_fallthru
          _
        %s1252 = sand.u32 %s61, 1
        %s1253 = scalar_lea.sflag [#allocation13], %s1252
        %s1254 = sand.u32 %s389, 1
        %s1255 = smul.addr %s1254, 128
        %s1256 = scalar_lea.vmem [#allocation14], %s1255
        // Predicated region
        $region133: #{transformer_forward.1} parent=107 // pred_check
          %p1257 = pneg %p402
        $region134: #{transformer_forward.1} parent=107 // pred_check_branch
          %1259 = sbr.rel (%p1257) target = $region136
        $region135: #{transformer_forward.1} parent=107 // pred_region
          %1260 = dma.done %s1253, 2048
        $region136: #{transformer_forward.1} parent=107 // pred_fallthru
          _
        %s1261 = sand.u32 %s61, 1
        %s1262 = scalar_lea.sflag [#allocation16], %s1261
        %s1263 = sand.u32 %s421, 1
        %s1264 = smul.addr %s1263, 128
        %s1265 = scalar_lea.vmem [#allocation15], %s1264
        // Predicated region
        $region137: #{transformer_forward.1} parent=107 // pred_check
          %p1266 = pneg %p434
        $region138: #{transformer_forward.1} parent=107 // pred_check_branch
          %1268 = sbr.rel (%p1266) target = $region140
        $region139: #{transformer_forward.1} parent=107 // pred_region
          %1269 = dma.done %s1262, 2048
        $region140: #{transformer_forward.1} parent=107 // pred_fallthru
          _
        %s1270 = sand.u32 %s61, 1
        %s1271 = scalar_lea.sflag [#allocation16], %s1270
        %s1272 = sand.u32 %s453, 1
        %s1273 = smul.addr %s1272, 128
        %s1274 = scalar_lea.vmem [#allocation17], %s1273
        // Predicated region
        $region141: #{transformer_forward.1} parent=107 // pred_check
          %p1275 = pneg %p466
        $region142: #{transformer_forward.1} parent=107 // pred_check_branch
          %1277 = sbr.rel (%p1275) target = $region144
        $region143: #{transformer_forward.1} parent=107 // pred_region
          %1278 = dma.done %s1271, 2048
        $region144: #{transformer_forward.1} parent=107 // pred_fallthru
          _
        %s1279 = sand.u32 %s61, 1
        %s1280 = scalar_lea.sflag [#allocation19], %s1279
        %s1281 = sand.u32 %s485, 1
        %s1282 = smul.addr %s1281, 128
        %s1283 = scalar_lea.vmem [#allocation18], %s1282
        // Predicated region
        $region145: #{transformer_forward.1} parent=107 // pred_check
          %p1284 = pneg %p498
        $region146: #{transformer_forward.1} parent=107 // pred_check_branch
          %1286 = sbr.rel (%p1284) target = $region148
        $region147: #{transformer_forward.1} parent=107 // pred_region
          %1287 = dma.done %s1280, 2048
        $region148: #{transformer_forward.1} parent=107 // pred_fallthru
          _
        %s1288 = sand.u32 %s61, 1
        %s1289 = scalar_lea.sflag [#allocation19], %s1288
        %s1290 = sand.u32 %s517, 1
        %s1291 = smul.addr %s1290, 128
        %s1292 = scalar_lea.vmem [#allocation20], %s1291
        // Predicated region
        $region149: #{transformer_forward.1} parent=107 // pred_check
          %p1293 = pneg %p530
        $region150: #{transformer_forward.1} parent=107 // pred_check_branch
          %1295 = sbr.rel (%p1293) target = $region152
        $region151: #{transformer_forward.1} parent=107 // pred_region
          %1296 = dma.done %s1289, 2048
        $region152: #{transformer_forward.1} parent=107 // pred_fallthru
          _
        %s1297 = sand.u32 %s61, 1
        %s1298 = scalar_lea.sflag [#allocation22], %s1297
        %s1299 = sand.u32 %s549, 1
        %s1300 = smul.addr %s1299, 128
        %s1301 = scalar_lea.vmem [#allocation21], %s1300
        // Predicated region
        $region153: #{transformer_forward.1} parent=107 // pred_check
          %p1302 = pneg %p562
        $region154: #{transformer_forward.1} parent=107 // pred_check_branch
          %1304 = sbr.rel (%p1302) target = $region156
        $region155: #{transformer_forward.1} parent=107 // pred_region
          %1305 = dma.done %s1298, 2048
        $region156: #{transformer_forward.1} parent=107 // pred_fallthru
          _
        %s1306 = sand.u32 %s61, 1
        %s1307 = scalar_lea.sflag [#allocation22], %s1306
        %s1308 = sand.u32 %s581, 1
        %s1309 = smul.addr %s1308, 128
        %s1310 = scalar_lea.vmem [#allocation23], %s1309
        // Predicated region
        $region157: #{transformer_forward.1} parent=107 // pred_check
          %p1311 = pneg %p594
        $region158: #{transformer_forward.1} parent=107 // pred_check_branch
          %1313 = sbr.rel (%p1311) target = $region160
        $region159: #{transformer_forward.1} parent=107 // pred_region
          %1314 = dma.done %s1307, 2048
        $region160: #{transformer_forward.1} parent=107 // pred_fallthru
          _
        %s1315 = sand.u32 %s61, 1
        %s1316 = scalar_lea.sflag [#allocation25], %s1315
        %s1317 = sand.u32 %s613, 1
        %s1318 = smul.addr %s1317, 256
        %s1319 = scalar_lea.vmem [#allocation24], %s1318
        // Predicated region
        $region161: #{transformer_forward.1} parent=107 // pred_check
          %p1320 = pneg %p626
        $region162: #{transformer_forward.1} parent=107 // pred_check_branch
          %1322 = sbr.rel (%p1320) target = $region164
        $region163: #{transformer_forward.1} parent=107 // pred_region
          %1323 = dma.done %s1316, 4096
        $region164: #{transformer_forward.1} parent=107 // pred_fallthru
          _
        %s1324 = sand.u32 %s61, 1
        %s1325 = scalar_lea.sflag [#allocation25], %s1324
        %s1326 = sand.u32 %s677, 1
        %s1327 = smul.addr %s1326, 256
        %s1328 = scalar_lea.vmem [#allocation26], %s1327
        // Predicated region
        $region165: #{transformer_forward.1} parent=107 // pred_check
          %p1329 = pneg %p690
        $region166: #{transformer_forward.1} parent=107 // pred_check_branch
          %1331 = sbr.rel (%p1329) target = $region168
        $region167: #{transformer_forward.1} parent=107 // pred_region
          %1332 = dma.done %s1325, 4096
        $region168: #{transformer_forward.1} parent=107 // pred_fallthru
          _
        %s1333 = sand.u32 %s709, 1
        %s1334 = scalar_lea.sflag [#allocation28], %s1333
        %s1335 = sand.u32 %s709, 1
        %s1336 = smul.addr %s1335, 8
        %s1337 = scalar_lea.vmem [#allocation27], %s1336
        // Predicated region
        $region169: #{transformer_forward.1} parent=107 // pred_check
          %p1338 = pneg %p722
        $region170: #{transformer_forward.1} parent=107 // pred_check_branch
          %1340 = sbr.rel (%p1338) target = $region172
        $region171: #{transformer_forward.1} parent=107 // pred_region
          %1341 = dma.done %s1334, 128
        $region172: #{transformer_forward.1} parent=107 // pred_fallthru
          _
        %p1342 = pneg %p77
        %p1343 = pneg %p74
        %p1344 = pneg %p98
        %p1345 = pneg %p95
        %p1346 = scmp.lt.s32.totalorder %s61, 1
        %s1347 = scalar_select %p1346, %s61, 1
        %p1348 = scmp.lt.s32.totalorder %s1347, 1
        %s1349 = scalar_select %p1348, %s1347, 1
        %s1350 = smul.addr %s1349, 16
        %s1351 = smul.addr %s1350, 8
        %s1352 = scalar_lea.vmem %s2, %s1351
        %p1353 = pneg %p128
        %p1354 = pneg %p125
        %s1355 = sand.u32 %s145, 1
        %s1356 = scalar_lea.sflag [#allocation4], %s1355
        %s1357 = sand.u32 %s145, 1
        %s1358 = smul.addr %s1357, 128
        %s1359 = scalar_lea.vmem [#allocation3], %s1358
        %p1360 = pneg %p158
        %p1361 = pneg %p155
        %s1362 = sand.u32 %s61, 1
        %s1363 = scalar_lea.sflag [#allocation7], %s1362
        %s1364 = sand.u32 %s175, 1
        %s1365 = smul.addr %s1364, 128
        %s1366 = scalar_lea.vmem [#allocation6], %s1365
        %p1367 = pneg %p188
        %p1368 = pneg %p185
        %s1369 = sand.u32 %s61, 1
        %s1370 = scalar_lea.sflag [#allocation7], %s1369
        %s1371 = sand.u32 %s205, 1
        %s1372 = smul.addr %s1371, 128
        %s1373 = scalar_lea.vmem [#allocation8], %s1372
        %p1374 = pneg %p218
        %p1375 = pneg %p215
        %p1376 = scmp.lt.s32.totalorder %s61, 1
        %s1377 = scalar_select %p1376, %s61, 1
        %p1378 = scmp.lt.s32.totalorder %s1377, 1
        %s1379 = scalar_select %p1378, %s1377, 1
        %s1380 = smul.addr %s1379, 32
        %s1381 = smul.addr %s1380, 8
        %s1382 = scalar_lea.vmem %s6, %s1381
        %p1383 = pneg %p248
        %p1384 = pneg %p245
        %p1385 = scmp.lt.s32.totalorder %s61, 1
        %s1386 = scalar_select %p1385, %s61, 1
        %p1387 = scmp.lt.s32.totalorder %s1386, 1
        %s1388 = scalar_select %p1387, %s1386, 1
        %s1389 = smul.addr %s1388, 2
        %s1390 = smul.addr %s1389, 8
        %s1391 = scalar_lea.vmem %s7, %s1390
        %p1392 = pneg %p278
        %p1393 = pneg %p275
        %s1394 = sand.u32 %s61, 1
        %s1395 = scalar_lea.sflag [#allocation10], %s1394
        %s1396 = sand.u32 %s295, 1
        %s1397 = smul.addr %s1396, 256
        %s1398 = scalar_lea.vmem [#allocation9], %s1397
        %p1399 = pneg %p308
        %p1400 = pneg %p305
        %s1401 = sand.u32 %s61, 1
        %s1402 = scalar_lea.sflag [#allocation10], %s1401
        %s1403 = sand.u32 %s325, 1
        %s1404 = smul.addr %s1403, 8
        %s1405 = scalar_lea.vmem [#allocation11], %s1404
        %p1406 = pneg %p338
        %p1407 = pneg %p335
        %s1408 = sand.u32 %s61, 1
        %s1409 = scalar_lea.sflag [#allocation13], %s1408
        %s1410 = sand.u32 %s357, 1
        %s1411 = smul.addr %s1410, 128
        %s1412 = scalar_lea.vmem [#allocation12], %s1411
        %p1413 = pneg %p370
        %p1414 = pneg %p367
        %s1415 = sand.u32 %s61, 1
        %s1416 = scalar_lea.sflag [#allocation13], %s1415
        %s1417 = sand.u32 %s389, 1
        %s1418 = smul.addr %s1417, 128
        %s1419 = scalar_lea.vmem [#allocation14], %s1418
        %p1420 = pneg %p402
        %p1421 = pneg %p399
        %s1422 = sand.u32 %s61, 1
        %s1423 = scalar_lea.sflag [#allocation16], %s1422
        %s1424 = sand.u32 %s421, 1
        %s1425 = smul.addr %s1424, 128
        %s1426 = scalar_lea.vmem [#allocation15], %s1425
        %p1427 = pneg %p434
        %p1428 = pneg %p431
        %s1429 = sand.u32 %s61, 1
        %s1430 = scalar_lea.sflag [#allocation16], %s1429
        %s1431 = sand.u32 %s453, 1
        %s1432 = smul.addr %s1431, 128
        %s1433 = scalar_lea.vmem [#allocation17], %s1432
        %p1434 = pneg %p466
        %p1435 = pneg %p463
        %s1436 = sand.u32 %s61, 1
        %s1437 = scalar_lea.sflag [#allocation19], %s1436
        %s1438 = sand.u32 %s485, 1
        %s1439 = smul.addr %s1438, 128
        %s1440 = scalar_lea.vmem [#allocation18], %s1439
        %p1441 = pneg %p498
        %p1442 = pneg %p495
        %s1443 = sand.u32 %s61, 1
        %s1444 = scalar_lea.sflag [#allocation19], %s1443
        %s1445 = sand.u32 %s517, 1
        %s1446 = smul.addr %s1445, 128
        %s1447 = scalar_lea.vmem [#allocation20], %s1446
        %p1448 = pneg %p530
        %p1449 = pneg %p527
        %s1450 = sand.u32 %s61, 1
        %s1451 = scalar_lea.sflag [#allocation22], %s1450
        %s1452 = sand.u32 %s549, 1
        %s1453 = smul.addr %s1452, 128
        %s1454 = scalar_lea.vmem [#allocation21], %s1453
        %p1455 = pneg %p562
        %p1456 = pneg %p559
        %s1457 = sand.u32 %s61, 1
        %s1458 = scalar_lea.sflag [#allocation22], %s1457
        %s1459 = sand.u32 %s581, 1
        %s1460 = smul.addr %s1459, 128
        %s1461 = scalar_lea.vmem [#allocation23], %s1460
        %p1462 = pneg %p594
        %p1463 = pneg %p591
        %s1464 = sand.u32 %s61, 1
        %s1465 = scalar_lea.sflag [#allocation25], %s1464
        %s1466 = sand.u32 %s613, 1
        %s1467 = smul.addr %s1466, 256
        %s1468 = scalar_lea.vmem [#allocation24], %s1467
        %p1469 = pneg %p626
        %p1470 = pneg %p623
        %s1471 = ssub.s32 %s61, 2
        %p1472 = scmp.gt.s32.totalorder %s1471, 0
        %s1473 = scalar_select %p1472, %s1471, 0
        %p1474 = scmp.lt.s32.totalorder %s1473, 1
        %s1475 = scalar_select %p1474, %s1473, 1
        %s1476 = smul.addr %s1475, 2
        %s1477 = smul.addr %s1476, 8
        %s1478 = scalar_lea.vmem %s19, %s1477
        %p1479 = pneg %p658
        %p1480 = pneg %p655
        %s1481 = sand.u32 %s61, 1
        %s1482 = scalar_lea.sflag [#allocation25], %s1481
        %s1483 = sand.u32 %s677, 1
        %s1484 = smul.addr %s1483, 256
        %s1485 = scalar_lea.vmem [#allocation26], %s1484
        %p1486 = pneg %p690
        %p1487 = pneg %p687
        %s1488 = sand.u32 %s709, 1
        %s1489 = scalar_lea.sflag [#allocation28], %s1488
        %s1490 = sand.u32 %s709, 1
        %s1491 = smul.addr %s1490, 8
        %s1492 = scalar_lea.vmem [#allocation27], %s1491
        %p1493 = pneg %p722
        %p1494 = pneg %p719
        %p1495 = pneg %p743
        %p1496 = pneg %p740
        %p1497 = scmp.lt.s32.totalorder %s61, 1
        %s1498 = scalar_select %p1497, %s61, 1
        %p1499 = scmp.lt.s32.totalorder %s1498, 1
        %s1500 = scalar_select %p1499, %s1498, 1
        %s1501 = smul.addr %s1500, 16
        %s1502 = smul.addr %s1501, 8
        %s1503 = scalar_lea.vmem %s2, %s1502
        %p1504 = scmp.lt.s32.totalorder %s61, 1
        %s1505 = scalar_select %p1504, %s61, 1
        %p1506 = scmp.lt.s32.totalorder %s61, 1
        %s1507 = scalar_select %p1506, %s61, 1
        %p1508 = scmp.lt.s32.totalorder %s61, 1
        %s1509 = scalar_select %p1508, %s61, 1
        %p1510 = scmp.lt.s32.totalorder %s61, 1
        %s1511 = scalar_select %p1510, %s61, 1
        %p1512 = scmp.lt.s32.totalorder %s61, 1
        %s1513 = scalar_select %p1512, %s61, 1
        %p1514 = scmp.lt.s32.totalorder %s1513, 1
        %s1515 = scalar_select %p1514, %s1513, 1
        %s1516 = smul.addr %s1515, 32
        %s1517 = smul.addr %s1516, 8
        %s1518 = scalar_lea.vmem %s6, %s1517
        %p1519 = scmp.lt.s32.totalorder %s61, 1
        %s1520 = scalar_select %p1519, %s61, 1
        %p1521 = scmp.lt.s32.totalorder %s61, 1
        %s1522 = scalar_select %p1521, %s61, 1
        %p1523 = scmp.lt.s32.totalorder %s1522, 1
        %s1524 = scalar_select %p1523, %s1522, 1
        %s1525 = smul.addr %s1524, 2
        %s1526 = smul.addr %s1525, 8
        %s1527 = scalar_lea.vmem %s7, %s1526
        %p1528 = scmp.lt.s32.totalorder %s61, 1
        %s1529 = scalar_select %p1528, %s61, 1
        %p1530 = scmp.lt.s32.totalorder %s61, 1
        %s1531 = scalar_select %p1530, %s61, 1
        %p1532 = scmp.lt.s32.totalorder %s61, 1
        %s1533 = scalar_select %p1532, %s61, 1
        %s1534 = ssub.s32 %s61, 2
        %p1535 = scmp.gt.s32.totalorder %s1534, 0
        %s1536 = scalar_select %p1535, %s1534, 0
        %s1537 = ssub.s32 %s61, 2
        %p1538 = scmp.gt.s32.totalorder %s1537, 0
        %s1539 = scalar_select %p1538, %s1537, 0
        %s1540 = ssub.s32 %s61, 2
        %p1541 = scmp.gt.s32.totalorder %s1540, 0
        %s1542 = scalar_select %p1541, %s1540, 0
        %s1543 = ssub.s32 %s61, 2
        %p1544 = scmp.gt.s32.totalorder %s1543, 0
        %s1545 = scalar_select %p1544, %s1543, 0
        %s1546 = ssub.s32 %s61, 2
        %p1547 = scmp.gt.s32.totalorder %s1546, 0
        %s1548 = scalar_select %p1547, %s1546, 0
        %s1549 = ssub.s32 %s61, 2
        %p1550 = scmp.gt.s32.totalorder %s1549, 0
        %s1551 = scalar_select %p1550, %s1549, 0
        %s1552 = ssub.s32 %s61, 2
        %p1553 = scmp.gt.s32.totalorder %s1552, 0
        %s1554 = scalar_select %p1553, %s1552, 0
        %s1555 = ssub.s32 %s61, 2
        %p1556 = scmp.gt.s32.totalorder %s1555, 0
        %s1557 = scalar_select %p1556, %s1555, 0
        %s1558 = ssub.s32 %s61, 2
        %p1559 = scmp.gt.s32.totalorder %s1558, 0
        %s1560 = scalar_select %p1559, %s1558, 0
        %s1561 = ssub.s32 %s61, 2
        %p1562 = scmp.gt.s32.totalorder %s1561, 0
        %s1563 = scalar_select %p1562, %s1561, 0
        %p1564 = scmp.lt.s32.totalorder %s1563, 1
        %s1565 = scalar_select %p1564, %s1563, 1
        %s1566 = smul.addr %s1565, 2
        %s1567 = smul.addr %s1566, 8
        %s1568 = scalar_lea.vmem %s19, %s1567
        %s1569 = ssub.s32 %s61, 2
        %p1570 = scmp.gt.s32.totalorder %s1569, 0
        %s1571 = scalar_select %p1570, %s1569, 0
        %s1572 = ssub.s32 %s61, 2
        %p1573 = scmp.gt.s32.totalorder %s1572, 0
        %s1574 = scalar_select %p1573, %s1572, 0
        %s1575 = ssub.s32 %s61, 2
        %p1576 = scmp.gt.s32.totalorder %s1575, 0
        %s1577 = scalar_select %p1576, %s1575, 0
        %p1578 = scmp.lt.s32.totalorder %s61, 2
        // Predicated region
        $region173: #{transformer_forward.1} parent=107 // pred_check
          %p1579 = pneg %p1578
        $region174: #{transformer_forward.1} parent=107 // pred_check_branch
          %1581 = sbr.rel (%p1579) target = $region176
        $region175: #{transformer_forward.1} parent=107 // pred_region
          %p1582 = scmp.eq.s32.totalorder %s61, 0
          // Predicated region
          $region177: #{transformer_forward.1} parent=175 // pred_check
            %p1583 = pneg %p1582
          $region178: #{transformer_forward.1} parent=175 // pred_check_branch
            %1585 = sbr.rel (%p1583) target = $region180
          $region179: #{transformer_forward.1} parent=175 // pred_region
            %v1586 = vld [vmem:[%s0] sm:$0xff]
            %v1587 = vld [vmem:[%s0 + $0x8] sm:$0xff]
            %1588 = vst [vmem:[#allocation2] sm:$0xff] %v1586
            %1589 = vst [vmem:[#allocation2 + $0x8] sm:$0xff] %v1587
          $region180: #{transformer_forward.1} parent=175 // pred_fallthru
            _
          %v1590 = vld [vmem:[#allocation2] sm:$0xff]
          %v1591 = vld [vmem:[#allocation2 + $0x8] sm:$0xff]
          %v1592 = vld [vmem:[%s1238] sm:$0xff]
          %v1593 = vld [vmem:[%s1527] sm:$0xff]
          %v1594 = vld [vmem:[%s1527 + $0x8] sm:$0xff]
          %v1595 = vld [vmem:[%s1503] sm:$0xff]
          %v1596 = vld [vmem:[%s1503 + $0x8] sm:$0xff]
          %v1597 = vld [vmem:[%s1503 + $0x10] sm:$0xff]
          %v1598 = vld [vmem:[%s1503 + $0x18] sm:$0xff]
          %v1599 = vld [vmem:[%s1503 + $0x20] sm:$0xff]
          %v1600 = vld [vmem:[%s1503 + $0x28] sm:$0xff]
          %v1601 = vld [vmem:[%s1503 + $0x30] sm:$0xff]
          %v1602 = vld [vmem:[%s1503 + $0x38] sm:$0xff]
          %v1603 = vld [vmem:[%s1503 + $0x40] sm:$0xff]
          %v1604 = vld [vmem:[%s1503 + $0x48] sm:$0xff]
          %v1605 = vld [vmem:[%s1503 + $0x50] sm:$0xff]
          %v1606 = vld [vmem:[%s1503 + $0x58] sm:$0xff]
          %v1607 = vld [vmem:[%s1503 + $0x60] sm:$0xff]
          %v1608 = vld [vmem:[%s1503 + $0x68] sm:$0xff]
          %v1609 = vld [vmem:[%s1503 + $0x70] sm:$0xff]
          %v1610 = vld [vmem:[%s1503 + $0x78] sm:$0xff]
          %1611 = vmatprep.subr.mxu0 0.0
          %1612 = vmatpush1.msra.mxu0 %v1610
          %1613 = vmatprep.subr.mxu0 0.0
          %1614 = vmatpush1.msra.mxu0 %v1609
          %1615 = vmatprep.subr.mxu0 0.0
          %1616 = vmatpush1.msra.mxu0 %v1608
          %1617 = vmatprep.subr.mxu0 0.0
          %1618 = vmatpush1.msra.mxu0 %v1607
          %1619 = vmatprep.subr.mxu0 0.0
          %1620 = vmatpush1.msra.mxu0 %v1606
          %1621 = vmatprep.subr.mxu0 0.0
          %1622 = vmatpush1.msra.mxu0 %v1605
          %1623 = vmatprep.subr.mxu0 0.0
          %1624 = vmatpush1.msra.mxu0 %v1604
          %1625 = vmatprep.subr.mxu0 0.0
          %1626 = vmatpush1.msra.mxu0 %v1603
          %1627 = vmatprep.subr.mxu0 0.0
          %1628 = vmatpush1.msra.mxu0 %v1602
          %1629 = vmatprep.subr.mxu0 0.0
          %1630 = vmatpush1.msra.mxu0 %v1601
          %1631 = vmatprep.subr.mxu0 0.0
          %1632 = vmatpush1.msra.mxu0 %v1600
          %1633 = vmatprep.subr.mxu0 0.0
          %1634 = vmatpush1.msra.mxu0 %v1599
          %1635 = vmatprep.subr.mxu0 0.0
          %1636 = vmatpush1.msra.mxu0 %v1598
          %1637 = vmatprep.subr.mxu0 0.0
          %1638 = vmatpush1.msra.mxu0 %v1597
          %1639 = vmatprep.subr.mxu0 0.0
          %1640 = vmatpush1.msra.mxu0 %v1596
          %1641 = vmatprep.subr.mxu0 0.0
          %1642 = vmatpush1.msra.mxu0 %v1595
          %1643 = vmatprep.subr.mxu0 0.0
          %1644 = vmatpush2.msra.mxu0 0.0
          %1645 = vmatprep.subr.mxu0 0.0
          %1646 = vmatpush2.msra.mxu0 0.0
          %1647 = vmatprep.subr.mxu0 0.0
          %1648 = vmatpush2.msra.mxu0 0.0
          %1649 = vmatprep.subr.mxu0 0.0
          %1650 = vmatpush2.msra.mxu0 0.0
          %1651 = vmatprep.subr.mxu0 0.0
          %1652 = vmatpush2.msra.mxu0 0.0
          %1653 = vmatprep.subr.mxu0 0.0
          %1654 = vmatpush2.msra.mxu0 0.0
          %1655 = vmatprep.subr.mxu0 0.0
          %1656 = vmatpush2.msra.mxu0 0.0
          %1657 = vmatprep.subr.mxu0 0.0
          %1658 = vmatpush2.msra.mxu0 0.0
          %1659 = vmatprep.subr.mxu0 0.0
          %1660 = vmatpush2.msra.mxu0 0.0
          %1661 = vmatprep.subr.mxu0 0.0
          %1662 = vmatpush2.msra.mxu0 0.0
          %1663 = vmatprep.subr.mxu0 0.0
          %1664 = vmatpush2.msra.mxu0 0.0
          %1665 = vmatprep.subr.mxu0 0.0
          %1666 = vmatpush2.msra.mxu0 0.0
          %1667 = vmatprep.subr.mxu0 0.0
          %1668 = vmatpush2.msra.mxu0 0.0
          %1669 = vmatprep.subr.mxu0 0.0
          %1670 = vmatpush2.msra.mxu0 0.0
          %1671 = vmatprep.subr.mxu0 0.0
          %1672 = vmatpush2.msra.mxu0 0.0
          %1673 = vmatprep.subr.mxu0 0.0
          %1674 = vmatpush2.msra.mxu0 0.0
          %1675 = vmatprep.mubr.f32.mxu0 0.0
          %1676 = vmatmul.mubr.f32.gmra.mxu0 %v1590
          %v1677 = vpop.f32.mrf.mxu0
          %v1678 = vadd.f32 0.0, %v1677
          %v1679 = vpop.f32.mrf.mxu0
          %1680 = vmatprep.mubr.f32.mxu0 0.0
          %1681 = vmatmul.mubr.f32.gmra.mxu0 %v1591
          %v1682 = vpop.f32.mrf.mxu0
          %v1683 = vadd.f32 0.0, %v1682
          %v1684 = vpop.f32.mrf.mxu0
          %1685 = vdwg.mxu0
          %v1686 = vld [vmem:[%s1202] sm:$0xff]
          %v1687 = vld [vmem:[%s1202 + $0x8] sm:$0xff]
          %v1688 = vld [vmem:[%s1202 + $0x10] sm:$0xff]
          %v1689 = vld [vmem:[%s1202 + $0x18] sm:$0xff]
          %v1690 = vld [vmem:[%s1202 + $0x20] sm:$0xff]
          %v1691 = vld [vmem:[%s1202 + $0x28] sm:$0xff]
          %v1692 = vld [vmem:[%s1202 + $0x30] sm:$0xff]
          %v1693 = vld [vmem:[%s1202 + $0x38] sm:$0xff]
          %v1694 = vld [vmem:[%s1202 + $0x40] sm:$0xff]
          %v1695 = vld [vmem:[%s1202 + $0x48] sm:$0xff]
          %v1696 = vld [vmem:[%s1202 + $0x50] sm:$0xff]
          %v1697 = vld [vmem:[%s1202 + $0x58] sm:$0xff]
          %v1698 = vld [vmem:[%s1202 + $0x60] sm:$0xff]
          %v1699 = vld [vmem:[%s1202 + $0x68] sm:$0xff]
          %v1700 = vld [vmem:[%s1202 + $0x70] sm:$0xff]
          %v1701 = vld [vmem:[%s1202 + $0x78] sm:$0xff]
          %1702 = vmatprep.subr.mxu0 0.0
          %1703 = vmatpush1.msra.mxu0 %v1701
          %1704 = vmatprep.subr.mxu0 0.0
          %1705 = vmatpush1.msra.mxu0 %v1700
          %1706 = vmatprep.subr.mxu0 0.0
          %1707 = vmatpush1.msra.mxu0 %v1699
          %1708 = vmatprep.subr.mxu0 0.0
          %1709 = vmatpush1.msra.mxu0 %v1698
          %1710 = vmatprep.subr.mxu0 0.0
          %1711 = vmatpush1.msra.mxu0 %v1697
          %1712 = vmatprep.subr.mxu0 0.0
          %1713 = vmatpush1.msra.mxu0 %v1696
          %1714 = vmatprep.subr.mxu0 0.0
          %1715 = vmatpush1.msra.mxu0 %v1695
          %1716 = vmatprep.subr.mxu0 0.0
          %1717 = vmatpush1.msra.mxu0 %v1694
          %1718 = vmatprep.subr.mxu0 0.0
          %1719 = vmatpush1.msra.mxu0 %v1693
          %1720 = vmatprep.subr.mxu0 0.0
          %1721 = vmatpush1.msra.mxu0 %v1692
          %1722 = vmatprep.subr.mxu0 0.0
          %1723 = vmatpush1.msra.mxu0 %v1691
          %1724 = vmatprep.subr.mxu0 0.0
          %1725 = vmatpush1.msra.mxu0 %v1690
          %1726 = vmatprep.subr.mxu0 0.0
          %1727 = vmatpush1.msra.mxu0 %v1689
          %1728 = vmatprep.subr.mxu0 0.0
          %1729 = vmatpush1.msra.mxu0 %v1688
          %1730 = vmatprep.subr.mxu0 0.0
          %1731 = vmatpush1.msra.mxu0 %v1687
          %1732 = vmatprep.subr.mxu0 0.0
          %1733 = vmatpush1.msra.mxu0 %v1686
          %1734 = vmatprep.subr.mxu0 0.0
          %1735 = vmatpush2.msra.mxu0 0.0
          %1736 = vmatprep.subr.mxu0 0.0
          %1737 = vmatpush2.msra.mxu0 0.0
          %1738 = vmatprep.subr.mxu0 0.0
          %1739 = vmatpush2.msra.mxu0 0.0
          %1740 = vmatprep.subr.mxu0 0.0
          %1741 = vmatpush2.msra.mxu0 0.0
          %1742 = vmatprep.subr.mxu0 0.0
          %1743 = vmatpush2.msra.mxu0 0.0
          %1744 = vmatprep.subr.mxu0 0.0
          %1745 = vmatpush2.msra.mxu0 0.0
          %1746 = vmatprep.subr.mxu0 0.0
          %1747 = vmatpush2.msra.mxu0 0.0
          %1748 = vmatprep.subr.mxu0 0.0
          %1749 = vmatpush2.msra.mxu0 0.0
          %1750 = vmatprep.subr.mxu0 0.0
          %1751 = vmatpush2.msra.mxu0 0.0
          %1752 = vmatprep.subr.mxu0 0.0
          %1753 = vmatpush2.msra.mxu0 0.0
          %1754 = vmatprep.subr.mxu0 0.0
          %1755 = vmatpush2.msra.mxu0 0.0
          %1756 = vmatprep.subr.mxu0 0.0
          %1757 = vmatpush2.msra.mxu0 0.0
          %1758 = vmatprep.subr.mxu0 0.0
          %1759 = vmatpush2.msra.mxu0 0.0
          %1760 = vmatprep.subr.mxu0 0.0
          %1761 = vmatpush2.msra.mxu0 0.0
          %1762 = vmatprep.subr.mxu0 0.0
          %1763 = vmatpush2.msra.mxu0 0.0
          %1764 = vmatprep.subr.mxu0 0.0
          %1765 = vmatpush2.msra.mxu0 0.0
          %1766 = vmatprep.mubr.f32.mxu0 0.0
          %1767 = vmatmul.mubr.f32.gmra.mxu0 %v1590
          %v1768 = vpop.f32.mrf.mxu0
          %v1769 = vadd.f32 0.0, %v1768
          %v1770 = vpop.f32.mrf.mxu0
          %1771 = vmatprep.mubr.f32.mxu0 0.0
          %1772 = vmatmul.mubr.f32.gmra.mxu0 %v1591
          %v1773 = vpop.f32.mrf.mxu0
          %v1774 = vadd.f32 0.0, %v1773
          %v1775 = vpop.f32.mrf.mxu0
          %1776 = vdwg.mxu0
          %v1777 = vld [vmem:[%s1211] sm:$0xff]
          %v1778 = vld [vmem:[%s1211 + $0x8] sm:$0xff]
          %v1779 = vld [vmem:[%s1211 + $0x10] sm:$0xff]
          %v1780 = vld [vmem:[%s1211 + $0x18] sm:$0xff]
          %v1781 = vld [vmem:[%s1211 + $0x20] sm:$0xff]
          %v1782 = vld [vmem:[%s1211 + $0x28] sm:$0xff]
          %v1783 = vld [vmem:[%s1211 + $0x30] sm:$0xff]
          %v1784 = vld [vmem:[%s1211 + $0x38] sm:$0xff]
          %v1785 = vld [vmem:[%s1211 + $0x40] sm:$0xff]
          %v1786 = vld [vmem:[%s1211 + $0x48] sm:$0xff]
          %v1787 = vld [vmem:[%s1211 + $0x50] sm:$0xff]
          %v1788 = vld [vmem:[%s1211 + $0x58] sm:$0xff]
          %v1789 = vld [vmem:[%s1211 + $0x60] sm:$0xff]
          %v1790 = vld [vmem:[%s1211 + $0x68] sm:$0xff]
          %v1791 = vld [vmem:[%s1211 + $0x70] sm:$0xff]
          %v1792 = vld [vmem:[%s1211 + $0x78] sm:$0xff]
          %1793 = vmatprep.subr.mxu0 0.0
          %1794 = vmatpush1.msra.mxu0 %v1792
          %1795 = vmatprep.subr.mxu0 0.0
          %1796 = vmatpush1.msra.mxu0 %v1791
          %1797 = vmatprep.subr.mxu0 0.0
          %1798 = vmatpush1.msra.mxu0 %v1790
          %1799 = vmatprep.subr.mxu0 0.0
          %1800 = vmatpush1.msra.mxu0 %v1789
          %1801 = vmatprep.subr.mxu0 0.0
          %1802 = vmatpush1.msra.mxu0 %v1788
          %1803 = vmatprep.subr.mxu0 0.0
          %1804 = vmatpush1.msra.mxu0 %v1787
          %1805 = vmatprep.subr.mxu0 0.0
          %1806 = vmatpush1.msra.mxu0 %v1786
          %1807 = vmatprep.subr.mxu0 0.0
          %1808 = vmatpush1.msra.mxu0 %v1785
          %1809 = vmatprep.subr.mxu0 0.0
          %1810 = vmatpush1.msra.mxu0 %v1784
          %1811 = vmatprep.subr.mxu0 0.0
          %1812 = vmatpush1.msra.mxu0 %v1783
          %1813 = vmatprep.subr.mxu0 0.0
          %1814 = vmatpush1.msra.mxu0 %v1782
          %1815 = vmatprep.subr.mxu0 0.0
          %1816 = vmatpush1.msra.mxu0 %v1781
          %1817 = vmatprep.subr.mxu0 0.0
          %1818 = vmatpush1.msra.mxu0 %v1780
          %1819 = vmatprep.subr.mxu0 0.0
          %1820 = vmatpush1.msra.mxu0 %v1779
          %1821 = vmatprep.subr.mxu0 0.0
          %1822 = vmatpush1.msra.mxu0 %v1778
          %1823 = vmatprep.subr.mxu0 0.0
          %1824 = vmatpush1.msra.mxu0 %v1777
          %1825 = vmatprep.subr.mxu0 0.0
          %1826 = vmatpush2.msra.mxu0 0.0
          %1827 = vmatprep.subr.mxu0 0.0
          %1828 = vmatpush2.msra.mxu0 0.0
          %1829 = vmatprep.subr.mxu0 0.0
          %1830 = vmatpush2.msra.mxu0 0.0
          %1831 = vmatprep.subr.mxu0 0.0
          %1832 = vmatpush2.msra.mxu0 0.0
          %1833 = vmatprep.subr.mxu0 0.0
          %1834 = vmatpush2.msra.mxu0 0.0
          %1835 = vmatprep.subr.mxu0 0.0
          %1836 = vmatpush2.msra.mxu0 0.0
          %1837 = vmatprep.subr.mxu0 0.0
          %1838 = vmatpush2.msra.mxu0 0.0
          %1839 = vmatprep.subr.mxu0 0.0
          %1840 = vmatpush2.msra.mxu0 0.0
          %1841 = vmatprep.subr.mxu0 0.0
          %1842 = vmatpush2.msra.mxu0 0.0
          %1843 = vmatprep.subr.mxu0 0.0
          %1844 = vmatpush2.msra.mxu0 0.0
          %1845 = vmatprep.subr.mxu0 0.0
          %1846 = vmatpush2.msra.mxu0 0.0
          %1847 = vmatprep.subr.mxu0 0.0
          %1848 = vmatpush2.msra.mxu0 0.0
          %1849 = vmatprep.subr.mxu0 0.0
          %1850 = vmatpush2.msra.mxu0 0.0
          %1851 = vmatprep.subr.mxu0 0.0
          %1852 = vmatpush2.msra.mxu0 0.0
          %1853 = vmatprep.subr.mxu0 0.0
          %1854 = vmatpush2.msra.mxu0 0.0
          %1855 = vmatprep.subr.mxu0 0.0
          %1856 = vmatpush2.msra.mxu0 0.0
          %1857 = vmatprep.mubr.f32.mxu0 0.0
          %1858 = vmatmul.mubr.f32.gmra.mxu0 %v1590
          %v1859 = vpop.f32.mrf.mxu0
          %v1860 = vadd.f32 0.0, %v1859
          %v1861 = vpop.f32.mrf.mxu0
          %1862 = vmatprep.mubr.f32.mxu0 0.0
          %1863 = vmatmul.mubr.f32.gmra.mxu0 %v1591
          %v1864 = vpop.f32.mrf.mxu0
          %v1865 = vadd.f32 0.0, %v1864
          %v1866 = vpop.f32.mrf.mxu0
          %1867 = vdwg.mxu0
          %v1868 = vld [vmem:[%s1220] sm:$0xff]
          %v1869 = vld [vmem:[%s1220 + $0x8] sm:$0xff]
          %v1870 = vld [vmem:[%s1220 + $0x10] sm:$0xff]
          %v1871 = vld [vmem:[%s1220 + $0x18] sm:$0xff]
          %v1872 = vld [vmem:[%s1220 + $0x20] sm:$0xff]
          %v1873 = vld [vmem:[%s1220 + $0x28] sm:$0xff]
          %v1874 = vld [vmem:[%s1220 + $0x30] sm:$0xff]
          %v1875 = vld [vmem:[%s1220 + $0x38] sm:$0xff]
          %v1876 = vld [vmem:[%s1220 + $0x40] sm:$0xff]
          %v1877 = vld [vmem:[%s1220 + $0x48] sm:$0xff]
          %v1878 = vld [vmem:[%s1220 + $0x50] sm:$0xff]
          %v1879 = vld [vmem:[%s1220 + $0x58] sm:$0xff]
          %v1880 = vld [vmem:[%s1220 + $0x60] sm:$0xff]
          %v1881 = vld [vmem:[%s1220 + $0x68] sm:$0xff]
          %v1882 = vld [vmem:[%s1220 + $0x70] sm:$0xff]
          %v1883 = vld [vmem:[%s1220 + $0x78] sm:$0xff]
          %vm1884 = vcmask 261120
          %v1886 = vsel %vm1884, %v1678, 0
          %v1889 = vsel %vm1884, %v1683, 0
          %v1892 = vsel %vm1884, %v1769, 0
          %v1895 = vsel %vm1884, %v1774, 0
          %1897 = vmatprep.subr.mxu0 0.0
          %1898 = vmatpush1.xpose.msra.mxu0 0.0
          %1899 = vmatprep.subr.mxu0 0.0
          %1900 = vmatpush1.xpose.msra.mxu0 0.0
          %1901 = vmatprep.subr.mxu0 0.0
          %1902 = vmatpush1.xpose.msra.mxu0 0.0
          %1903 = vmatprep.subr.mxu0 0.0
          %1904 = vmatpush1.xpose.msra.mxu0 0.0
          %1905 = vmatprep.subr.mxu0 0.0
          %1906 = vmatpush1.xpose.msra.mxu0 0.0
          %1907 = vmatprep.subr.mxu0 0.0
          %1908 = vmatpush1.xpose.msra.mxu0 0.0
          %1909 = vmatprep.subr.mxu0 0.0
          %1910 = vmatpush1.xpose.msra.mxu0 0.0
          %1911 = vmatprep.subr.mxu0 0.0
          %1912 = vmatpush1.xpose.msra.mxu0 0.0
          %1913 = vmatprep.subr.mxu0 0.0
          %1914 = vmatpush1.xpose.msra.mxu0 0.0
          %1915 = vmatprep.subr.mxu0 0.0
          %1916 = vmatpush1.xpose.msra.mxu0 0.0
          %1917 = vmatprep.subr.mxu0 0.0
          %1918 = vmatpush1.xpose.msra.mxu0 0.0
          %1919 = vmatprep.subr.mxu0 0.0
          %1920 = vmatpush1.xpose.msra.mxu0 0.0
          %1921 = vmatprep.subr.mxu0 0.0
          %1922 = vmatpush1.xpose.msra.mxu0 0.0
          %1923 = vmatprep.subr.mxu0 0.0
          %1924 = vmatpush1.xpose.msra.mxu0 0.0
          %1925 = vmatprep.subr.mxu0 0.0
          %1926 = vmatpush1.xpose.msra.mxu0 %v1895
          %1927 = vmatprep.subr.mxu0 0.0
          %1928 = vmatpush1.xpose.msra.mxu0 %v1892
          %1929 = vmatprep.subr.mxu0 0.0
          %1930 = vmatpush2.xpose.msra.mxu0 0.0
          %1931 = vmatprep.subr.mxu0 0.0
          %1932 = vmatpush2.xpose.msra.mxu0 0.0
          %1933 = vmatprep.subr.mxu0 0.0
          %1934 = vmatpush2.xpose.msra.mxu0 0.0
          %1935 = vmatprep.subr.mxu0 0.0
          %1936 = vmatpush2.xpose.msra.mxu0 0.0
          %1937 = vmatprep.subr.mxu0 0.0
          %1938 = vmatpush2.xpose.msra.mxu0 0.0
          %1939 = vmatprep.subr.mxu0 0.0
          %1940 = vmatpush2.xpose.msra.mxu0 0.0
          %1941 = vmatprep.subr.mxu0 0.0
          %1942 = vmatpush2.xpose.msra.mxu0 0.0
          %1943 = vmatprep.subr.mxu0 0.0
          %1944 = vmatpush2.xpose.msra.mxu0 0.0
          %1945 = vmatprep.subr.mxu0 0.0
          %1946 = vmatpush2.xpose.msra.mxu0 0.0
          %1947 = vmatprep.subr.mxu0 0.0
          %1948 = vmatpush2.xpose.msra.mxu0 0.0
          %1949 = vmatprep.subr.mxu0 0.0
          %1950 = vmatpush2.xpose.msra.mxu0 0.0
          %1951 = vmatprep.subr.mxu0 0.0
          %1952 = vmatpush2.xpose.msra.mxu0 0.0
          %1953 = vmatprep.subr.mxu0 0.0
          %1954 = vmatpush2.xpose.msra.mxu0 0.0
          %1955 = vmatprep.subr.mxu0 0.0
          %1956 = vmatpush2.xpose.msra.mxu0 0.0
          %1957 = vmatprep.subr.mxu0 0.0
          %1958 = vmatpush2.xpose.msra.mxu0 0.0
          %1959 = vmatprep.subr.mxu0 0.0
          %1960 = vmatpush2.xpose.msra.mxu0 0.0
          %1961 = vmatprep.mubr.f32.mxu0 0.0
          %1962 = vmatmul.mubr.f32.gmra.mxu0 %v1886
          %v1963 = vpop.f32.mrf.mxu0
          %v1964 = vadd.f32 0.0, %v1963
          %v1965 = vpop.f32.mrf.mxu0
          %1966 = vmatprep.mubr.f32.mxu0 0.0
          %1967 = vmatmul.mubr.f32.gmra.mxu0 %v1889
          %v1968 = vpop.f32.mrf.mxu0
          %v1969 = vadd.f32 0.0, %v1968
          %v1970 = vpop.f32.mrf.mxu0
          %1971 = vdwg.mxu0
          %vm1972 = vcmask 130048
          %v1973 = vsel %vm1972, %v1964, -inf
          %1974 = vmax.xlane.f32.xlu0 %v1973
          %v1975 = vpop.xlane.xlu0 %1974
          %v1976 = vsel %vm1972, %v1969, -inf
          %1977 = vmax.xlane.f32.xlu0 %v1976
          %v1978 = vpop.xlane.xlu0 %1977
          %v1979 = vsub.f32 %v1964, %v1975
          %v1980 = vsub.f32 %v1969, %v1978
          %v1981 = vmul.f32 %v1979, 1.442695
          %v1982 = vpow.pop %v1981
          %v1983 = vmul.f32 %v1980, 1.442695
          %v1984 = vpow.pop %v1983
          %v1985 = vsel %vm1972, %v1982, 0.0
          %1986 = vadd.xlane.f32.xlu0 %v1985
          %v1987 = vpop.xlane.xlu0 %1986
          %v1988 = vsel %vm1972, %v1984, 0.0
          %1989 = vadd.xlane.f32.xlu0 %v1988
          %v1990 = vpop.xlane.xlu0 %1989
          %v1991 = vrcp.pop %v1987
          %v1992 = vrcp.pop %v1990
          %v1993 = vmul.f32 %v1982, %v1991
          %v1994 = vmul.f32 %v1984, %v1992
          %v1996 = vsel %vm1972, %v1993, 0
          %v1999 = vsel %vm1972, %v1994, 0
          %2001 = vmatprep.subr.mxu0 0.0
          %2002 = vmatpush1.msra.mxu0 0.0
          %2003 = vmatprep.subr.mxu0 0.0
          %2004 = vmatpush1.msra.mxu0 0.0
          %2005 = vmatprep.subr.mxu0 0.0
          %2006 = vmatpush1.msra.mxu0 0.0
          %2007 = vmatprep.subr.mxu0 0.0
          %2008 = vmatpush1.msra.mxu0 0.0
          %2009 = vmatprep.subr.mxu0 0.0
          %2010 = vmatpush1.msra.mxu0 0.0
          %2011 = vmatprep.subr.mxu0 0.0
          %2012 = vmatpush1.msra.mxu0 0.0
          %2013 = vmatprep.subr.mxu0 0.0
          %2014 = vmatpush1.msra.mxu0 0.0
          %2015 = vmatprep.subr.mxu0 0.0
          %2016 = vmatpush1.msra.mxu0 0.0
          %2017 = vmatprep.subr.mxu0 0.0
          %2018 = vmatpush1.msra.mxu0 0.0
          %2019 = vmatprep.subr.mxu0 0.0
          %2020 = vmatpush1.msra.mxu0 0.0
          %2021 = vmatprep.subr.mxu0 0.0
          %2022 = vmatpush1.msra.mxu0 0.0
          %2023 = vmatprep.subr.mxu0 0.0
          %2024 = vmatpush1.msra.mxu0 0.0
          %2025 = vmatprep.subr.mxu0 0.0
          %2026 = vmatpush1.msra.mxu0 0.0
          %2027 = vmatprep.subr.mxu0 0.0
          %2028 = vmatpush1.msra.mxu0 0.0
          %2029 = vmatprep.subr.mxu0 0.0
          %2030 = vmatpush1.msra.mxu0 %v1865
          %2031 = vmatprep.subr.mxu0 0.0
          %2032 = vmatpush1.msra.mxu0 %v1860
          %2033 = vmatprep.subr.mxu0 0.0
          %2034 = vmatpush2.msra.mxu0 0.0
          %2035 = vmatprep.subr.mxu0 0.0
          %2036 = vmatpush2.msra.mxu0 0.0
          %2037 = vmatprep.subr.mxu0 0.0
          %2038 = vmatpush2.msra.mxu0 0.0
          %2039 = vmatprep.subr.mxu0 0.0
          %2040 = vmatpush2.msra.mxu0 0.0
          %2041 = vmatprep.subr.mxu0 0.0
          %2042 = vmatpush2.msra.mxu0 0.0
          %2043 = vmatprep.subr.mxu0 0.0
          %2044 = vmatpush2.msra.mxu0 0.0
          %2045 = vmatprep.subr.mxu0 0.0
          %2046 = vmatpush2.msra.mxu0 0.0
          %2047 = vmatprep.subr.mxu0 0.0
          %2048 = vmatpush2.msra.mxu0 0.0
          %2049 = vmatprep.subr.mxu0 0.0
          %2050 = vmatpush2.msra.mxu0 0.0
          %2051 = vmatprep.subr.mxu0 0.0
          %2052 = vmatpush2.msra.mxu0 0.0
          %2053 = vmatprep.subr.mxu0 0.0
          %2054 = vmatpush2.msra.mxu0 0.0
          %2055 = vmatprep.subr.mxu0 0.0
          %2056 = vmatpush2.msra.mxu0 0.0
          %2057 = vmatprep.subr.mxu0 0.0
          %2058 = vmatpush2.msra.mxu0 0.0
          %2059 = vmatprep.subr.mxu0 0.0
          %2060 = vmatpush2.msra.mxu0 0.0
          %2061 = vmatprep.subr.mxu0 0.0
          %2062 = vmatpush2.msra.mxu0 0.0
          %2063 = vmatprep.subr.mxu0 0.0
          %2064 = vmatpush2.msra.mxu0 0.0
          %2065 = vmatprep.mubr.f32.mxu0 0.0
          %2066 = vmatmul.mubr.f32.gmra.mxu0 %v1996
          %v2067 = vpop.f32.mrf.mxu0
          %v2068 = vadd.f32 0.0, %v2067
          %v2069 = vpop.f32.mrf.mxu0
          %2070 = vmatprep.mubr.f32.mxu0 0.0
          %2071 = vmatmul.mubr.f32.gmra.mxu0 %v1999
          %v2072 = vpop.f32.mrf.mxu0
          %v2073 = vadd.f32 0.0, %v2072
          %v2074 = vpop.f32.mrf.mxu0
          %2075 = vdwg.mxu0
          %2076 = vrot.lane.b32.xlu0 %v1678, 96
          %v2077 = vpop.permute.xlu0 %2076
          %2078 = vrot.lane.b32.xlu0 %v1683, 96
          %v2079 = vpop.permute.xlu0 %2078
          %2080 = vrot.lane.b32.xlu0 %v1769, 96
          %v2081 = vpop.permute.xlu0 %2080
          %2082 = vrot.lane.b32.xlu0 %v1774, 96
          %v2083 = vpop.permute.xlu0 %2082
          %v2084 = vsel %vm1884, %v2077, 0
          %v2086 = vsel %vm1884, %v2079, 0
          %v2088 = vsel %vm1884, %v2081, 0
          %v2090 = vsel %vm1884, %v2083, 0
          %2092 = vmatprep.subr.mxu0 0.0
          %2093 = vmatpush1.xpose.msra.mxu0 0.0
          %2094 = vmatprep.subr.mxu0 0.0
          %2095 = vmatpush1.xpose.msra.mxu0 0.0
          %2096 = vmatprep.subr.mxu0 0.0
          %2097 = vmatpush1.xpose.msra.mxu0 0.0
          %2098 = vmatprep.subr.mxu0 0.0
          %2099 = vmatpush1.xpose.msra.mxu0 0.0
          %2100 = vmatprep.subr.mxu0 0.0
          %2101 = vmatpush1.xpose.msra.mxu0 0.0
          %2102 = vmatprep.subr.mxu0 0.0
          %2103 = vmatpush1.xpose.msra.mxu0 0.0
          %2104 = vmatprep.subr.mxu0 0.0
          %2105 = vmatpush1.xpose.msra.mxu0 0.0
          %2106 = vmatprep.subr.mxu0 0.0
          %2107 = vmatpush1.xpose.msra.mxu0 0.0
          %2108 = vmatprep.subr.mxu0 0.0
          %2109 = vmatpush1.xpose.msra.mxu0 0.0
          %2110 = vmatprep.subr.mxu0 0.0
          %2111 = vmatpush1.xpose.msra.mxu0 0.0
          %2112 = vmatprep.subr.mxu0 0.0
          %2113 = vmatpush1.xpose.msra.mxu0 0.0
          %2114 = vmatprep.subr.mxu0 0.0
          %2115 = vmatpush1.xpose.msra.mxu0 0.0
          %2116 = vmatprep.subr.mxu0 0.0
          %2117 = vmatpush1.xpose.msra.mxu0 0.0
          %2118 = vmatprep.subr.mxu0 0.0
          %2119 = vmatpush1.xpose.msra.mxu0 0.0
          %2120 = vmatprep.subr.mxu0 0.0
          %2121 = vmatpush1.xpose.msra.mxu0 %v2090
          %2122 = vmatprep.subr.mxu0 0.0
          %2123 = vmatpush1.xpose.msra.mxu0 %v2088
          %2124 = vmatprep.subr.mxu0 0.0
          %2125 = vmatpush2.xpose.msra.mxu0 0.0
          %2126 = vmatprep.subr.mxu0 0.0
          %2127 = vmatpush2.xpose.msra.mxu0 0.0
          %2128 = vmatprep.subr.mxu0 0.0
          %2129 = vmatpush2.xpose.msra.mxu0 0.0
          %2130 = vmatprep.subr.mxu0 0.0
          %2131 = vmatpush2.xpose.msra.mxu0 0.0
          %2132 = vmatprep.subr.mxu0 0.0
          %2133 = vmatpush2.xpose.msra.mxu0 0.0
          %2134 = vmatprep.subr.mxu0 0.0
          %2135 = vmatpush2.xpose.msra.mxu0 0.0
          %2136 = vmatprep.subr.mxu0 0.0
          %2137 = vmatpush2.xpose.msra.mxu0 0.0
          %2138 = vmatprep.subr.mxu0 0.0
          %2139 = vmatpush2.xpose.msra.mxu0 0.0
          %2140 = vmatprep.subr.mxu0 0.0
          %2141 = vmatpush2.xpose.msra.mxu0 0.0
          %2142 = vmatprep.subr.mxu0 0.0
          %2143 = vmatpush2.xpose.msra.mxu0 0.0
          %2144 = vmatprep.subr.mxu0 0.0
          %2145 = vmatpush2.xpose.msra.mxu0 0.0
          %2146 = vmatprep.subr.mxu0 0.0
          %2147 = vmatpush2.xpose.msra.mxu0 0.0
          %2148 = vmatprep.subr.mxu0 0.0
          %2149 = vmatpush2.xpose.msra.mxu0 0.0
          %2150 = vmatprep.subr.mxu0 0.0
          %2151 = vmatpush2.xpose.msra.mxu0 0.0
          %2152 = vmatprep.subr.mxu0 0.0
          %2153 = vmatpush2.xpose.msra.mxu0 0.0
          %2154 = vmatprep.subr.mxu0 0.0
          %2155 = vmatpush2.xpose.msra.mxu0 0.0
          %2156 = vmatprep.mubr.f32.mxu0 0.0
          %2157 = vmatmul.mubr.f32.gmra.mxu0 %v2084
          %v2158 = vpop.f32.mrf.mxu0
          %v2159 = vadd.f32 0.0, %v2158
          %v2160 = vpop.f32.mrf.mxu0
          %2161 = vmatprep.mubr.f32.mxu0 0.0
          %2162 = vmatmul.mubr.f32.gmra.mxu0 %v2086
          %v2163 = vpop.f32.mrf.mxu0
          %v2164 = vadd.f32 0.0, %v2163
          %v2165 = vpop.f32.mrf.mxu0
          %2166 = vdwg.mxu0
          %v2167 = vsel %vm1972, %v2159, -inf
          %2168 = vmax.xlane.f32.xlu0 %v2167
          %v2169 = vpop.xlane.xlu0 %2168
          %v2170 = vsel %vm1972, %v2164, -inf
          %2171 = vmax.xlane.f32.xlu0 %v2170
          %v2172 = vpop.xlane.xlu0 %2171
          %v2173 = vsub.f32 %v2159, %v2169
          %v2174 = vsub.f32 %v2164, %v2172
          %v2175 = vmul.f32 %v2173, 1.442695
          %v2176 = vpow.pop %v2175
          %v2177 = vmul.f32 %v2174, 1.442695
          %v2178 = vpow.pop %v2177
          %v2179 = vsel %vm1972, %v2176, 0.0
          %2180 = vadd.xlane.f32.xlu0 %v2179
          %v2181 = vpop.xlane.xlu0 %2180
          %v2182 = vsel %vm1972, %v2178, 0.0
          %2183 = vadd.xlane.f32.xlu0 %v2182
          %v2184 = vpop.xlane.xlu0 %2183
          %v2185 = vrcp.pop %v2181
          %v2186 = vrcp.pop %v2184
          %v2187 = vmul.f32 %v2176, %v2185
          %v2188 = vmul.f32 %v2178, %v2186
          %2191 = vrot.lane.b32.xlu0 %v1860, 96
          %v2192 = vpop.permute.xlu0 %2191
          %2193 = vrot.lane.b32.xlu0 %v1865, 96
          %v2194 = vpop.permute.xlu0 %2193
          %v2198 = vsel %vm1972, %v2187, 0
          %v2201 = vsel %vm1972, %v2188, 0
          %2203 = vmatprep.subr.mxu0 0.0
          %2204 = vmatpush1.msra.mxu0 0.0
          %2205 = vmatprep.subr.mxu0 0.0
          %2206 = vmatpush1.msra.mxu0 0.0
          %2207 = vmatprep.subr.mxu0 0.0
          %2208 = vmatpush1.msra.mxu0 0.0
          %2209 = vmatprep.subr.mxu0 0.0
          %2210 = vmatpush1.msra.mxu0 0.0
          %2211 = vmatprep.subr.mxu0 0.0
          %2212 = vmatpush1.msra.mxu0 0.0
          %2213 = vmatprep.subr.mxu0 0.0
          %2214 = vmatpush1.msra.mxu0 0.0
          %2215 = vmatprep.subr.mxu0 0.0
          %2216 = vmatpush1.msra.mxu0 0.0
          %2217 = vmatprep.subr.mxu0 0.0
          %2218 = vmatpush1.msra.mxu0 0.0
          %2219 = vmatprep.subr.mxu0 0.0
          %2220 = vmatpush1.msra.mxu0 0.0
          %2221 = vmatprep.subr.mxu0 0.0
          %2222 = vmatpush1.msra.mxu0 0.0
          %2223 = vmatprep.subr.mxu0 0.0
          %2224 = vmatpush1.msra.mxu0 0.0
          %2225 = vmatprep.subr.mxu0 0.0
          %2226 = vmatpush1.msra.mxu0 0.0
          %2227 = vmatprep.subr.mxu0 0.0
          %2228 = vmatpush1.msra.mxu0 0.0
          %2229 = vmatprep.subr.mxu0 0.0
          %2230 = vmatpush1.msra.mxu0 0.0
          %2231 = vmatprep.subr.mxu0 0.0
          %2232 = vmatpush1.msra.mxu0 %v2194
          %2233 = vmatprep.subr.mxu0 0.0
          %2234 = vmatpush1.msra.mxu0 %v2192
          %2235 = vmatprep.subr.mxu0 0.0
          %2236 = vmatpush2.msra.mxu0 0.0
          %2237 = vmatprep.subr.mxu0 0.0
          %2238 = vmatpush2.msra.mxu0 0.0
          %2239 = vmatprep.subr.mxu0 0.0
          %2240 = vmatpush2.msra.mxu0 0.0
          %2241 = vmatprep.subr.mxu0 0.0
          %2242 = vmatpush2.msra.mxu0 0.0
          %2243 = vmatprep.subr.mxu0 0.0
          %2244 = vmatpush2.msra.mxu0 0.0
          %2245 = vmatprep.subr.mxu0 0.0
          %2246 = vmatpush2.msra.mxu0 0.0
          %2247 = vmatprep.subr.mxu0 0.0
          %2248 = vmatpush2.msra.mxu0 0.0
          %2249 = vmatprep.subr.mxu0 0.0
          %2250 = vmatpush2.msra.mxu0 0.0
          %2251 = vmatprep.subr.mxu0 0.0
          %2252 = vmatpush2.msra.mxu0 0.0
          %2253 = vmatprep.subr.mxu0 0.0
          %2254 = vmatpush2.msra.mxu0 0.0
          %2255 = vmatprep.subr.mxu0 0.0
          %2256 = vmatpush2.msra.mxu0 0.0
          %2257 = vmatprep.subr.mxu0 0.0
          %2258 = vmatpush2.msra.mxu0 0.0
          %2259 = vmatprep.subr.mxu0 0.0
          %2260 = vmatpush2.msra.mxu0 0.0
          %2261 = vmatprep.subr.mxu0 0.0
          %2262 = vmatpush2.msra.mxu0 0.0
          %2263 = vmatprep.subr.mxu0 0.0
          %2264 = vmatpush2.msra.mxu0 0.0
          %2265 = vmatprep.subr.mxu0 0.0
          %2266 = vmatpush2.msra.mxu0 0.0
          %2267 = vmatprep.mubr.f32.mxu0 0.0
          %2268 = vmatmul.mubr.f32.gmra.mxu0 %v2198
          %v2269 = vpop.f32.mrf.mxu0
          %v2270 = vadd.f32 0.0, %v2269
          %v2271 = vpop.f32.mrf.mxu0
          %2272 = vmatprep.mubr.f32.mxu0 0.0
          %2273 = vmatmul.mubr.f32.gmra.mxu0 %v2201
          %v2274 = vpop.f32.mrf.mxu0
          %v2275 = vadd.f32 0.0, %v2274
          %v2276 = vpop.f32.mrf.mxu0
          %2277 = vdwg.mxu0
          %2278 = vrot.lane.b32.xlu0 %v1678, 64
          %v2279 = vpop.permute.xlu0 %2278
          %2280 = vrot.lane.b32.xlu0 %v1683, 64
          %v2281 = vpop.permute.xlu0 %2280
          %2282 = vrot.lane.b32.xlu0 %v1769, 64
          %v2283 = vpop.permute.xlu0 %2282
          %2284 = vrot.lane.b32.xlu0 %v1774, 64
          %v2285 = vpop.permute.xlu0 %2284
          %v2286 = vsel %vm1884, %v2279, 0
          %v2288 = vsel %vm1884, %v2281, 0
          %v2290 = vsel %vm1884, %v2283, 0
          %v2292 = vsel %vm1884, %v2285, 0
          %2294 = vmatprep.subr.mxu0 0.0
          %2295 = vmatpush1.xpose.msra.mxu0 0.0
          %2296 = vmatprep.subr.mxu0 0.0
          %2297 = vmatpush1.xpose.msra.mxu0 0.0
          %2298 = vmatprep.subr.mxu0 0.0
          %2299 = vmatpush1.xpose.msra.mxu0 0.0
          %2300 = vmatprep.subr.mxu0 0.0
          %2301 = vmatpush1.xpose.msra.mxu0 0.0
          %2302 = vmatprep.subr.mxu0 0.0
          %2303 = vmatpush1.xpose.msra.mxu0 0.0
          %2304 = vmatprep.subr.mxu0 0.0
          %2305 = vmatpush1.xpose.msra.mxu0 0.0
          %2306 = vmatprep.subr.mxu0 0.0
          %2307 = vmatpush1.xpose.msra.mxu0 0.0
          %2308 = vmatprep.subr.mxu0 0.0
          %2309 = vmatpush1.xpose.msra.mxu0 0.0
          %2310 = vmatprep.subr.mxu0 0.0
          %2311 = vmatpush1.xpose.msra.mxu0 0.0
          %2312 = vmatprep.subr.mxu0 0.0
          %2313 = vmatpush1.xpose.msra.mxu0 0.0
          %2314 = vmatprep.subr.mxu0 0.0
          %2315 = vmatpush1.xpose.msra.mxu0 0.0
          %2316 = vmatprep.subr.mxu0 0.0
          %2317 = vmatpush1.xpose.msra.mxu0 0.0
          %2318 = vmatprep.subr.mxu0 0.0
          %2319 = vmatpush1.xpose.msra.mxu0 0.0
          %2320 = vmatprep.subr.mxu0 0.0
          %2321 = vmatpush1.xpose.msra.mxu0 0.0
          %2322 = vmatprep.subr.mxu0 0.0
          %2323 = vmatpush1.xpose.msra.mxu0 %v2292
          %2324 = vmatprep.subr.mxu0 0.0
          %2325 = vmatpush1.xpose.msra.mxu0 %v2290
          %2326 = vmatprep.subr.mxu0 0.0
          %2327 = vmatpush2.xpose.msra.mxu0 0.0
          %2328 = vmatprep.subr.mxu0 0.0
          %2329 = vmatpush2.xpose.msra.mxu0 0.0
          %2330 = vmatprep.subr.mxu0 0.0
          %2331 = vmatpush2.xpose.msra.mxu0 0.0
          %2332 = vmatprep.subr.mxu0 0.0
          %2333 = vmatpush2.xpose.msra.mxu0 0.0
          %2334 = vmatprep.subr.mxu0 0.0
          %2335 = vmatpush2.xpose.msra.mxu0 0.0
          %2336 = vmatprep.subr.mxu0 0.0
          %2337 = vmatpush2.xpose.msra.mxu0 0.0
          %2338 = vmatprep.subr.mxu0 0.0
          %2339 = vmatpush2.xpose.msra.mxu0 0.0
          %2340 = vmatprep.subr.mxu0 0.0
          %2341 = vmatpush2.xpose.msra.mxu0 0.0
          %2342 = vmatprep.subr.mxu0 0.0
          %2343 = vmatpush2.xpose.msra.mxu0 0.0
          %2344 = vmatprep.subr.mxu0 0.0
          %2345 = vmatpush2.xpose.msra.mxu0 0.0
          %2346 = vmatprep.subr.mxu0 0.0
          %2347 = vmatpush2.xpose.msra.mxu0 0.0
          %2348 = vmatprep.subr.mxu0 0.0
          %2349 = vmatpush2.xpose.msra.mxu0 0.0
          %2350 = vmatprep.subr.mxu0 0.0
          %2351 = vmatpush2.xpose.msra.mxu0 0.0
          %2352 = vmatprep.subr.mxu0 0.0
          %2353 = vmatpush2.xpose.msra.mxu0 0.0
          %2354 = vmatprep.subr.mxu0 0.0
          %2355 = vmatpush2.xpose.msra.mxu0 0.0
          %2356 = vmatprep.subr.mxu0 0.0
          %2357 = vmatpush2.xpose.msra.mxu0 0.0
          %2358 = vmatprep.mubr.f32.mxu0 0.0
          %2359 = vmatmul.mubr.f32.gmra.mxu0 %v2286
          %v2360 = vpop.f32.mrf.mxu0
          %v2361 = vadd.f32 0.0, %v2360
          %v2362 = vpop.f32.mrf.mxu0
          %2363 = vmatprep.mubr.f32.mxu0 0.0
          %2364 = vmatmul.mubr.f32.gmra.mxu0 %v2288
          %v2365 = vpop.f32.mrf.mxu0
          %v2366 = vadd.f32 0.0, %v2365
          %v2367 = vpop.f32.mrf.mxu0
          %2368 = vdwg.mxu0
          %v2369 = vsel %vm1972, %v2361, -inf
          %2370 = vmax.xlane.f32.xlu0 %v2369
          %v2371 = vpop.xlane.xlu0 %2370
          %v2372 = vsel %vm1972, %v2366, -inf
          %2373 = vmax.xlane.f32.xlu0 %v2372
          %v2374 = vpop.xlane.xlu0 %2373
          %v2375 = vsub.f32 %v2361, %v2371
          %v2376 = vsub.f32 %v2366, %v2374
          %v2377 = vmul.f32 %v2375, 1.442695
          %v2378 = vpow.pop %v2377
          %v2379 = vmul.f32 %v2376, 1.442695
          %v2380 = vpow.pop %v2379
          %v2381 = vsel %vm1972, %v2378, 0.0
          %2382 = vadd.xlane.f32.xlu0 %v2381
          %v2383 = vpop.xlane.xlu0 %2382
          %v2384 = vsel %vm1972, %v2380, 0.0
          %2385 = vadd.xlane.f32.xlu0 %v2384
          %v2386 = vpop.xlane.xlu0 %2385
          %v2387 = vrcp.pop %v2383
          %v2388 = vrcp.pop %v2386
          %v2389 = vmul.f32 %v2378, %v2387
          %v2390 = vmul.f32 %v2380, %v2388
          %2391 = vrot.lane.b32.xlu0 %v1860, 64
          %v2392 = vpop.permute.xlu0 %2391
          %2393 = vrot.lane.b32.xlu0 %v1865, 64
          %v2394 = vpop.permute.xlu0 %2393
          %v2398 = vsel %vm1972, %v2389, 0
          %v2401 = vsel %vm1972, %v2390, 0
          %2403 = vmatprep.subr.mxu0 0.0
          %2404 = vmatpush1.msra.mxu0 0.0
          %2405 = vmatprep.subr.mxu0 0.0
          %2406 = vmatpush1.msra.mxu0 0.0
          %2407 = vmatprep.subr.mxu0 0.0
          %2408 = vmatpush1.msra.mxu0 0.0
          %2409 = vmatprep.subr.mxu0 0.0
          %2410 = vmatpush1.msra.mxu0 0.0
          %2411 = vmatprep.subr.mxu0 0.0
          %2412 = vmatpush1.msra.mxu0 0.0
          %2413 = vmatprep.subr.mxu0 0.0
          %2414 = vmatpush1.msra.mxu0 0.0
          %2415 = vmatprep.subr.mxu0 0.0
          %2416 = vmatpush1.msra.mxu0 0.0
          %2417 = vmatprep.subr.mxu0 0.0
          %2418 = vmatpush1.msra.mxu0 0.0
          %2419 = vmatprep.subr.mxu0 0.0
          %2420 = vmatpush1.msra.mxu0 0.0
          %2421 = vmatprep.subr.mxu0 0.0
          %2422 = vmatpush1.msra.mxu0 0.0
          %2423 = vmatprep.subr.mxu0 0.0
          %2424 = vmatpush1.msra.mxu0 0.0
          %2425 = vmatprep.subr.mxu0 0.0
          %2426 = vmatpush1.msra.mxu0 0.0
          %2427 = vmatprep.subr.mxu0 0.0
          %2428 = vmatpush1.msra.mxu0 0.0
          %2429 = vmatprep.subr.mxu0 0.0
          %2430 = vmatpush1.msra.mxu0 0.0
          %2431 = vmatprep.subr.mxu0 0.0
          %2432 = vmatpush1.msra.mxu0 %v2394
          %2433 = vmatprep.subr.mxu0 0.0
          %2434 = vmatpush1.msra.mxu0 %v2392
          %2435 = vmatprep.subr.mxu0 0.0
          %2436 = vmatpush2.msra.mxu0 0.0
          %2437 = vmatprep.subr.mxu0 0.0
          %2438 = vmatpush2.msra.mxu0 0.0
          %2439 = vmatprep.subr.mxu0 0.0
          %2440 = vmatpush2.msra.mxu0 0.0
          %2441 = vmatprep.subr.mxu0 0.0
          %2442 = vmatpush2.msra.mxu0 0.0
          %2443 = vmatprep.subr.mxu0 0.0
          %2444 = vmatpush2.msra.mxu0 0.0
          %2445 = vmatprep.subr.mxu0 0.0
          %2446 = vmatpush2.msra.mxu0 0.0
          %2447 = vmatprep.subr.mxu0 0.0
          %2448 = vmatpush2.msra.mxu0 0.0
          %2449 = vmatprep.subr.mxu0 0.0
          %2450 = vmatpush2.msra.mxu0 0.0
          %2451 = vmatprep.subr.mxu0 0.0
          %2452 = vmatpush2.msra.mxu0 0.0
          %2453 = vmatprep.subr.mxu0 0.0
          %2454 = vmatpush2.msra.mxu0 0.0
          %2455 = vmatprep.subr.mxu0 0.0
          %2456 = vmatpush2.msra.mxu0 0.0
          %2457 = vmatprep.subr.mxu0 0.0
          %2458 = vmatpush2.msra.mxu0 0.0
          %2459 = vmatprep.subr.mxu0 0.0
          %2460 = vmatpush2.msra.mxu0 0.0
          %2461 = vmatprep.subr.mxu0 0.0
          %2462 = vmatpush2.msra.mxu0 0.0
          %2463 = vmatprep.subr.mxu0 0.0
          %2464 = vmatpush2.msra.mxu0 0.0
          %2465 = vmatprep.subr.mxu0 0.0
          %2466 = vmatpush2.msra.mxu0 0.0
          %2467 = vmatprep.mubr.f32.mxu0 0.0
          %2468 = vmatmul.mubr.f32.gmra.mxu0 %v2398
          %v2469 = vpop.f32.mrf.mxu0
          %v2470 = vadd.f32 0.0, %v2469
          %v2471 = vpop.f32.mrf.mxu0
          %2472 = vmatprep.mubr.f32.mxu0 0.0
          %2473 = vmatmul.mubr.f32.gmra.mxu0 %v2401
          %v2474 = vpop.f32.mrf.mxu0
          %v2475 = vadd.f32 0.0, %v2474
          %v2476 = vpop.f32.mrf.mxu0
          %2477 = vdwg.mxu0
          %2478 = vrot.lane.b32.xlu0 %v1678, 32
          %v2479 = vpop.permute.xlu0 %2478
          %2480 = vrot.lane.b32.xlu0 %v1683, 32
          %v2481 = vpop.permute.xlu0 %2480
          %2482 = vrot.lane.b32.xlu0 %v1769, 32
          %v2483 = vpop.permute.xlu0 %2482
          %2484 = vrot.lane.b32.xlu0 %v1774, 32
          %v2485 = vpop.permute.xlu0 %2484
          %v2486 = vsel %vm1884, %v2479, 0
          %v2488 = vsel %vm1884, %v2481, 0
          %v2490 = vsel %vm1884, %v2483, 0
          %v2492 = vsel %vm1884, %v2485, 0
          %2494 = vmatprep.subr.mxu0 0.0
          %2495 = vmatpush1.xpose.msra.mxu0 0.0
          %2496 = vmatprep.subr.mxu0 0.0
          %2497 = vmatpush1.xpose.msra.mxu0 0.0
          %2498 = vmatprep.subr.mxu0 0.0
          %2499 = vmatpush1.xpose.msra.mxu0 0.0
          %2500 = vmatprep.subr.mxu0 0.0
          %2501 = vmatpush1.xpose.msra.mxu0 0.0
          %2502 = vmatprep.subr.mxu0 0.0
          %2503 = vmatpush1.xpose.msra.mxu0 0.0
          %2504 = vmatprep.subr.mxu0 0.0
          %2505 = vmatpush1.xpose.msra.mxu0 0.0
          %2506 = vmatprep.subr.mxu0 0.0
          %2507 = vmatpush1.xpose.msra.mxu0 0.0
          %2508 = vmatprep.subr.mxu0 0.0
          %2509 = vmatpush1.xpose.msra.mxu0 0.0
          %2510 = vmatprep.subr.mxu0 0.0
          %2511 = vmatpush1.xpose.msra.mxu0 0.0
          %2512 = vmatprep.subr.mxu0 0.0
          %2513 = vmatpush1.xpose.msra.mxu0 0.0
          %2514 = vmatprep.subr.mxu0 0.0
          %2515 = vmatpush1.xpose.msra.mxu0 0.0
          %2516 = vmatprep.subr.mxu0 0.0
          %2517 = vmatpush1.xpose.msra.mxu0 0.0
          %2518 = vmatprep.subr.mxu0 0.0
          %2519 = vmatpush1.xpose.msra.mxu0 0.0
          %2520 = vmatprep.subr.mxu0 0.0
          %2521 = vmatpush1.xpose.msra.mxu0 0.0
          %2522 = vmatprep.subr.mxu0 0.0
          %2523 = vmatpush1.xpose.msra.mxu0 %v2492
          %2524 = vmatprep.subr.mxu0 0.0
          %2525 = vmatpush1.xpose.msra.mxu0 %v2490
          %2526 = vmatprep.subr.mxu0 0.0
          %2527 = vmatpush2.xpose.msra.mxu0 0.0
          %2528 = vmatprep.subr.mxu0 0.0
          %2529 = vmatpush2.xpose.msra.mxu0 0.0
          %2530 = vmatprep.subr.mxu0 0.0
          %2531 = vmatpush2.xpose.msra.mxu0 0.0
          %2532 = vmatprep.subr.mxu0 0.0
          %2533 = vmatpush2.xpose.msra.mxu0 0.0
          %2534 = vmatprep.subr.mxu0 0.0
          %2535 = vmatpush2.xpose.msra.mxu0 0.0
          %2536 = vmatprep.subr.mxu0 0.0
          %2537 = vmatpush2.xpose.msra.mxu0 0.0
          %2538 = vmatprep.subr.mxu0 0.0
          %2539 = vmatpush2.xpose.msra.mxu0 0.0
          %2540 = vmatprep.subr.mxu0 0.0
          %2541 = vmatpush2.xpose.msra.mxu0 0.0
          %2542 = vmatprep.subr.mxu0 0.0
          %2543 = vmatpush2.xpose.msra.mxu0 0.0
          %2544 = vmatprep.subr.mxu0 0.0
          %2545 = vmatpush2.xpose.msra.mxu0 0.0
          %2546 = vmatprep.subr.mxu0 0.0
          %2547 = vmatpush2.xpose.msra.mxu0 0.0
          %2548 = vmatprep.subr.mxu0 0.0
          %2549 = vmatpush2.xpose.msra.mxu0 0.0
          %2550 = vmatprep.subr.mxu0 0.0
          %2551 = vmatpush2.xpose.msra.mxu0 0.0
          %2552 = vmatprep.subr.mxu0 0.0
          %2553 = vmatpush2.xpose.msra.mxu0 0.0
          %2554 = vmatprep.subr.mxu0 0.0
          %2555 = vmatpush2.xpose.msra.mxu0 0.0
          %2556 = vmatprep.subr.mxu0 0.0
          %2557 = vmatpush2.xpose.msra.mxu0 0.0
          %2558 = vmatprep.mubr.f32.mxu0 0.0
          %2559 = vmatmul.mubr.f32.gmra.mxu0 %v2486
          %v2560 = vpop.f32.mrf.mxu0
          %v2561 = vadd.f32 0.0, %v2560
          %v2562 = vpop.f32.mrf.mxu0
          %2563 = vmatprep.mubr.f32.mxu0 0.0
          %2564 = vmatmul.mubr.f32.gmra.mxu0 %v2488
          %v2565 = vpop.f32.mrf.mxu0
          %v2566 = vadd.f32 0.0, %v2565
          %v2567 = vpop.f32.mrf.mxu0
          %2568 = vdwg.mxu0
          %v2569 = vsel %vm1972, %v2561, -inf
          %2570 = vmax.xlane.f32.xlu0 %v2569
          %v2571 = vpop.xlane.xlu0 %2570
          %v2572 = vsel %vm1972, %v2566, -inf
          %2573 = vmax.xlane.f32.xlu0 %v2572
          %v2574 = vpop.xlane.xlu0 %2573
          %v2575 = vsub.f32 %v2561, %v2571
          %v2576 = vsub.f32 %v2566, %v2574
          %v2577 = vmul.f32 %v2575, 1.442695
          %v2578 = vpow.pop %v2577
          %v2579 = vmul.f32 %v2576, 1.442695
          %v2580 = vpow.pop %v2579
          %v2581 = vsel %vm1972, %v2578, 0.0
          %2582 = vadd.xlane.f32.xlu0 %v2581
          %v2583 = vpop.xlane.xlu0 %2582
          %v2584 = vsel %vm1972, %v2580, 0.0
          %2585 = vadd.xlane.f32.xlu0 %v2584
          %v2586 = vpop.xlane.xlu0 %2585
          %v2587 = vrcp.pop %v2583
          %v2588 = vrcp.pop %v2586
          %v2589 = vmul.f32 %v2578, %v2587
          %v2590 = vmul.f32 %v2580, %v2588
          %2591 = vrot.lane.b32.xlu0 %v1860, 32
          %v2592 = vpop.permute.xlu0 %2591
          %2593 = vrot.lane.b32.xlu0 %v1865, 32
          %v2594 = vpop.permute.xlu0 %2593
          %v2598 = vsel %vm1972, %v2589, 0
          %v2601 = vsel %vm1972, %v2590, 0
          %2603 = vmatprep.subr.mxu0 0.0
          %2604 = vmatpush1.msra.mxu0 0.0
          %2605 = vmatprep.subr.mxu0 0.0
          %2606 = vmatpush1.msra.mxu0 0.0
          %2607 = vmatprep.subr.mxu0 0.0
          %2608 = vmatpush1.msra.mxu0 0.0
          %2609 = vmatprep.subr.mxu0 0.0
          %2610 = vmatpush1.msra.mxu0 0.0
          %2611 = vmatprep.subr.mxu0 0.0
          %2612 = vmatpush1.msra.mxu0 0.0
          %2613 = vmatprep.subr.mxu0 0.0
          %2614 = vmatpush1.msra.mxu0 0.0
          %2615 = vmatprep.subr.mxu0 0.0
          %2616 = vmatpush1.msra.mxu0 0.0
          %2617 = vmatprep.subr.mxu0 0.0
          %2618 = vmatpush1.msra.mxu0 0.0
          %2619 = vmatprep.subr.mxu0 0.0
          %2620 = vmatpush1.msra.mxu0 0.0
          %2621 = vmatprep.subr.mxu0 0.0
          %2622 = vmatpush1.msra.mxu0 0.0
          %2623 = vmatprep.subr.mxu0 0.0
          %2624 = vmatpush1.msra.mxu0 0.0
          %2625 = vmatprep.subr.mxu0 0.0
          %2626 = vmatpush1.msra.mxu0 0.0
          %2627 = vmatprep.subr.mxu0 0.0
          %2628 = vmatpush1.msra.mxu0 0.0
          %2629 = vmatprep.subr.mxu0 0.0
          %2630 = vmatpush1.msra.mxu0 0.0
          %2631 = vmatprep.subr.mxu0 0.0
          %2632 = vmatpush1.msra.mxu0 %v2594
          %2633 = vmatprep.subr.mxu0 0.0
          %2634 = vmatpush1.msra.mxu0 %v2592
          %2635 = vmatprep.subr.mxu0 0.0
          %2636 = vmatpush2.msra.mxu0 0.0
          %2637 = vmatprep.subr.mxu0 0.0
          %2638 = vmatpush2.msra.mxu0 0.0
          %2639 = vmatprep.subr.mxu0 0.0
          %2640 = vmatpush2.msra.mxu0 0.0
          %2641 = vmatprep.subr.mxu0 0.0
          %2642 = vmatpush2.msra.mxu0 0.0
          %2643 = vmatprep.subr.mxu0 0.0
          %2644 = vmatpush2.msra.mxu0 0.0
          %2645 = vmatprep.subr.mxu0 0.0
          %2646 = vmatpush2.msra.mxu0 0.0
          %2647 = vmatprep.subr.mxu0 0.0
          %2648 = vmatpush2.msra.mxu0 0.0
          %2649 = vmatprep.subr.mxu0 0.0
          %2650 = vmatpush2.msra.mxu0 0.0
          %2651 = vmatprep.subr.mxu0 0.0
          %2652 = vmatpush2.msra.mxu0 0.0
          %2653 = vmatprep.subr.mxu0 0.0
          %2654 = vmatpush2.msra.mxu0 0.0
          %2655 = vmatprep.subr.mxu0 0.0
          %2656 = vmatpush2.msra.mxu0 0.0
          %2657 = vmatprep.subr.mxu0 0.0
          %2658 = vmatpush2.msra.mxu0 0.0
          %2659 = vmatprep.subr.mxu0 0.0
          %2660 = vmatpush2.msra.mxu0 0.0
          %2661 = vmatprep.subr.mxu0 0.0
          %2662 = vmatpush2.msra.mxu0 0.0
          %2663 = vmatprep.subr.mxu0 0.0
          %2664 = vmatpush2.msra.mxu0 0.0
          %2665 = vmatprep.subr.mxu0 0.0
          %2666 = vmatpush2.msra.mxu0 0.0
          %2667 = vmatprep.mubr.f32.mxu0 0.0
          %2668 = vmatmul.mubr.f32.gmra.mxu0 %v2598
          %v2669 = vpop.f32.mrf.mxu0
          %v2670 = vadd.f32 0.0, %v2669
          %v2671 = vpop.f32.mrf.mxu0
          %2672 = vmatprep.mubr.f32.mxu0 0.0
          %2673 = vmatmul.mubr.f32.gmra.mxu0 %v2601
          %v2674 = vpop.f32.mrf.mxu0
          %v2675 = vadd.f32 0.0, %v2674
          %v2676 = vpop.f32.mrf.mxu0
          %2677 = vdwg.mxu0
          %2680 = vrot.lane.b32.xlu0 %v2270, 32
          %v2681 = vpop.permute.xlu0 %2680
          %2682 = vrot.lane.b32.xlu0 %v2275, 32
          %v2683 = vpop.permute.xlu0 %2682
          %2688 = vrot.lane.b32.xlu0 %v2470, 64
          %v2689 = vpop.permute.xlu0 %2688
          %2690 = vrot.lane.b32.xlu0 %v2475, 64
          %v2691 = vpop.permute.xlu0 %2690
          %2696 = vrot.lane.b32.xlu0 %v2670, 96
          %v2697 = vpop.permute.xlu0 %2696
          %2698 = vrot.lane.b32.xlu0 %v2675, 96
          %v2699 = vpop.permute.xlu0 %2698
          %v2702 = vsel %vm1884, %v2068, %v2681
          %v2703 = vsel %vm1884, %v2073, %v2683
          %vm2704 = vcmask 523264
          %v2705 = vsel %vm2704, %v2702, %v2689
          %v2706 = vsel %vm2704, %v2703, %v2691
          %vm2707 = vcmask 785408
          %v2708 = vsel %vm2707, %v2705, %v2697
          %v2709 = vsel %vm2707, %v2706, %v2699
          %2710 = vmatprep.subr.mxu0 0.0
          %2711 = vmatpush1.msra.mxu0 %v1883
          %2712 = vmatprep.subr.mxu0 0.0
          %2713 = vmatpush1.msra.mxu0 %v1882
          %2714 = vmatprep.subr.mxu0 0.0
          %2715 = vmatpush1.msra.mxu0 %v1881
          %2716 = vmatprep.subr.mxu0 0.0
          %2717 = vmatpush1.msra.mxu0 %v1880
          %2718 = vmatprep.subr.mxu0 0.0
          %2719 = vmatpush1.msra.mxu0 %v1879
          %2720 = vmatprep.subr.mxu0 0.0
          %2721 = vmatpush1.msra.mxu0 %v1878
          %2722 = vmatprep.subr.mxu0 0.0
          %2723 = vmatpush1.msra.mxu0 %v1877
          %2724 = vmatprep.subr.mxu0 0.0
          %2725 = vmatpush1.msra.mxu0 %v1876
          %2726 = vmatprep.subr.mxu0 0.0
          %2727 = vmatpush1.msra.mxu0 %v1875
          %2728 = vmatprep.subr.mxu0 0.0
          %2729 = vmatpush1.msra.mxu0 %v1874
          %2730 = vmatprep.subr.mxu0 0.0
          %2731 = vmatpush1.msra.mxu0 %v1873
          %2732 = vmatprep.subr.mxu0 0.0
          %2733 = vmatpush1.msra.mxu0 %v1872
          %2734 = vmatprep.subr.mxu0 0.0
          %2735 = vmatpush1.msra.mxu0 %v1871
          %2736 = vmatprep.subr.mxu0 0.0
          %2737 = vmatpush1.msra.mxu0 %v1870
          %2738 = vmatprep.subr.mxu0 0.0
          %2739 = vmatpush1.msra.mxu0 %v1869
          %2740 = vmatprep.subr.mxu0 0.0
          %2741 = vmatpush1.msra.mxu0 %v1868
          %2742 = vmatprep.subr.mxu0 0.0
          %2743 = vmatpush2.msra.mxu0 0.0
          %2744 = vmatprep.subr.mxu0 0.0
          %2745 = vmatpush2.msra.mxu0 0.0
          %2746 = vmatprep.subr.mxu0 0.0
          %2747 = vmatpush2.msra.mxu0 0.0
          %2748 = vmatprep.subr.mxu0 0.0
          %2749 = vmatpush2.msra.mxu0 0.0
          %2750 = vmatprep.subr.mxu0 0.0
          %2751 = vmatpush2.msra.mxu0 0.0
          %2752 = vmatprep.subr.mxu0 0.0
          %2753 = vmatpush2.msra.mxu0 0.0
          %2754 = vmatprep.subr.mxu0 0.0
          %2755 = vmatpush2.msra.mxu0 0.0
          %2756 = vmatprep.subr.mxu0 0.0
          %2757 = vmatpush2.msra.mxu0 0.0
          %2758 = vmatprep.subr.mxu0 0.0
          %2759 = vmatpush2.msra.mxu0 0.0
          %2760 = vmatprep.subr.mxu0 0.0
          %2761 = vmatpush2.msra.mxu0 0.0
          %2762 = vmatprep.subr.mxu0 0.0
          %2763 = vmatpush2.msra.mxu0 0.0
          %2764 = vmatprep.subr.mxu0 0.0
          %2765 = vmatpush2.msra.mxu0 0.0
          %2766 = vmatprep.subr.mxu0 0.0
          %2767 = vmatpush2.msra.mxu0 0.0
          %2768 = vmatprep.subr.mxu0 0.0
          %2769 = vmatpush2.msra.mxu0 0.0
          %2770 = vmatprep.subr.mxu0 0.0
          %2771 = vmatpush2.msra.mxu0 0.0
          %2772 = vmatprep.subr.mxu0 0.0
          %2773 = vmatpush2.msra.mxu0 0.0
          %2774 = vmatprep.mubr.f32.mxu0 0.0
          %2775 = vmatmul.mubr.f32.gmra.mxu0 %v2708
          %v2776 = vpop.f32.mrf.mxu0
          %v2777 = vadd.f32 %v1590, %v2776
          %v2778 = vpop.f32.mrf.mxu0
          %2779 = vmatprep.mubr.f32.mxu0 0.0
          %2780 = vmatmul.mubr.f32.gmra.mxu0 %v2709
          %v2781 = vpop.f32.mrf.mxu0
          %v2782 = vadd.f32 %v1591, %v2781
          %v2783 = vpop.f32.mrf.mxu0
          %2784 = vdwg.mxu0
          %2785 = vadd.xlane.f32.xlu0 %v2777
          %v2786 = vpop.xlane.xlu0 %2785
          %2787 = vadd.xlane.f32.xlu0 %v2782
          %v2788 = vpop.xlane.xlu0 %2787
          %v2789 = vrcp.pop 128.0
          %v2790 = vmul.f32 %v2786, %v2789
          %v2791 = vmul.f32 %v2788, %v2789
          %v2792 = vsub.f32 %v2777, %v2790
          %v2793 = vsub.f32 %v2782, %v2791
          %v2794 = vmul.f32 %v2792, %v2792
          %v2795 = vmul.f32 %v2793, %v2793
          %2796 = vadd.xlane.f32.xlu0 %v2794
          %v2797 = vpop.xlane.xlu0 %2796
          %2798 = vadd.xlane.f32.xlu0 %v2795
          %v2799 = vpop.xlane.xlu0 %2798
          %v2800 = vmul.f32 %v2797, %v2789
          %v2801 = vmul.f32 %v2799, %v2789
          %v2802 = vadd.f32 %v2800, 1e-05
          %v2803 = vadd.f32 %v2801, 1e-05
          %v2804 = vrsqrt.pop %v2802
          %v2805 = vrsqrt.pop %v2803
          %v2806 = vmul.f32 %v2792, %v2804
          %v2807 = vmul.f32 %v2793, %v2805
          %v2808 = vlaneseq
          %v2809 = vshrl.u32 %v2808, 7
          %v2810 = vsub.s32 0, %v2809
          %v2811 = vrot.slane %v1592, %v2810
          %v2812 = vmul.f32 %v2806, %v2811
          %v2813 = vmul.f32 %v2807, %v2811
          %v2814 = vlaneseq
          %v2815 = vshrl.u32 %v2814, 7
          %v2816 = vsub.s32 1, %v2815
          %v2817 = vrot.slane %v1592, %v2816
          %v2818 = vadd.f32 %v2812, %v2817
          %v2819 = vadd.f32 %v2813, %v2817
          %v2820 = vld [vmem:[%s1518] sm:$0xff]
          %v2821 = vld [vmem:[%s1518 + $0x8] sm:$0xff]
          %v2822 = vld [vmem:[%s1518 + $0x10] sm:$0xff]
          %v2823 = vld [vmem:[%s1518 + $0x18] sm:$0xff]
          %v2824 = vld [vmem:[%s1518 + $0x20] sm:$0xff]
          %v2825 = vld [vmem:[%s1518 + $0x28] sm:$0xff]
          %v2826 = vld [vmem:[%s1518 + $0x30] sm:$0xff]
          %v2827 = vld [vmem:[%s1518 + $0x38] sm:$0xff]
          %v2828 = vld [vmem:[%s1518 + $0x40] sm:$0xff]
          %v2829 = vld [vmem:[%s1518 + $0x48] sm:$0xff]
          %v2830 = vld [vmem:[%s1518 + $0x50] sm:$0xff]
          %v2831 = vld [vmem:[%s1518 + $0x58] sm:$0xff]
          %v2832 = vld [vmem:[%s1518 + $0x60] sm:$0xff]
          %v2833 = vld [vmem:[%s1518 + $0x68] sm:$0xff]
          %v2834 = vld [vmem:[%s1518 + $0x70] sm:$0xff]
          %v2835 = vld [vmem:[%s1518 + $0x78] sm:$0xff]
          %v2836 = vld [vmem:[%s1518 + $0x80] sm:$0xff]
          %v2837 = vld [vmem:[%s1518 + $0x88] sm:$0xff]
          %v2838 = vld [vmem:[%s1518 + $0x90] sm:$0xff]
          %v2839 = vld [vmem:[%s1518 + $0x98] sm:$0xff]
          %v2840 = vld [vmem:[%s1518 + $0xa0] sm:$0xff]
          %v2841 = vld [vmem:[%s1518 + $0xa8] sm:$0xff]
          %v2842 = vld [vmem:[%s1518 + $0xb0] sm:$0xff]
          %v2843 = vld [vmem:[%s1518 + $0xb8] sm:$0xff]
          %v2844 = vld [vmem:[%s1518 + $0xc0] sm:$0xff]
          %v2845 = vld [vmem:[%s1518 + $0xc8] sm:$0xff]
          %v2846 = vld [vmem:[%s1518 + $0xd0] sm:$0xff]
          %v2847 = vld [vmem:[%s1518 + $0xd8] sm:$0xff]
          %v2848 = vld [vmem:[%s1518 + $0xe0] sm:$0xff]
          %v2849 = vld [vmem:[%s1518 + $0xe8] sm:$0xff]
          %v2850 = vld [vmem:[%s1518 + $0xf0] sm:$0xff]
          %v2851 = vld [vmem:[%s1518 + $0xf8] sm:$0xff]
          %v2852 = vlaneseq
          %v2853 = vshrl.u32 %v2852, 7
          %v2854 = vsub.s32 0, %v2853
          %v2855 = vrot.slane %v1593, %v2854
          %v2856 = vlaneseq
          %v2857 = vshrl.u32 %v2856, 7
          %v2858 = vsub.s32 0, %v2857
          %v2859 = vrot.slane %v1594, %v2858
          %2860 = vmatprep.subr.mxu0 %v2851
          %2861 = vmatpush1.msra.mxu0 %v2850
          %2862 = vmatprep.subr.mxu0 %v2849
          %2863 = vmatpush1.msra.mxu0 %v2848
          %2864 = vmatprep.subr.mxu0 %v2847
          %2865 = vmatpush1.msra.mxu0 %v2846
          %2866 = vmatprep.subr.mxu0 %v2845
          %2867 = vmatpush1.msra.mxu0 %v2844
          %2868 = vmatprep.subr.mxu0 %v2843
          %2869 = vmatpush1.msra.mxu0 %v2842
          %2870 = vmatprep.subr.mxu0 %v2841
          %2871 = vmatpush1.msra.mxu0 %v2840
          %2872 = vmatprep.subr.mxu0 %v2839
          %2873 = vmatpush1.msra.mxu0 %v2838
          %2874 = vmatprep.subr.mxu0 %v2837
          %2875 = vmatpush1.msra.mxu0 %v2836
          %2876 = vmatprep.subr.mxu0 %v2835
          %2877 = vmatpush1.msra.mxu0 %v2834
          %2878 = vmatprep.subr.mxu0 %v2833
          %2879 = vmatpush1.msra.mxu0 %v2832
          %2880 = vmatprep.subr.mxu0 %v2831
          %2881 = vmatpush1.msra.mxu0 %v2830
          %2882 = vmatprep.subr.mxu0 %v2829
          %2883 = vmatpush1.msra.mxu0 %v2828
          %2884 = vmatprep.subr.mxu0 %v2827
          %2885 = vmatpush1.msra.mxu0 %v2826
          %2886 = vmatprep.subr.mxu0 %v2825
          %2887 = vmatpush1.msra.mxu0 %v2824
          %2888 = vmatprep.subr.mxu0 %v2823
          %2889 = vmatpush1.msra.mxu0 %v2822
          %2890 = vmatprep.subr.mxu0 %v2821
          %2891 = vmatpush1.msra.mxu0 %v2820
          %2892 = vmatprep.subr.mxu0 0.0
          %2893 = vmatpush2.msra.mxu0 0.0
          %2894 = vmatprep.subr.mxu0 0.0
          %2895 = vmatpush2.msra.mxu0 0.0
          %2896 = vmatprep.subr.mxu0 0.0
          %2897 = vmatpush2.msra.mxu0 0.0
          %2898 = vmatprep.subr.mxu0 0.0
          %2899 = vmatpush2.msra.mxu0 0.0
          %2900 = vmatprep.subr.mxu0 0.0
          %2901 = vmatpush2.msra.mxu0 0.0
          %2902 = vmatprep.subr.mxu0 0.0
          %2903 = vmatpush2.msra.mxu0 0.0
          %2904 = vmatprep.subr.mxu0 0.0
          %2905 = vmatpush2.msra.mxu0 0.0
          %2906 = vmatprep.subr.mxu0 0.0
          %2907 = vmatpush2.msra.mxu0 0.0
          %2908 = vmatprep.subr.mxu0 0.0
          %2909 = vmatpush2.msra.mxu0 0.0
          %2910 = vmatprep.subr.mxu0 0.0
          %2911 = vmatpush2.msra.mxu0 0.0
          %2912 = vmatprep.subr.mxu0 0.0
          %2913 = vmatpush2.msra.mxu0 0.0
          %2914 = vmatprep.subr.mxu0 0.0
          %2915 = vmatpush2.msra.mxu0 0.0
          %2916 = vmatprep.subr.mxu0 0.0
          %2917 = vmatpush2.msra.mxu0 0.0
          %2918 = vmatprep.subr.mxu0 0.0
          %2919 = vmatpush2.msra.mxu0 0.0
          %2920 = vmatprep.subr.mxu0 0.0
          %2921 = vmatpush2.msra.mxu0 0.0
          %2922 = vmatprep.subr.mxu0 0.0
          %2923 = vmatpush2.msra.mxu0 0.0
          %2924 = vmatprep.mubr.f32.mxu0 0.0
          %2925 = vmatmul.mubr.f32.gmra.mxu0 %v2818
          %v2926 = vpop.f32.mrf.mxu0
          %v2927 = vadd.f32 %v2855, %v2926
          %v2928 = vpop.f32.mrf.mxu0
          %v2929 = vadd.f32 %v2859, %v2928
          %2930 = vmatprep.mubr.f32.mxu0 0.0
          %2931 = vmatmul.mubr.f32.gmra.mxu0 %v2819
          %v2932 = vpop.f32.mrf.mxu0
          %v2933 = vadd.f32 %v2855, %v2932
          %v2934 = vpop.f32.mrf.mxu0
          %v2935 = vadd.f32 %v2859, %v2934
          %2936 = vdwg.mxu0
          %v2937 = vmax.f32 %v2927, 0.0
          %v2938 = vmax.f32 %v2929, 0.0
          %v2939 = vmax.f32 %v2933, 0.0
          %v2940 = vmax.f32 %v2935, 0.0
          %v2941 = vld [vmem:[%s1229] sm:$0xff]
          %v2942 = vld [vmem:[%s1229 + $0x8] sm:$0xff]
          %v2943 = vld [vmem:[%s1229 + $0x10] sm:$0xff]
          %v2944 = vld [vmem:[%s1229 + $0x18] sm:$0xff]
          %v2945 = vld [vmem:[%s1229 + $0x20] sm:$0xff]
          %v2946 = vld [vmem:[%s1229 + $0x28] sm:$0xff]
          %v2947 = vld [vmem:[%s1229 + $0x30] sm:$0xff]
          %v2948 = vld [vmem:[%s1229 + $0x38] sm:$0xff]
          %v2949 = vld [vmem:[%s1229 + $0x40] sm:$0xff]
          %v2950 = vld [vmem:[%s1229 + $0x48] sm:$0xff]
          %v2951 = vld [vmem:[%s1229 + $0x50] sm:$0xff]
          %v2952 = vld [vmem:[%s1229 + $0x58] sm:$0xff]
          %v2953 = vld [vmem:[%s1229 + $0x60] sm:$0xff]
          %v2954 = vld [vmem:[%s1229 + $0x68] sm:$0xff]
          %v2955 = vld [vmem:[%s1229 + $0x70] sm:$0xff]
          %v2956 = vld [vmem:[%s1229 + $0x78] sm:$0xff]
          %v2957 = vld [vmem:[%s1229 + $0x80] sm:$0xff]
          %v2958 = vld [vmem:[%s1229 + $0x88] sm:$0xff]
          %v2959 = vld [vmem:[%s1229 + $0x90] sm:$0xff]
          %v2960 = vld [vmem:[%s1229 + $0x98] sm:$0xff]
          %v2961 = vld [vmem:[%s1229 + $0xa0] sm:$0xff]
          %v2962 = vld [vmem:[%s1229 + $0xa8] sm:$0xff]
          %v2963 = vld [vmem:[%s1229 + $0xb0] sm:$0xff]
          %v2964 = vld [vmem:[%s1229 + $0xb8] sm:$0xff]
          %v2965 = vld [vmem:[%s1229 + $0xc0] sm:$0xff]
          %v2966 = vld [vmem:[%s1229 + $0xc8] sm:$0xff]
          %v2967 = vld [vmem:[%s1229 + $0xd0] sm:$0xff]
          %v2968 = vld [vmem:[%s1229 + $0xd8] sm:$0xff]
          %v2969 = vld [vmem:[%s1229 + $0xe0] sm:$0xff]
          %v2970 = vld [vmem:[%s1229 + $0xe8] sm:$0xff]
          %v2971 = vld [vmem:[%s1229 + $0xf0] sm:$0xff]
          %v2972 = vld [vmem:[%s1229 + $0xf8] sm:$0xff]
          %v2973 = vlaneseq
          %v2974 = vshrl.u32 %v2973, 7
          %v2975 = vsub.s32 4, %v2974
          %v2976 = vrot.slane %v1592, %v2975
          %2977 = vmatprep.subr.mxu0 0.0
          %2978 = vmatpush1.msra.mxu0 %v2956
          %2979 = vmatprep.subr.mxu0 0.0
          %2980 = vmatpush1.msra.mxu0 %v2955
          %2981 = vmatprep.subr.mxu0 0.0
          %2982 = vmatpush1.msra.mxu0 %v2954
          %2983 = vmatprep.subr.mxu0 0.0
          %2984 = vmatpush1.msra.mxu0 %v2953
          %2985 = vmatprep.subr.mxu0 0.0
          %2986 = vmatpush1.msra.mxu0 %v2952
          %2987 = vmatprep.subr.mxu0 0.0
          %2988 = vmatpush1.msra.mxu0 %v2951
          %2989 = vmatprep.subr.mxu0 0.0
          %2990 = vmatpush1.msra.mxu0 %v2950
          %2991 = vmatprep.subr.mxu0 0.0
          %2992 = vmatpush1.msra.mxu0 %v2949
          %2993 = vmatprep.subr.mxu0 0.0
          %2994 = vmatpush1.msra.mxu0 %v2948
          %2995 = vmatprep.subr.mxu0 0.0
          %2996 = vmatpush1.msra.mxu0 %v2947
          %2997 = vmatprep.subr.mxu0 0.0
          %2998 = vmatpush1.msra.mxu0 %v2946
          %2999 = vmatprep.subr.mxu0 0.0
          %3000 = vmatpush1.msra.mxu0 %v2945
          %3001 = vmatprep.subr.mxu0 0.0
          %3002 = vmatpush1.msra.mxu0 %v2944
          %3003 = vmatprep.subr.mxu0 0.0
          %3004 = vmatpush1.msra.mxu0 %v2943
          %3005 = vmatprep.subr.mxu0 0.0
          %3006 = vmatpush1.msra.mxu0 %v2942
          %3007 = vmatprep.subr.mxu0 0.0
          %3008 = vmatpush1.msra.mxu0 %v2941
          %3009 = vmatprep.subr.mxu0 0.0
          %3010 = vmatpush2.msra.mxu0 %v2972
          %3011 = vmatprep.subr.mxu0 0.0
          %3012 = vmatpush2.msra.mxu0 %v2971
          %3013 = vmatprep.subr.mxu0 0.0
          %3014 = vmatpush2.msra.mxu0 %v2970
          %3015 = vmatprep.subr.mxu0 0.0
          %3016 = vmatpush2.msra.mxu0 %v2969
          %3017 = vmatprep.subr.mxu0 0.0
          %3018 = vmatpush2.msra.mxu0 %v2968
          %3019 = vmatprep.subr.mxu0 0.0
          %3020 = vmatpush2.msra.mxu0 %v2967
          %3021 = vmatprep.subr.mxu0 0.0
          %3022 = vmatpush2.msra.mxu0 %v2966
          %3023 = vmatprep.subr.mxu0 0.0
          %3024 = vmatpush2.msra.mxu0 %v2965
          %3025 = vmatprep.subr.mxu0 0.0
          %3026 = vmatpush2.msra.mxu0 %v2964
          %3027 = vmatprep.subr.mxu0 0.0
          %3028 = vmatpush2.msra.mxu0 %v2963
          %3029 = vmatprep.subr.mxu0 0.0
          %3030 = vmatpush2.msra.mxu0 %v2962
          %3031 = vmatprep.subr.mxu0 0.0
          %3032 = vmatpush2.msra.mxu0 %v2961
          %3033 = vmatprep.subr.mxu0 0.0
          %3034 = vmatpush2.msra.mxu0 %v2960
          %3035 = vmatprep.subr.mxu0 0.0
          %3036 = vmatpush2.msra.mxu0 %v2959
          %3037 = vmatprep.subr.mxu0 0.0
          %3038 = vmatpush2.msra.mxu0 %v2958
          %3039 = vmatprep.subr.mxu0 0.0
          %3040 = vmatpush2.msra.mxu0 %v2957
          %3041 = vmatprep.mubr.f32.mxu0 %v2938
          %3042 = vmatmul.mubr.f32.gmra.mxu0 %v2937
          %v3043 = vpop.f32.mrf.mxu0
          %v3044 = vadd.f32 %v2976, %v3043
          %v3045 = vpop.f32.mrf.mxu0
          %3046 = vmatprep.mubr.f32.mxu0 %v2940
          %3047 = vmatmul.mubr.f32.gmra.mxu0 %v2939
          %v3048 = vpop.f32.mrf.mxu0
          %v3049 = vadd.f32 %v2976, %v3048
          %v3050 = vpop.f32.mrf.mxu0
          %3051 = vdwg.mxu0
          %v3052 = vadd.f32 %v3044, %v2818
          %v3053 = vadd.f32 %v3049, %v2819
          %3054 = vadd.xlane.f32.xlu0 %v3052
          %v3055 = vpop.xlane.xlu0 %3054
          %3056 = vadd.xlane.f32.xlu0 %v3053
          %v3057 = vpop.xlane.xlu0 %3056
          %v3058 = vmul.f32 %v3055, %v2789
          %v3059 = vmul.f32 %v3057, %v2789
          %v3060 = vsub.f32 %v3052, %v3058
          %v3061 = vsub.f32 %v3053, %v3059
          %v3062 = vmul.f32 %v3060, %v3060
          %v3063 = vmul.f32 %v3061, %v3061
          %3064 = vadd.xlane.f32.xlu0 %v3062
          %v3065 = vpop.xlane.xlu0 %3064
          %3066 = vadd.xlane.f32.xlu0 %v3063
          %v3067 = vpop.xlane.xlu0 %3066
          %v3068 = vmul.f32 %v3065, %v2789
          %v3069 = vmul.f32 %v3067, %v2789
          %v3070 = vadd.f32 %v3068, 1e-05
          %v3071 = vadd.f32 %v3069, 1e-05
          %v3072 = vrsqrt.pop %v3070
          %v3073 = vrsqrt.pop %v3071
          %v3074 = vmul.f32 %v3060, %v3072
          %v3075 = vmul.f32 %v3061, %v3073
          %v3076 = vlaneseq
          %v3077 = vshrl.u32 %v3076, 7
          %v3078 = vsub.s32 2, %v3077
          %v3079 = vrot.slane %v1592, %v3078
          %v3080 = vmul.f32 %v3074, %v3079
          %v3081 = vmul.f32 %v3075, %v3079
          %v3082 = vlaneseq
          %v3083 = vshrl.u32 %v3082, 7
          %v3084 = vsub.s32 3, %v3083
          %v3085 = vrot.slane %v1592, %v3084
          %v3086 = vadd.f32 %v3080, %v3085
          %v3087 = vadd.f32 %v3081, %v3085
          %3088 = vst [vmem:[#allocation2] sm:$0xff] %v3086
          %3089 = vst [vmem:[#allocation2 + $0x8] sm:$0xff] %v3087
        $region176: #{transformer_forward.1} parent=107 // pred_fallthru
          _
        %p3090 = scmp.ge.s32.totalorder %s61, 2
        // Predicated region
        $region181: #{transformer_forward.1} parent=107 // pred_check
          %p3091 = pneg %p3090
        $region182: #{transformer_forward.1} parent=107 // pred_check_branch
          %3093 = sbr.rel (%p3091) target = $region184
        $region183: #{transformer_forward.1} parent=107 // pred_region
          %p3094 = scmp.eq.s32.totalorder %s61, 2
          // Predicated region
          $region185: #{transformer_forward.1} parent=183 // pred_check
            %p3095 = pneg %p3094
          $region186: #{transformer_forward.1} parent=183 // pred_check_branch
            %3097 = sbr.rel (%p3095) target = $region188
          $region187: #{transformer_forward.1} parent=183 // pred_region
            %v3098 = vld [vmem:[%s1] sm:$0xff]
            %v3099 = vld [vmem:[%s1 + $0x8] sm:$0xff]
            %3100 = vst [vmem:[#allocation29] sm:$0xff] %v3098
            %3101 = vst [vmem:[#allocation29 + $0x8] sm:$0xff] %v3099
          $region188: #{transformer_forward.1} parent=183 // pred_fallthru
            _
          %v3102 = vld [vmem:[#allocation29] sm:$0xff]
          %v3103 = vld [vmem:[#allocation29 + $0x8] sm:$0xff]
          %v3104 = vld [vmem:[#allocation2] sm:$0xff]
          %v3105 = vld [vmem:[#allocation2 + $0x8] sm:$0xff]
          %v3106 = vld [vmem:[%s1337] sm:$0xff]
          %v3107 = vld [vmem:[%s1568] sm:$0xff]
          %v3108 = vld [vmem:[%s1568 + $0x8] sm:$0xff]
          %v3109 = vld [vmem:[%s1247] sm:$0xff]
          %v3110 = vld [vmem:[%s1247 + $0x8] sm:$0xff]
          %v3111 = vld [vmem:[%s1247 + $0x10] sm:$0xff]
          %v3112 = vld [vmem:[%s1247 + $0x18] sm:$0xff]
          %v3113 = vld [vmem:[%s1247 + $0x20] sm:$0xff]
          %v3114 = vld [vmem:[%s1247 + $0x28] sm:$0xff]
          %v3115 = vld [vmem:[%s1247 + $0x30] sm:$0xff]
          %v3116 = vld [vmem:[%s1247 + $0x38] sm:$0xff]
          %v3117 = vld [vmem:[%s1247 + $0x40] sm:$0xff]
          %v3118 = vld [vmem:[%s1247 + $0x48] sm:$0xff]
          %v3119 = vld [vmem:[%s1247 + $0x50] sm:$0xff]
          %v3120 = vld [vmem:[%s1247 + $0x58] sm:$0xff]
          %v3121 = vld [vmem:[%s1247 + $0x60] sm:$0xff]
          %v3122 = vld [vmem:[%s1247 + $0x68] sm:$0xff]
          %v3123 = vld [vmem:[%s1247 + $0x70] sm:$0xff]
          %v3124 = vld [vmem:[%s1247 + $0x78] sm:$0xff]
          %3125 = vmatprep.subr.mxu0 0.0
          %3126 = vmatpush1.msra.mxu0 %v3124
          %3127 = vmatprep.subr.mxu0 0.0
          %3128 = vmatpush1.msra.mxu0 %v3123
          %3129 = vmatprep.subr.mxu0 0.0
          %3130 = vmatpush1.msra.mxu0 %v3122
          %3131 = vmatprep.subr.mxu0 0.0
          %3132 = vmatpush1.msra.mxu0 %v3121
          %3133 = vmatprep.subr.mxu0 0.0
          %3134 = vmatpush1.msra.mxu0 %v3120
          %3135 = vmatprep.subr.mxu0 0.0
          %3136 = vmatpush1.msra.mxu0 %v3119
          %3137 = vmatprep.subr.mxu0 0.0
          %3138 = vmatpush1.msra.mxu0 %v3118
          %3139 = vmatprep.subr.mxu0 0.0
          %3140 = vmatpush1.msra.mxu0 %v3117
          %3141 = vmatprep.subr.mxu0 0.0
          %3142 = vmatpush1.msra.mxu0 %v3116
          %3143 = vmatprep.subr.mxu0 0.0
          %3144 = vmatpush1.msra.mxu0 %v3115
          %3145 = vmatprep.subr.mxu0 0.0
          %3146 = vmatpush1.msra.mxu0 %v3114
          %3147 = vmatprep.subr.mxu0 0.0
          %3148 = vmatpush1.msra.mxu0 %v3113
          %3149 = vmatprep.subr.mxu0 0.0
          %3150 = vmatpush1.msra.mxu0 %v3112
          %3151 = vmatprep.subr.mxu0 0.0
          %3152 = vmatpush1.msra.mxu0 %v3111
          %3153 = vmatprep.subr.mxu0 0.0
          %3154 = vmatpush1.msra.mxu0 %v3110
          %3155 = vmatprep.subr.mxu0 0.0
          %3156 = vmatpush1.msra.mxu0 %v3109
          %3157 = vmatprep.subr.mxu0 0.0
          %3158 = vmatpush2.msra.mxu0 0.0
          %3159 = vmatprep.subr.mxu0 0.0
          %3160 = vmatpush2.msra.mxu0 0.0
          %3161 = vmatprep.subr.mxu0 0.0
          %3162 = vmatpush2.msra.mxu0 0.0
          %3163 = vmatprep.subr.mxu0 0.0
          %3164 = vmatpush2.msra.mxu0 0.0
          %3165 = vmatprep.subr.mxu0 0.0
          %3166 = vmatpush2.msra.mxu0 0.0
          %3167 = vmatprep.subr.mxu0 0.0
          %3168 = vmatpush2.msra.mxu0 0.0
          %3169 = vmatprep.subr.mxu0 0.0
          %3170 = vmatpush2.msra.mxu0 0.0
          %3171 = vmatprep.subr.mxu0 0.0
          %3172 = vmatpush2.msra.mxu0 0.0
          %3173 = vmatprep.subr.mxu0 0.0
          %3174 = vmatpush2.msra.mxu0 0.0
          %3175 = vmatprep.subr.mxu0 0.0
          %3176 = vmatpush2.msra.mxu0 0.0
          %3177 = vmatprep.subr.mxu0 0.0
          %3178 = vmatpush2.msra.mxu0 0.0
          %3179 = vmatprep.subr.mxu0 0.0
          %3180 = vmatpush2.msra.mxu0 0.0
          %3181 = vmatprep.subr.mxu0 0.0
          %3182 = vmatpush2.msra.mxu0 0.0
          %3183 = vmatprep.subr.mxu0 0.0
          %3184 = vmatpush2.msra.mxu0 0.0
          %3185 = vmatprep.subr.mxu0 0.0
          %3186 = vmatpush2.msra.mxu0 0.0
          %3187 = vmatprep.subr.mxu0 0.0
          %3188 = vmatpush2.msra.mxu0 0.0
          %3189 = vmatprep.mubr.f32.mxu0 0.0
          %3190 = vmatmul.mubr.f32.gmra.mxu0 %v3102
          %v3191 = vpop.f32.mrf.mxu0
          %v3192 = vadd.f32 0.0, %v3191
          %v3193 = vpop.f32.mrf.mxu0
          %3194 = vmatprep.mubr.f32.mxu0 0.0
          %3195 = vmatmul.mubr.f32.gmra.mxu0 %v3103
          %v3196 = vpop.f32.mrf.mxu0
          %v3197 = vadd.f32 0.0, %v3196
          %v3198 = vpop.f32.mrf.mxu0
          %3199 = vdwg.mxu0
          %v3200 = vld [vmem:[%s1256] sm:$0xff]
          %v3201 = vld [vmem:[%s1256 + $0x8] sm:$0xff]
          %v3202 = vld [vmem:[%s1256 + $0x10] sm:$0xff]
          %v3203 = vld [vmem:[%s1256 + $0x18] sm:$0xff]
          %v3204 = vld [vmem:[%s1256 + $0x20] sm:$0xff]
          %v3205 = vld [vmem:[%s1256 + $0x28] sm:$0xff]
          %v3206 = vld [vmem:[%s1256 + $0x30] sm:$0xff]
          %v3207 = vld [vmem:[%s1256 + $0x38] sm:$0xff]
          %v3208 = vld [vmem:[%s1256 + $0x40] sm:$0xff]
          %v3209 = vld [vmem:[%s1256 + $0x48] sm:$0xff]
          %v3210 = vld [vmem:[%s1256 + $0x50] sm:$0xff]
          %v3211 = vld [vmem:[%s1256 + $0x58] sm:$0xff]
          %v3212 = vld [vmem:[%s1256 + $0x60] sm:$0xff]
          %v3213 = vld [vmem:[%s1256 + $0x68] sm:$0xff]
          %v3214 = vld [vmem:[%s1256 + $0x70] sm:$0xff]
          %v3215 = vld [vmem:[%s1256 + $0x78] sm:$0xff]
          %3216 = vmatprep.subr.mxu0 0.0
          %3217 = vmatpush1.msra.mxu0 %v3215
          %3218 = vmatprep.subr.mxu0 0.0
          %3219 = vmatpush1.msra.mxu0 %v3214
          %3220 = vmatprep.subr.mxu0 0.0
          %3221 = vmatpush1.msra.mxu0 %v3213
          %3222 = vmatprep.subr.mxu0 0.0
          %3223 = vmatpush1.msra.mxu0 %v3212
          %3224 = vmatprep.subr.mxu0 0.0
          %3225 = vmatpush1.msra.mxu0 %v3211
          %3226 = vmatprep.subr.mxu0 0.0
          %3227 = vmatpush1.msra.mxu0 %v3210
          %3228 = vmatprep.subr.mxu0 0.0
          %3229 = vmatpush1.msra.mxu0 %v3209
          %3230 = vmatprep.subr.mxu0 0.0
          %3231 = vmatpush1.msra.mxu0 %v3208
          %3232 = vmatprep.subr.mxu0 0.0
          %3233 = vmatpush1.msra.mxu0 %v3207
          %3234 = vmatprep.subr.mxu0 0.0
          %3235 = vmatpush1.msra.mxu0 %v3206
          %3236 = vmatprep.subr.mxu0 0.0
          %3237 = vmatpush1.msra.mxu0 %v3205
          %3238 = vmatprep.subr.mxu0 0.0
          %3239 = vmatpush1.msra.mxu0 %v3204
          %3240 = vmatprep.subr.mxu0 0.0
          %3241 = vmatpush1.msra.mxu0 %v3203
          %3242 = vmatprep.subr.mxu0 0.0
          %3243 = vmatpush1.msra.mxu0 %v3202
          %3244 = vmatprep.subr.mxu0 0.0
          %3245 = vmatpush1.msra.mxu0 %v3201
          %3246 = vmatprep.subr.mxu0 0.0
          %3247 = vmatpush1.msra.mxu0 %v3200
          %3248 = vmatprep.subr.mxu0 0.0
          %3249 = vmatpush2.msra.mxu0 0.0
          %3250 = vmatprep.subr.mxu0 0.0
          %3251 = vmatpush2.msra.mxu0 0.0
          %3252 = vmatprep.subr.mxu0 0.0
          %3253 = vmatpush2.msra.mxu0 0.0
          %3254 = vmatprep.subr.mxu0 0.0
          %3255 = vmatpush2.msra.mxu0 0.0
          %3256 = vmatprep.subr.mxu0 0.0
          %3257 = vmatpush2.msra.mxu0 0.0
          %3258 = vmatprep.subr.mxu0 0.0
          %3259 = vmatpush2.msra.mxu0 0.0
          %3260 = vmatprep.subr.mxu0 0.0
          %3261 = vmatpush2.msra.mxu0 0.0
          %3262 = vmatprep.subr.mxu0 0.0
          %3263 = vmatpush2.msra.mxu0 0.0
          %3264 = vmatprep.subr.mxu0 0.0
          %3265 = vmatpush2.msra.mxu0 0.0
          %3266 = vmatprep.subr.mxu0 0.0
          %3267 = vmatpush2.msra.mxu0 0.0
          %3268 = vmatprep.subr.mxu0 0.0
          %3269 = vmatpush2.msra.mxu0 0.0
          %3270 = vmatprep.subr.mxu0 0.0
          %3271 = vmatpush2.msra.mxu0 0.0
          %3272 = vmatprep.subr.mxu0 0.0
          %3273 = vmatpush2.msra.mxu0 0.0
          %3274 = vmatprep.subr.mxu0 0.0
          %3275 = vmatpush2.msra.mxu0 0.0
          %3276 = vmatprep.subr.mxu0 0.0
          %3277 = vmatpush2.msra.mxu0 0.0
          %3278 = vmatprep.subr.mxu0 0.0
          %3279 = vmatpush2.msra.mxu0 0.0
          %3280 = vmatprep.mubr.f32.mxu0 0.0
          %3281 = vmatmul.mubr.f32.gmra.mxu0 %v3102
          %v3282 = vpop.f32.mrf.mxu0
          %v3283 = vadd.f32 0.0, %v3282
          %v3284 = vpop.f32.mrf.mxu0
          %3285 = vmatprep.mubr.f32.mxu0 0.0
          %3286 = vmatmul.mubr.f32.gmra.mxu0 %v3103
          %v3287 = vpop.f32.mrf.mxu0
          %v3288 = vadd.f32 0.0, %v3287
          %v3289 = vpop.f32.mrf.mxu0
          %3290 = vdwg.mxu0
          %v3291 = vld [vmem:[%s1265] sm:$0xff]
          %v3292 = vld [vmem:[%s1265 + $0x8] sm:$0xff]
          %v3293 = vld [vmem:[%s1265 + $0x10] sm:$0xff]
          %v3294 = vld [vmem:[%s1265 + $0x18] sm:$0xff]
          %v3295 = vld [vmem:[%s1265 + $0x20] sm:$0xff]
          %v3296 = vld [vmem:[%s1265 + $0x28] sm:$0xff]
          %v3297 = vld [vmem:[%s1265 + $0x30] sm:$0xff]
          %v3298 = vld [vmem:[%s1265 + $0x38] sm:$0xff]
          %v3299 = vld [vmem:[%s1265 + $0x40] sm:$0xff]
          %v3300 = vld [vmem:[%s1265 + $0x48] sm:$0xff]
          %v3301 = vld [vmem:[%s1265 + $0x50] sm:$0xff]
          %v3302 = vld [vmem:[%s1265 + $0x58] sm:$0xff]
          %v3303 = vld [vmem:[%s1265 + $0x60] sm:$0xff]
          %v3304 = vld [vmem:[%s1265 + $0x68] sm:$0xff]
          %v3305 = vld [vmem:[%s1265 + $0x70] sm:$0xff]
          %v3306 = vld [vmem:[%s1265 + $0x78] sm:$0xff]
          %3307 = vmatprep.subr.mxu0 0.0
          %3308 = vmatpush1.msra.mxu0 %v3306
          %3309 = vmatprep.subr.mxu0 0.0
          %3310 = vmatpush1.msra.mxu0 %v3305
          %3311 = vmatprep.subr.mxu0 0.0
          %3312 = vmatpush1.msra.mxu0 %v3304
          %3313 = vmatprep.subr.mxu0 0.0
          %3314 = vmatpush1.msra.mxu0 %v3303
          %3315 = vmatprep.subr.mxu0 0.0
          %3316 = vmatpush1.msra.mxu0 %v3302
          %3317 = vmatprep.subr.mxu0 0.0
          %3318 = vmatpush1.msra.mxu0 %v3301
          %3319 = vmatprep.subr.mxu0 0.0
          %3320 = vmatpush1.msra.mxu0 %v3300
          %3321 = vmatprep.subr.mxu0 0.0
          %3322 = vmatpush1.msra.mxu0 %v3299
          %3323 = vmatprep.subr.mxu0 0.0
          %3324 = vmatpush1.msra.mxu0 %v3298
          %3325 = vmatprep.subr.mxu0 0.0
          %3326 = vmatpush1.msra.mxu0 %v3297
          %3327 = vmatprep.subr.mxu0 0.0
          %3328 = vmatpush1.msra.mxu0 %v3296
          %3329 = vmatprep.subr.mxu0 0.0
          %3330 = vmatpush1.msra.mxu0 %v3295
          %3331 = vmatprep.subr.mxu0 0.0
          %3332 = vmatpush1.msra.mxu0 %v3294
          %3333 = vmatprep.subr.mxu0 0.0
          %3334 = vmatpush1.msra.mxu0 %v3293
          %3335 = vmatprep.subr.mxu0 0.0
          %3336 = vmatpush1.msra.mxu0 %v3292
          %3337 = vmatprep.subr.mxu0 0.0
          %3338 = vmatpush1.msra.mxu0 %v3291
          %3339 = vmatprep.subr.mxu0 0.0
          %3340 = vmatpush2.msra.mxu0 0.0
          %3341 = vmatprep.subr.mxu0 0.0
          %3342 = vmatpush2.msra.mxu0 0.0
          %3343 = vmatprep.subr.mxu0 0.0
          %3344 = vmatpush2.msra.mxu0 0.0
          %3345 = vmatprep.subr.mxu0 0.0
          %3346 = vmatpush2.msra.mxu0 0.0
          %3347 = vmatprep.subr.mxu0 0.0
          %3348 = vmatpush2.msra.mxu0 0.0
          %3349 = vmatprep.subr.mxu0 0.0
          %3350 = vmatpush2.msra.mxu0 0.0
          %3351 = vmatprep.subr.mxu0 0.0
          %3352 = vmatpush2.msra.mxu0 0.0
          %3353 = vmatprep.subr.mxu0 0.0
          %3354 = vmatpush2.msra.mxu0 0.0
          %3355 = vmatprep.subr.mxu0 0.0
          %3356 = vmatpush2.msra.mxu0 0.0
          %3357 = vmatprep.subr.mxu0 0.0
          %3358 = vmatpush2.msra.mxu0 0.0
          %3359 = vmatprep.subr.mxu0 0.0
          %3360 = vmatpush2.msra.mxu0 0.0
          %3361 = vmatprep.subr.mxu0 0.0
          %3362 = vmatpush2.msra.mxu0 0.0
          %3363 = vmatprep.subr.mxu0 0.0
          %3364 = vmatpush2.msra.mxu0 0.0
          %3365 = vmatprep.subr.mxu0 0.0
          %3366 = vmatpush2.msra.mxu0 0.0
          %3367 = vmatprep.subr.mxu0 0.0
          %3368 = vmatpush2.msra.mxu0 0.0
          %3369 = vmatprep.subr.mxu0 0.0
          %3370 = vmatpush2.msra.mxu0 0.0
          %3371 = vmatprep.mubr.f32.mxu0 0.0
          %3372 = vmatmul.mubr.f32.gmra.mxu0 %v3102
          %v3373 = vpop.f32.mrf.mxu0
          %v3374 = vadd.f32 0.0, %v3373
          %v3375 = vpop.f32.mrf.mxu0
          %3376 = vmatprep.mubr.f32.mxu0 0.0
          %3377 = vmatmul.mubr.f32.gmra.mxu0 %v3103
          %v3378 = vpop.f32.mrf.mxu0
          %v3379 = vadd.f32 0.0, %v3378
          %v3380 = vpop.f32.mrf.mxu0
          %3381 = vdwg.mxu0
          %v3382 = vld [vmem:[%s1274] sm:$0xff]
          %v3383 = vld [vmem:[%s1274 + $0x8] sm:$0xff]
          %v3384 = vld [vmem:[%s1274 + $0x10] sm:$0xff]
          %v3385 = vld [vmem:[%s1274 + $0x18] sm:$0xff]
          %v3386 = vld [vmem:[%s1274 + $0x20] sm:$0xff]
          %v3387 = vld [vmem:[%s1274 + $0x28] sm:$0xff]
          %v3388 = vld [vmem:[%s1274 + $0x30] sm:$0xff]
          %v3389 = vld [vmem:[%s1274 + $0x38] sm:$0xff]
          %v3390 = vld [vmem:[%s1274 + $0x40] sm:$0xff]
          %v3391 = vld [vmem:[%s1274 + $0x48] sm:$0xff]
          %v3392 = vld [vmem:[%s1274 + $0x50] sm:$0xff]
          %v3393 = vld [vmem:[%s1274 + $0x58] sm:$0xff]
          %v3394 = vld [vmem:[%s1274 + $0x60] sm:$0xff]
          %v3395 = vld [vmem:[%s1274 + $0x68] sm:$0xff]
          %v3396 = vld [vmem:[%s1274 + $0x70] sm:$0xff]
          %v3397 = vld [vmem:[%s1274 + $0x78] sm:$0xff]
          %v3398 = vlaneseq
          %v3399 = vshrl.u32 %v3398, 7
          %v3400 = vadd.s32 %v3399, 8
          %v3401 = vlaneseq
          %v3402 = vand.u32 %v3401, 127
          %vm3403 = vcmp.gt.s32.totalorder %v3402, %v3399
          %vm3404 = vcmp.gt.s32.totalorder %v3402, %v3400
          %vm3405 = vcmask 261120
          %v3407 = vsel %vm3405, %v3192, 0
          %v3410 = vsel %vm3405, %v3197, 0
          %v3413 = vsel %vm3405, %v3283, 0
          %v3416 = vsel %vm3405, %v3288, 0
          %3418 = vmatprep.subr.mxu0 0.0
          %3419 = vmatpush1.xpose.msra.mxu0 0.0
          %3420 = vmatprep.subr.mxu0 0.0
          %3421 = vmatpush1.xpose.msra.mxu0 0.0
          %3422 = vmatprep.subr.mxu0 0.0
          %3423 = vmatpush1.xpose.msra.mxu0 0.0
          %3424 = vmatprep.subr.mxu0 0.0
          %3425 = vmatpush1.xpose.msra.mxu0 0.0
          %3426 = vmatprep.subr.mxu0 0.0
          %3427 = vmatpush1.xpose.msra.mxu0 0.0
          %3428 = vmatprep.subr.mxu0 0.0
          %3429 = vmatpush1.xpose.msra.mxu0 0.0
          %3430 = vmatprep.subr.mxu0 0.0
          %3431 = vmatpush1.xpose.msra.mxu0 0.0
          %3432 = vmatprep.subr.mxu0 0.0
          %3433 = vmatpush1.xpose.msra.mxu0 0.0
          %3434 = vmatprep.subr.mxu0 0.0
          %3435 = vmatpush1.xpose.msra.mxu0 0.0
          %3436 = vmatprep.subr.mxu0 0.0
          %3437 = vmatpush1.xpose.msra.mxu0 0.0
          %3438 = vmatprep.subr.mxu0 0.0
          %3439 = vmatpush1.xpose.msra.mxu0 0.0
          %3440 = vmatprep.subr.mxu0 0.0
          %3441 = vmatpush1.xpose.msra.mxu0 0.0
          %3442 = vmatprep.subr.mxu0 0.0
          %3443 = vmatpush1.xpose.msra.mxu0 0.0
          %3444 = vmatprep.subr.mxu0 0.0
          %3445 = vmatpush1.xpose.msra.mxu0 0.0
          %3446 = vmatprep.subr.mxu0 0.0
          %3447 = vmatpush1.xpose.msra.mxu0 %v3416
          %3448 = vmatprep.subr.mxu0 0.0
          %3449 = vmatpush1.xpose.msra.mxu0 %v3413
          %3450 = vmatprep.subr.mxu0 0.0
          %3451 = vmatpush2.xpose.msra.mxu0 0.0
          %3452 = vmatprep.subr.mxu0 0.0
          %3453 = vmatpush2.xpose.msra.mxu0 0.0
          %3454 = vmatprep.subr.mxu0 0.0
          %3455 = vmatpush2.xpose.msra.mxu0 0.0
          %3456 = vmatprep.subr.mxu0 0.0
          %3457 = vmatpush2.xpose.msra.mxu0 0.0
          %3458 = vmatprep.subr.mxu0 0.0
          %3459 = vmatpush2.xpose.msra.mxu0 0.0
          %3460 = vmatprep.subr.mxu0 0.0
          %3461 = vmatpush2.xpose.msra.mxu0 0.0
          %3462 = vmatprep.subr.mxu0 0.0
          %3463 = vmatpush2.xpose.msra.mxu0 0.0
          %3464 = vmatprep.subr.mxu0 0.0
          %3465 = vmatpush2.xpose.msra.mxu0 0.0
          %3466 = vmatprep.subr.mxu0 0.0
          %3467 = vmatpush2.xpose.msra.mxu0 0.0
          %3468 = vmatprep.subr.mxu0 0.0
          %3469 = vmatpush2.xpose.msra.mxu0 0.0
          %3470 = vmatprep.subr.mxu0 0.0
          %3471 = vmatpush2.xpose.msra.mxu0 0.0
          %3472 = vmatprep.subr.mxu0 0.0
          %3473 = vmatpush2.xpose.msra.mxu0 0.0
          %3474 = vmatprep.subr.mxu0 0.0
          %3475 = vmatpush2.xpose.msra.mxu0 0.0
          %3476 = vmatprep.subr.mxu0 0.0
          %3477 = vmatpush2.xpose.msra.mxu0 0.0
          %3478 = vmatprep.subr.mxu0 0.0
          %3479 = vmatpush2.xpose.msra.mxu0 0.0
          %3480 = vmatprep.subr.mxu0 0.0
          %3481 = vmatpush2.xpose.msra.mxu0 0.0
          %3482 = vmatprep.mubr.f32.mxu0 0.0
          %3483 = vmatmul.mubr.f32.gmra.mxu0 %v3407
          %v3484 = vpop.f32.mrf.mxu0
          %v3485 = vadd.f32 0.0, %v3484
          %v3486 = vpop.f32.mrf.mxu0
          %3487 = vmatprep.mubr.f32.mxu0 0.0
          %3488 = vmatmul.mubr.f32.gmra.mxu0 %v3410
          %v3489 = vpop.f32.mrf.mxu0
          %v3490 = vadd.f32 0.0, %v3489
          %v3491 = vpop.f32.mrf.mxu0
          %3492 = vdwg.mxu0
          %v3493 = vsel %vm3403, -1e+30, %v3485
          %v3494 = vsel %vm3404, -1e+30, %v3490
          %vm3495 = vcmask 130048
          %v3496 = vsel %vm3495, %v3493, -inf
          %3497 = vmax.xlane.f32.xlu0 %v3496
          %v3498 = vpop.xlane.xlu0 %3497
          %v3499 = vsel %vm3495, %v3494, -inf
          %3500 = vmax.xlane.f32.xlu0 %v3499
          %v3501 = vpop.xlane.xlu0 %3500
          %v3502 = vsub.f32 %v3493, %v3498
          %v3503 = vsub.f32 %v3494, %v3501
          %v3504 = vmul.f32 %v3502, 1.442695
          %v3505 = vpow.pop %v3504
          %v3506 = vmul.f32 %v3503, 1.442695
          %v3507 = vpow.pop %v3506
          %v3508 = vsel %vm3495, %v3505, 0.0
          %3509 = vadd.xlane.f32.xlu0 %v3508
          %v3510 = vpop.xlane.xlu0 %3509
          %v3511 = vsel %vm3495, %v3507, 0.0
          %3512 = vadd.xlane.f32.xlu0 %v3511
          %v3513 = vpop.xlane.xlu0 %3512
          %v3514 = vrcp.pop %v3510
          %v3515 = vrcp.pop %v3513
          %v3516 = vmul.f32 %v3505, %v3514
          %v3517 = vmul.f32 %v3507, %v3515
          %v3519 = vsel %vm3495, %v3516, 0
          %v3522 = vsel %vm3495, %v3517, 0
          %3524 = vmatprep.subr.mxu0 0.0
          %3525 = vmatpush1.msra.mxu0 0.0
          %3526 = vmatprep.subr.mxu0 0.0
          %3527 = vmatpush1.msra.mxu0 0.0
          %3528 = vmatprep.subr.mxu0 0.0
          %3529 = vmatpush1.msra.mxu0 0.0
          %3530 = vmatprep.subr.mxu0 0.0
          %3531 = vmatpush1.msra.mxu0 0.0
          %3532 = vmatprep.subr.mxu0 0.0
          %3533 = vmatpush1.msra.mxu0 0.0
          %3534 = vmatprep.subr.mxu0 0.0
          %3535 = vmatpush1.msra.mxu0 0.0
          %3536 = vmatprep.subr.mxu0 0.0
          %3537 = vmatpush1.msra.mxu0 0.0
          %3538 = vmatprep.subr.mxu0 0.0
          %3539 = vmatpush1.msra.mxu0 0.0
          %3540 = vmatprep.subr.mxu0 0.0
          %3541 = vmatpush1.msra.mxu0 0.0
          %3542 = vmatprep.subr.mxu0 0.0
          %3543 = vmatpush1.msra.mxu0 0.0
          %3544 = vmatprep.subr.mxu0 0.0
          %3545 = vmatpush1.msra.mxu0 0.0
          %3546 = vmatprep.subr.mxu0 0.0
          %3547 = vmatpush1.msra.mxu0 0.0
          %3548 = vmatprep.subr.mxu0 0.0
          %3549 = vmatpush1.msra.mxu0 0.0
          %3550 = vmatprep.subr.mxu0 0.0
          %3551 = vmatpush1.msra.mxu0 0.0
          %3552 = vmatprep.subr.mxu0 0.0
          %3553 = vmatpush1.msra.mxu0 %v3379
          %3554 = vmatprep.subr.mxu0 0.0
          %3555 = vmatpush1.msra.mxu0 %v3374
          %3556 = vmatprep.subr.mxu0 0.0
          %3557 = vmatpush2.msra.mxu0 0.0
          %3558 = vmatprep.subr.mxu0 0.0
          %3559 = vmatpush2.msra.mxu0 0.0
          %3560 = vmatprep.subr.mxu0 0.0
          %3561 = vmatpush2.msra.mxu0 0.0
          %3562 = vmatprep.subr.mxu0 0.0
          %3563 = vmatpush2.msra.mxu0 0.0
          %3564 = vmatprep.subr.mxu0 0.0
          %3565 = vmatpush2.msra.mxu0 0.0
          %3566 = vmatprep.subr.mxu0 0.0
          %3567 = vmatpush2.msra.mxu0 0.0
          %3568 = vmatprep.subr.mxu0 0.0
          %3569 = vmatpush2.msra.mxu0 0.0
          %3570 = vmatprep.subr.mxu0 0.0
          %3571 = vmatpush2.msra.mxu0 0.0
          %3572 = vmatprep.subr.mxu0 0.0
          %3573 = vmatpush2.msra.mxu0 0.0
          %3574 = vmatprep.subr.mxu0 0.0
          %3575 = vmatpush2.msra.mxu0 0.0
          %3576 = vmatprep.subr.mxu0 0.0
          %3577 = vmatpush2.msra.mxu0 0.0
          %3578 = vmatprep.subr.mxu0 0.0
          %3579 = vmatpush2.msra.mxu0 0.0
          %3580 = vmatprep.subr.mxu0 0.0
          %3581 = vmatpush2.msra.mxu0 0.0
          %3582 = vmatprep.subr.mxu0 0.0
          %3583 = vmatpush2.msra.mxu0 0.0
          %3584 = vmatprep.subr.mxu0 0.0
          %3585 = vmatpush2.msra.mxu0 0.0
          %3586 = vmatprep.subr.mxu0 0.0
          %3587 = vmatpush2.msra.mxu0 0.0
          %3588 = vmatprep.mubr.f32.mxu0 0.0
          %3589 = vmatmul.mubr.f32.gmra.mxu0 %v3519
          %v3590 = vpop.f32.mrf.mxu0
          %v3591 = vadd.f32 0.0, %v3590
          %v3592 = vpop.f32.mrf.mxu0
          %3593 = vmatprep.mubr.f32.mxu0 0.0
          %3594 = vmatmul.mubr.f32.gmra.mxu0 %v3522
          %v3595 = vpop.f32.mrf.mxu0
          %v3596 = vadd.f32 0.0, %v3595
          %v3597 = vpop.f32.mrf.mxu0
          %3598 = vdwg.mxu0
          %3599 = vrot.lane.b32.xlu0 %v3192, 96
          %v3600 = vpop.permute.xlu0 %3599
          %3601 = vrot.lane.b32.xlu0 %v3197, 96
          %v3602 = vpop.permute.xlu0 %3601
          %3603 = vrot.lane.b32.xlu0 %v3283, 96
          %v3604 = vpop.permute.xlu0 %3603
          %3605 = vrot.lane.b32.xlu0 %v3288, 96
          %v3606 = vpop.permute.xlu0 %3605
          %v3607 = vsel %vm3405, %v3600, 0
          %v3609 = vsel %vm3405, %v3602, 0
          %v3611 = vsel %vm3405, %v3604, 0
          %v3613 = vsel %vm3405, %v3606, 0
          %3615 = vmatprep.subr.mxu0 0.0
          %3616 = vmatpush1.xpose.msra.mxu0 0.0
          %3617 = vmatprep.subr.mxu0 0.0
          %3618 = vmatpush1.xpose.msra.mxu0 0.0
          %3619 = vmatprep.subr.mxu0 0.0
          %3620 = vmatpush1.xpose.msra.mxu0 0.0
          %3621 = vmatprep.subr.mxu0 0.0
          %3622 = vmatpush1.xpose.msra.mxu0 0.0
          %3623 = vmatprep.subr.mxu0 0.0
          %3624 = vmatpush1.xpose.msra.mxu0 0.0
          %3625 = vmatprep.subr.mxu0 0.0
          %3626 = vmatpush1.xpose.msra.mxu0 0.0
          %3627 = vmatprep.subr.mxu0 0.0
          %3628 = vmatpush1.xpose.msra.mxu0 0.0
          %3629 = vmatprep.subr.mxu0 0.0
          %3630 = vmatpush1.xpose.msra.mxu0 0.0
          %3631 = vmatprep.subr.mxu0 0.0
          %3632 = vmatpush1.xpose.msra.mxu0 0.0
          %3633 = vmatprep.subr.mxu0 0.0
          %3634 = vmatpush1.xpose.msra.mxu0 0.0
          %3635 = vmatprep.subr.mxu0 0.0
          %3636 = vmatpush1.xpose.msra.mxu0 0.0
          %3637 = vmatprep.subr.mxu0 0.0
          %3638 = vmatpush1.xpose.msra.mxu0 0.0
          %3639 = vmatprep.subr.mxu0 0.0
          %3640 = vmatpush1.xpose.msra.mxu0 0.0
          %3641 = vmatprep.subr.mxu0 0.0
          %3642 = vmatpush1.xpose.msra.mxu0 0.0
          %3643 = vmatprep.subr.mxu0 0.0
          %3644 = vmatpush1.xpose.msra.mxu0 %v3613
          %3645 = vmatprep.subr.mxu0 0.0
          %3646 = vmatpush1.xpose.msra.mxu0 %v3611
          %3647 = vmatprep.subr.mxu0 0.0
          %3648 = vmatpush2.xpose.msra.mxu0 0.0
          %3649 = vmatprep.subr.mxu0 0.0
          %3650 = vmatpush2.xpose.msra.mxu0 0.0
          %3651 = vmatprep.subr.mxu0 0.0
          %3652 = vmatpush2.xpose.msra.mxu0 0.0
          %3653 = vmatprep.subr.mxu0 0.0
          %3654 = vmatpush2.xpose.msra.mxu0 0.0
          %3655 = vmatprep.subr.mxu0 0.0
          %3656 = vmatpush2.xpose.msra.mxu0 0.0
          %3657 = vmatprep.subr.mxu0 0.0
          %3658 = vmatpush2.xpose.msra.mxu0 0.0
          %3659 = vmatprep.subr.mxu0 0.0
          %3660 = vmatpush2.xpose.msra.mxu0 0.0
          %3661 = vmatprep.subr.mxu0 0.0
          %3662 = vmatpush2.xpose.msra.mxu0 0.0
          %3663 = vmatprep.subr.mxu0 0.0
          %3664 = vmatpush2.xpose.msra.mxu0 0.0
          %3665 = vmatprep.subr.mxu0 0.0
          %3666 = vmatpush2.xpose.msra.mxu0 0.0
          %3667 = vmatprep.subr.mxu0 0.0
          %3668 = vmatpush2.xpose.msra.mxu0 0.0
          %3669 = vmatprep.subr.mxu0 0.0
          %3670 = vmatpush2.xpose.msra.mxu0 0.0
          %3671 = vmatprep.subr.mxu0 0.0
          %3672 = vmatpush2.xpose.msra.mxu0 0.0
          %3673 = vmatprep.subr.mxu0 0.0
          %3674 = vmatpush2.xpose.msra.mxu0 0.0
          %3675 = vmatprep.subr.mxu0 0.0
          %3676 = vmatpush2.xpose.msra.mxu0 0.0
          %3677 = vmatprep.subr.mxu0 0.0
          %3678 = vmatpush2.xpose.msra.mxu0 0.0
          %3679 = vmatprep.mubr.f32.mxu0 0.0
          %3680 = vmatmul.mubr.f32.gmra.mxu0 %v3607
          %v3681 = vpop.f32.mrf.mxu0
          %v3682 = vadd.f32 0.0, %v3681
          %v3683 = vpop.f32.mrf.mxu0
          %3684 = vmatprep.mubr.f32.mxu0 0.0
          %3685 = vmatmul.mubr.f32.gmra.mxu0 %v3609
          %v3686 = vpop.f32.mrf.mxu0
          %v3687 = vadd.f32 0.0, %v3686
          %v3688 = vpop.f32.mrf.mxu0
          %3689 = vdwg.mxu0
          %v3690 = vsel %vm3403, -1e+30, %v3682
          %v3691 = vsel %vm3404, -1e+30, %v3687
          %v3692 = vsel %vm3495, %v3690, -inf
          %3693 = vmax.xlane.f32.xlu0 %v3692
          %v3694 = vpop.xlane.xlu0 %3693
          %v3695 = vsel %vm3495, %v3691, -inf
          %3696 = vmax.xlane.f32.xlu0 %v3695
          %v3697 = vpop.xlane.xlu0 %3696
          %v3698 = vsub.f32 %v3690, %v3694
          %v3699 = vsub.f32 %v3691, %v3697
          %v3700 = vmul.f32 %v3698, 1.442695
          %v3701 = vpow.pop %v3700
          %v3702 = vmul.f32 %v3699, 1.442695
          %v3703 = vpow.pop %v3702
          %v3704 = vsel %vm3495, %v3701, 0.0
          %3705 = vadd.xlane.f32.xlu0 %v3704
          %v3706 = vpop.xlane.xlu0 %3705
          %v3707 = vsel %vm3495, %v3703, 0.0
          %3708 = vadd.xlane.f32.xlu0 %v3707
          %v3709 = vpop.xlane.xlu0 %3708
          %v3710 = vrcp.pop %v3706
          %v3711 = vrcp.pop %v3709
          %v3712 = vmul.f32 %v3701, %v3710
          %v3713 = vmul.f32 %v3703, %v3711
          %3716 = vrot.lane.b32.xlu0 %v3374, 96
          %v3717 = vpop.permute.xlu0 %3716
          %3718 = vrot.lane.b32.xlu0 %v3379, 96
          %v3719 = vpop.permute.xlu0 %3718
          %v3723 = vsel %vm3495, %v3712, 0
          %v3726 = vsel %vm3495, %v3713, 0
          %3728 = vmatprep.subr.mxu0 0.0
          %3729 = vmatpush1.msra.mxu0 0.0
          %3730 = vmatprep.subr.mxu0 0.0
          %3731 = vmatpush1.msra.mxu0 0.0
          %3732 = vmatprep.subr.mxu0 0.0
          %3733 = vmatpush1.msra.mxu0 0.0
          %3734 = vmatprep.subr.mxu0 0.0
          %3735 = vmatpush1.msra.mxu0 0.0
          %3736 = vmatprep.subr.mxu0 0.0
          %3737 = vmatpush1.msra.mxu0 0.0
          %3738 = vmatprep.subr.mxu0 0.0
          %3739 = vmatpush1.msra.mxu0 0.0
          %3740 = vmatprep.subr.mxu0 0.0
          %3741 = vmatpush1.msra.mxu0 0.0
          %3742 = vmatprep.subr.mxu0 0.0
          %3743 = vmatpush1.msra.mxu0 0.0
          %3744 = vmatprep.subr.mxu0 0.0
          %3745 = vmatpush1.msra.mxu0 0.0
          %3746 = vmatprep.subr.mxu0 0.0
          %3747 = vmatpush1.msra.mxu0 0.0
          %3748 = vmatprep.subr.mxu0 0.0
          %3749 = vmatpush1.msra.mxu0 0.0
          %3750 = vmatprep.subr.mxu0 0.0
          %3751 = vmatpush1.msra.mxu0 0.0
          %3752 = vmatprep.subr.mxu0 0.0
          %3753 = vmatpush1.msra.mxu0 0.0
          %3754 = vmatprep.subr.mxu0 0.0
          %3755 = vmatpush1.msra.mxu0 0.0
          %3756 = vmatprep.subr.mxu0 0.0
          %3757 = vmatpush1.msra.mxu0 %v3719
          %3758 = vmatprep.subr.mxu0 0.0
          %3759 = vmatpush1.msra.mxu0 %v3717
          %3760 = vmatprep.subr.mxu0 0.0
          %3761 = vmatpush2.msra.mxu0 0.0
          %3762 = vmatprep.subr.mxu0 0.0
          %3763 = vmatpush2.msra.mxu0 0.0
          %3764 = vmatprep.subr.mxu0 0.0
          %3765 = vmatpush2.msra.mxu0 0.0
          %3766 = vmatprep.subr.mxu0 0.0
          %3767 = vmatpush2.msra.mxu0 0.0
          %3768 = vmatprep.subr.mxu0 0.0
          %3769 = vmatpush2.msra.mxu0 0.0
          %3770 = vmatprep.subr.mxu0 0.0
          %3771 = vmatpush2.msra.mxu0 0.0
          %3772 = vmatprep.subr.mxu0 0.0
          %3773 = vmatpush2.msra.mxu0 0.0
          %3774 = vmatprep.subr.mxu0 0.0
          %3775 = vmatpush2.msra.mxu0 0.0
          %3776 = vmatprep.subr.mxu0 0.0
          %3777 = vmatpush2.msra.mxu0 0.0
          %3778 = vmatprep.subr.mxu0 0.0
          %3779 = vmatpush2.msra.mxu0 0.0
          %3780 = vmatprep.subr.mxu0 0.0
          %3781 = vmatpush2.msra.mxu0 0.0
          %3782 = vmatprep.subr.mxu0 0.0
          %3783 = vmatpush2.msra.mxu0 0.0
          %3784 = vmatprep.subr.mxu0 0.0
          %3785 = vmatpush2.msra.mxu0 0.0
          %3786 = vmatprep.subr.mxu0 0.0
          %3787 = vmatpush2.msra.mxu0 0.0
          %3788 = vmatprep.subr.mxu0 0.0
          %3789 = vmatpush2.msra.mxu0 0.0
          %3790 = vmatprep.subr.mxu0 0.0
          %3791 = vmatpush2.msra.mxu0 0.0
          %3792 = vmatprep.mubr.f32.mxu0 0.0
          %3793 = vmatmul.mubr.f32.gmra.mxu0 %v3723
          %v3794 = vpop.f32.mrf.mxu0
          %v3795 = vadd.f32 0.0, %v3794
          %v3796 = vpop.f32.mrf.mxu0
          %3797 = vmatprep.mubr.f32.mxu0 0.0
          %3798 = vmatmul.mubr.f32.gmra.mxu0 %v3726
          %v3799 = vpop.f32.mrf.mxu0
          %v3800 = vadd.f32 0.0, %v3799
          %v3801 = vpop.f32.mrf.mxu0
          %3802 = vdwg.mxu0
          %3803 = vrot.lane.b32.xlu0 %v3192, 64
          %v3804 = vpop.permute.xlu0 %3803
          %3805 = vrot.lane.b32.xlu0 %v3197, 64
          %v3806 = vpop.permute.xlu0 %3805
          %3807 = vrot.lane.b32.xlu0 %v3283, 64
          %v3808 = vpop.permute.xlu0 %3807
          %3809 = vrot.lane.b32.xlu0 %v3288, 64
          %v3810 = vpop.permute.xlu0 %3809
          %v3811 = vsel %vm3405, %v3804, 0
          %v3813 = vsel %vm3405, %v3806, 0
          %v3815 = vsel %vm3405, %v3808, 0
          %v3817 = vsel %vm3405, %v3810, 0
          %3819 = vmatprep.subr.mxu0 0.0
          %3820 = vmatpush1.xpose.msra.mxu0 0.0
          %3821 = vmatprep.subr.mxu0 0.0
          %3822 = vmatpush1.xpose.msra.mxu0 0.0
          %3823 = vmatprep.subr.mxu0 0.0
          %3824 = vmatpush1.xpose.msra.mxu0 0.0
          %3825 = vmatprep.subr.mxu0 0.0
          %3826 = vmatpush1.xpose.msra.mxu0 0.0
          %3827 = vmatprep.subr.mxu0 0.0
          %3828 = vmatpush1.xpose.msra.mxu0 0.0
          %3829 = vmatprep.subr.mxu0 0.0
          %3830 = vmatpush1.xpose.msra.mxu0 0.0
          %3831 = vmatprep.subr.mxu0 0.0
          %3832 = vmatpush1.xpose.msra.mxu0 0.0
          %3833 = vmatprep.subr.mxu0 0.0
          %3834 = vmatpush1.xpose.msra.mxu0 0.0
          %3835 = vmatprep.subr.mxu0 0.0
          %3836 = vmatpush1.xpose.msra.mxu0 0.0
          %3837 = vmatprep.subr.mxu0 0.0
          %3838 = vmatpush1.xpose.msra.mxu0 0.0
          %3839 = vmatprep.subr.mxu0 0.0
          %3840 = vmatpush1.xpose.msra.mxu0 0.0
          %3841 = vmatprep.subr.mxu0 0.0
          %3842 = vmatpush1.xpose.msra.mxu0 0.0
          %3843 = vmatprep.subr.mxu0 0.0
          %3844 = vmatpush1.xpose.msra.mxu0 0.0
          %3845 = vmatprep.subr.mxu0 0.0
          %3846 = vmatpush1.xpose.msra.mxu0 0.0
          %3847 = vmatprep.subr.mxu0 0.0
          %3848 = vmatpush1.xpose.msra.mxu0 %v3817
          %3849 = vmatprep.subr.mxu0 0.0
          %3850 = vmatpush1.xpose.msra.mxu0 %v3815
          %3851 = vmatprep.subr.mxu0 0.0
          %3852 = vmatpush2.xpose.msra.mxu0 0.0
          %3853 = vmatprep.subr.mxu0 0.0
          %3854 = vmatpush2.xpose.msra.mxu0 0.0
          %3855 = vmatprep.subr.mxu0 0.0
          %3856 = vmatpush2.xpose.msra.mxu0 0.0
          %3857 = vmatprep.subr.mxu0 0.0
          %3858 = vmatpush2.xpose.msra.mxu0 0.0
          %3859 = vmatprep.subr.mxu0 0.0
          %3860 = vmatpush2.xpose.msra.mxu0 0.0
          %3861 = vmatprep.subr.mxu0 0.0
          %3862 = vmatpush2.xpose.msra.mxu0 0.0
          %3863 = vmatprep.subr.mxu0 0.0
          %3864 = vmatpush2.xpose.msra.mxu0 0.0
          %3865 = vmatprep.subr.mxu0 0.0
          %3866 = vmatpush2.xpose.msra.mxu0 0.0
          %3867 = vmatprep.subr.mxu0 0.0
          %3868 = vmatpush2.xpose.msra.mxu0 0.0
          %3869 = vmatprep.subr.mxu0 0.0
          %3870 = vmatpush2.xpose.msra.mxu0 0.0
          %3871 = vmatprep.subr.mxu0 0.0
          %3872 = vmatpush2.xpose.msra.mxu0 0.0
          %3873 = vmatprep.subr.mxu0 0.0
          %3874 = vmatpush2.xpose.msra.mxu0 0.0
          %3875 = vmatprep.subr.mxu0 0.0
          %3876 = vmatpush2.xpose.msra.mxu0 0.0
          %3877 = vmatprep.subr.mxu0 0.0
          %3878 = vmatpush2.xpose.msra.mxu0 0.0
          %3879 = vmatprep.subr.mxu0 0.0
          %3880 = vmatpush2.xpose.msra.mxu0 0.0
          %3881 = vmatprep.subr.mxu0 0.0
          %3882 = vmatpush2.xpose.msra.mxu0 0.0
          %3883 = vmatprep.mubr.f32.mxu0 0.0
          %3884 = vmatmul.mubr.f32.gmra.mxu0 %v3811
          %v3885 = vpop.f32.mrf.mxu0
          %v3886 = vadd.f32 0.0, %v3885
          %v3887 = vpop.f32.mrf.mxu0
          %3888 = vmatprep.mubr.f32.mxu0 0.0
          %3889 = vmatmul.mubr.f32.gmra.mxu0 %v3813
          %v3890 = vpop.f32.mrf.mxu0
          %v3891 = vadd.f32 0.0, %v3890
          %v3892 = vpop.f32.mrf.mxu0
          %3893 = vdwg.mxu0
          %v3894 = vsel %vm3403, -1e+30, %v3886
          %v3895 = vsel %vm3404, -1e+30, %v3891
          %v3896 = vsel %vm3495, %v3894, -inf
          %3897 = vmax.xlane.f32.xlu0 %v3896
          %v3898 = vpop.xlane.xlu0 %3897
          %v3899 = vsel %vm3495, %v3895, -inf
          %3900 = vmax.xlane.f32.xlu0 %v3899
          %v3901 = vpop.xlane.xlu0 %3900
          %v3902 = vsub.f32 %v3894, %v3898
          %v3903 = vsub.f32 %v3895, %v3901
          %v3904 = vmul.f32 %v3902, 1.442695
          %v3905 = vpow.pop %v3904
          %v3906 = vmul.f32 %v3903, 1.442695
          %v3907 = vpow.pop %v3906
          %v3908 = vsel %vm3495, %v3905, 0.0
          %3909 = vadd.xlane.f32.xlu0 %v3908
          %v3910 = vpop.xlane.xlu0 %3909
          %v3911 = vsel %vm3495, %v3907, 0.0
          %3912 = vadd.xlane.f32.xlu0 %v3911
          %v3913 = vpop.xlane.xlu0 %3912
          %v3914 = vrcp.pop %v3910
          %v3915 = vrcp.pop %v3913
          %v3916 = vmul.f32 %v3905, %v3914
          %v3917 = vmul.f32 %v3907, %v3915
          %3918 = vrot.lane.b32.xlu0 %v3374, 64
          %v3919 = vpop.permute.xlu0 %3918
          %3920 = vrot.lane.b32.xlu0 %v3379, 64
          %v3921 = vpop.permute.xlu0 %3920
          %v3925 = vsel %vm3495, %v3916, 0
          %v3928 = vsel %vm3495, %v3917, 0
          %3930 = vmatprep.subr.mxu0 0.0
          %3931 = vmatpush1.msra.mxu0 0.0
          %3932 = vmatprep.subr.mxu0 0.0
          %3933 = vmatpush1.msra.mxu0 0.0
          %3934 = vmatprep.subr.mxu0 0.0
          %3935 = vmatpush1.msra.mxu0 0.0
          %3936 = vmatprep.subr.mxu0 0.0
          %3937 = vmatpush1.msra.mxu0 0.0
          %3938 = vmatprep.subr.mxu0 0.0
          %3939 = vmatpush1.msra.mxu0 0.0
          %3940 = vmatprep.subr.mxu0 0.0
          %3941 = vmatpush1.msra.mxu0 0.0
          %3942 = vmatprep.subr.mxu0 0.0
          %3943 = vmatpush1.msra.mxu0 0.0
          %3944 = vmatprep.subr.mxu0 0.0
          %3945 = vmatpush1.msra.mxu0 0.0
          %3946 = vmatprep.subr.mxu0 0.0
          %3947 = vmatpush1.msra.mxu0 0.0
          %3948 = vmatprep.subr.mxu0 0.0
          %3949 = vmatpush1.msra.mxu0 0.0
          %3950 = vmatprep.subr.mxu0 0.0
          %3951 = vmatpush1.msra.mxu0 0.0
          %3952 = vmatprep.subr.mxu0 0.0
          %3953 = vmatpush1.msra.mxu0 0.0
          %3954 = vmatprep.subr.mxu0 0.0
          %3955 = vmatpush1.msra.mxu0 0.0
          %3956 = vmatprep.subr.mxu0 0.0
          %3957 = vmatpush1.msra.mxu0 0.0
          %3958 = vmatprep.subr.mxu0 0.0
          %3959 = vmatpush1.msra.mxu0 %v3921
          %3960 = vmatprep.subr.mxu0 0.0
          %3961 = vmatpush1.msra.mxu0 %v3919
          %3962 = vmatprep.subr.mxu0 0.0
          %3963 = vmatpush2.msra.mxu0 0.0
          %3964 = vmatprep.subr.mxu0 0.0
          %3965 = vmatpush2.msra.mxu0 0.0
          %3966 = vmatprep.subr.mxu0 0.0
          %3967 = vmatpush2.msra.mxu0 0.0
          %3968 = vmatprep.subr.mxu0 0.0
          %3969 = vmatpush2.msra.mxu0 0.0
          %3970 = vmatprep.subr.mxu0 0.0
          %3971 = vmatpush2.msra.mxu0 0.0
          %3972 = vmatprep.subr.mxu0 0.0
          %3973 = vmatpush2.msra.mxu0 0.0
          %3974 = vmatprep.subr.mxu0 0.0
          %3975 = vmatpush2.msra.mxu0 0.0
          %3976 = vmatprep.subr.mxu0 0.0
          %3977 = vmatpush2.msra.mxu0 0.0
          %3978 = vmatprep.subr.mxu0 0.0
          %3979 = vmatpush2.msra.mxu0 0.0
          %3980 = vmatprep.subr.mxu0 0.0
          %3981 = vmatpush2.msra.mxu0 0.0
          %3982 = vmatprep.subr.mxu0 0.0
          %3983 = vmatpush2.msra.mxu0 0.0
          %3984 = vmatprep.subr.mxu0 0.0
          %3985 = vmatpush2.msra.mxu0 0.0
          %3986 = vmatprep.subr.mxu0 0.0
          %3987 = vmatpush2.msra.mxu0 0.0
          %3988 = vmatprep.subr.mxu0 0.0
          %3989 = vmatpush2.msra.mxu0 0.0
          %3990 = vmatprep.subr.mxu0 0.0
          %3991 = vmatpush2.msra.mxu0 0.0
          %3992 = vmatprep.subr.mxu0 0.0
          %3993 = vmatpush2.msra.mxu0 0.0
          %3994 = vmatprep.mubr.f32.mxu0 0.0
          %3995 = vmatmul.mubr.f32.gmra.mxu0 %v3925
          %v3996 = vpop.f32.mrf.mxu0
          %v3997 = vadd.f32 0.0, %v3996
          %v3998 = vpop.f32.mrf.mxu0
          %3999 = vmatprep.mubr.f32.mxu0 0.0
          %4000 = vmatmul.mubr.f32.gmra.mxu0 %v3928
          %v4001 = vpop.f32.mrf.mxu0
          %v4002 = vadd.f32 0.0, %v4001
          %v4003 = vpop.f32.mrf.mxu0
          %4004 = vdwg.mxu0
          %4005 = vrot.lane.b32.xlu0 %v3192, 32
          %v4006 = vpop.permute.xlu0 %4005
          %4007 = vrot.lane.b32.xlu0 %v3197, 32
          %v4008 = vpop.permute.xlu0 %4007
          %4009 = vrot.lane.b32.xlu0 %v3283, 32
          %v4010 = vpop.permute.xlu0 %4009
          %4011 = vrot.lane.b32.xlu0 %v3288, 32
          %v4012 = vpop.permute.xlu0 %4011
          %v4013 = vsel %vm3405, %v4006, 0
          %v4015 = vsel %vm3405, %v4008, 0
          %v4017 = vsel %vm3405, %v4010, 0
          %v4019 = vsel %vm3405, %v4012, 0
          %4021 = vmatprep.subr.mxu0 0.0
          %4022 = vmatpush1.xpose.msra.mxu0 0.0
          %4023 = vmatprep.subr.mxu0 0.0
          %4024 = vmatpush1.xpose.msra.mxu0 0.0
          %4025 = vmatprep.subr.mxu0 0.0
          %4026 = vmatpush1.xpose.msra.mxu0 0.0
          %4027 = vmatprep.subr.mxu0 0.0
          %4028 = vmatpush1.xpose.msra.mxu0 0.0
          %4029 = vmatprep.subr.mxu0 0.0
          %4030 = vmatpush1.xpose.msra.mxu0 0.0
          %4031 = vmatprep.subr.mxu0 0.0
          %4032 = vmatpush1.xpose.msra.mxu0 0.0
          %4033 = vmatprep.subr.mxu0 0.0
          %4034 = vmatpush1.xpose.msra.mxu0 0.0
          %4035 = vmatprep.subr.mxu0 0.0
          %4036 = vmatpush1.xpose.msra.mxu0 0.0
          %4037 = vmatprep.subr.mxu0 0.0
          %4038 = vmatpush1.xpose.msra.mxu0 0.0
          %4039 = vmatprep.subr.mxu0 0.0
          %4040 = vmatpush1.xpose.msra.mxu0 0.0
          %4041 = vmatprep.subr.mxu0 0.0
          %4042 = vmatpush1.xpose.msra.mxu0 0.0
          %4043 = vmatprep.subr.mxu0 0.0
          %4044 = vmatpush1.xpose.msra.mxu0 0.0
          %4045 = vmatprep.subr.mxu0 0.0
          %4046 = vmatpush1.xpose.msra.mxu0 0.0
          %4047 = vmatprep.subr.mxu0 0.0
          %4048 = vmatpush1.xpose.msra.mxu0 0.0
          %4049 = vmatprep.subr.mxu0 0.0
          %4050 = vmatpush1.xpose.msra.mxu0 %v4019
          %4051 = vmatprep.subr.mxu0 0.0
          %4052 = vmatpush1.xpose.msra.mxu0 %v4017
          %4053 = vmatprep.subr.mxu0 0.0
          %4054 = vmatpush2.xpose.msra.mxu0 0.0
          %4055 = vmatprep.subr.mxu0 0.0
          %4056 = vmatpush2.xpose.msra.mxu0 0.0
          %4057 = vmatprep.subr.mxu0 0.0
          %4058 = vmatpush2.xpose.msra.mxu0 0.0
          %4059 = vmatprep.subr.mxu0 0.0
          %4060 = vmatpush2.xpose.msra.mxu0 0.0
          %4061 = vmatprep.subr.mxu0 0.0
          %4062 = vmatpush2.xpose.msra.mxu0 0.0
          %4063 = vmatprep.subr.mxu0 0.0
          %4064 = vmatpush2.xpose.msra.mxu0 0.0
          %4065 = vmatprep.subr.mxu0 0.0
          %4066 = vmatpush2.xpose.msra.mxu0 0.0
          %4067 = vmatprep.subr.mxu0 0.0
          %4068 = vmatpush2.xpose.msra.mxu0 0.0
          %4069 = vmatprep.subr.mxu0 0.0
          %4070 = vmatpush2.xpose.msra.mxu0 0.0
          %4071 = vmatprep.subr.mxu0 0.0
          %4072 = vmatpush2.xpose.msra.mxu0 0.0
          %4073 = vmatprep.subr.mxu0 0.0
          %4074 = vmatpush2.xpose.msra.mxu0 0.0
          %4075 = vmatprep.subr.mxu0 0.0
          %4076 = vmatpush2.xpose.msra.mxu0 0.0
          %4077 = vmatprep.subr.mxu0 0.0
          %4078 = vmatpush2.xpose.msra.mxu0 0.0
          %4079 = vmatprep.subr.mxu0 0.0
          %4080 = vmatpush2.xpose.msra.mxu0 0.0
          %4081 = vmatprep.subr.mxu0 0.0
          %4082 = vmatpush2.xpose.msra.mxu0 0.0
          %4083 = vmatprep.subr.mxu0 0.0
          %4084 = vmatpush2.xpose.msra.mxu0 0.0
          %4085 = vmatprep.mubr.f32.mxu0 0.0
          %4086 = vmatmul.mubr.f32.gmra.mxu0 %v4013
          %v4087 = vpop.f32.mrf.mxu0
          %v4088 = vadd.f32 0.0, %v4087
          %v4089 = vpop.f32.mrf.mxu0
          %4090 = vmatprep.mubr.f32.mxu0 0.0
          %4091 = vmatmul.mubr.f32.gmra.mxu0 %v4015
          %v4092 = vpop.f32.mrf.mxu0
          %v4093 = vadd.f32 0.0, %v4092
          %v4094 = vpop.f32.mrf.mxu0
          %4095 = vdwg.mxu0
          %v4096 = vsel %vm3403, -1e+30, %v4088
          %v4097 = vsel %vm3404, -1e+30, %v4093
          %v4098 = vsel %vm3495, %v4096, -inf
          %4099 = vmax.xlane.f32.xlu0 %v4098
          %v4100 = vpop.xlane.xlu0 %4099
          %v4101 = vsel %vm3495, %v4097, -inf
          %4102 = vmax.xlane.f32.xlu0 %v4101
          %v4103 = vpop.xlane.xlu0 %4102
          %v4104 = vsub.f32 %v4096, %v4100
          %v4105 = vsub.f32 %v4097, %v4103
          %v4106 = vmul.f32 %v4104, 1.442695
          %v4107 = vpow.pop %v4106
          %v4108 = vmul.f32 %v4105, 1.442695
          %v4109 = vpow.pop %v4108
          %v4110 = vsel %vm3495, %v4107, 0.0
          %4111 = vadd.xlane.f32.xlu0 %v4110
          %v4112 = vpop.xlane.xlu0 %4111
          %v4113 = vsel %vm3495, %v4109, 0.0
          %4114 = vadd.xlane.f32.xlu0 %v4113
          %v4115 = vpop.xlane.xlu0 %4114
          %v4116 = vrcp.pop %v4112
          %v4117 = vrcp.pop %v4115
          %v4118 = vmul.f32 %v4107, %v4116
          %v4119 = vmul.f32 %v4109, %v4117
          %4120 = vrot.lane.b32.xlu0 %v3374, 32
          %v4121 = vpop.permute.xlu0 %4120
          %4122 = vrot.lane.b32.xlu0 %v3379, 32
          %v4123 = vpop.permute.xlu0 %4122
          %v4127 = vsel %vm3495, %v4118, 0
          %v4130 = vsel %vm3495, %v4119, 0
          %4132 = vmatprep.subr.mxu0 0.0
          %4133 = vmatpush1.msra.mxu0 0.0
          %4134 = vmatprep.subr.mxu0 0.0
          %4135 = vmatpush1.msra.mxu0 0.0
          %4136 = vmatprep.subr.mxu0 0.0
          %4137 = vmatpush1.msra.mxu0 0.0
          %4138 = vmatprep.subr.mxu0 0.0
          %4139 = vmatpush1.msra.mxu0 0.0
          %4140 = vmatprep.subr.mxu0 0.0
          %4141 = vmatpush1.msra.mxu0 0.0
          %4142 = vmatprep.subr.mxu0 0.0
          %4143 = vmatpush1.msra.mxu0 0.0
          %4144 = vmatprep.subr.mxu0 0.0
          %4145 = vmatpush1.msra.mxu0 0.0
          %4146 = vmatprep.subr.mxu0 0.0
          %4147 = vmatpush1.msra.mxu0 0.0
          %4148 = vmatprep.subr.mxu0 0.0
          %4149 = vmatpush1.msra.mxu0 0.0
          %4150 = vmatprep.subr.mxu0 0.0
          %4151 = vmatpush1.msra.mxu0 0.0
          %4152 = vmatprep.subr.mxu0 0.0
          %4153 = vmatpush1.msra.mxu0 0.0
          %4154 = vmatprep.subr.mxu0 0.0
          %4155 = vmatpush1.msra.mxu0 0.0
          %4156 = vmatprep.subr.mxu0 0.0
          %4157 = vmatpush1.msra.mxu0 0.0
          %4158 = vmatprep.subr.mxu0 0.0
          %4159 = vmatpush1.msra.mxu0 0.0
          %4160 = vmatprep.subr.mxu0 0.0
          %4161 = vmatpush1.msra.mxu0 %v4123
          %4162 = vmatprep.subr.mxu0 0.0
          %4163 = vmatpush1.msra.mxu0 %v4121
          %4164 = vmatprep.subr.mxu0 0.0
          %4165 = vmatpush2.msra.mxu0 0.0
          %4166 = vmatprep.subr.mxu0 0.0
          %4167 = vmatpush2.msra.mxu0 0.0
          %4168 = vmatprep.subr.mxu0 0.0
          %4169 = vmatpush2.msra.mxu0 0.0
          %4170 = vmatprep.subr.mxu0 0.0
          %4171 = vmatpush2.msra.mxu0 0.0
          %4172 = vmatprep.subr.mxu0 0.0
          %4173 = vmatpush2.msra.mxu0 0.0
          %4174 = vmatprep.subr.mxu0 0.0
          %4175 = vmatpush2.msra.mxu0 0.0
          %4176 = vmatprep.subr.mxu0 0.0
          %4177 = vmatpush2.msra.mxu0 0.0
          %4178 = vmatprep.subr.mxu0 0.0
          %4179 = vmatpush2.msra.mxu0 0.0
          %4180 = vmatprep.subr.mxu0 0.0
          %4181 = vmatpush2.msra.mxu0 0.0
          %4182 = vmatprep.subr.mxu0 0.0
          %4183 = vmatpush2.msra.mxu0 0.0
          %4184 = vmatprep.subr.mxu0 0.0
          %4185 = vmatpush2.msra.mxu0 0.0
          %4186 = vmatprep.subr.mxu0 0.0
          %4187 = vmatpush2.msra.mxu0 0.0
          %4188 = vmatprep.subr.mxu0 0.0
          %4189 = vmatpush2.msra.mxu0 0.0
          %4190 = vmatprep.subr.mxu0 0.0
          %4191 = vmatpush2.msra.mxu0 0.0
          %4192 = vmatprep.subr.mxu0 0.0
          %4193 = vmatpush2.msra.mxu0 0.0
          %4194 = vmatprep.subr.mxu0 0.0
          %4195 = vmatpush2.msra.mxu0 0.0
          %4196 = vmatprep.mubr.f32.mxu0 0.0
          %4197 = vmatmul.mubr.f32.gmra.mxu0 %v4127
          %v4198 = vpop.f32.mrf.mxu0
          %v4199 = vadd.f32 0.0, %v4198
          %v4200 = vpop.f32.mrf.mxu0
          %4201 = vmatprep.mubr.f32.mxu0 0.0
          %4202 = vmatmul.mubr.f32.gmra.mxu0 %v4130
          %v4203 = vpop.f32.mrf.mxu0
          %v4204 = vadd.f32 0.0, %v4203
          %v4205 = vpop.f32.mrf.mxu0
          %4206 = vdwg.mxu0
          %4209 = vrot.lane.b32.xlu0 %v3795, 32
          %v4210 = vpop.permute.xlu0 %4209
          %4211 = vrot.lane.b32.xlu0 %v3800, 32
          %v4212 = vpop.permute.xlu0 %4211
          %4217 = vrot.lane.b32.xlu0 %v3997, 64
          %v4218 = vpop.permute.xlu0 %4217
          %4219 = vrot.lane.b32.xlu0 %v4002, 64
          %v4220 = vpop.permute.xlu0 %4219
          %4225 = vrot.lane.b32.xlu0 %v4199, 96
          %v4226 = vpop.permute.xlu0 %4225
          %4227 = vrot.lane.b32.xlu0 %v4204, 96
          %v4228 = vpop.permute.xlu0 %4227
          %v4231 = vsel %vm3405, %v3591, %v4210
          %v4232 = vsel %vm3405, %v3596, %v4212
          %vm4233 = vcmask 523264
          %v4234 = vsel %vm4233, %v4231, %v4218
          %v4235 = vsel %vm4233, %v4232, %v4220
          %vm4236 = vcmask 785408
          %v4237 = vsel %vm4236, %v4234, %v4226
          %v4238 = vsel %vm4236, %v4235, %v4228
          %4239 = vmatprep.subr.mxu0 0.0
          %4240 = vmatpush1.msra.mxu0 %v3397
          %4241 = vmatprep.subr.mxu0 0.0
          %4242 = vmatpush1.msra.mxu0 %v3396
          %4243 = vmatprep.subr.mxu0 0.0
          %4244 = vmatpush1.msra.mxu0 %v3395
          %4245 = vmatprep.subr.mxu0 0.0
          %4246 = vmatpush1.msra.mxu0 %v3394
          %4247 = vmatprep.subr.mxu0 0.0
          %4248 = vmatpush1.msra.mxu0 %v3393
          %4249 = vmatprep.subr.mxu0 0.0
          %4250 = vmatpush1.msra.mxu0 %v3392
          %4251 = vmatprep.subr.mxu0 0.0
          %4252 = vmatpush1.msra.mxu0 %v3391
          %4253 = vmatprep.subr.mxu0 0.0
          %4254 = vmatpush1.msra.mxu0 %v3390
          %4255 = vmatprep.subr.mxu0 0.0
          %4256 = vmatpush1.msra.mxu0 %v3389
          %4257 = vmatprep.subr.mxu0 0.0
          %4258 = vmatpush1.msra.mxu0 %v3388
          %4259 = vmatprep.subr.mxu0 0.0
          %4260 = vmatpush1.msra.mxu0 %v3387
          %4261 = vmatprep.subr.mxu0 0.0
          %4262 = vmatpush1.msra.mxu0 %v3386
          %4263 = vmatprep.subr.mxu0 0.0
          %4264 = vmatpush1.msra.mxu0 %v3385
          %4265 = vmatprep.subr.mxu0 0.0
          %4266 = vmatpush1.msra.mxu0 %v3384
          %4267 = vmatprep.subr.mxu0 0.0
          %4268 = vmatpush1.msra.mxu0 %v3383
          %4269 = vmatprep.subr.mxu0 0.0
          %4270 = vmatpush1.msra.mxu0 %v3382
          %4271 = vmatprep.subr.mxu0 0.0
          %4272 = vmatpush2.msra.mxu0 0.0
          %4273 = vmatprep.subr.mxu0 0.0
          %4274 = vmatpush2.msra.mxu0 0.0
          %4275 = vmatprep.subr.mxu0 0.0
          %4276 = vmatpush2.msra.mxu0 0.0
          %4277 = vmatprep.subr.mxu0 0.0
          %4278 = vmatpush2.msra.mxu0 0.0
          %4279 = vmatprep.subr.mxu0 0.0
          %4280 = vmatpush2.msra.mxu0 0.0
          %4281 = vmatprep.subr.mxu0 0.0
          %4282 = vmatpush2.msra.mxu0 0.0
          %4283 = vmatprep.subr.mxu0 0.0
          %4284 = vmatpush2.msra.mxu0 0.0
          %4285 = vmatprep.subr.mxu0 0.0
          %4286 = vmatpush2.msra.mxu0 0.0
          %4287 = vmatprep.subr.mxu0 0.0
          %4288 = vmatpush2.msra.mxu0 0.0
          %4289 = vmatprep.subr.mxu0 0.0
          %4290 = vmatpush2.msra.mxu0 0.0
          %4291 = vmatprep.subr.mxu0 0.0
          %4292 = vmatpush2.msra.mxu0 0.0
          %4293 = vmatprep.subr.mxu0 0.0
          %4294 = vmatpush2.msra.mxu0 0.0
          %4295 = vmatprep.subr.mxu0 0.0
          %4296 = vmatpush2.msra.mxu0 0.0
          %4297 = vmatprep.subr.mxu0 0.0
          %4298 = vmatpush2.msra.mxu0 0.0
          %4299 = vmatprep.subr.mxu0 0.0
          %4300 = vmatpush2.msra.mxu0 0.0
          %4301 = vmatprep.subr.mxu0 0.0
          %4302 = vmatpush2.msra.mxu0 0.0
          %4303 = vmatprep.mubr.f32.mxu0 0.0
          %4304 = vmatmul.mubr.f32.gmra.mxu0 %v4237
          %v4305 = vpop.f32.mrf.mxu0
          %v4306 = vadd.f32 %v3102, %v4305
          %v4307 = vpop.f32.mrf.mxu0
          %4308 = vmatprep.mubr.f32.mxu0 0.0
          %4309 = vmatmul.mubr.f32.gmra.mxu0 %v4238
          %v4310 = vpop.f32.mrf.mxu0
          %v4311 = vadd.f32 %v3103, %v4310
          %v4312 = vpop.f32.mrf.mxu0
          %4313 = vdwg.mxu0
          %4314 = vadd.xlane.f32.xlu0 %v4306
          %v4315 = vpop.xlane.xlu0 %4314
          %4316 = vadd.xlane.f32.xlu0 %v4311
          %v4317 = vpop.xlane.xlu0 %4316
          %v4318 = vrcp.pop 128.0
          %v4319 = vmul.f32 %v4315, %v4318
          %v4320 = vmul.f32 %v4317, %v4318
          %v4321 = vsub.f32 %v4306, %v4319
          %v4322 = vsub.f32 %v4311, %v4320
          %v4323 = vmul.f32 %v4321, %v4321
          %v4324 = vmul.f32 %v4322, %v4322
          %4325 = vadd.xlane.f32.xlu0 %v4323
          %v4326 = vpop.xlane.xlu0 %4325
          %4327 = vadd.xlane.f32.xlu0 %v4324
          %v4328 = vpop.xlane.xlu0 %4327
          %v4329 = vmul.f32 %v4326, %v4318
          %v4330 = vmul.f32 %v4328, %v4318
          %v4331 = vadd.f32 %v4329, 1e-05
          %v4332 = vadd.f32 %v4330, 1e-05
          %v4333 = vrsqrt.pop %v4331
          %v4334 = vrsqrt.pop %v4332
          %v4335 = vmul.f32 %v4321, %v4333
          %v4336 = vmul.f32 %v4322, %v4334
          %v4337 = vlaneseq
          %v4338 = vshrl.u32 %v4337, 7
          %v4339 = vsub.s32 0, %v4338
          %v4340 = vrot.slane %v3106, %v4339
          %v4341 = vmul.f32 %v4335, %v4340
          %v4342 = vmul.f32 %v4336, %v4340
          %v4343 = vlaneseq
          %v4344 = vshrl.u32 %v4343, 7
          %v4345 = vsub.s32 1, %v4344
          %v4346 = vrot.slane %v3106, %v4345
          %v4347 = vadd.f32 %v4341, %v4346
          %v4348 = vadd.f32 %v4342, %v4346
          %v4349 = vld [vmem:[%s1283] sm:$0xff]
          %v4350 = vld [vmem:[%s1283 + $0x8] sm:$0xff]
          %v4351 = vld [vmem:[%s1283 + $0x10] sm:$0xff]
          %v4352 = vld [vmem:[%s1283 + $0x18] sm:$0xff]
          %v4353 = vld [vmem:[%s1283 + $0x20] sm:$0xff]
          %v4354 = vld [vmem:[%s1283 + $0x28] sm:$0xff]
          %v4355 = vld [vmem:[%s1283 + $0x30] sm:$0xff]
          %v4356 = vld [vmem:[%s1283 + $0x38] sm:$0xff]
          %v4357 = vld [vmem:[%s1283 + $0x40] sm:$0xff]
          %v4358 = vld [vmem:[%s1283 + $0x48] sm:$0xff]
          %v4359 = vld [vmem:[%s1283 + $0x50] sm:$0xff]
          %v4360 = vld [vmem:[%s1283 + $0x58] sm:$0xff]
          %v4361 = vld [vmem:[%s1283 + $0x60] sm:$0xff]
          %v4362 = vld [vmem:[%s1283 + $0x68] sm:$0xff]
          %v4363 = vld [vmem:[%s1283 + $0x70] sm:$0xff]
          %v4364 = vld [vmem:[%s1283 + $0x78] sm:$0xff]
          %4365 = vmatprep.subr.mxu0 0.0
          %4366 = vmatpush1.msra.mxu0 %v4364
          %4367 = vmatprep.subr.mxu0 0.0
          %4368 = vmatpush1.msra.mxu0 %v4363
          %4369 = vmatprep.subr.mxu0 0.0
          %4370 = vmatpush1.msra.mxu0 %v4362
          %4371 = vmatprep.subr.mxu0 0.0
          %4372 = vmatpush1.msra.mxu0 %v4361
          %4373 = vmatprep.subr.mxu0 0.0
          %4374 = vmatpush1.msra.mxu0 %v4360
          %4375 = vmatprep.subr.mxu0 0.0
          %4376 = vmatpush1.msra.mxu0 %v4359
          %4377 = vmatprep.subr.mxu0 0.0
          %4378 = vmatpush1.msra.mxu0 %v4358
          %4379 = vmatprep.subr.mxu0 0.0
          %4380 = vmatpush1.msra.mxu0 %v4357
          %4381 = vmatprep.subr.mxu0 0.0
          %4382 = vmatpush1.msra.mxu0 %v4356
          %4383 = vmatprep.subr.mxu0 0.0
          %4384 = vmatpush1.msra.mxu0 %v4355
          %4385 = vmatprep.subr.mxu0 0.0
          %4386 = vmatpush1.msra.mxu0 %v4354
          %4387 = vmatprep.subr.mxu0 0.0
          %4388 = vmatpush1.msra.mxu0 %v4353
          %4389 = vmatprep.subr.mxu0 0.0
          %4390 = vmatpush1.msra.mxu0 %v4352
          %4391 = vmatprep.subr.mxu0 0.0
          %4392 = vmatpush1.msra.mxu0 %v4351
          %4393 = vmatprep.subr.mxu0 0.0
          %4394 = vmatpush1.msra.mxu0 %v4350
          %4395 = vmatprep.subr.mxu0 0.0
          %4396 = vmatpush1.msra.mxu0 %v4349
          %4397 = vmatprep.subr.mxu0 0.0
          %4398 = vmatpush2.msra.mxu0 0.0
          %4399 = vmatprep.subr.mxu0 0.0
          %4400 = vmatpush2.msra.mxu0 0.0
          %4401 = vmatprep.subr.mxu0 0.0
          %4402 = vmatpush2.msra.mxu0 0.0
          %4403 = vmatprep.subr.mxu0 0.0
          %4404 = vmatpush2.msra.mxu0 0.0
          %4405 = vmatprep.subr.mxu0 0.0
          %4406 = vmatpush2.msra.mxu0 0.0
          %4407 = vmatprep.subr.mxu0 0.0
          %4408 = vmatpush2.msra.mxu0 0.0
          %4409 = vmatprep.subr.mxu0 0.0
          %4410 = vmatpush2.msra.mxu0 0.0
          %4411 = vmatprep.subr.mxu0 0.0
          %4412 = vmatpush2.msra.mxu0 0.0
          %4413 = vmatprep.subr.mxu0 0.0
          %4414 = vmatpush2.msra.mxu0 0.0
          %4415 = vmatprep.subr.mxu0 0.0
          %4416 = vmatpush2.msra.mxu0 0.0
          %4417 = vmatprep.subr.mxu0 0.0
          %4418 = vmatpush2.msra.mxu0 0.0
          %4419 = vmatprep.subr.mxu0 0.0
          %4420 = vmatpush2.msra.mxu0 0.0
          %4421 = vmatprep.subr.mxu0 0.0
          %4422 = vmatpush2.msra.mxu0 0.0
          %4423 = vmatprep.subr.mxu0 0.0
          %4424 = vmatpush2.msra.mxu0 0.0
          %4425 = vmatprep.subr.mxu0 0.0
          %4426 = vmatpush2.msra.mxu0 0.0
          %4427 = vmatprep.subr.mxu0 0.0
          %4428 = vmatpush2.msra.mxu0 0.0
          %4429 = vmatprep.mubr.f32.mxu0 0.0
          %4430 = vmatmul.mubr.f32.gmra.mxu0 %v4347
          %v4431 = vpop.f32.mrf.mxu0
          %v4432 = vadd.f32 0.0, %v4431
          %v4433 = vpop.f32.mrf.mxu0
          %4434 = vmatprep.mubr.f32.mxu0 0.0
          %4435 = vmatmul.mubr.f32.gmra.mxu0 %v4348
          %v4436 = vpop.f32.mrf.mxu0
          %v4437 = vadd.f32 0.0, %v4436
          %v4438 = vpop.f32.mrf.mxu0
          %4439 = vdwg.mxu0
          %v4440 = vld [vmem:[%s1292] sm:$0xff]
          %v4441 = vld [vmem:[%s1292 + $0x8] sm:$0xff]
          %v4442 = vld [vmem:[%s1292 + $0x10] sm:$0xff]
          %v4443 = vld [vmem:[%s1292 + $0x18] sm:$0xff]
          %v4444 = vld [vmem:[%s1292 + $0x20] sm:$0xff]
          %v4445 = vld [vmem:[%s1292 + $0x28] sm:$0xff]
          %v4446 = vld [vmem:[%s1292 + $0x30] sm:$0xff]
          %v4447 = vld [vmem:[%s1292 + $0x38] sm:$0xff]
          %v4448 = vld [vmem:[%s1292 + $0x40] sm:$0xff]
          %v4449 = vld [vmem:[%s1292 + $0x48] sm:$0xff]
          %v4450 = vld [vmem:[%s1292 + $0x50] sm:$0xff]
          %v4451 = vld [vmem:[%s1292 + $0x58] sm:$0xff]
          %v4452 = vld [vmem:[%s1292 + $0x60] sm:$0xff]
          %v4453 = vld [vmem:[%s1292 + $0x68] sm:$0xff]
          %v4454 = vld [vmem:[%s1292 + $0x70] sm:$0xff]
          %v4455 = vld [vmem:[%s1292 + $0x78] sm:$0xff]
          %4456 = vmatprep.subr.mxu0 0.0
          %4457 = vmatpush1.msra.mxu0 %v4455
          %4458 = vmatprep.subr.mxu0 0.0
          %4459 = vmatpush1.msra.mxu0 %v4454
          %4460 = vmatprep.subr.mxu0 0.0
          %4461 = vmatpush1.msra.mxu0 %v4453
          %4462 = vmatprep.subr.mxu0 0.0
          %4463 = vmatpush1.msra.mxu0 %v4452
          %4464 = vmatprep.subr.mxu0 0.0
          %4465 = vmatpush1.msra.mxu0 %v4451
          %4466 = vmatprep.subr.mxu0 0.0
          %4467 = vmatpush1.msra.mxu0 %v4450
          %4468 = vmatprep.subr.mxu0 0.0
          %4469 = vmatpush1.msra.mxu0 %v4449
          %4470 = vmatprep.subr.mxu0 0.0
          %4471 = vmatpush1.msra.mxu0 %v4448
          %4472 = vmatprep.subr.mxu0 0.0
          %4473 = vmatpush1.msra.mxu0 %v4447
          %4474 = vmatprep.subr.mxu0 0.0
          %4475 = vmatpush1.msra.mxu0 %v4446
          %4476 = vmatprep.subr.mxu0 0.0
          %4477 = vmatpush1.msra.mxu0 %v4445
          %4478 = vmatprep.subr.mxu0 0.0
          %4479 = vmatpush1.msra.mxu0 %v4444
          %4480 = vmatprep.subr.mxu0 0.0
          %4481 = vmatpush1.msra.mxu0 %v4443
          %4482 = vmatprep.subr.mxu0 0.0
          %4483 = vmatpush1.msra.mxu0 %v4442
          %4484 = vmatprep.subr.mxu0 0.0
          %4485 = vmatpush1.msra.mxu0 %v4441
          %4486 = vmatprep.subr.mxu0 0.0
          %4487 = vmatpush1.msra.mxu0 %v4440
          %4488 = vmatprep.subr.mxu0 0.0
          %4489 = vmatpush2.msra.mxu0 0.0
          %4490 = vmatprep.subr.mxu0 0.0
          %4491 = vmatpush2.msra.mxu0 0.0
          %4492 = vmatprep.subr.mxu0 0.0
          %4493 = vmatpush2.msra.mxu0 0.0
          %4494 = vmatprep.subr.mxu0 0.0
          %4495 = vmatpush2.msra.mxu0 0.0
          %4496 = vmatprep.subr.mxu0 0.0
          %4497 = vmatpush2.msra.mxu0 0.0
          %4498 = vmatprep.subr.mxu0 0.0
          %4499 = vmatpush2.msra.mxu0 0.0
          %4500 = vmatprep.subr.mxu0 0.0
          %4501 = vmatpush2.msra.mxu0 0.0
          %4502 = vmatprep.subr.mxu0 0.0
          %4503 = vmatpush2.msra.mxu0 0.0
          %4504 = vmatprep.subr.mxu0 0.0
          %4505 = vmatpush2.msra.mxu0 0.0
          %4506 = vmatprep.subr.mxu0 0.0
          %4507 = vmatpush2.msra.mxu0 0.0
          %4508 = vmatprep.subr.mxu0 0.0
          %4509 = vmatpush2.msra.mxu0 0.0
          %4510 = vmatprep.subr.mxu0 0.0
          %4511 = vmatpush2.msra.mxu0 0.0
          %4512 = vmatprep.subr.mxu0 0.0
          %4513 = vmatpush2.msra.mxu0 0.0
          %4514 = vmatprep.subr.mxu0 0.0
          %4515 = vmatpush2.msra.mxu0 0.0
          %4516 = vmatprep.subr.mxu0 0.0
          %4517 = vmatpush2.msra.mxu0 0.0
          %4518 = vmatprep.subr.mxu0 0.0
          %4519 = vmatpush2.msra.mxu0 0.0
          %4520 = vmatprep.mubr.f32.mxu0 0.0
          %4521 = vmatmul.mubr.f32.gmra.mxu0 %v3104
          %v4522 = vpop.f32.mrf.mxu0
          %v4523 = vadd.f32 0.0, %v4522
          %v4524 = vpop.f32.mrf.mxu0
          %4525 = vmatprep.mubr.f32.mxu0 0.0
          %4526 = vmatmul.mubr.f32.gmra.mxu0 %v3105
          %v4527 = vpop.f32.mrf.mxu0
          %v4528 = vadd.f32 0.0, %v4527
          %v4529 = vpop.f32.mrf.mxu0
          %4530 = vdwg.mxu0
          %v4531 = vld [vmem:[%s1301] sm:$0xff]
          %v4532 = vld [vmem:[%s1301 + $0x8] sm:$0xff]
          %v4533 = vld [vmem:[%s1301 + $0x10] sm:$0xff]
          %v4534 = vld [vmem:[%s1301 + $0x18] sm:$0xff]
          %v4535 = vld [vmem:[%s1301 + $0x20] sm:$0xff]
          %v4536 = vld [vmem:[%s1301 + $0x28] sm:$0xff]
          %v4537 = vld [vmem:[%s1301 + $0x30] sm:$0xff]
          %v4538 = vld [vmem:[%s1301 + $0x38] sm:$0xff]
          %v4539 = vld [vmem:[%s1301 + $0x40] sm:$0xff]
          %v4540 = vld [vmem:[%s1301 + $0x48] sm:$0xff]
          %v4541 = vld [vmem:[%s1301 + $0x50] sm:$0xff]
          %v4542 = vld [vmem:[%s1301 + $0x58] sm:$0xff]
          %v4543 = vld [vmem:[%s1301 + $0x60] sm:$0xff]
          %v4544 = vld [vmem:[%s1301 + $0x68] sm:$0xff]
          %v4545 = vld [vmem:[%s1301 + $0x70] sm:$0xff]
          %v4546 = vld [vmem:[%s1301 + $0x78] sm:$0xff]
          %4547 = vmatprep.subr.mxu0 0.0
          %4548 = vmatpush1.msra.mxu0 %v4546
          %4549 = vmatprep.subr.mxu0 0.0
          %4550 = vmatpush1.msra.mxu0 %v4545
          %4551 = vmatprep.subr.mxu0 0.0
          %4552 = vmatpush1.msra.mxu0 %v4544
          %4553 = vmatprep.subr.mxu0 0.0
          %4554 = vmatpush1.msra.mxu0 %v4543
          %4555 = vmatprep.subr.mxu0 0.0
          %4556 = vmatpush1.msra.mxu0 %v4542
          %4557 = vmatprep.subr.mxu0 0.0
          %4558 = vmatpush1.msra.mxu0 %v4541
          %4559 = vmatprep.subr.mxu0 0.0
          %4560 = vmatpush1.msra.mxu0 %v4540
          %4561 = vmatprep.subr.mxu0 0.0
          %4562 = vmatpush1.msra.mxu0 %v4539
          %4563 = vmatprep.subr.mxu0 0.0
          %4564 = vmatpush1.msra.mxu0 %v4538
          %4565 = vmatprep.subr.mxu0 0.0
          %4566 = vmatpush1.msra.mxu0 %v4537
          %4567 = vmatprep.subr.mxu0 0.0
          %4568 = vmatpush1.msra.mxu0 %v4536
          %4569 = vmatprep.subr.mxu0 0.0
          %4570 = vmatpush1.msra.mxu0 %v4535
          %4571 = vmatprep.subr.mxu0 0.0
          %4572 = vmatpush1.msra.mxu0 %v4534
          %4573 = vmatprep.subr.mxu0 0.0
          %4574 = vmatpush1.msra.mxu0 %v4533
          %4575 = vmatprep.subr.mxu0 0.0
          %4576 = vmatpush1.msra.mxu0 %v4532
          %4577 = vmatprep.subr.mxu0 0.0
          %4578 = vmatpush1.msra.mxu0 %v4531
          %4579 = vmatprep.subr.mxu0 0.0
          %4580 = vmatpush2.msra.mxu0 0.0
          %4581 = vmatprep.subr.mxu0 0.0
          %4582 = vmatpush2.msra.mxu0 0.0
          %4583 = vmatprep.subr.mxu0 0.0
          %4584 = vmatpush2.msra.mxu0 0.0
          %4585 = vmatprep.subr.mxu0 0.0
          %4586 = vmatpush2.msra.mxu0 0.0
          %4587 = vmatprep.subr.mxu0 0.0
          %4588 = vmatpush2.msra.mxu0 0.0
          %4589 = vmatprep.subr.mxu0 0.0
          %4590 = vmatpush2.msra.mxu0 0.0
          %4591 = vmatprep.subr.mxu0 0.0
          %4592 = vmatpush2.msra.mxu0 0.0
          %4593 = vmatprep.subr.mxu0 0.0
          %4594 = vmatpush2.msra.mxu0 0.0
          %4595 = vmatprep.subr.mxu0 0.0
          %4596 = vmatpush2.msra.mxu0 0.0
          %4597 = vmatprep.subr.mxu0 0.0
          %4598 = vmatpush2.msra.mxu0 0.0
          %4599 = vmatprep.subr.mxu0 0.0
          %4600 = vmatpush2.msra.mxu0 0.0
          %4601 = vmatprep.subr.mxu0 0.0
          %4602 = vmatpush2.msra.mxu0 0.0
          %4603 = vmatprep.subr.mxu0 0.0
          %4604 = vmatpush2.msra.mxu0 0.0
          %4605 = vmatprep.subr.mxu0 0.0
          %4606 = vmatpush2.msra.mxu0 0.0
          %4607 = vmatprep.subr.mxu0 0.0
          %4608 = vmatpush2.msra.mxu0 0.0
          %4609 = vmatprep.subr.mxu0 0.0
          %4610 = vmatpush2.msra.mxu0 0.0
          %4611 = vmatprep.mubr.f32.mxu0 0.0
          %4612 = vmatmul.mubr.f32.gmra.mxu0 %v3104
          %v4613 = vpop.f32.mrf.mxu0
          %v4614 = vadd.f32 0.0, %v4613
          %v4615 = vpop.f32.mrf.mxu0
          %4616 = vmatprep.mubr.f32.mxu0 0.0
          %4617 = vmatmul.mubr.f32.gmra.mxu0 %v3105
          %v4618 = vpop.f32.mrf.mxu0
          %v4619 = vadd.f32 0.0, %v4618
          %v4620 = vpop.f32.mrf.mxu0
          %4621 = vdwg.mxu0
          %v4622 = vld [vmem:[%s1310] sm:$0xff]
          %v4623 = vld [vmem:[%s1310 + $0x8] sm:$0xff]
          %v4624 = vld [vmem:[%s1310 + $0x10] sm:$0xff]
          %v4625 = vld [vmem:[%s1310 + $0x18] sm:$0xff]
          %v4626 = vld [vmem:[%s1310 + $0x20] sm:$0xff]
          %v4627 = vld [vmem:[%s1310 + $0x28] sm:$0xff]
          %v4628 = vld [vmem:[%s1310 + $0x30] sm:$0xff]
          %v4629 = vld [vmem:[%s1310 + $0x38] sm:$0xff]
          %v4630 = vld [vmem:[%s1310 + $0x40] sm:$0xff]
          %v4631 = vld [vmem:[%s1310 + $0x48] sm:$0xff]
          %v4632 = vld [vmem:[%s1310 + $0x50] sm:$0xff]
          %v4633 = vld [vmem:[%s1310 + $0x58] sm:$0xff]
          %v4634 = vld [vmem:[%s1310 + $0x60] sm:$0xff]
          %v4635 = vld [vmem:[%s1310 + $0x68] sm:$0xff]
          %v4636 = vld [vmem:[%s1310 + $0x70] sm:$0xff]
          %v4637 = vld [vmem:[%s1310 + $0x78] sm:$0xff]
          %v4639 = vsel %vm3405, %v4432, 0
          %v4642 = vsel %vm3405, %v4437, 0
          %v4645 = vsel %vm3405, %v4523, 0
          %v4648 = vsel %vm3405, %v4528, 0
          %4650 = vmatprep.subr.mxu0 0.0
          %4651 = vmatpush1.xpose.msra.mxu0 0.0
          %4652 = vmatprep.subr.mxu0 0.0
          %4653 = vmatpush1.xpose.msra.mxu0 0.0
          %4654 = vmatprep.subr.mxu0 0.0
          %4655 = vmatpush1.xpose.msra.mxu0 0.0
          %4656 = vmatprep.subr.mxu0 0.0
          %4657 = vmatpush1.xpose.msra.mxu0 0.0
          %4658 = vmatprep.subr.mxu0 0.0
          %4659 = vmatpush1.xpose.msra.mxu0 0.0
          %4660 = vmatprep.subr.mxu0 0.0
          %4661 = vmatpush1.xpose.msra.mxu0 0.0
          %4662 = vmatprep.subr.mxu0 0.0
          %4663 = vmatpush1.xpose.msra.mxu0 0.0
          %4664 = vmatprep.subr.mxu0 0.0
          %4665 = vmatpush1.xpose.msra.mxu0 0.0
          %4666 = vmatprep.subr.mxu0 0.0
          %4667 = vmatpush1.xpose.msra.mxu0 0.0
          %4668 = vmatprep.subr.mxu0 0.0
          %4669 = vmatpush1.xpose.msra.mxu0 0.0
          %4670 = vmatprep.subr.mxu0 0.0
          %4671 = vmatpush1.xpose.msra.mxu0 0.0
          %4672 = vmatprep.subr.mxu0 0.0
          %4673 = vmatpush1.xpose.msra.mxu0 0.0
          %4674 = vmatprep.subr.mxu0 0.0
          %4675 = vmatpush1.xpose.msra.mxu0 0.0
          %4676 = vmatprep.subr.mxu0 0.0
          %4677 = vmatpush1.xpose.msra.mxu0 0.0
          %4678 = vmatprep.subr.mxu0 0.0
          %4679 = vmatpush1.xpose.msra.mxu0 %v4648
          %4680 = vmatprep.subr.mxu0 0.0
          %4681 = vmatpush1.xpose.msra.mxu0 %v4645
          %4682 = vmatprep.subr.mxu0 0.0
          %4683 = vmatpush2.xpose.msra.mxu0 0.0
          %4684 = vmatprep.subr.mxu0 0.0
          %4685 = vmatpush2.xpose.msra.mxu0 0.0
          %4686 = vmatprep.subr.mxu0 0.0
          %4687 = vmatpush2.xpose.msra.mxu0 0.0
          %4688 = vmatprep.subr.mxu0 0.0
          %4689 = vmatpush2.xpose.msra.mxu0 0.0
          %4690 = vmatprep.subr.mxu0 0.0
          %4691 = vmatpush2.xpose.msra.mxu0 0.0
          %4692 = vmatprep.subr.mxu0 0.0
          %4693 = vmatpush2.xpose.msra.mxu0 0.0
          %4694 = vmatprep.subr.mxu0 0.0
          %4695 = vmatpush2.xpose.msra.mxu0 0.0
          %4696 = vmatprep.subr.mxu0 0.0
          %4697 = vmatpush2.xpose.msra.mxu0 0.0
          %4698 = vmatprep.subr.mxu0 0.0
          %4699 = vmatpush2.xpose.msra.mxu0 0.0
          %4700 = vmatprep.subr.mxu0 0.0
          %4701 = vmatpush2.xpose.msra.mxu0 0.0
          %4702 = vmatprep.subr.mxu0 0.0
          %4703 = vmatpush2.xpose.msra.mxu0 0.0
          %4704 = vmatprep.subr.mxu0 0.0
          %4705 = vmatpush2.xpose.msra.mxu0 0.0
          %4706 = vmatprep.subr.mxu0 0.0
          %4707 = vmatpush2.xpose.msra.mxu0 0.0
          %4708 = vmatprep.subr.mxu0 0.0
          %4709 = vmatpush2.xpose.msra.mxu0 0.0
          %4710 = vmatprep.subr.mxu0 0.0
          %4711 = vmatpush2.xpose.msra.mxu0 0.0
          %4712 = vmatprep.subr.mxu0 0.0
          %4713 = vmatpush2.xpose.msra.mxu0 0.0
          %4714 = vmatprep.mubr.f32.mxu0 0.0
          %4715 = vmatmul.mubr.f32.gmra.mxu0 %v4639
          %v4716 = vpop.f32.mrf.mxu0
          %v4717 = vadd.f32 0.0, %v4716
          %v4718 = vpop.f32.mrf.mxu0
          %4719 = vmatprep.mubr.f32.mxu0 0.0
          %4720 = vmatmul.mubr.f32.gmra.mxu0 %v4642
          %v4721 = vpop.f32.mrf.mxu0
          %v4722 = vadd.f32 0.0, %v4721
          %v4723 = vpop.f32.mrf.mxu0
          %4724 = vdwg.mxu0
          %v4725 = vsel %vm3495, %v4717, -inf
          %4726 = vmax.xlane.f32.xlu0 %v4725
          %v4727 = vpop.xlane.xlu0 %4726
          %v4728 = vsel %vm3495, %v4722, -inf
          %4729 = vmax.xlane.f32.xlu0 %v4728
          %v4730 = vpop.xlane.xlu0 %4729
          %v4731 = vsub.f32 %v4717, %v4727
          %v4732 = vsub.f32 %v4722, %v4730
          %v4733 = vmul.f32 %v4731, 1.442695
          %v4734 = vpow.pop %v4733
          %v4735 = vmul.f32 %v4732, 1.442695
          %v4736 = vpow.pop %v4735
          %v4737 = vsel %vm3495, %v4734, 0.0
          %4738 = vadd.xlane.f32.xlu0 %v4737
          %v4739 = vpop.xlane.xlu0 %4738
          %v4740 = vsel %vm3495, %v4736, 0.0
          %4741 = vadd.xlane.f32.xlu0 %v4740
          %v4742 = vpop.xlane.xlu0 %4741
          %v4743 = vrcp.pop %v4739
          %v4744 = vrcp.pop %v4742
          %v4745 = vmul.f32 %v4734, %v4743
          %v4746 = vmul.f32 %v4736, %v4744
          %v4748 = vsel %vm3495, %v4745, 0
          %v4751 = vsel %vm3495, %v4746, 0
          %4753 = vmatprep.subr.mxu0 0.0
          %4754 = vmatpush1.msra.mxu0 0.0
          %4755 = vmatprep.subr.mxu0 0.0
          %4756 = vmatpush1.msra.mxu0 0.0
          %4757 = vmatprep.subr.mxu0 0.0
          %4758 = vmatpush1.msra.mxu0 0.0
          %4759 = vmatprep.subr.mxu0 0.0
          %4760 = vmatpush1.msra.mxu0 0.0
          %4761 = vmatprep.subr.mxu0 0.0
          %4762 = vmatpush1.msra.mxu0 0.0
          %4763 = vmatprep.subr.mxu0 0.0
          %4764 = vmatpush1.msra.mxu0 0.0
          %4765 = vmatprep.subr.mxu0 0.0
          %4766 = vmatpush1.msra.mxu0 0.0
          %4767 = vmatprep.subr.mxu0 0.0
          %4768 = vmatpush1.msra.mxu0 0.0
          %4769 = vmatprep.subr.mxu0 0.0
          %4770 = vmatpush1.msra.mxu0 0.0
          %4771 = vmatprep.subr.mxu0 0.0
          %4772 = vmatpush1.msra.mxu0 0.0
          %4773 = vmatprep.subr.mxu0 0.0
          %4774 = vmatpush1.msra.mxu0 0.0
          %4775 = vmatprep.subr.mxu0 0.0
          %4776 = vmatpush1.msra.mxu0 0.0
          %4777 = vmatprep.subr.mxu0 0.0
          %4778 = vmatpush1.msra.mxu0 0.0
          %4779 = vmatprep.subr.mxu0 0.0
          %4780 = vmatpush1.msra.mxu0 0.0
          %4781 = vmatprep.subr.mxu0 0.0
          %4782 = vmatpush1.msra.mxu0 %v4619
          %4783 = vmatprep.subr.mxu0 0.0
          %4784 = vmatpush1.msra.mxu0 %v4614
          %4785 = vmatprep.subr.mxu0 0.0
          %4786 = vmatpush2.msra.mxu0 0.0
          %4787 = vmatprep.subr.mxu0 0.0
          %4788 = vmatpush2.msra.mxu0 0.0
          %4789 = vmatprep.subr.mxu0 0.0
          %4790 = vmatpush2.msra.mxu0 0.0
          %4791 = vmatprep.subr.mxu0 0.0
          %4792 = vmatpush2.msra.mxu0 0.0
          %4793 = vmatprep.subr.mxu0 0.0
          %4794 = vmatpush2.msra.mxu0 0.0
          %4795 = vmatprep.subr.mxu0 0.0
          %4796 = vmatpush2.msra.mxu0 0.0
          %4797 = vmatprep.subr.mxu0 0.0
          %4798 = vmatpush2.msra.mxu0 0.0
          %4799 = vmatprep.subr.mxu0 0.0
          %4800 = vmatpush2.msra.mxu0 0.0
          %4801 = vmatprep.subr.mxu0 0.0
          %4802 = vmatpush2.msra.mxu0 0.0
          %4803 = vmatprep.subr.mxu0 0.0
          %4804 = vmatpush2.msra.mxu0 0.0
          %4805 = vmatprep.subr.mxu0 0.0
          %4806 = vmatpush2.msra.mxu0 0.0
          %4807 = vmatprep.subr.mxu0 0.0
          %4808 = vmatpush2.msra.mxu0 0.0
          %4809 = vmatprep.subr.mxu0 0.0
          %4810 = vmatpush2.msra.mxu0 0.0
          %4811 = vmatprep.subr.mxu0 0.0
          %4812 = vmatpush2.msra.mxu0 0.0
          %4813 = vmatprep.subr.mxu0 0.0
          %4814 = vmatpush2.msra.mxu0 0.0
          %4815 = vmatprep.subr.mxu0 0.0
          %4816 = vmatpush2.msra.mxu0 0.0
          %4817 = vmatprep.mubr.f32.mxu0 0.0
          %4818 = vmatmul.mubr.f32.gmra.mxu0 %v4748
          %v4819 = vpop.f32.mrf.mxu0
          %v4820 = vadd.f32 0.0, %v4819
          %v4821 = vpop.f32.mrf.mxu0
          %4822 = vmatprep.mubr.f32.mxu0 0.0
          %4823 = vmatmul.mubr.f32.gmra.mxu0 %v4751
          %v4824 = vpop.f32.mrf.mxu0
          %v4825 = vadd.f32 0.0, %v4824
          %v4826 = vpop.f32.mrf.mxu0
          %4827 = vdwg.mxu0
          %4828 = vrot.lane.b32.xlu0 %v4432, 96
          %v4829 = vpop.permute.xlu0 %4828
          %4830 = vrot.lane.b32.xlu0 %v4437, 96
          %v4831 = vpop.permute.xlu0 %4830
          %4832 = vrot.lane.b32.xlu0 %v4523, 96
          %v4833 = vpop.permute.xlu0 %4832
          %4834 = vrot.lane.b32.xlu0 %v4528, 96
          %v4835 = vpop.permute.xlu0 %4834
          %v4836 = vsel %vm3405, %v4829, 0
          %v4838 = vsel %vm3405, %v4831, 0
          %v4840 = vsel %vm3405, %v4833, 0
          %v4842 = vsel %vm3405, %v4835, 0
          %4844 = vmatprep.subr.mxu0 0.0
          %4845 = vmatpush1.xpose.msra.mxu0 0.0
          %4846 = vmatprep.subr.mxu0 0.0
          %4847 = vmatpush1.xpose.msra.mxu0 0.0
          %4848 = vmatprep.subr.mxu0 0.0
          %4849 = vmatpush1.xpose.msra.mxu0 0.0
          %4850 = vmatprep.subr.mxu0 0.0
          %4851 = vmatpush1.xpose.msra.mxu0 0.0
          %4852 = vmatprep.subr.mxu0 0.0
          %4853 = vmatpush1.xpose.msra.mxu0 0.0
          %4854 = vmatprep.subr.mxu0 0.0
          %4855 = vmatpush1.xpose.msra.mxu0 0.0
          %4856 = vmatprep.subr.mxu0 0.0
          %4857 = vmatpush1.xpose.msra.mxu0 0.0
          %4858 = vmatprep.subr.mxu0 0.0
          %4859 = vmatpush1.xpose.msra.mxu0 0.0
          %4860 = vmatprep.subr.mxu0 0.0
          %4861 = vmatpush1.xpose.msra.mxu0 0.0
          %4862 = vmatprep.subr.mxu0 0.0
          %4863 = vmatpush1.xpose.msra.mxu0 0.0
          %4864 = vmatprep.subr.mxu0 0.0
          %4865 = vmatpush1.xpose.msra.mxu0 0.0
          %4866 = vmatprep.subr.mxu0 0.0
          %4867 = vmatpush1.xpose.msra.mxu0 0.0
          %4868 = vmatprep.subr.mxu0 0.0
          %4869 = vmatpush1.xpose.msra.mxu0 0.0
          %4870 = vmatprep.subr.mxu0 0.0
          %4871 = vmatpush1.xpose.msra.mxu0 0.0
          %4872 = vmatprep.subr.mxu0 0.0
          %4873 = vmatpush1.xpose.msra.mxu0 %v4842
          %4874 = vmatprep.subr.mxu0 0.0
          %4875 = vmatpush1.xpose.msra.mxu0 %v4840
          %4876 = vmatprep.subr.mxu0 0.0
          %4877 = vmatpush2.xpose.msra.mxu0 0.0
          %4878 = vmatprep.subr.mxu0 0.0
          %4879 = vmatpush2.xpose.msra.mxu0 0.0
          %4880 = vmatprep.subr.mxu0 0.0
          %4881 = vmatpush2.xpose.msra.mxu0 0.0
          %4882 = vmatprep.subr.mxu0 0.0
          %4883 = vmatpush2.xpose.msra.mxu0 0.0
          %4884 = vmatprep.subr.mxu0 0.0
          %4885 = vmatpush2.xpose.msra.mxu0 0.0
          %4886 = vmatprep.subr.mxu0 0.0
          %4887 = vmatpush2.xpose.msra.mxu0 0.0
          %4888 = vmatprep.subr.mxu0 0.0
          %4889 = vmatpush2.xpose.msra.mxu0 0.0
          %4890 = vmatprep.subr.mxu0 0.0
          %4891 = vmatpush2.xpose.msra.mxu0 0.0
          %4892 = vmatprep.subr.mxu0 0.0
          %4893 = vmatpush2.xpose.msra.mxu0 0.0
          %4894 = vmatprep.subr.mxu0 0.0
          %4895 = vmatpush2.xpose.msra.mxu0 0.0
          %4896 = vmatprep.subr.mxu0 0.0
          %4897 = vmatpush2.xpose.msra.mxu0 0.0
          %4898 = vmatprep.subr.mxu0 0.0
          %4899 = vmatpush2.xpose.msra.mxu0 0.0
          %4900 = vmatprep.subr.mxu0 0.0
          %4901 = vmatpush2.xpose.msra.mxu0 0.0
          %4902 = vmatprep.subr.mxu0 0.0
          %4903 = vmatpush2.xpose.msra.mxu0 0.0
          %4904 = vmatprep.subr.mxu0 0.0
          %4905 = vmatpush2.xpose.msra.mxu0 0.0
          %4906 = vmatprep.subr.mxu0 0.0
          %4907 = vmatpush2.xpose.msra.mxu0 0.0
          %4908 = vmatprep.mubr.f32.mxu0 0.0
          %4909 = vmatmul.mubr.f32.gmra.mxu0 %v4836
          %v4910 = vpop.f32.mrf.mxu0
          %v4911 = vadd.f32 0.0, %v4910
          %v4912 = vpop.f32.mrf.mxu0
          %4913 = vmatprep.mubr.f32.mxu0 0.0
          %4914 = vmatmul.mubr.f32.gmra.mxu0 %v4838
          %v4915 = vpop.f32.mrf.mxu0
          %v4916 = vadd.f32 0.0, %v4915
          %v4917 = vpop.f32.mrf.mxu0
          %4918 = vdwg.mxu0
          %v4919 = vsel %vm3495, %v4911, -inf
          %4920 = vmax.xlane.f32.xlu0 %v4919
          %v4921 = vpop.xlane.xlu0 %4920
          %v4922 = vsel %vm3495, %v4916, -inf
          %4923 = vmax.xlane.f32.xlu0 %v4922
          %v4924 = vpop.xlane.xlu0 %4923
          %v4925 = vsub.f32 %v4911, %v4921
          %v4926 = vsub.f32 %v4916, %v4924
          %v4927 = vmul.f32 %v4925, 1.442695
          %v4928 = vpow.pop %v4927
          %v4929 = vmul.f32 %v4926, 1.442695
          %v4930 = vpow.pop %v4929
          %v4931 = vsel %vm3495, %v4928, 0.0
          %4932 = vadd.xlane.f32.xlu0 %v4931
          %v4933 = vpop.xlane.xlu0 %4932
          %v4934 = vsel %vm3495, %v4930, 0.0
          %4935 = vadd.xlane.f32.xlu0 %v4934
          %v4936 = vpop.xlane.xlu0 %4935
          %v4937 = vrcp.pop %v4933
          %v4938 = vrcp.pop %v4936
          %v4939 = vmul.f32 %v4928, %v4937
          %v4940 = vmul.f32 %v4930, %v4938
          %4943 = vrot.lane.b32.xlu0 %v4614, 96
          %v4944 = vpop.permute.xlu0 %4943
          %4945 = vrot.lane.b32.xlu0 %v4619, 96
          %v4946 = vpop.permute.xlu0 %4945
          %v4950 = vsel %vm3495, %v4939, 0
          %v4953 = vsel %vm3495, %v4940, 0
          %4955 = vmatprep.subr.mxu0 0.0
          %4956 = vmatpush1.msra.mxu0 0.0
          %4957 = vmatprep.subr.mxu0 0.0
          %4958 = vmatpush1.msra.mxu0 0.0
          %4959 = vmatprep.subr.mxu0 0.0
          %4960 = vmatpush1.msra.mxu0 0.0
          %4961 = vmatprep.subr.mxu0 0.0
          %4962 = vmatpush1.msra.mxu0 0.0
          %4963 = vmatprep.subr.mxu0 0.0
          %4964 = vmatpush1.msra.mxu0 0.0
          %4965 = vmatprep.subr.mxu0 0.0
          %4966 = vmatpush1.msra.mxu0 0.0
          %4967 = vmatprep.subr.mxu0 0.0
          %4968 = vmatpush1.msra.mxu0 0.0
          %4969 = vmatprep.subr.mxu0 0.0
          %4970 = vmatpush1.msra.mxu0 0.0
          %4971 = vmatprep.subr.mxu0 0.0
          %4972 = vmatpush1.msra.mxu0 0.0
          %4973 = vmatprep.subr.mxu0 0.0
          %4974 = vmatpush1.msra.mxu0 0.0
          %4975 = vmatprep.subr.mxu0 0.0
          %4976 = vmatpush1.msra.mxu0 0.0
          %4977 = vmatprep.subr.mxu0 0.0
          %4978 = vmatpush1.msra.mxu0 0.0
          %4979 = vmatprep.subr.mxu0 0.0
          %4980 = vmatpush1.msra.mxu0 0.0
          %4981 = vmatprep.subr.mxu0 0.0
          %4982 = vmatpush1.msra.mxu0 0.0
          %4983 = vmatprep.subr.mxu0 0.0
          %4984 = vmatpush1.msra.mxu0 %v4946
          %4985 = vmatprep.subr.mxu0 0.0
          %4986 = vmatpush1.msra.mxu0 %v4944
          %4987 = vmatprep.subr.mxu0 0.0
          %4988 = vmatpush2.msra.mxu0 0.0
          %4989 = vmatprep.subr.mxu0 0.0
          %4990 = vmatpush2.msra.mxu0 0.0
          %4991 = vmatprep.subr.mxu0 0.0
          %4992 = vmatpush2.msra.mxu0 0.0
          %4993 = vmatprep.subr.mxu0 0.0
          %4994 = vmatpush2.msra.mxu0 0.0
          %4995 = vmatprep.subr.mxu0 0.0
          %4996 = vmatpush2.msra.mxu0 0.0
          %4997 = vmatprep.subr.mxu0 0.0
          %4998 = vmatpush2.msra.mxu0 0.0
          %4999 = vmatprep.subr.mxu0 0.0
          %5000 = vmatpush2.msra.mxu0 0.0
          %5001 = vmatprep.subr.mxu0 0.0
          %5002 = vmatpush2.msra.mxu0 0.0
          %5003 = vmatprep.subr.mxu0 0.0
          %5004 = vmatpush2.msra.mxu0 0.0
          %5005 = vmatprep.subr.mxu0 0.0
          %5006 = vmatpush2.msra.mxu0 0.0
          %5007 = vmatprep.subr.mxu0 0.0
          %5008 = vmatpush2.msra.mxu0 0.0
          %5009 = vmatprep.subr.mxu0 0.0
          %5010 = vmatpush2.msra.mxu0 0.0
          %5011 = vmatprep.subr.mxu0 0.0
          %5012 = vmatpush2.msra.mxu0 0.0
          %5013 = vmatprep.subr.mxu0 0.0
          %5014 = vmatpush2.msra.mxu0 0.0
          %5015 = vmatprep.subr.mxu0 0.0
          %5016 = vmatpush2.msra.mxu0 0.0
          %5017 = vmatprep.subr.mxu0 0.0
          %5018 = vmatpush2.msra.mxu0 0.0
          %5019 = vmatprep.mubr.f32.mxu0 0.0
          %5020 = vmatmul.mubr.f32.gmra.mxu0 %v4950
          %v5021 = vpop.f32.mrf.mxu0
          %v5022 = vadd.f32 0.0, %v5021
          %v5023 = vpop.f32.mrf.mxu0
          %5024 = vmatprep.mubr.f32.mxu0 0.0
          %5025 = vmatmul.mubr.f32.gmra.mxu0 %v4953
          %v5026 = vpop.f32.mrf.mxu0
          %v5027 = vadd.f32 0.0, %v5026
          %v5028 = vpop.f32.mrf.mxu0
          %5029 = vdwg.mxu0
          %5030 = vrot.lane.b32.xlu0 %v4432, 64
          %v5031 = vpop.permute.xlu0 %5030
          %5032 = vrot.lane.b32.xlu0 %v4437, 64
          %v5033 = vpop.permute.xlu0 %5032
          %5034 = vrot.lane.b32.xlu0 %v4523, 64
          %v5035 = vpop.permute.xlu0 %5034
          %5036 = vrot.lane.b32.xlu0 %v4528, 64
          %v5037 = vpop.permute.xlu0 %5036
          %v5038 = vsel %vm3405, %v5031, 0
          %v5040 = vsel %vm3405, %v5033, 0
          %v5042 = vsel %vm3405, %v5035, 0
          %v5044 = vsel %vm3405, %v5037, 0
          %5046 = vmatprep.subr.mxu0 0.0
          %5047 = vmatpush1.xpose.msra.mxu0 0.0
          %5048 = vmatprep.subr.mxu0 0.0
          %5049 = vmatpush1.xpose.msra.mxu0 0.0
          %5050 = vmatprep.subr.mxu0 0.0
          %5051 = vmatpush1.xpose.msra.mxu0 0.0
          %5052 = vmatprep.subr.mxu0 0.0
          %5053 = vmatpush1.xpose.msra.mxu0 0.0
          %5054 = vmatprep.subr.mxu0 0.0
          %5055 = vmatpush1.xpose.msra.mxu0 0.0
          %5056 = vmatprep.subr.mxu0 0.0
          %5057 = vmatpush1.xpose.msra.mxu0 0.0
          %5058 = vmatprep.subr.mxu0 0.0
          %5059 = vmatpush1.xpose.msra.mxu0 0.0
          %5060 = vmatprep.subr.mxu0 0.0
          %5061 = vmatpush1.xpose.msra.mxu0 0.0
          %5062 = vmatprep.subr.mxu0 0.0
          %5063 = vmatpush1.xpose.msra.mxu0 0.0
          %5064 = vmatprep.subr.mxu0 0.0
          %5065 = vmatpush1.xpose.msra.mxu0 0.0
          %5066 = vmatprep.subr.mxu0 0.0
          %5067 = vmatpush1.xpose.msra.mxu0 0.0
          %5068 = vmatprep.subr.mxu0 0.0
          %5069 = vmatpush1.xpose.msra.mxu0 0.0
          %5070 = vmatprep.subr.mxu0 0.0
          %5071 = vmatpush1.xpose.msra.mxu0 0.0
          %5072 = vmatprep.subr.mxu0 0.0
          %5073 = vmatpush1.xpose.msra.mxu0 0.0
          %5074 = vmatprep.subr.mxu0 0.0
          %5075 = vmatpush1.xpose.msra.mxu0 %v5044
          %5076 = vmatprep.subr.mxu0 0.0
          %5077 = vmatpush1.xpose.msra.mxu0 %v5042
          %5078 = vmatprep.subr.mxu0 0.0
          %5079 = vmatpush2.xpose.msra.mxu0 0.0
          %5080 = vmatprep.subr.mxu0 0.0
          %5081 = vmatpush2.xpose.msra.mxu0 0.0
          %5082 = vmatprep.subr.mxu0 0.0
          %5083 = vmatpush2.xpose.msra.mxu0 0.0
          %5084 = vmatprep.subr.mxu0 0.0
          %5085 = vmatpush2.xpose.msra.mxu0 0.0
          %5086 = vmatprep.subr.mxu0 0.0
          %5087 = vmatpush2.xpose.msra.mxu0 0.0
          %5088 = vmatprep.subr.mxu0 0.0
          %5089 = vmatpush2.xpose.msra.mxu0 0.0
          %5090 = vmatprep.subr.mxu0 0.0
          %5091 = vmatpush2.xpose.msra.mxu0 0.0
          %5092 = vmatprep.subr.mxu0 0.0
          %5093 = vmatpush2.xpose.msra.mxu0 0.0
          %5094 = vmatprep.subr.mxu0 0.0
          %5095 = vmatpush2.xpose.msra.mxu0 0.0
          %5096 = vmatprep.subr.mxu0 0.0
          %5097 = vmatpush2.xpose.msra.mxu0 0.0
          %5098 = vmatprep.subr.mxu0 0.0
          %5099 = vmatpush2.xpose.msra.mxu0 0.0
          %5100 = vmatprep.subr.mxu0 0.0
          %5101 = vmatpush2.xpose.msra.mxu0 0.0
          %5102 = vmatprep.subr.mxu0 0.0
          %5103 = vmatpush2.xpose.msra.mxu0 0.0
          %5104 = vmatprep.subr.mxu0 0.0
          %5105 = vmatpush2.xpose.msra.mxu0 0.0
          %5106 = vmatprep.subr.mxu0 0.0
          %5107 = vmatpush2.xpose.msra.mxu0 0.0
          %5108 = vmatprep.subr.mxu0 0.0
          %5109 = vmatpush2.xpose.msra.mxu0 0.0
          %5110 = vmatprep.mubr.f32.mxu0 0.0
          %5111 = vmatmul.mubr.f32.gmra.mxu0 %v5038
          %v5112 = vpop.f32.mrf.mxu0
          %v5113 = vadd.f32 0.0, %v5112
          %v5114 = vpop.f32.mrf.mxu0
          %5115 = vmatprep.mubr.f32.mxu0 0.0
          %5116 = vmatmul.mubr.f32.gmra.mxu0 %v5040
          %v5117 = vpop.f32.mrf.mxu0
          %v5118 = vadd.f32 0.0, %v5117
          %v5119 = vpop.f32.mrf.mxu0
          %5120 = vdwg.mxu0
          %v5121 = vsel %vm3495, %v5113, -inf
          %5122 = vmax.xlane.f32.xlu0 %v5121
          %v5123 = vpop.xlane.xlu0 %5122
          %v5124 = vsel %vm3495, %v5118, -inf
          %5125 = vmax.xlane.f32.xlu0 %v5124
          %v5126 = vpop.xlane.xlu0 %5125
          %v5127 = vsub.f32 %v5113, %v5123
          %v5128 = vsub.f32 %v5118, %v5126
          %v5129 = vmul.f32 %v5127, 1.442695
          %v5130 = vpow.pop %v5129
          %v5131 = vmul.f32 %v5128, 1.442695
          %v5132 = vpow.pop %v5131
          %v5133 = vsel %vm3495, %v5130, 0.0
          %5134 = vadd.xlane.f32.xlu0 %v5133
          %v5135 = vpop.xlane.xlu0 %5134
          %v5136 = vsel %vm3495, %v5132, 0.0
          %5137 = vadd.xlane.f32.xlu0 %v5136
          %v5138 = vpop.xlane.xlu0 %5137
          %v5139 = vrcp.pop %v5135
          %v5140 = vrcp.pop %v5138
          %v5141 = vmul.f32 %v5130, %v5139
          %v5142 = vmul.f32 %v5132, %v5140
          %5143 = vrot.lane.b32.xlu0 %v4614, 64
          %v5144 = vpop.permute.xlu0 %5143
          %5145 = vrot.lane.b32.xlu0 %v4619, 64
          %v5146 = vpop.permute.xlu0 %5145
          %v5150 = vsel %vm3495, %v5141, 0
          %v5153 = vsel %vm3495, %v5142, 0
          %5155 = vmatprep.subr.mxu0 0.0
          %5156 = vmatpush1.msra.mxu0 0.0
          %5157 = vmatprep.subr.mxu0 0.0
          %5158 = vmatpush1.msra.mxu0 0.0
          %5159 = vmatprep.subr.mxu0 0.0
          %5160 = vmatpush1.msra.mxu0 0.0
          %5161 = vmatprep.subr.mxu0 0.0
          %5162 = vmatpush1.msra.mxu0 0.0
          %5163 = vmatprep.subr.mxu0 0.0
          %5164 = vmatpush1.msra.mxu0 0.0
          %5165 = vmatprep.subr.mxu0 0.0
          %5166 = vmatpush1.msra.mxu0 0.0
          %5167 = vmatprep.subr.mxu0 0.0
          %5168 = vmatpush1.msra.mxu0 0.0
          %5169 = vmatprep.subr.mxu0 0.0
          %5170 = vmatpush1.msra.mxu0 0.0
          %5171 = vmatprep.subr.mxu0 0.0
          %5172 = vmatpush1.msra.mxu0 0.0
          %5173 = vmatprep.subr.mxu0 0.0
          %5174 = vmatpush1.msra.mxu0 0.0
          %5175 = vmatprep.subr.mxu0 0.0
          %5176 = vmatpush1.msra.mxu0 0.0
          %5177 = vmatprep.subr.mxu0 0.0
          %5178 = vmatpush1.msra.mxu0 0.0
          %5179 = vmatprep.subr.mxu0 0.0
          %5180 = vmatpush1.msra.mxu0 0.0
          %5181 = vmatprep.subr.mxu0 0.0
          %5182 = vmatpush1.msra.mxu0 0.0
          %5183 = vmatprep.subr.mxu0 0.0
          %5184 = vmatpush1.msra.mxu0 %v5146
          %5185 = vmatprep.subr.mxu0 0.0
          %5186 = vmatpush1.msra.mxu0 %v5144
          %5187 = vmatprep.subr.mxu0 0.0
          %5188 = vmatpush2.msra.mxu0 0.0
          %5189 = vmatprep.subr.mxu0 0.0
          %5190 = vmatpush2.msra.mxu0 0.0
          %5191 = vmatprep.subr.mxu0 0.0
          %5192 = vmatpush2.msra.mxu0 0.0
          %5193 = vmatprep.subr.mxu0 0.0
          %5194 = vmatpush2.msra.mxu0 0.0
          %5195 = vmatprep.subr.mxu0 0.0
          %5196 = vmatpush2.msra.mxu0 0.0
          %5197 = vmatprep.subr.mxu0 0.0
          %5198 = vmatpush2.msra.mxu0 0.0
          %5199 = vmatprep.subr.mxu0 0.0
          %5200 = vmatpush2.msra.mxu0 0.0
          %5201 = vmatprep.subr.mxu0 0.0
          %5202 = vmatpush2.msra.mxu0 0.0
          %5203 = vmatprep.subr.mxu0 0.0
          %5204 = vmatpush2.msra.mxu0 0.0
          %5205 = vmatprep.subr.mxu0 0.0
          %5206 = vmatpush2.msra.mxu0 0.0
          %5207 = vmatprep.subr.mxu0 0.0
          %5208 = vmatpush2.msra.mxu0 0.0
          %5209 = vmatprep.subr.mxu0 0.0
          %5210 = vmatpush2.msra.mxu0 0.0
          %5211 = vmatprep.subr.mxu0 0.0
          %5212 = vmatpush2.msra.mxu0 0.0
          %5213 = vmatprep.subr.mxu0 0.0
          %5214 = vmatpush2.msra.mxu0 0.0
          %5215 = vmatprep.subr.mxu0 0.0
          %5216 = vmatpush2.msra.mxu0 0.0
          %5217 = vmatprep.subr.mxu0 0.0
          %5218 = vmatpush2.msra.mxu0 0.0
          %5219 = vmatprep.mubr.f32.mxu0 0.0
          %5220 = vmatmul.mubr.f32.gmra.mxu0 %v5150
          %v5221 = vpop.f32.mrf.mxu0
          %v5222 = vadd.f32 0.0, %v5221
          %v5223 = vpop.f32.mrf.mxu0
          %5224 = vmatprep.mubr.f32.mxu0 0.0
          %5225 = vmatmul.mubr.f32.gmra.mxu0 %v5153
          %v5226 = vpop.f32.mrf.mxu0
          %v5227 = vadd.f32 0.0, %v5226
          %v5228 = vpop.f32.mrf.mxu0
          %5229 = vdwg.mxu0
          %5230 = vrot.lane.b32.xlu0 %v4432, 32
          %v5231 = vpop.permute.xlu0 %5230
          %5232 = vrot.lane.b32.xlu0 %v4437, 32
          %v5233 = vpop.permute.xlu0 %5232
          %5234 = vrot.lane.b32.xlu0 %v4523, 32
          %v5235 = vpop.permute.xlu0 %5234
          %5236 = vrot.lane.b32.xlu0 %v4528, 32
          %v5237 = vpop.permute.xlu0 %5236
          %v5238 = vsel %vm3405, %v5231, 0
          %v5240 = vsel %vm3405, %v5233, 0
          %v5242 = vsel %vm3405, %v5235, 0
          %v5244 = vsel %vm3405, %v5237, 0
          %5246 = vmatprep.subr.mxu0 0.0
          %5247 = vmatpush1.xpose.msra.mxu0 0.0
          %5248 = vmatprep.subr.mxu0 0.0
          %5249 = vmatpush1.xpose.msra.mxu0 0.0
          %5250 = vmatprep.subr.mxu0 0.0
          %5251 = vmatpush1.xpose.msra.mxu0 0.0
          %5252 = vmatprep.subr.mxu0 0.0
          %5253 = vmatpush1.xpose.msra.mxu0 0.0
          %5254 = vmatprep.subr.mxu0 0.0
          %5255 = vmatpush1.xpose.msra.mxu0 0.0
          %5256 = vmatprep.subr.mxu0 0.0
          %5257 = vmatpush1.xpose.msra.mxu0 0.0
          %5258 = vmatprep.subr.mxu0 0.0
          %5259 = vmatpush1.xpose.msra.mxu0 0.0
          %5260 = vmatprep.subr.mxu0 0.0
          %5261 = vmatpush1.xpose.msra.mxu0 0.0
          %5262 = vmatprep.subr.mxu0 0.0
          %5263 = vmatpush1.xpose.msra.mxu0 0.0
          %5264 = vmatprep.subr.mxu0 0.0
          %5265 = vmatpush1.xpose.msra.mxu0 0.0
          %5266 = vmatprep.subr.mxu0 0.0
          %5267 = vmatpush1.xpose.msra.mxu0 0.0
          %5268 = vmatprep.subr.mxu0 0.0
          %5269 = vmatpush1.xpose.msra.mxu0 0.0
          %5270 = vmatprep.subr.mxu0 0.0
          %5271 = vmatpush1.xpose.msra.mxu0 0.0
          %5272 = vmatprep.subr.mxu0 0.0
          %5273 = vmatpush1.xpose.msra.mxu0 0.0
          %5274 = vmatprep.subr.mxu0 0.0
          %5275 = vmatpush1.xpose.msra.mxu0 %v5244
          %5276 = vmatprep.subr.mxu0 0.0
          %5277 = vmatpush1.xpose.msra.mxu0 %v5242
          %5278 = vmatprep.subr.mxu0 0.0
          %5279 = vmatpush2.xpose.msra.mxu0 0.0
          %5280 = vmatprep.subr.mxu0 0.0
          %5281 = vmatpush2.xpose.msra.mxu0 0.0
          %5282 = vmatprep.subr.mxu0 0.0
          %5283 = vmatpush2.xpose.msra.mxu0 0.0
          %5284 = vmatprep.subr.mxu0 0.0
          %5285 = vmatpush2.xpose.msra.mxu0 0.0
          %5286 = vmatprep.subr.mxu0 0.0
          %5287 = vmatpush2.xpose.msra.mxu0 0.0
          %5288 = vmatprep.subr.mxu0 0.0
          %5289 = vmatpush2.xpose.msra.mxu0 0.0
          %5290 = vmatprep.subr.mxu0 0.0
          %5291 = vmatpush2.xpose.msra.mxu0 0.0
          %5292 = vmatprep.subr.mxu0 0.0
          %5293 = vmatpush2.xpose.msra.mxu0 0.0
          %5294 = vmatprep.subr.mxu0 0.0
          %5295 = vmatpush2.xpose.msra.mxu0 0.0
          %5296 = vmatprep.subr.mxu0 0.0
          %5297 = vmatpush2.xpose.msra.mxu0 0.0
          %5298 = vmatprep.subr.mxu0 0.0
          %5299 = vmatpush2.xpose.msra.mxu0 0.0
          %5300 = vmatprep.subr.mxu0 0.0
          %5301 = vmatpush2.xpose.msra.mxu0 0.0
          %5302 = vmatprep.subr.mxu0 0.0
          %5303 = vmatpush2.xpose.msra.mxu0 0.0
          %5304 = vmatprep.subr.mxu0 0.0
          %5305 = vmatpush2.xpose.msra.mxu0 0.0
          %5306 = vmatprep.subr.mxu0 0.0
          %5307 = vmatpush2.xpose.msra.mxu0 0.0
          %5308 = vmatprep.subr.mxu0 0.0
          %5309 = vmatpush2.xpose.msra.mxu0 0.0
          %5310 = vmatprep.mubr.f32.mxu0 0.0
          %5311 = vmatmul.mubr.f32.gmra.mxu0 %v5238
          %v5312 = vpop.f32.mrf.mxu0
          %v5313 = vadd.f32 0.0, %v5312
          %v5314 = vpop.f32.mrf.mxu0
          %5315 = vmatprep.mubr.f32.mxu0 0.0
          %5316 = vmatmul.mubr.f32.gmra.mxu0 %v5240
          %v5317 = vpop.f32.mrf.mxu0
          %v5318 = vadd.f32 0.0, %v5317
          %v5319 = vpop.f32.mrf.mxu0
          %5320 = vdwg.mxu0
          %v5321 = vsel %vm3495, %v5313, -inf
          %5322 = vmax.xlane.f32.xlu0 %v5321
          %v5323 = vpop.xlane.xlu0 %5322
          %v5324 = vsel %vm3495, %v5318, -inf
          %5325 = vmax.xlane.f32.xlu0 %v5324
          %v5326 = vpop.xlane.xlu0 %5325
          %v5327 = vsub.f32 %v5313, %v5323
          %v5328 = vsub.f32 %v5318, %v5326
          %v5329 = vmul.f32 %v5327, 1.442695
          %v5330 = vpow.pop %v5329
          %v5331 = vmul.f32 %v5328, 1.442695
          %v5332 = vpow.pop %v5331
          %v5333 = vsel %vm3495, %v5330, 0.0
          %5334 = vadd.xlane.f32.xlu0 %v5333
          %v5335 = vpop.xlane.xlu0 %5334
          %v5336 = vsel %vm3495, %v5332, 0.0
          %5337 = vadd.xlane.f32.xlu0 %v5336
          %v5338 = vpop.xlane.xlu0 %5337
          %v5339 = vrcp.pop %v5335
          %v5340 = vrcp.pop %v5338
          %v5341 = vmul.f32 %v5330, %v5339
          %v5342 = vmul.f32 %v5332, %v5340
          %5343 = vrot.lane.b32.xlu0 %v4614, 32
          %v5344 = vpop.permute.xlu0 %5343
          %5345 = vrot.lane.b32.xlu0 %v4619, 32
          %v5346 = vpop.permute.xlu0 %5345
          %v5350 = vsel %vm3495, %v5341, 0
          %v5353 = vsel %vm3495, %v5342, 0
          %5355 = vmatprep.subr.mxu0 0.0
          %5356 = vmatpush1.msra.mxu0 0.0
          %5357 = vmatprep.subr.mxu0 0.0
          %5358 = vmatpush1.msra.mxu0 0.0
          %5359 = vmatprep.subr.mxu0 0.0
          %5360 = vmatpush1.msra.mxu0 0.0
          %5361 = vmatprep.subr.mxu0 0.0
          %5362 = vmatpush1.msra.mxu0 0.0
          %5363 = vmatprep.subr.mxu0 0.0
          %5364 = vmatpush1.msra.mxu0 0.0
          %5365 = vmatprep.subr.mxu0 0.0
          %5366 = vmatpush1.msra.mxu0 0.0
          %5367 = vmatprep.subr.mxu0 0.0
          %5368 = vmatpush1.msra.mxu0 0.0
          %5369 = vmatprep.subr.mxu0 0.0
          %5370 = vmatpush1.msra.mxu0 0.0
          %5371 = vmatprep.subr.mxu0 0.0
          %5372 = vmatpush1.msra.mxu0 0.0
          %5373 = vmatprep.subr.mxu0 0.0
          %5374 = vmatpush1.msra.mxu0 0.0
          %5375 = vmatprep.subr.mxu0 0.0
          %5376 = vmatpush1.msra.mxu0 0.0
          %5377 = vmatprep.subr.mxu0 0.0
          %5378 = vmatpush1.msra.mxu0 0.0
          %5379 = vmatprep.subr.mxu0 0.0
          %5380 = vmatpush1.msra.mxu0 0.0
          %5381 = vmatprep.subr.mxu0 0.0
          %5382 = vmatpush1.msra.mxu0 0.0
          %5383 = vmatprep.subr.mxu0 0.0
          %5384 = vmatpush1.msra.mxu0 %v5346
          %5385 = vmatprep.subr.mxu0 0.0
          %5386 = vmatpush1.msra.mxu0 %v5344
          %5387 = vmatprep.subr.mxu0 0.0
          %5388 = vmatpush2.msra.mxu0 0.0
          %5389 = vmatprep.subr.mxu0 0.0
          %5390 = vmatpush2.msra.mxu0 0.0
          %5391 = vmatprep.subr.mxu0 0.0
          %5392 = vmatpush2.msra.mxu0 0.0
          %5393 = vmatprep.subr.mxu0 0.0
          %5394 = vmatpush2.msra.mxu0 0.0
          %5395 = vmatprep.subr.mxu0 0.0
          %5396 = vmatpush2.msra.mxu0 0.0
          %5397 = vmatprep.subr.mxu0 0.0
          %5398 = vmatpush2.msra.mxu0 0.0
          %5399 = vmatprep.subr.mxu0 0.0
          %5400 = vmatpush2.msra.mxu0 0.0
          %5401 = vmatprep.subr.mxu0 0.0
          %5402 = vmatpush2.msra.mxu0 0.0
          %5403 = vmatprep.subr.mxu0 0.0
          %5404 = vmatpush2.msra.mxu0 0.0
          %5405 = vmatprep.subr.mxu0 0.0
          %5406 = vmatpush2.msra.mxu0 0.0
          %5407 = vmatprep.subr.mxu0 0.0
          %5408 = vmatpush2.msra.mxu0 0.0
          %5409 = vmatprep.subr.mxu0 0.0
          %5410 = vmatpush2.msra.mxu0 0.0
          %5411 = vmatprep.subr.mxu0 0.0
          %5412 = vmatpush2.msra.mxu0 0.0
          %5413 = vmatprep.subr.mxu0 0.0
          %5414 = vmatpush2.msra.mxu0 0.0
          %5415 = vmatprep.subr.mxu0 0.0
          %5416 = vmatpush2.msra.mxu0 0.0
          %5417 = vmatprep.subr.mxu0 0.0
          %5418 = vmatpush2.msra.mxu0 0.0
          %5419 = vmatprep.mubr.f32.mxu0 0.0
          %5420 = vmatmul.mubr.f32.gmra.mxu0 %v5350
          %v5421 = vpop.f32.mrf.mxu0
          %v5422 = vadd.f32 0.0, %v5421
          %v5423 = vpop.f32.mrf.mxu0
          %5424 = vmatprep.mubr.f32.mxu0 0.0
          %5425 = vmatmul.mubr.f32.gmra.mxu0 %v5353
          %v5426 = vpop.f32.mrf.mxu0
          %v5427 = vadd.f32 0.0, %v5426
          %v5428 = vpop.f32.mrf.mxu0
          %5429 = vdwg.mxu0
          %5432 = vrot.lane.b32.xlu0 %v5022, 32
          %v5433 = vpop.permute.xlu0 %5432
          %5434 = vrot.lane.b32.xlu0 %v5027, 32
          %v5435 = vpop.permute.xlu0 %5434
          %5440 = vrot.lane.b32.xlu0 %v5222, 64
          %v5441 = vpop.permute.xlu0 %5440
          %5442 = vrot.lane.b32.xlu0 %v5227, 64
          %v5443 = vpop.permute.xlu0 %5442
          %5448 = vrot.lane.b32.xlu0 %v5422, 96
          %v5449 = vpop.permute.xlu0 %5448
          %5450 = vrot.lane.b32.xlu0 %v5427, 96
          %v5451 = vpop.permute.xlu0 %5450
          %v5454 = vsel %vm3405, %v4820, %v5433
          %v5455 = vsel %vm3405, %v4825, %v5435
          %v5456 = vsel %vm4233, %v5454, %v5441
          %v5457 = vsel %vm4233, %v5455, %v5443
          %v5458 = vsel %vm4236, %v5456, %v5449
          %v5459 = vsel %vm4236, %v5457, %v5451
          %5460 = vmatprep.subr.mxu0 0.0
          %5461 = vmatpush1.msra.mxu0 %v4637
          %5462 = vmatprep.subr.mxu0 0.0
          %5463 = vmatpush1.msra.mxu0 %v4636
          %5464 = vmatprep.subr.mxu0 0.0
          %5465 = vmatpush1.msra.mxu0 %v4635
          %5466 = vmatprep.subr.mxu0 0.0
          %5467 = vmatpush1.msra.mxu0 %v4634
          %5468 = vmatprep.subr.mxu0 0.0
          %5469 = vmatpush1.msra.mxu0 %v4633
          %5470 = vmatprep.subr.mxu0 0.0
          %5471 = vmatpush1.msra.mxu0 %v4632
          %5472 = vmatprep.subr.mxu0 0.0
          %5473 = vmatpush1.msra.mxu0 %v4631
          %5474 = vmatprep.subr.mxu0 0.0
          %5475 = vmatpush1.msra.mxu0 %v4630
          %5476 = vmatprep.subr.mxu0 0.0
          %5477 = vmatpush1.msra.mxu0 %v4629
          %5478 = vmatprep.subr.mxu0 0.0
          %5479 = vmatpush1.msra.mxu0 %v4628
          %5480 = vmatprep.subr.mxu0 0.0
          %5481 = vmatpush1.msra.mxu0 %v4627
          %5482 = vmatprep.subr.mxu0 0.0
          %5483 = vmatpush1.msra.mxu0 %v4626
          %5484 = vmatprep.subr.mxu0 0.0
          %5485 = vmatpush1.msra.mxu0 %v4625
          %5486 = vmatprep.subr.mxu0 0.0
          %5487 = vmatpush1.msra.mxu0 %v4624
          %5488 = vmatprep.subr.mxu0 0.0
          %5489 = vmatpush1.msra.mxu0 %v4623
          %5490 = vmatprep.subr.mxu0 0.0
          %5491 = vmatpush1.msra.mxu0 %v4622
          %5492 = vmatprep.subr.mxu0 0.0
          %5493 = vmatpush2.msra.mxu0 0.0
          %5494 = vmatprep.subr.mxu0 0.0
          %5495 = vmatpush2.msra.mxu0 0.0
          %5496 = vmatprep.subr.mxu0 0.0
          %5497 = vmatpush2.msra.mxu0 0.0
          %5498 = vmatprep.subr.mxu0 0.0
          %5499 = vmatpush2.msra.mxu0 0.0
          %5500 = vmatprep.subr.mxu0 0.0
          %5501 = vmatpush2.msra.mxu0 0.0
          %5502 = vmatprep.subr.mxu0 0.0
          %5503 = vmatpush2.msra.mxu0 0.0
          %5504 = vmatprep.subr.mxu0 0.0
          %5505 = vmatpush2.msra.mxu0 0.0
          %5506 = vmatprep.subr.mxu0 0.0
          %5507 = vmatpush2.msra.mxu0 0.0
          %5508 = vmatprep.subr.mxu0 0.0
          %5509 = vmatpush2.msra.mxu0 0.0
          %5510 = vmatprep.subr.mxu0 0.0
          %5511 = vmatpush2.msra.mxu0 0.0
          %5512 = vmatprep.subr.mxu0 0.0
          %5513 = vmatpush2.msra.mxu0 0.0
          %5514 = vmatprep.subr.mxu0 0.0
          %5515 = vmatpush2.msra.mxu0 0.0
          %5516 = vmatprep.subr.mxu0 0.0
          %5517 = vmatpush2.msra.mxu0 0.0
          %5518 = vmatprep.subr.mxu0 0.0
          %5519 = vmatpush2.msra.mxu0 0.0
          %5520 = vmatprep.subr.mxu0 0.0
          %5521 = vmatpush2.msra.mxu0 0.0
          %5522 = vmatprep.subr.mxu0 0.0
          %5523 = vmatpush2.msra.mxu0 0.0
          %5524 = vmatprep.mubr.f32.mxu0 0.0
          %5525 = vmatmul.mubr.f32.gmra.mxu0 %v5458
          %v5526 = vpop.f32.mrf.mxu0
          %v5527 = vadd.f32 %v4347, %v5526
          %v5528 = vpop.f32.mrf.mxu0
          %5529 = vmatprep.mubr.f32.mxu0 0.0
          %5530 = vmatmul.mubr.f32.gmra.mxu0 %v5459
          %v5531 = vpop.f32.mrf.mxu0
          %v5532 = vadd.f32 %v4348, %v5531
          %v5533 = vpop.f32.mrf.mxu0
          %5534 = vdwg.mxu0
          %5535 = vadd.xlane.f32.xlu0 %v5527
          %v5536 = vpop.xlane.xlu0 %5535
          %5537 = vadd.xlane.f32.xlu0 %v5532
          %v5538 = vpop.xlane.xlu0 %5537
          %v5539 = vmul.f32 %v5536, %v4318
          %v5540 = vmul.f32 %v5538, %v4318
          %v5541 = vsub.f32 %v5527, %v5539
          %v5542 = vsub.f32 %v5532, %v5540
          %v5543 = vmul.f32 %v5541, %v5541
          %v5544 = vmul.f32 %v5542, %v5542
          %5545 = vadd.xlane.f32.xlu0 %v5543
          %v5546 = vpop.xlane.xlu0 %5545
          %5547 = vadd.xlane.f32.xlu0 %v5544
          %v5548 = vpop.xlane.xlu0 %5547
          %v5549 = vmul.f32 %v5546, %v4318
          %v5550 = vmul.f32 %v5548, %v4318
          %v5551 = vadd.f32 %v5549, 1e-05
          %v5552 = vadd.f32 %v5550, 1e-05
          %v5553 = vrsqrt.pop %v5551
          %v5554 = vrsqrt.pop %v5552
          %v5555 = vmul.f32 %v5541, %v5553
          %v5556 = vmul.f32 %v5542, %v5554
          %v5557 = vlaneseq
          %v5558 = vshrl.u32 %v5557, 7
          %v5559 = vsub.s32 2, %v5558
          %v5560 = vrot.slane %v3106, %v5559
          %v5561 = vmul.f32 %v5555, %v5560
          %v5562 = vmul.f32 %v5556, %v5560
          %v5563 = vlaneseq
          %v5564 = vshrl.u32 %v5563, 7
          %v5565 = vsub.s32 3, %v5564
          %v5566 = vrot.slane %v3106, %v5565
          %v5567 = vadd.f32 %v5561, %v5566
          %v5568 = vadd.f32 %v5562, %v5566
          %v5569 = vld [vmem:[%s1319] sm:$0xff]
          %v5570 = vld [vmem:[%s1319 + $0x8] sm:$0xff]
          %v5571 = vld [vmem:[%s1319 + $0x10] sm:$0xff]
          %v5572 = vld [vmem:[%s1319 + $0x18] sm:$0xff]
          %v5573 = vld [vmem:[%s1319 + $0x20] sm:$0xff]
          %v5574 = vld [vmem:[%s1319 + $0x28] sm:$0xff]
          %v5575 = vld [vmem:[%s1319 + $0x30] sm:$0xff]
          %v5576 = vld [vmem:[%s1319 + $0x38] sm:$0xff]
          %v5577 = vld [vmem:[%s1319 + $0x40] sm:$0xff]
          %v5578 = vld [vmem:[%s1319 + $0x48] sm:$0xff]
          %v5579 = vld [vmem:[%s1319 + $0x50] sm:$0xff]
          %v5580 = vld [vmem:[%s1319 + $0x58] sm:$0xff]
          %v5581 = vld [vmem:[%s1319 + $0x60] sm:$0xff]
          %v5582 = vld [vmem:[%s1319 + $0x68] sm:$0xff]
          %v5583 = vld [vmem:[%s1319 + $0x70] sm:$0xff]
          %v5584 = vld [vmem:[%s1319 + $0x78] sm:$0xff]
          %v5585 = vld [vmem:[%s1319 + $0x80] sm:$0xff]
          %v5586 = vld [vmem:[%s1319 + $0x88] sm:$0xff]
          %v5587 = vld [vmem:[%s1319 + $0x90] sm:$0xff]
          %v5588 = vld [vmem:[%s1319 + $0x98] sm:$0xff]
          %v5589 = vld [vmem:[%s1319 + $0xa0] sm:$0xff]
          %v5590 = vld [vmem:[%s1319 + $0xa8] sm:$0xff]
          %v5591 = vld [vmem:[%s1319 + $0xb0] sm:$0xff]
          %v5592 = vld [vmem:[%s1319 + $0xb8] sm:$0xff]
          %v5593 = vld [vmem:[%s1319 + $0xc0] sm:$0xff]
          %v5594 = vld [vmem:[%s1319 + $0xc8] sm:$0xff]
          %v5595 = vld [vmem:[%s1319 + $0xd0] sm:$0xff]
          %v5596 = vld [vmem:[%s1319 + $0xd8] sm:$0xff]
          %v5597 = vld [vmem:[%s1319 + $0xe0] sm:$0xff]
          %v5598 = vld [vmem:[%s1319 + $0xe8] sm:$0xff]
          %v5599 = vld [vmem:[%s1319 + $0xf0] sm:$0xff]
          %v5600 = vld [vmem:[%s1319 + $0xf8] sm:$0xff]
          %v5601 = vlaneseq
          %v5602 = vshrl.u32 %v5601, 7
          %v5603 = vsub.s32 0, %v5602
          %v5604 = vrot.slane %v3107, %v5603
          %v5605 = vlaneseq
          %v5606 = vshrl.u32 %v5605, 7
          %v5607 = vsub.s32 0, %v5606
          %v5608 = vrot.slane %v3108, %v5607
          %5609 = vmatprep.subr.mxu0 %v5600
          %5610 = vmatpush1.msra.mxu0 %v5599
          %5611 = vmatprep.subr.mxu0 %v5598
          %5612 = vmatpush1.msra.mxu0 %v5597
          %5613 = vmatprep.subr.mxu0 %v5596
          %5614 = vmatpush1.msra.mxu0 %v5595
          %5615 = vmatprep.subr.mxu0 %v5594
          %5616 = vmatpush1.msra.mxu0 %v5593
          %5617 = vmatprep.subr.mxu0 %v5592
          %5618 = vmatpush1.msra.mxu0 %v5591
          %5619 = vmatprep.subr.mxu0 %v5590
          %5620 = vmatpush1.msra.mxu0 %v5589
          %5621 = vmatprep.subr.mxu0 %v5588
          %5622 = vmatpush1.msra.mxu0 %v5587
          %5623 = vmatprep.subr.mxu0 %v5586
          %5624 = vmatpush1.msra.mxu0 %v5585
          %5625 = vmatprep.subr.mxu0 %v5584
          %5626 = vmatpush1.msra.mxu0 %v5583
          %5627 = vmatprep.subr.mxu0 %v5582
          %5628 = vmatpush1.msra.mxu0 %v5581
          %5629 = vmatprep.subr.mxu0 %v5580
          %5630 = vmatpush1.msra.mxu0 %v5579
          %5631 = vmatprep.subr.mxu0 %v5578
          %5632 = vmatpush1.msra.mxu0 %v5577
          %5633 = vmatprep.subr.mxu0 %v5576
          %5634 = vmatpush1.msra.mxu0 %v5575
          %5635 = vmatprep.subr.mxu0 %v5574
          %5636 = vmatpush1.msra.mxu0 %v5573
          %5637 = vmatprep.subr.mxu0 %v5572
          %5638 = vmatpush1.msra.mxu0 %v5571
          %5639 = vmatprep.subr.mxu0 %v5570
          %5640 = vmatpush1.msra.mxu0 %v5569
          %5641 = vmatprep.subr.mxu0 0.0
          %5642 = vmatpush2.msra.mxu0 0.0
          %5643 = vmatprep.subr.mxu0 0.0
          %5644 = vmatpush2.msra.mxu0 0.0
          %5645 = vmatprep.subr.mxu0 0.0
          %5646 = vmatpush2.msra.mxu0 0.0
          %5647 = vmatprep.subr.mxu0 0.0
          %5648 = vmatpush2.msra.mxu0 0.0
          %5649 = vmatprep.subr.mxu0 0.0
          %5650 = vmatpush2.msra.mxu0 0.0
          %5651 = vmatprep.subr.mxu0 0.0
          %5652 = vmatpush2.msra.mxu0 0.0
          %5653 = vmatprep.subr.mxu0 0.0
          %5654 = vmatpush2.msra.mxu0 0.0
          %5655 = vmatprep.subr.mxu0 0.0
          %5656 = vmatpush2.msra.mxu0 0.0
          %5657 = vmatprep.subr.mxu0 0.0
          %5658 = vmatpush2.msra.mxu0 0.0
          %5659 = vmatprep.subr.mxu0 0.0
          %5660 = vmatpush2.msra.mxu0 0.0
          %5661 = vmatprep.subr.mxu0 0.0
          %5662 = vmatpush2.msra.mxu0 0.0
          %5663 = vmatprep.subr.mxu0 0.0
          %5664 = vmatpush2.msra.mxu0 0.0
          %5665 = vmatprep.subr.mxu0 0.0
          %5666 = vmatpush2.msra.mxu0 0.0
          %5667 = vmatprep.subr.mxu0 0.0
          %5668 = vmatpush2.msra.mxu0 0.0
          %5669 = vmatprep.subr.mxu0 0.0
          %5670 = vmatpush2.msra.mxu0 0.0
          %5671 = vmatprep.subr.mxu0 0.0
          %5672 = vmatpush2.msra.mxu0 0.0
          %5673 = vmatprep.mubr.f32.mxu0 0.0
          %5674 = vmatmul.mubr.f32.gmra.mxu0 %v5567
          %v5675 = vpop.f32.mrf.mxu0
          %v5676 = vadd.f32 %v5604, %v5675
          %v5677 = vpop.f32.mrf.mxu0
          %v5678 = vadd.f32 %v5608, %v5677
          %5679 = vmatprep.mubr.f32.mxu0 0.0
          %5680 = vmatmul.mubr.f32.gmra.mxu0 %v5568
          %v5681 = vpop.f32.mrf.mxu0
          %v5682 = vadd.f32 %v5604, %v5681
          %v5683 = vpop.f32.mrf.mxu0
          %v5684 = vadd.f32 %v5608, %v5683
          %5685 = vdwg.mxu0
          %v5686 = vmax.f32 %v5676, 0.0
          %v5687 = vmax.f32 %v5678, 0.0
          %v5688 = vmax.f32 %v5682, 0.0
          %v5689 = vmax.f32 %v5684, 0.0
          %v5690 = vld [vmem:[%s1328] sm:$0xff]
          %v5691 = vld [vmem:[%s1328 + $0x8] sm:$0xff]
          %v5692 = vld [vmem:[%s1328 + $0x10] sm:$0xff]
          %v5693 = vld [vmem:[%s1328 + $0x18] sm:$0xff]
          %v5694 = vld [vmem:[%s1328 + $0x20] sm:$0xff]
          %v5695 = vld [vmem:[%s1328 + $0x28] sm:$0xff]
          %v5696 = vld [vmem:[%s1328 + $0x30] sm:$0xff]
          %v5697 = vld [vmem:[%s1328 + $0x38] sm:$0xff]
          %v5698 = vld [vmem:[%s1328 + $0x40] sm:$0xff]
          %v5699 = vld [vmem:[%s1328 + $0x48] sm:$0xff]
          %v5700 = vld [vmem:[%s1328 + $0x50] sm:$0xff]
          %v5701 = vld [vmem:[%s1328 + $0x58] sm:$0xff]
          %v5702 = vld [vmem:[%s1328 + $0x60] sm:$0xff]
          %v5703 = vld [vmem:[%s1328 + $0x68] sm:$0xff]
          %v5704 = vld [vmem:[%s1328 + $0x70] sm:$0xff]
          %v5705 = vld [vmem:[%s1328 + $0x78] sm:$0xff]
          %v5706 = vld [vmem:[%s1328 + $0x80] sm:$0xff]
          %v5707 = vld [vmem:[%s1328 + $0x88] sm:$0xff]
          %v5708 = vld [vmem:[%s1328 + $0x90] sm:$0xff]
          %v5709 = vld [vmem:[%s1328 + $0x98] sm:$0xff]
          %v5710 = vld [vmem:[%s1328 + $0xa0] sm:$0xff]
          %v5711 = vld [vmem:[%s1328 + $0xa8] sm:$0xff]
          %v5712 = vld [vmem:[%s1328 + $0xb0] sm:$0xff]
          %v5713 = vld [vmem:[%s1328 + $0xb8] sm:$0xff]
          %v5714 = vld [vmem:[%s1328 + $0xc0] sm:$0xff]
          %v5715 = vld [vmem:[%s1328 + $0xc8] sm:$0xff]
          %v5716 = vld [vmem:[%s1328 + $0xd0] sm:$0xff]
          %v5717 = vld [vmem:[%s1328 + $0xd8] sm:$0xff]
          %v5718 = vld [vmem:[%s1328 + $0xe0] sm:$0xff]
          %v5719 = vld [vmem:[%s1328 + $0xe8] sm:$0xff]
          %v5720 = vld [vmem:[%s1328 + $0xf0] sm:$0xff]
          %v5721 = vld [vmem:[%s1328 + $0xf8] sm:$0xff]
          %v5722 = vlaneseq
          %v5723 = vshrl.u32 %v5722, 7
          %v5724 = vsub.s32 6, %v5723
          %v5725 = vrot.slane %v3106, %v5724
          %5726 = vmatprep.subr.mxu0 0.0
          %5727 = vmatpush1.msra.mxu0 %v5705
          %5728 = vmatprep.subr.mxu0 0.0
          %5729 = vmatpush1.msra.mxu0 %v5704
          %5730 = vmatprep.subr.mxu0 0.0
          %5731 = vmatpush1.msra.mxu0 %v5703
          %5732 = vmatprep.subr.mxu0 0.0
          %5733 = vmatpush1.msra.mxu0 %v5702
          %5734 = vmatprep.subr.mxu0 0.0
          %5735 = vmatpush1.msra.mxu0 %v5701
          %5736 = vmatprep.subr.mxu0 0.0
          %5737 = vmatpush1.msra.mxu0 %v5700
          %5738 = vmatprep.subr.mxu0 0.0
          %5739 = vmatpush1.msra.mxu0 %v5699
          %5740 = vmatprep.subr.mxu0 0.0
          %5741 = vmatpush1.msra.mxu0 %v5698
          %5742 = vmatprep.subr.mxu0 0.0
          %5743 = vmatpush1.msra.mxu0 %v5697
          %5744 = vmatprep.subr.mxu0 0.0
          %5745 = vmatpush1.msra.mxu0 %v5696
          %5746 = vmatprep.subr.mxu0 0.0
          %5747 = vmatpush1.msra.mxu0 %v5695
          %5748 = vmatprep.subr.mxu0 0.0
          %5749 = vmatpush1.msra.mxu0 %v5694
          %5750 = vmatprep.subr.mxu0 0.0
          %5751 = vmatpush1.msra.mxu0 %v5693
          %5752 = vmatprep.subr.mxu0 0.0
          %5753 = vmatpush1.msra.mxu0 %v5692
          %5754 = vmatprep.subr.mxu0 0.0
          %5755 = vmatpush1.msra.mxu0 %v5691
          %5756 = vmatprep.subr.mxu0 0.0
          %5757 = vmatpush1.msra.mxu0 %v5690
          %5758 = vmatprep.subr.mxu0 0.0
          %5759 = vmatpush2.msra.mxu0 %v5721
          %5760 = vmatprep.subr.mxu0 0.0
          %5761 = vmatpush2.msra.mxu0 %v5720
          %5762 = vmatprep.subr.mxu0 0.0
          %5763 = vmatpush2.msra.mxu0 %v5719
          %5764 = vmatprep.subr.mxu0 0.0
          %5765 = vmatpush2.msra.mxu0 %v5718
          %5766 = vmatprep.subr.mxu0 0.0
          %5767 = vmatpush2.msra.mxu0 %v5717
          %5768 = vmatprep.subr.mxu0 0.0
          %5769 = vmatpush2.msra.mxu0 %v5716
          %5770 = vmatprep.subr.mxu0 0.0
          %5771 = vmatpush2.msra.mxu0 %v5715
          %5772 = vmatprep.subr.mxu0 0.0
          %5773 = vmatpush2.msra.mxu0 %v5714
          %5774 = vmatprep.subr.mxu0 0.0
          %5775 = vmatpush2.msra.mxu0 %v5713
          %5776 = vmatprep.subr.mxu0 0.0
          %5777 = vmatpush2.msra.mxu0 %v5712
          %5778 = vmatprep.subr.mxu0 0.0
          %5779 = vmatpush2.msra.mxu0 %v5711
          %5780 = vmatprep.subr.mxu0 0.0
          %5781 = vmatpush2.msra.mxu0 %v5710
          %5782 = vmatprep.subr.mxu0 0.0
          %5783 = vmatpush2.msra.mxu0 %v5709
          %5784 = vmatprep.subr.mxu0 0.0
          %5785 = vmatpush2.msra.mxu0 %v5708
          %5786 = vmatprep.subr.mxu0 0.0
          %5787 = vmatpush2.msra.mxu0 %v5707
          %5788 = vmatprep.subr.mxu0 0.0
          %5789 = vmatpush2.msra.mxu0 %v5706
          %5790 = vmatprep.mubr.f32.mxu0 %v5687
          %5791 = vmatmul.mubr.f32.gmra.mxu0 %v5686
          %v5792 = vpop.f32.mrf.mxu0
          %v5793 = vadd.f32 %v5725, %v5792
          %v5794 = vpop.f32.mrf.mxu0
          %5795 = vmatprep.mubr.f32.mxu0 %v5689
          %5796 = vmatmul.mubr.f32.gmra.mxu0 %v5688
          %v5797 = vpop.f32.mrf.mxu0
          %v5798 = vadd.f32 %v5725, %v5797
          %v5799 = vpop.f32.mrf.mxu0
          %5800 = vdwg.mxu0
          %v5801 = vadd.f32 %v5793, %v5567
          %v5802 = vadd.f32 %v5798, %v5568
          %5803 = vadd.xlane.f32.xlu0 %v5801
          %v5804 = vpop.xlane.xlu0 %5803
          %5805 = vadd.xlane.f32.xlu0 %v5802
          %v5806 = vpop.xlane.xlu0 %5805
          %v5807 = vmul.f32 %v5804, %v4318
          %v5808 = vmul.f32 %v5806, %v4318
          %v5809 = vsub.f32 %v5801, %v5807
          %v5810 = vsub.f32 %v5802, %v5808
          %v5811 = vmul.f32 %v5809, %v5809
          %v5812 = vmul.f32 %v5810, %v5810
          %5813 = vadd.xlane.f32.xlu0 %v5811
          %v5814 = vpop.xlane.xlu0 %5813
          %5815 = vadd.xlane.f32.xlu0 %v5812
          %v5816 = vpop.xlane.xlu0 %5815
          %v5817 = vmul.f32 %v5814, %v4318
          %v5818 = vmul.f32 %v5816, %v4318
          %v5819 = vadd.f32 %v5817, 1e-05
          %v5820 = vadd.f32 %v5818, 1e-05
          %v5821 = vrsqrt.pop %v5819
          %v5822 = vrsqrt.pop %v5820
          %v5823 = vmul.f32 %v5809, %v5821
          %v5824 = vmul.f32 %v5810, %v5822
          %v5825 = vlaneseq
          %v5826 = vshrl.u32 %v5825, 7
          %v5827 = vsub.s32 4, %v5826
          %v5828 = vrot.slane %v3106, %v5827
          %v5829 = vmul.f32 %v5823, %v5828
          %v5830 = vmul.f32 %v5824, %v5828
          %v5831 = vlaneseq
          %v5832 = vshrl.u32 %v5831, 7
          %v5833 = vsub.s32 5, %v5832
          %v5834 = vrot.slane %v3106, %v5833
          %v5835 = vadd.f32 %v5829, %v5834
          %v5836 = vadd.f32 %v5830, %v5834
          %5837 = vst [vmem:[#allocation29] sm:$0xff] %v5835
          %5838 = vst [vmem:[#allocation29 + $0x8] sm:$0xff] %v5836
        $region184: #{transformer_forward.1} parent=107 // pred_fallthru
          _
        // Predicated region
        $region189: #{transformer_forward.1} parent=107 // pred_check
          %p5839 = pneg %p740
        $region190: #{transformer_forward.1} parent=107 // pred_check_branch
          %5841 = sbr.rel (%p5839) target = $region192
        $region191: #{transformer_forward.1} parent=107 // pred_region
          %s5843 = ssub.s32 256, 256
          %5844 = vsyncadd [#allocation5], %s5843
          %s5845 = sshll.u32 [#allocation29], 4
          %s5846 = int_to_ptr.vmem [resolvable:$true] %s5845
          %5851 = dma.vmem_to_hbm [thread:$0]  %s5846, 256, %s22, [#allocation5], 128, 128, 8
        $region192: #{transformer_forward.1} parent=107 // pred_fallthru
          _
        // Predicated region
        $region193: #{transformer_forward.1} parent=107 // pred_check
          %p5852 = pneg %p740
        $region194: #{transformer_forward.1} parent=107 // pred_check_branch
          %5854 = sbr.rel (%p5852) target = $region196
        $region195: #{transformer_forward.1} parent=107 // pred_region
          %5855 = dma.done [#allocation5], 256
        $region196: #{transformer_forward.1} parent=107 // pred_fallthru
          _
      $region108: #{transformer_forward.1} parent=5 // pred_fallthru
        _
      %p5856 = scmp.le.s32.totalorder 2, %s56
      // Predicated region
      $region197: #{transformer_forward.1} parent=5 // pred_check
        %p5857 = pneg %p5856
      $region198: #{transformer_forward.1} parent=5 // pred_check_branch
        %5859 = sbr.rel (%p5857) target = $region200
      $region199: #{transformer_forward.1} parent=5 // pred_region
        %s5860 = ssub.s32 %s56, 2
      $region200: #{transformer_forward.1} parent=5 // pred_fallthru
        _
    $region6: #{transformer_forward.1} parent=1 // loop_footer
      %s60 = sadd.s32 1, %s56
    $region7: #{transformer_forward.1} parent=1 // loop_footer_branch
      %55 = sbr.rel target = $region3
    $region8: #{transformer_forward.1} parent=1 // loop_exit
      _
    %5861 = vsyncpa [#allocation4], 1
    %s5862 = scalar_lea.sflag [#allocation4], 1
    %5863 = vsyncpa %s5862, 1
    %5864 = vsyncpa [#allocation7], 1
    %s5865 = scalar_lea.sflag [#allocation7], 1
    %5866 = vsyncpa %s5865, 1
    %5867 = vsyncpa [#allocation10], 1
    %s5868 = scalar_lea.sflag [#allocation10], 1
    %5869 = vsyncpa %s5868, 1
    %5870 = vsyncpa [#allocation13], 1
    %s5871 = scalar_lea.sflag [#allocation13], 1
    %5872 = vsyncpa %s5871, 1
    %5873 = vsyncpa [#allocation16], 1
    %s5874 = scalar_lea.sflag [#allocation16], 1
    %5875 = vsyncpa %s5874, 1
    %5876 = vsyncpa [#allocation19], 1
    %s5877 = scalar_lea.sflag [#allocation19], 1
    %5878 = vsyncpa %s5877, 1
    %5879 = vsyncpa [#allocation22], 1
    %s5880 = scalar_lea.sflag [#allocation22], 1
    %5881 = vsyncpa %s5880, 1
    %5882 = vsyncpa [#allocation25], 1
    %s5883 = scalar_lea.sflag [#allocation25], 1
    %5884 = vsyncpa %s5883, 1
    %5885 = vsyncpa [#allocation28], 1
    %s5886 = scalar_lea.sflag [#allocation28], 1
    %5887 = vsyncpa %s5886, 1
    %5888 = vsyncpa [#allocation5], 1
    %s5889 = scalar_lea.sflag [#allocation5], 1
    %5890 = vsyncpa %s5889, 1

</llo_original>
